<compile_context>
chip_gen: v7x
topology: tpu7x:2x2x1
jax: 0.10.0
libtpu: 0.0.40
codegen_flags: <defaults>
</compile_context>

<pallas_src>
import jax
import jax.numpy as jnp
from jax.experimental import pallas as pl
from jax.experimental.pallas import tpu as pltpu

OUT_PAD = 128  # lane-dense padded width of the logits output slab

WEIGHT_KEYS = ('t1', 'b1', 'w2', 'b2', 'wp1a', 'wp1b', 'bp1', 'wp2', 'bp2')


def _round_up(x, m):
    return ((x + m - 1) // m) * m


def _base_classification_kernel(
    ids_ref,                    # (2*tile_b*L, 1) int32, rows = [x1 rows | x2 rows]
    t1_ref, b1_ref,             # folded gather∘Linear1 table (Vp, Hp); bias f32 (1, Hp)
    w2_ref, b2_ref,             # Linear(H,2H) pre-scaled by 1/L; (Hp, 2Hp) / (1, 2Hp)
    wp1a_ref, wp1b_ref, bp1_ref,  # predict Linear(4H,2H) split; (2Hp, 2Hp) x2 / (1, 2Hp)
    wp2_ref, bp2_ref,           # predict Linear(2H,2) lane-padded; (2Hp, 128) / (1, 128)
    out_ref,                    # (tile_b, 128) f32; cols >= 2 sliced off in wrapper
):
    rows = ids_ref.shape[0]
    Vp, Hp = t1_ref.shape
    tb = out_ref.shape[0]
    L = rows // (2 * tb)
    cdt = t1_ref.dtype
    # f32 path: true f32 MXU passes (validation); bf16 path: native single pass.
    prec = jax.lax.Precision.HIGHEST if cdt == jnp.float32 else None

    # ---- in-kernel embedding gather fused with the first encoder Linear ----
    # emb[ids] @ w1 == (emb @ w1)[ids]; the row gather is a one-hot MXU matmul
    # against the VMEM-resident precomputed table t1 = emb @ w1.
    ids = ids_ref[...]                                           # (rows, 1)
    onehot = (jax.lax.broadcasted_iota(jnp.int32, (rows, Vp), 1) == ids)
    onehot = onehot.astype(jnp.float32).astype(cdt)              # (rows, Vp)
    h = jnp.dot(onehot, t1_ref[...], preferred_element_type=jnp.float32,
                precision=prec) + b1_ref[...]
    h = jnp.maximum(h, 0.0)                                      # (rows, Hp) f32

    # ---- sequence mean hoisted above Linear(H,2H); 1/L folded into w2 ------
    hs = jnp.sum(h.reshape(2 * tb, L, Hp), axis=1)               # (2*tb, Hp) f32
    m = jnp.dot(hs.astype(cdt), w2_ref[...], preferred_element_type=jnp.float32,
                precision=prec) + b2_ref[...]                    # (2*tb, 2Hp) f32
    m = m.astype(cdt)
    m1, m2 = m[:tb, :], m[tb:, :]                                # contiguous halves

    # ---- concat([m1, m2]) @ wp1 == m1 @ wp1a + m2 @ wp1b  (no lane concat) --
    p = (jnp.dot(m1, wp1a_ref[...], preferred_element_type=jnp.float32,
                 precision=prec)
         + jnp.dot(m2, wp1b_ref[...], preferred_element_type=jnp.float32,
                   precision=prec)
         + bp1_ref[...])
    p = jnp.maximum(p, 0.0)

    logits = jnp.dot(p.astype(cdt), wp2_ref[...],
                     preferred_element_type=jnp.float32,
                     precision=prec) + bp2_ref[...]              # (tb, 128)
    out_ref[...] = logits.astype(out_ref.dtype)


def prepare_params(params, seq_len, compute_dtype=jnp.bfloat16):
    """One-time parameter prep (hoisted out of the forward path):
    lane-pad H and vocab to 128, fold embedding @ w1, fold 1/L into w2,
    split wp1, lane-pad wp2/bp2, cast matmul weights to the compute dtype."""
    cdt = jnp.dtype(compute_dtype)
    f32 = jnp.float32
    hp = jax.lax.Precision.HIGHEST
    V, H = params['embedding'].shape
    Hp = _round_up(max(H, 128), 128)
    Vp = _round_up(max(V, 128), 128)

    emb = jnp.zeros((Vp, Hp), f32).at[:V, :H].set(params['embedding'].astype(f32))
    w1 = jnp.zeros((Hp, Hp), f32).at[:H, :H].set(params['w1'].astype(f32))
    t1 = jnp.dot(emb, w1, precision=hp)                          # gather∘Linear1
    b1 = jnp.zeros((1, Hp), f32).at[:, :H].set(params['b1'].astype(f32))
    w2 = jnp.zeros((Hp, 2 * Hp), f32).at[:H, :2 * H].set(
        params['w2'].astype(f32) * (1.0 / float(seq_len)))       # mean folded in
    b2 = jnp.zeros((1, 2 * Hp), f32).at[:, :2 * H].set(params['b2'].astype(f32))
    wp1 = params['wp1'].astype(f32)
    wp1a = jnp.zeros((2 * Hp, 2 * Hp), f32).at[:2 * H, :2 * H].set(wp1[:2 * H])
    wp1b = jnp.zeros((2 * Hp, 2 * Hp), f32).at[:2 * H, :2 * H].set(wp1[2 * H:])
    bp1 = jnp.zeros((1, 2 * Hp), f32).at[:, :2 * H].set(params['bp1'].astype(f32))
    wp2 = jnp.zeros((2 * Hp, OUT_PAD), f32).at[:2 * H, :2].set(params['wp2'].astype(f32))
    bp2 = jnp.zeros((1, OUT_PAD), f32).at[:, :2].set(params['bp2'].astype(f32))

    return {
        't1': t1.astype(cdt), 'b1': b1,
        'w2': w2.astype(cdt), 'b2': b2,
        'wp1a': wp1a.astype(cdt), 'wp1b': wp1b.astype(cdt), 'bp1': bp1,
        'wp2': wp2.astype(cdt), 'bp2': bp2,
        'meta': {'H': H, 'Hp': Hp, 'V': V, 'Vp': Vp, 'L': int(seq_len),
                 'cdt': cdt},
    }


def base_classification_forward(x1_ids, x2_ids, prepped, tile_b=None):
    """x1_ids, x2_ids: (B, L) int32 token ids. Returns (B, 2) f32 logits."""
    meta = prepped['meta']
    L, Hp, Vp, cdt = meta['L'], meta['Hp'], meta['Vp'], meta['cdt']
    B, Lx = x1_ids.shape
    assert Lx == L and x2_ids.shape == (B, L)
    csz = cdt.itemsize

    # ---- generation-aware, weight-aware VMEM budget -------------------------
    try:
        phys_vmem = int(pltpu.get_tpu_info().vmem_capacity_bytes)
    except Exception:
        phys_vmem = 64 * 1024 * 1024                   # v7x per-TC worst case
    vmem_limit = max(32 << 20, min(phys_vmem - (16 << 20), 96 << 20))

    weight_bytes = sum(int(prepped[k].size) * prepped[k].dtype.itemsize
                       for k in WEIGHT_KEYS)
    # Single-buffer the constant weight blocks only when double-buffering them
    # would meaningfully eat VMEM (large H); demo-size weights stay default.
    single_buffer_weights = (2 * weight_bytes > (8 << 20))
    weight_buffers = 1 if single_buffer_weights else 2
    resident = weight_buffers * weight_bytes + (4 << 20)        # + headroom

    # VMEM per batch row: ids block (sublane-padded, double-buffered), one-hot
    # gather matrix, f32 h + compute-dtype copy, double-buffered output row.
    per_row = (2 * L) * (2 * 512 + Vp * csz + Hp * (4 + csz)) + 2 * OUT_PAD * 4
    avail = max(vmem_limit - resident, 1 << 20)
    if tile_b is None:
        tile_b = avail // per_row
    tile_b = int(min(tile_b, 1024))
    tile_b = min(tile_b, max(8, _round_up(-(-B // 2), 8)))      # >= 2 grid steps
    tile_b = max(8, (tile_b // 8) * 8)                          # sublane aligned
    num_tiles = max(2, -(-B // tile_b))                         # feed both v7x TCs
    Bp = num_tiles * tile_b

    # ---- token ids: pad batch, stack streams, tile-major (rows, 1) layout ---
    ids = jnp.stack([x1_ids, x2_ids], axis=0).astype(jnp.int32)   # (2, B, L)
    if Bp != B:
        ids = jnp.pad(ids, ((0, 0), (0, Bp - B), (0, 0)))         # pad with id 0
    ids = ids.reshape(2, num_tiles, tile_b, L).transpose(1, 0, 2, 3)
    ids = ids.reshape(num_tiles * 2 * tile_b * L, 1)              # (rows_total, 1)

    rep2 = lambda i: (0, 0)
    wkw = {'pipeline_mode': pl.Buffered(1)} if single_buffer_weights else {}
    in_specs = [
        pl.BlockSpec((2 * tile_b * L, 1), lambda i: (i, 0)),      # ids
        pl.BlockSpec((Vp, Hp), rep2, **wkw),                      # t1 = emb @ w1
        pl.BlockSpec((1, Hp), rep2, **wkw),                       # b1
        pl.BlockSpec((Hp, 2 * Hp), rep2, **wkw),                  # w2 (pre / L)
        pl.BlockSpec((1, 2 * Hp), rep2, **wkw),                   # b2
        pl.BlockSpec((2 * Hp, 2 * Hp), rep2, **wkw),              # wp1a
        pl.BlockSpec((2 * Hp, 2 * Hp), rep2, **wkw),              # wp1b
        pl.BlockSpec((1, 2 * Hp), rep2, **wkw),                   # bp1
        pl.BlockSpec((2 * Hp, OUT_PAD), rep2, **wkw),             # wp2 (lane-padded)
        pl.BlockSpec((1, OUT_PAD), rep2, **wkw),                  # bp2 (lane-padded)
    ]
    out_specs = pl.BlockSpec((tile_b, OUT_PAD), lambda i: (i, 0))

    out_pad = pl.pallas_call(
        _base_classification_kernel,
        out_shape=jax.ShapeDtypeStruct((Bp, OUT_PAD), jnp.float32),
        grid=(num_tiles,),
        in_specs=in_specs,
        out_specs=out_specs,
        compiler_params=pltpu.CompilerParams(
            dimension_semantics=("parallel",),
            vmem_limit_bytes=int(vmem_limit),
        ),
    )(ids, *(prepped[k] for k in WEIGHT_KEYS))

    return out_pad[:B, :2]


def init_params(key, vocab_size, hidden_dim):
    H = hidden_dim
    keys = jax.random.split(key, 5)

    def lin(k, fan_in, fan_out):
        # deterministic, roughly PyTorch-like uniform init, stored as (in, out)
        bound = 1.0 / jnp.sqrt(fan_in)
        kw, kb = jax.random.split(k)
        w = jax.random.uniform(kw, (fan_in, fan_out), jnp.float32, -bound, bound)
        b = jax.random.uniform(kb, (1, fan_out), jnp.float32, -bound, bound)
        return w, b

    params = {'embedding': jax.random.normal(keys[0], (vocab_size, H), jnp.float32)}
    params['w1'], params['b1'] = lin(keys[1], H, H)             # encoder Linear(H,H)
    params['w2'], params['b2'] = lin(keys[2], H, 2 * H)         # encoder Linear(H,2H)
    params['wp1'], params['bp1'] = lin(keys[3], 4 * H, 2 * H)   # predict Linear(4H,2H)
    params['wp2'], params['bp2'] = lin(keys[4], 2 * H, 2)       # predict Linear(2H,2)
    return params


def reference_forward(x1_ids, x2_ids, params):
    """Pure-JAX reference mirroring the PyTorch forward (eval mode), f32."""
    hp = jax.lax.Precision.HIGHEST
    emb = params['embedding']

    def encode(x):
        h = jnp.maximum(
            jnp.einsum('blh,hd->bld', x, params['w1'], precision=hp) + params['b1'], 0.0)
        e = jnp.einsum('blh,hd->bld', h, params['w2'], precision=hp) + params['b2']
        return jnp.mean(e, axis=1)

    x1 = jnp.take(emb, x1_ids, axis=0)
    x2 = jnp.take(emb, x2_ids, axis=0)
    final_enc = jnp.concatenate([encode(x1), encode(x2)], axis=-1)
    p = jnp.maximum(jnp.dot(final_enc, params['wp1'], precision=hp) + params['bp1'], 0.0)
    return jnp.dot(p, params['wp2'], precision=hp) + params['bp2']


if __name__ == "__main__":
    key = jax.random.PRNGKey(0)
    vocab_size, hidden_dim = 100, 32
    B, L = 2, 8

    k_params, k_x1, k_x2, k_y1, k_y2 = jax.random.split(key, 5)
    params = init_params(k_params, vocab_size, hidden_dim)
    x1_ids = jax.random.randint(k_x1, (B, L), 0, vocab_size, dtype=jnp.int32)
    x2_ids = jax.random.randint(k_x2, (B, L), 0, vocab_size, dtype=jnp.int32)

    ref = reference_forward(x1_ids, x2_ids, params)

    # exact-math validation path (f32 weights, Precision.HIGHEST MXU passes)
    prepped_f32 = prepare_params(params, seq_len=L, compute_dtype=jnp.float32)
    out_f32 = jax.block_until_ready(
        base_classification_forward(x1_ids, x2_ids, prepped_f32))
    assert out_f32.shape == (B, 2)
    assert jnp.allclose(out_f32, ref, atol=1e-4, rtol=1e-4), (out_f32, ref)

    # serving path (bf16 MXU operands, f32 accumulation) -- loose check
    prepped_bf16 = prepare_params(params, seq_len=L, compute_dtype=jnp.bfloat16)
    out_bf16 = jax.block_until_ready(
        base_classification_forward(x1_ids, x2_ids, prepped_bf16))
    assert out_bf16.shape == (B, 2)
    assert float(jnp.max(jnp.abs(out_bf16 - ref))) < 0.1, (out_bf16, ref)

    # tiled + padded path: B not a multiple of the tile, explicit tile_b
    Bt = 10
    y1_ids = jax.random.randint(k_y1, (Bt, L), 0, vocab_size, dtype=jnp.int32)
    y2_ids = jax.random.randint(k_y2, (Bt, L), 0, vocab_size, dtype=jnp.int32)
    ref_t = reference_forward(y1_ids, y2_ids, params)
    out_t = jax.block_until_ready(
        base_classification_forward(y1_ids, y2_ids, prepped_f32, tile_b=8))
    assert out_t.shape == (Bt, 2)
    assert jnp.allclose(out_t, ref_t, atol=1e-4, rtol=1e-4), (out_t, ref_t)

    print("KERNEL_OK")
</pallas_src>

<mosaic_0001>
module attributes {stable_mosaic.version = 11 : i64} {
  func.func @_base_classification_kernel(%arg0: i32, %arg1: memref<128x1xi32, #tpu.memory_space<vmem>>, %arg2: memref<128x128xf32, #tpu.memory_space<vmem>>, %arg3: memref<1x128xf32, #tpu.memory_space<vmem>>, %arg4: memref<128x256xf32, #tpu.memory_space<vmem>>, %arg5: memref<1x256xf32, #tpu.memory_space<vmem>>, %arg6: memref<256x256xf32, #tpu.memory_space<vmem>>, %arg7: memref<256x256xf32, #tpu.memory_space<vmem>>, %arg8: memref<1x256xf32, #tpu.memory_space<vmem>>, %arg9: memref<256x128xf32, #tpu.memory_space<vmem>>, %arg10: memref<1x128xf32, #tpu.memory_space<vmem>>, %arg11: memref<8x128xf32, #tpu.memory_space<vmem>>) attributes {dimension_semantics = [#tpu.dimension_semantics<parallel>], iteration_bounds = array<i64: 2>, scalar_prefetch = 0 : i64, scratch_operands = 0 : i64, tpu.core_type = #tpu.core_type<tc>, window_params = [{transform_indices = @transform_0, window_bounds = array<i64: 128, 1>}, {pipeline_mode = #tpu.pipeline_mode<synchronous>, transform_indices = @transform_1, window_bounds = array<i64: 128, 128>}, {pipeline_mode = #tpu.pipeline_mode<synchronous>, transform_indices = @transform_2, window_bounds = array<i64: 1, 128>}, {pipeline_mode = #tpu.pipeline_mode<synchronous>, transform_indices = @transform_3, window_bounds = array<i64: 128, 256>}, {pipeline_mode = #tpu.pipeline_mode<synchronous>, transform_indices = @transform_4, window_bounds = array<i64: 1, 256>}, {pipeline_mode = #tpu.pipeline_mode<synchronous>, transform_indices = @transform_5, window_bounds = array<i64: 256, 256>}, {pipeline_mode = #tpu.pipeline_mode<synchronous>, transform_indices = @transform_6, window_bounds = array<i64: 256, 256>}, {pipeline_mode = #tpu.pipeline_mode<synchronous>, transform_indices = @transform_7, window_bounds = array<i64: 1, 256>}, {pipeline_mode = #tpu.pipeline_mode<synchronous>, transform_indices = @transform_8, window_bounds = array<i64: 256, 128>}, {pipeline_mode = #tpu.pipeline_mode<synchronous>, transform_indices = @transform_9, window_bounds = array<i64: 1, 128>}, {transform_indices = @transform_10, window_bounds = array<i64: 8, 128>}]} {
    %c0 = arith.constant 0 : index
    %c0_0 = arith.constant 0 : index
    %0 = vector.load %arg1[%c0, %c0_0] : memref<128x1xi32, #tpu.memory_space<vmem>>, vector<128x1xi32>
    %1 = tpu.iota {dimensions = array<i32: 1>} : vector<128x128xi32>
    %2 = vector.broadcast %0 : vector<128x1xi32> to vector<128x128xi32>
    %3 = arith.cmpi eq, %1, %2 : vector<128x128xi32>
    %4 = arith.extui %3 : vector<128x128xi1> to vector<128x128xi32>
    %5 = arith.sitofp %4 : vector<128x128xi32> to vector<128x128xf32>
    %c0_1 = arith.constant 0 : index
    %c0_2 = arith.constant 0 : index
    %6 = vector.load %arg2[%c0_1, %c0_2] : memref<128x128xf32, #tpu.memory_space<vmem>>, vector<128x128xf32>
    %cst = arith.constant dense<0.000000e+00> : vector<128x128xf32>
    %7 = tpu.matmul %5, %6, %cst {dimension_numbers = #tpu.dot_dimension_numbers<[1], [0], [0], [1], [0, 0, 1, 1], [], []>, precision = #tpu.contract_precision<fp32>} : vector<128x128xf32>, vector<128x128xf32>, vector<128x128xf32> -> vector<128x128xf32>
    %c0_3 = arith.constant 0 : index
    %c0_4 = arith.constant 0 : index
    %8 = vector.load %arg3[%c0_3, %c0_4] : memref<1x128xf32, #tpu.memory_space<vmem>>, vector<1x128xf32>
    %9 = vector.broadcast %8 : vector<1x128xf32> to vector<128x128xf32>
    %10 = arith.addf %7, %9 : vector<128x128xf32>
    %cst_5 = arith.constant 0.000000e+00 : f32
    %11 = vector.broadcast %cst_5 : f32 to vector<128x128xf32>
    %12 = arith.maximumf %10, %11 : vector<128x128xf32>
    %13 = vector.shape_cast %12 : vector<128x128xf32> to vector<16x8x128xf32>
    %cst_6 = arith.constant dense<0.000000e+00> : vector<16x128xf32>
    %14 = vector.multi_reduction <add>, %13, %cst_6 [1] : vector<16x8x128xf32> to vector<16x128xf32>
    %c0_7 = arith.constant 0 : index
    %c0_8 = arith.constant 0 : index
    %15 = vector.load %arg4[%c0_7, %c0_8] : memref<128x256xf32, #tpu.memory_space<vmem>>, vector<128x256xf32>
    %cst_9 = arith.constant dense<0.000000e+00> : vector<16x256xf32>
    %16 = tpu.matmul %14, %15, %cst_9 {dimension_numbers = #tpu.dot_dimension_numbers<[1], [0], [0], [1], [0, 0, 1, 1], [], []>, precision = #tpu.contract_precision<fp32>} : vector<16x128xf32>, vector<128x256xf32>, vector<16x256xf32> -> vector<16x256xf32>
    %c0_10 = arith.constant 0 : index
    %c0_11 = arith.constant 0 : index
    %17 = vector.load %arg5[%c0_10, %c0_11] : memref<1x256xf32, #tpu.memory_space<vmem>>, vector<1x256xf32>
    %18 = vector.broadcast %17 : vector<1x256xf32> to vector<16x256xf32>
    %19 = arith.addf %16, %18 : vector<16x256xf32>
    %20 = vector.extract_strided_slice %19 {offsets = [0, 0], sizes = [8, 256], strides = [1, 1]} : vector<16x256xf32> to vector<8x256xf32>
    %21 = vector.extract_strided_slice %19 {offsets = [8, 0], sizes = [8, 256], strides = [1, 1]} : vector<16x256xf32> to vector<8x256xf32>
    %c0_12 = arith.constant 0 : index
    %c0_13 = arith.constant 0 : index
    %22 = vector.load %arg6[%c0_12, %c0_13] : memref<256x256xf32, #tpu.memory_space<vmem>>, vector<256x256xf32>
    %cst_14 = arith.constant dense<0.000000e+00> : vector<8x256xf32>
    %23 = tpu.matmul %20, %22, %cst_14 {dimension_numbers = #tpu.dot_dimension_numbers<[1], [0], [0], [1], [0, 0, 1, 1], [], []>, precision = #tpu.contract_precision<fp32>} : vector<8x256xf32>, vector<256x256xf32>, vector<8x256xf32> -> vector<8x256xf32>
    %c0_15 = arith.constant 0 : index
    %c0_16 = arith.constant 0 : index
    %24 = vector.load %arg7[%c0_15, %c0_16] : memref<256x256xf32, #tpu.memory_space<vmem>>, vector<256x256xf32>
    %cst_17 = arith.constant dense<0.000000e+00> : vector<8x256xf32>
    %25 = tpu.matmul %21, %24, %cst_17 {dimension_numbers = #tpu.dot_dimension_numbers<[1], [0], [0], [1], [0, 0, 1, 1], [], []>, precision = #tpu.contract_precision<fp32>} : vector<8x256xf32>, vector<256x256xf32>, vector<8x256xf32> -> vector<8x256xf32>
    %26 = arith.addf %23, %25 : vector<8x256xf32>
    %c0_18 = arith.constant 0 : index
    %c0_19 = arith.constant 0 : index
    %27 = vector.load %arg8[%c0_18, %c0_19] : memref<1x256xf32, #tpu.memory_space<vmem>>, vector<1x256xf32>
    %28 = vector.broadcast %27 : vector<1x256xf32> to vector<8x256xf32>
    %29 = arith.addf %26, %28 : vector<8x256xf32>
    %cst_20 = arith.constant 0.000000e+00 : f32
    %30 = vector.broadcast %cst_20 : f32 to vector<8x256xf32>
    %31 = arith.maximumf %29, %30 : vector<8x256xf32>
    %c0_21 = arith.constant 0 : index
    %c0_22 = arith.constant 0 : index
    %32 = vector.load %arg9[%c0_21, %c0_22] : memref<256x128xf32, #tpu.memory_space<vmem>>, vector<256x128xf32>
    %cst_23 = arith.constant dense<0.000000e+00> : vector<8x128xf32>
    %33 = tpu.matmul %31, %32, %cst_23 {dimension_numbers = #tpu.dot_dimension_numbers<[1], [0], [0], [1], [0, 0, 1, 1], [], []>, precision = #tpu.contract_precision<fp32>} : vector<8x256xf32>, vector<256x128xf32>, vector<8x128xf32> -> vector<8x128xf32>
    %c0_24 = arith.constant 0 : index
    %c0_25 = arith.constant 0 : index
    %34 = vector.load %arg10[%c0_24, %c0_25] : memref<1x128xf32, #tpu.memory_space<vmem>>, vector<1x128xf32>
    %35 = vector.broadcast %34 : vector<1x128xf32> to vector<8x128xf32>
    %36 = arith.addf %33, %35 : vector<8x128xf32>
    %c0_26 = arith.constant 0 : index
    %c0_27 = arith.constant 0 : index
    %37 = vector.load %arg11[%c0_26, %c0_27] : memref<8x128xf32, #tpu.memory_space<vmem>>, vector<8x128xf32>
    tpu.vector_store %arg11[%c0_26, %c0_27], %36 {strides = array<i32>} : memref<8x128xf32, #tpu.memory_space<vmem>>, vector<8x128xf32>,
    return
  }
  func.func @transform_0(%arg0: i32) -> (i32, i32) {
    %c0_i32 = arith.constant 0 : i32
    %c0_i32_0 = arith.constant 0 : i32
    return %arg0, %c0_i32 : i32, i32
  }
  func.func @transform_1(%arg0: i32) -> (i32, i32) {
    %c0_i32 = arith.constant 0 : i32
    %c0_i32_0 = arith.constant 0 : i32
    %c0_i32_1 = arith.constant 0 : i32
    return %c0_i32, %c0_i32_0 : i32, i32
  }
  func.func @transform_2(%arg0: i32) -> (i32, i32) {
    %c0_i32 = arith.constant 0 : i32
    %c0_i32_0 = arith.constant 0 : i32
    %c0_i32_1 = arith.constant 0 : i32
    return %c0_i32, %c0_i32_0 : i32, i32
  }
  func.func @transform_3(%arg0: i32) -> (i32, i32) {
    %c0_i32 = arith.constant 0 : i32
    %c0_i32_0 = arith.constant 0 : i32
    %c0_i32_1 = arith.constant 0 : i32
    return %c0_i32, %c0_i32_0 : i32, i32
  }
  func.func @transform_4(%arg0: i32) -> (i32, i32) {
    %c0_i32 = arith.constant 0 : i32
    %c0_i32_0 = arith.constant 0 : i32
    %c0_i32_1 = arith.constant 0 : i32
    return %c0_i32, %c0_i32_0 : i32, i32
  }
  func.func @transform_5(%arg0: i32) -> (i32, i32) {
    %c0_i32 = arith.constant 0 : i32
    %c0_i32_0 = arith.constant 0 : i32
    %c0_i32_1 = arith.constant 0 : i32
    return %c0_i32, %c0_i32_0 : i32, i32
  }
  func.func @transform_6(%arg0: i32) -> (i32, i32) {
    %c0_i32 = arith.constant 0 : i32
    %c0_i32_0 = arith.constant 0 : i32
    %c0_i32_1 = arith.constant 0 : i32
    return %c0_i32, %c0_i32_0 : i32, i32
  }
  func.func @transform_7(%arg0: i32) -> (i32, i32) {
    %c0_i32 = arith.constant 0 : i32
    %c0_i32_0 = arith.constant 0 : i32
    %c0_i32_1 = arith.constant 0 : i32
    return %c0_i32, %c0_i32_0 : i32, i32
  }
  func.func @transform_8(%arg0: i32) -> (i32, i32) {
    %c0_i32 = arith.constant 0 : i32
    %c0_i32_0 = arith.constant 0 : i32
    %c0_i32_1 = arith.constant 0 : i32
    return %c0_i32, %c0_i32_0 : i32, i32
  }
  func.func @transform_9(%arg0: i32) -> (i32, i32) {
    %c0_i32 = arith.constant 0 : i32
    %c0_i32_0 = arith.constant 0 : i32
    %c0_i32_1 = arith.constant 0 : i32
    return %c0_i32, %c0_i32_0 : i32, i32
  }
  func.func @transform_10(%arg0: i32) -> (i32, i32) {
    %c0_i32 = arith.constant 0 : i32
    %c0_i32_0 = arith.constant 0 : i32
    return %arg0, %c0_i32 : i32, i32
  }
}

</mosaic_0001>

<llo_original>
// kernel: tpu_custom_call.1
$region0: #{tpu_custom_call.1}
  #allocation0 [shape = 'u32[]', space=smem, size = 0x4, offset = 0x4, fixed_abs, tag = 'smem constant byte address 0x4 - core index']
  #allocation1 [shape = 'u32[144,128]{1,0:T(1,128)}', space=vmem, size = 0x12000, scoped, tag = 'internal scratch']
  %s0 = inlined_call_operand.vmem [shape: s32[256,1], index: 0, kind: input, shape index: {}]
  %s1 = inlined_call_operand.hbm [shape: f32[128,128], index: 1, kind: input, shape index: {}]
  %s2 = inlined_call_operand.vmem [shape: f32[1,128], index: 2, kind: input, shape index: {}]
  %s3 = inlined_call_operand.vmem [shape: f32[128,256], index: 3, kind: input, shape index: {}]
  %s4 = inlined_call_operand.vmem [shape: f32[1,256], index: 4, kind: input, shape index: {}]
  %s5 = inlined_call_operand.hbm [shape: f32[256,256], index: 5, kind: input, shape index: {}]
  %s6 = inlined_call_operand.hbm [shape: f32[256,256], index: 6, kind: input, shape index: {}]
  %s7 = inlined_call_operand.vmem [shape: f32[1,256], index: 7, kind: input, shape index: {}]
  %s8 = inlined_call_operand.hbm [shape: f32[256,128], index: 8, kind: input, shape index: {}]
  %s9 = inlined_call_operand.vmem [shape: f32[1,128], index: 9, kind: input, shape index: {}]
  %s10 = inlined_call_operand.hbm [shape: f32[16,128], index: 10, kind: output, shape index: {}]
  %s11 = sld [smem:[#allocation0]]
  $region89: #{tpu_custom_call.1} parent=0
    _
  %s13 = ssub.s32 1, %s11
  %s14 = scalar_select 0, %s13, %s11
  $region1: #{tpu_custom_call.1} parent=0
    #allocation2 [shape = 'u8[65536]{0}', space=vmem, size = 0x10000, scoped, tag = 'input window, operand 1, single buffered']
    #allocation3 [shape = 's32[2]{0}', space=sflag, size = 0x8, scoped, tag = 'scoped memory for tpu_custom_call.1']
    #allocation4 [shape = 's32[2]{0}', space=sflag, size = 0x8, scoped, tag = 'scoped memory for tpu_custom_call.1']
    #allocation5 [shape = 'u8[262144]{0}', space=vmem, size = 0x40000, scoped, tag = 'input window, operand 5, single buffered']
    #allocation6 [shape = 's32[1]{0}', space=sflag, size = 0x4, scoped, tag = 'scoped memory for tpu_custom_call.1']
    #allocation7 [shape = 'u8[262144]{0}', space=vmem, size = 0x40000, scoped, tag = 'input window, operand 6, single buffered']
    #allocation8 [shape = 'u8[131072]{0}', space=vmem, size = 0x20000, scoped, tag = 'input window, operand 8, single buffered']
    #allocation9 [shape = 's32[1]{0}', space=sflag, size = 0x4, scoped, tag = 'scoped memory for tpu_custom_call.1']
    #allocation10 [shape = 'u8[8192]{0}', space=vmem, size = 0x2000, scoped, tag = 'output window, operand 0']
    %15 = vsyncpa [#allocation3], 0
    %16 = vsyncpa [#allocation6], 0
    %17 = vsyncpa [#allocation9], 0
    %18 = vsyncpa [#allocation4], 0
    %s19 = scalar_lea.sflag [#allocation4], 1
    %20 = vsyncpa %s19, 0
    loop: start=0, step=1, limit=4
    $region2: #{tpu_custom_call.1} parent=1 // loop_pre_header
      _
    $region3: #{tpu_custom_call.1} parent=1 // loop_header
      %s22 = sphi 0, %s26
      %p23 = scmp.ge.s32.totalorder %s22, 4
      %s32 = sphi 0, %s34
      %s35 = sphi 0, %s32
      %s36 = sphi 0, %s35
      %s52 = sphi 0, %s36
      %s56 = sphi 0, %s56
      %s58 = sphi 0, %s56
      %s59 = sphi 0, %s58
      %s73 = sphi 0, %s59
      %s77 = sphi 0, %s77
      %s79 = sphi 0, %s77
      %s80 = sphi 0, %s79
      %s94 = sphi 0, %s80
      %s98 = sphi 0, %s98
      %s100 = sphi 0, %s98
      %s101 = sphi 0, %s100
      %s115 = sphi 0, %s101
      %s119 = sphi 0, %s119
      %s121 = sphi 0, %s119
      %s122 = sphi 0, %s121
      %s136 = sphi 0, %s122
      %s140 = sphi 0, %s140
      %s142 = sphi 0, %s140
      %s143 = sphi 0, %s142
      %s157 = sphi 0, %s143
      %s161 = sphi 0, %s161
      %s163 = sphi 0, %s161
      %s164 = sphi 0, %s163
      %s178 = sphi 0, %s164
      %s182 = sphi 0, %s182
      %s184 = sphi 0, %s182
      %s185 = sphi 0, %s184
      %s199 = sphi 0, %s185
      %s203 = sphi 0, %s203
      %s205 = sphi 0, %s203
      %s206 = sphi 0, %s205
      %s220 = sphi 0, %s206
      %s224 = sphi 0, %s224
      %s226 = sphi 0, %s224
      %s227 = sphi 0, %s226
      %s241 = sphi 0, %s227
      %s247 = sphi 0, %s249
      %s250 = sphi 0, %s247
      %s251 = sphi 0, %s250
      %s267 = sphi 0, %s251
    $region4: #{tpu_custom_call.1} parent=1 // loop_header_branch
      %25 = sbr.rel (%p23) target = $region8
    $region5: #{tpu_custom_call.1} parent=1 // loop_body
      %s27 = ssub.s32 %s22, 1
      %s28 = ssub.s32 %s22, 2
      %s29 = sadd.s32 %s22, 1
      %s30 = ssub.s32 %s22, %s29
      %p31 = scmp.eq.s32.totalorder %s30, 0
      %s33 = sadd.s32 %s32, 1
      %s34 = scalar_select %p31, %s32, %s33
      %p37 = pneg %p31
      %p38 = scmp.eq.s32.totalorder %s22, 1
      %p39 = por %p37, %p38
      %p40 = scmp.ne.s32.totalorder %s32, %s35
      %p41 = scmp.eq.s32.totalorder %s22, 0
      %p42 = por %p40, %p41
      %p43 = scmp.ne.s32.totalorder %s32, %s35
      %p44 = scmp.eq.s32.totalorder %s27, 1
      %p45 = por %p43, %p44
      %p46 = scmp.ne.s32.totalorder %s35, %s36
      %p47 = scmp.eq.s32.totalorder %s27, 0
      %p48 = por %p46, %p47
      %p49 = scmp.ne.s32.totalorder %s35, %s36
      %p50 = scmp.eq.s32.totalorder %s28, 1
      %p51 = por %p49, %p50
      %p53 = scmp.ne.s32.totalorder %s36, %s52
      %p54 = scmp.eq.s32.totalorder %s28, 0
      %p55 = por %p53, %p54
      %s57 = sadd.s32 %s56, 1
      %p60 = scmp.eq.s32.totalorder %s22, 1
      %p61 = scmp.ne.s32.totalorder %s56, %s58
      %p62 = scmp.eq.s32.totalorder %s22, 0
      %p63 = por %p61, %p62
      %p64 = scmp.ne.s32.totalorder %s56, %s58
      %p65 = scmp.eq.s32.totalorder %s27, 1
      %p66 = por %p64, %p65
      %p67 = scmp.ne.s32.totalorder %s58, %s59
      %p68 = scmp.eq.s32.totalorder %s27, 0
      %p69 = por %p67, %p68
      %p70 = scmp.ne.s32.totalorder %s58, %s59
      %p71 = scmp.eq.s32.totalorder %s28, 1
      %p72 = por %p70, %p71
      %p74 = scmp.ne.s32.totalorder %s59, %s73
      %p75 = scmp.eq.s32.totalorder %s28, 0
      %p76 = por %p74, %p75
      %s78 = sadd.s32 %s77, 1
      %p81 = scmp.eq.s32.totalorder %s22, 1
      %p82 = scmp.ne.s32.totalorder %s77, %s79
      %p83 = scmp.eq.s32.totalorder %s22, 0
      %p84 = por %p82, %p83
      %p85 = scmp.ne.s32.totalorder %s77, %s79
      %p86 = scmp.eq.s32.totalorder %s27, 1
      %p87 = por %p85, %p86
      %p88 = scmp.ne.s32.totalorder %s79, %s80
      %p89 = scmp.eq.s32.totalorder %s27, 0
      %p90 = por %p88, %p89
      %p91 = scmp.ne.s32.totalorder %s79, %s80
      %p92 = scmp.eq.s32.totalorder %s28, 1
      %p93 = por %p91, %p92
      %p95 = scmp.ne.s32.totalorder %s80, %s94
      %p96 = scmp.eq.s32.totalorder %s28, 0
      %p97 = por %p95, %p96
      %s99 = sadd.s32 %s98, 1
      %p102 = scmp.eq.s32.totalorder %s22, 1
      %p103 = scmp.ne.s32.totalorder %s98, %s100
      %p104 = scmp.eq.s32.totalorder %s22, 0
      %p105 = por %p103, %p104
      %p106 = scmp.ne.s32.totalorder %s98, %s100
      %p107 = scmp.eq.s32.totalorder %s27, 1
      %p108 = por %p106, %p107
      %p109 = scmp.ne.s32.totalorder %s100, %s101
      %p110 = scmp.eq.s32.totalorder %s27, 0
      %p111 = por %p109, %p110
      %p112 = scmp.ne.s32.totalorder %s100, %s101
      %p113 = scmp.eq.s32.totalorder %s28, 1
      %p114 = por %p112, %p113
      %p116 = scmp.ne.s32.totalorder %s101, %s115
      %p117 = scmp.eq.s32.totalorder %s28, 0
      %p118 = por %p116, %p117
      %s120 = sadd.s32 %s119, 1
      %p123 = scmp.eq.s32.totalorder %s22, 1
      %p124 = scmp.ne.s32.totalorder %s119, %s121
      %p125 = scmp.eq.s32.totalorder %s22, 0
      %p126 = por %p124, %p125
      %p127 = scmp.ne.s32.totalorder %s119, %s121
      %p128 = scmp.eq.s32.totalorder %s27, 1
      %p129 = por %p127, %p128
      %p130 = scmp.ne.s32.totalorder %s121, %s122
      %p131 = scmp.eq.s32.totalorder %s27, 0
      %p132 = por %p130, %p131
      %p133 = scmp.ne.s32.totalorder %s121, %s122
      %p134 = scmp.eq.s32.totalorder %s28, 1
      %p135 = por %p133, %p134
      %p137 = scmp.ne.s32.totalorder %s122, %s136
      %p138 = scmp.eq.s32.totalorder %s28, 0
      %p139 = por %p137, %p138
      %s141 = sadd.s32 %s140, 1
      %p144 = scmp.eq.s32.totalorder %s22, 1
      %p145 = scmp.ne.s32.totalorder %s140, %s142
      %p146 = scmp.eq.s32.totalorder %s22, 0
      %p147 = por %p145, %p146
      %p148 = scmp.ne.s32.totalorder %s140, %s142
      %p149 = scmp.eq.s32.totalorder %s27, 1
      %p150 = por %p148, %p149
      %p151 = scmp.ne.s32.totalorder %s142, %s143
      %p152 = scmp.eq.s32.totalorder %s27, 0
      %p153 = por %p151, %p152
      %p154 = scmp.ne.s32.totalorder %s142, %s143
      %p155 = scmp.eq.s32.totalorder %s28, 1
      %p156 = por %p154, %p155
      %p158 = scmp.ne.s32.totalorder %s143, %s157
      %p159 = scmp.eq.s32.totalorder %s28, 0
      %p160 = por %p158, %p159
      %s162 = sadd.s32 %s161, 1
      %p165 = scmp.eq.s32.totalorder %s22, 1
      %p166 = scmp.ne.s32.totalorder %s161, %s163
      %p167 = scmp.eq.s32.totalorder %s22, 0
      %p168 = por %p166, %p167
      %p169 = scmp.ne.s32.totalorder %s161, %s163
      %p170 = scmp.eq.s32.totalorder %s27, 1
      %p171 = por %p169, %p170
      %p172 = scmp.ne.s32.totalorder %s163, %s164
      %p173 = scmp.eq.s32.totalorder %s27, 0
      %p174 = por %p172, %p173
      %p175 = scmp.ne.s32.totalorder %s163, %s164
      %p176 = scmp.eq.s32.totalorder %s28, 1
      %p177 = por %p175, %p176
      %p179 = scmp.ne.s32.totalorder %s164, %s178
      %p180 = scmp.eq.s32.totalorder %s28, 0
      %p181 = por %p179, %p180
      %s183 = sadd.s32 %s182, 1
      %p186 = scmp.eq.s32.totalorder %s22, 1
      %p187 = scmp.ne.s32.totalorder %s182, %s184
      %p188 = scmp.eq.s32.totalorder %s22, 0
      %p189 = por %p187, %p188
      %p190 = scmp.ne.s32.totalorder %s182, %s184
      %p191 = scmp.eq.s32.totalorder %s27, 1
      %p192 = por %p190, %p191
      %p193 = scmp.ne.s32.totalorder %s184, %s185
      %p194 = scmp.eq.s32.totalorder %s27, 0
      %p195 = por %p193, %p194
      %p196 = scmp.ne.s32.totalorder %s184, %s185
      %p197 = scmp.eq.s32.totalorder %s28, 1
      %p198 = por %p196, %p197
      %p200 = scmp.ne.s32.totalorder %s185, %s199
      %p201 = scmp.eq.s32.totalorder %s28, 0
      %p202 = por %p200, %p201
      %s204 = sadd.s32 %s203, 1
      %p207 = scmp.eq.s32.totalorder %s22, 1
      %p208 = scmp.ne.s32.totalorder %s203, %s205
      %p209 = scmp.eq.s32.totalorder %s22, 0
      %p210 = por %p208, %p209
      %p211 = scmp.ne.s32.totalorder %s203, %s205
      %p212 = scmp.eq.s32.totalorder %s27, 1
      %p213 = por %p211, %p212
      %p214 = scmp.ne.s32.totalorder %s205, %s206
      %p215 = scmp.eq.s32.totalorder %s27, 0
      %p216 = por %p214, %p215
      %p217 = scmp.ne.s32.totalorder %s205, %s206
      %p218 = scmp.eq.s32.totalorder %s28, 1
      %p219 = por %p217, %p218
      %p221 = scmp.ne.s32.totalorder %s206, %s220
      %p222 = scmp.eq.s32.totalorder %s28, 0
      %p223 = por %p221, %p222
      %s225 = sadd.s32 %s224, 1
      %p228 = scmp.eq.s32.totalorder %s22, 1
      %p229 = scmp.ne.s32.totalorder %s224, %s226
      %p230 = scmp.eq.s32.totalorder %s22, 0
      %p231 = por %p229, %p230
      %p232 = scmp.ne.s32.totalorder %s224, %s226
      %p233 = scmp.eq.s32.totalorder %s27, 1
      %p234 = por %p232, %p233
      %p235 = scmp.ne.s32.totalorder %s226, %s227
      %p236 = scmp.eq.s32.totalorder %s27, 0
      %p237 = por %p235, %p236
      %p238 = scmp.ne.s32.totalorder %s226, %s227
      %p239 = scmp.eq.s32.totalorder %s28, 1
      %p240 = por %p238, %p239
      %p242 = scmp.ne.s32.totalorder %s227, %s241
      %p243 = scmp.eq.s32.totalorder %s28, 0
      %p244 = por %p242, %p243
      %s245 = ssub.s32 %s22, %s29
      %p246 = scmp.eq.s32.totalorder %s245, 0
      %s248 = sadd.s32 %s247, 1
      %s249 = scalar_select %p246, %s247, %s248
      %p252 = pneg %p246
      %p253 = scmp.eq.s32.totalorder %s22, 1
      %p254 = por %p252, %p253
      %p255 = scmp.ne.s32.totalorder %s247, %s250
      %p256 = scmp.eq.s32.totalorder %s22, 0
      %p257 = por %p255, %p256
      %p258 = scmp.ne.s32.totalorder %s247, %s250
      %p259 = scmp.eq.s32.totalorder %s27, 1
      %p260 = por %p258, %p259
      %p261 = scmp.ne.s32.totalorder %s250, %s251
      %p262 = scmp.eq.s32.totalorder %s27, 0
      %p263 = por %p261, %p262
      %p264 = scmp.ne.s32.totalorder %s250, %s251
      %p265 = scmp.eq.s32.totalorder %s28, 1
      %p266 = por %p264, %p265
      %p268 = scmp.ne.s32.totalorder %s251, %s267
      %p269 = scmp.eq.s32.totalorder %s28, 0
      %p270 = por %p268, %p269
      %p271 = scmp.le.s32.totalorder 1, %s22
      %p272 = scmp.lt.s32.totalorder %s22, 3
      %p273 = pnand %p271, %p272
      %p274 = pneg %p273
      // Predicated region
      $region9: #{tpu_custom_call.1} parent=5 // pred_check
        _
      $region10: #{tpu_custom_call.1} parent=5 // pred_check_branch
        %276 = sbr.rel (%p273) target = $region12
      $region11: #{tpu_custom_call.1} parent=5 // pred_region
        %s277 = ssub.s32 %s22, 1
        // Predicated region
        $region13: #{tpu_custom_call.1} parent=11 // pred_check
          %p278 = pneg %p69
        $region14: #{tpu_custom_call.1} parent=11 // pred_check_branch
          %280 = sbr.rel (%p278) target = $region16
        $region15: #{tpu_custom_call.1} parent=11 // pred_region
          %s282 = ssub.s32 2048, 2048
          %283 = vsyncadd [#allocation3], %s282
          %s284 = sshll.u32 [#allocation2], 4
          %s285 = int_to_ptr.vmem [resolvable:$true] %s284
          %290 = dma.hbm_to_vmem [thread:$0]  %s1, 2048, %s285, [#allocation3], 128, 128, 8
        $region16: #{tpu_custom_call.1} parent=11 // pred_fallthru
          _
        // Predicated region
        $region17: #{tpu_custom_call.1} parent=11 // pred_check
          %p291 = pneg %p90
        $region18: #{tpu_custom_call.1} parent=11 // pred_check_branch
          %293 = sbr.rel (%p291) target = $region20
        $region19: #{tpu_custom_call.1} parent=11 // pred_region
          _
        $region20: #{tpu_custom_call.1} parent=11 // pred_fallthru
          _
        // Predicated region
        $region21: #{tpu_custom_call.1} parent=11 // pred_check
          %p294 = pneg %p111
        $region22: #{tpu_custom_call.1} parent=11 // pred_check_branch
          %296 = sbr.rel (%p294) target = $region24
        $region23: #{tpu_custom_call.1} parent=11 // pred_region
          _
        $region24: #{tpu_custom_call.1} parent=11 // pred_fallthru
          _
        // Predicated region
        $region25: #{tpu_custom_call.1} parent=11 // pred_check
          %p297 = pneg %p132
        $region26: #{tpu_custom_call.1} parent=11 // pred_check_branch
          %299 = sbr.rel (%p297) target = $region28
        $region27: #{tpu_custom_call.1} parent=11 // pred_region
          _
        $region28: #{tpu_custom_call.1} parent=11 // pred_fallthru
          _
        // Predicated region
        $region29: #{tpu_custom_call.1} parent=11 // pred_check
          %p300 = pneg %p153
        $region30: #{tpu_custom_call.1} parent=11 // pred_check_branch
          %302 = sbr.rel (%p300) target = $region32
        $region31: #{tpu_custom_call.1} parent=11 // pred_region
          %s304 = ssub.s32 8192, 8192
          %305 = vsyncadd [#allocation6], %s304
          %s306 = sshll.u32 [#allocation5], 4
          %s307 = int_to_ptr.vmem [resolvable:$true] %s306
          %312 = dma.hbm_to_vmem [thread:$0]  %s5, 8192, %s307, [#allocation6], 256, 256, 16
        $region32: #{tpu_custom_call.1} parent=11 // pred_fallthru
          _
        // Predicated region
        $region33: #{tpu_custom_call.1} parent=11 // pred_check
          %p313 = pneg %p174
        $region34: #{tpu_custom_call.1} parent=11 // pred_check_branch
          %315 = sbr.rel (%p313) target = $region36
        $region35: #{tpu_custom_call.1} parent=11 // pred_region
          %s317 = ssub.s32 8192, 8192
          %318 = vsyncadd [#allocation6], %s317
          %s319 = sshll.u32 [#allocation7], 4
          %s320 = int_to_ptr.vmem [resolvable:$true] %s319
          %325 = dma.hbm_to_vmem [thread:$0]  %s6, 8192, %s320, [#allocation6], 256, 256, 16
        $region36: #{tpu_custom_call.1} parent=11 // pred_fallthru
          _
        // Predicated region
        $region37: #{tpu_custom_call.1} parent=11 // pred_check
          %p326 = pneg %p195
        $region38: #{tpu_custom_call.1} parent=11 // pred_check_branch
          %328 = sbr.rel (%p326) target = $region40
        $region39: #{tpu_custom_call.1} parent=11 // pred_region
          _
        $region40: #{tpu_custom_call.1} parent=11 // pred_fallthru
          _
        // Predicated region
        $region41: #{tpu_custom_call.1} parent=11 // pred_check
          %p329 = pneg %p216
        $region42: #{tpu_custom_call.1} parent=11 // pred_check_branch
          %331 = sbr.rel (%p329) target = $region44
        $region43: #{tpu_custom_call.1} parent=11 // pred_region
          %s333 = ssub.s32 4096, 4096
          %334 = vsyncadd [#allocation9], %s333
          %s335 = sshll.u32 [#allocation8], 4
          %s336 = int_to_ptr.vmem [resolvable:$true] %s335
          %341 = dma.hbm_to_vmem [thread:$0]  %s8, 4096, %s336, [#allocation9], 128, 128, 8
        $region44: #{tpu_custom_call.1} parent=11 // pred_fallthru
          _
        // Predicated region
        $region45: #{tpu_custom_call.1} parent=11 // pred_check
          %p342 = pneg %p237
        $region46: #{tpu_custom_call.1} parent=11 // pred_check_branch
          %344 = sbr.rel (%p342) target = $region48
        $region47: #{tpu_custom_call.1} parent=11 // pred_region
          _
        $region48: #{tpu_custom_call.1} parent=11 // pred_fallthru
          _
      $region12: #{tpu_custom_call.1} parent=5 // pred_fallthru
        _
      %p345 = scmp.lt.s32.totalorder %s22, 2
      // Predicated region
      $region49: #{tpu_custom_call.1} parent=5 // pred_check
        %p346 = pneg %p345
      $region50: #{tpu_custom_call.1} parent=5 // pred_check_branch
        %348 = sbr.rel (%p346) target = $region52
      $region51: #{tpu_custom_call.1} parent=5 // pred_region
        // Predicated region
        $region53: #{tpu_custom_call.1} parent=51 // pred_check
          %p349 = pneg %p42
        $region54: #{tpu_custom_call.1} parent=51 // pred_check_branch
          %351 = sbr.rel (%p349) target = $region56
        $region55: #{tpu_custom_call.1} parent=51 // pred_region
          %s352 = smul.u32 16, %s22
          %p353 = scmp.lt.s32.totalorder %s352, 31
          %s354 = scalar_select %p353, %s352, 31
          %s355 = smul.addr %s354, 8
          %s356 = scalar_lea.vmem %s0, %s355
          %s357 = smul.u32 16, %s22
        $region56: #{tpu_custom_call.1} parent=51 // pred_fallthru
          _
      $region52: #{tpu_custom_call.1} parent=5 // pred_fallthru
        _
      %p358 = scmp.le.s32.totalorder 1, %s22
      %p359 = scmp.lt.s32.totalorder %s22, 3
      %p360 = pnand %p358, %p359
      %p361 = pneg %p360
      // Predicated region
      $region57: #{tpu_custom_call.1} parent=5 // pred_check
        _
      $region58: #{tpu_custom_call.1} parent=5 // pred_check_branch
        %363 = sbr.rel (%p360) target = $region60
      $region59: #{tpu_custom_call.1} parent=5 // pred_region
        %s364 = ssub.s32 %s22, 1
        // Predicated region
        $region61: #{tpu_custom_call.1} parent=59 // pred_check
          %p365 = pneg %p69
        $region62: #{tpu_custom_call.1} parent=59 // pred_check_branch
          %367 = sbr.rel (%p365) target = $region64
        $region63: #{tpu_custom_call.1} parent=59 // pred_region
          %368 = dma.done [#allocation3], 2048
        $region64: #{tpu_custom_call.1} parent=59 // pred_fallthru
          _
        // Predicated region
        $region65: #{tpu_custom_call.1} parent=59 // pred_check
          %p369 = pneg %p153
        $region66: #{tpu_custom_call.1} parent=59 // pred_check_branch
          %371 = sbr.rel (%p369) target = $region68
        $region67: #{tpu_custom_call.1} parent=59 // pred_region
          %372 = dma.done [#allocation6], 8192
        $region68: #{tpu_custom_call.1} parent=59 // pred_fallthru
          _
        // Predicated region
        $region69: #{tpu_custom_call.1} parent=59 // pred_check
          %p373 = pneg %p174
        $region70: #{tpu_custom_call.1} parent=59 // pred_check_branch
          %375 = sbr.rel (%p373) target = $region72
        $region71: #{tpu_custom_call.1} parent=59 // pred_region
          %376 = dma.done [#allocation6], 8192
        $region72: #{tpu_custom_call.1} parent=59 // pred_fallthru
          _
        // Predicated region
        $region73: #{tpu_custom_call.1} parent=59 // pred_check
          %p377 = pneg %p216
        $region74: #{tpu_custom_call.1} parent=59 // pred_check_branch
          %379 = sbr.rel (%p377) target = $region76
        $region75: #{tpu_custom_call.1} parent=59 // pred_region
          %380 = dma.done [#allocation9], 4096
        $region76: #{tpu_custom_call.1} parent=59 // pred_fallthru
          _
        %s381 = smul.u32 16, %s27
        %p382 = scmp.lt.s32.totalorder %s381, 31
        %s383 = scalar_select %p382, %s381, 31
        %s384 = smul.addr %s383, 8
        %s385 = scalar_lea.vmem %s0, %s384
        %p386 = pneg %p48
        %p387 = pneg %p45
        %p388 = pneg %p69
        %p389 = pneg %p66
        %p390 = pneg %p90
        %p391 = pneg %p87
        %p392 = pneg %p111
        %p393 = pneg %p108
        %p394 = pneg %p132
        %p395 = pneg %p129
        %p396 = pneg %p153
        %p397 = pneg %p150
        %p398 = pneg %p174
        %p399 = pneg %p171
        %p400 = pneg %p195
        %p401 = pneg %p192
        %p402 = pneg %p216
        %p403 = pneg %p213
        %p404 = pneg %p237
        %p405 = pneg %p234
        %p406 = pneg %p263
        %p407 = pneg %p260
        %s408 = sand.u32 %s250, 1
        %s409 = scalar_lea.sflag [#allocation4], %s408
        %s410 = sand.u32 %s250, 1
        %s411 = smul.addr %s410, 8
        %s412 = scalar_lea.vmem [#allocation10], %s411
        %s413 = smul.u32 16, %s27
        %p414 = scmp.lt.s32.totalorder %s413, 31
        %s415 = scalar_select %p414, %s413, 31
        %s416 = smul.addr %s415, 8
        %s417 = scalar_lea.vmem %s0, %s416
        %s418 = smul.u32 16, %s27
        %v419 = vld [vmem:[%s417] sm:$0xff]
        %v420 = vld [vmem:[%s417 + $0x8] sm:$0xff]
        %v421 = vld [vmem:[%s417 + $0x10] sm:$0xff]
        %v422 = vld [vmem:[%s417 + $0x18] sm:$0xff]
        %v423 = vld [vmem:[%s417 + $0x20] sm:$0xff]
        %v424 = vld [vmem:[%s417 + $0x28] sm:$0xff]
        %v425 = vld [vmem:[%s417 + $0x30] sm:$0xff]
        %v426 = vld [vmem:[%s417 + $0x38] sm:$0xff]
        %v427 = vld [vmem:[%s417 + $0x40] sm:$0xff]
        %v428 = vld [vmem:[%s417 + $0x48] sm:$0xff]
        %v429 = vld [vmem:[%s417 + $0x50] sm:$0xff]
        %v430 = vld [vmem:[%s417 + $0x58] sm:$0xff]
        %v431 = vld [vmem:[%s417 + $0x60] sm:$0xff]
        %v432 = vld [vmem:[%s417 + $0x68] sm:$0xff]
        %v433 = vld [vmem:[%s417 + $0x70] sm:$0xff]
        %v434 = vld [vmem:[%s417 + $0x78] sm:$0xff]
        %v435 = vlaneseq
        %v436 = vand.u32 %v435, 127
        %437 = vset.pattern.permute.xlu0 0
        %438 = vperm.xlu0 %437, %v419
        %v439 = vpop.permute.xlu0 %438
        %440 = vset.pattern.permute.xlu0 0
        %441 = vperm.xlu0 %440, %v420
        %v442 = vpop.permute.xlu0 %441
        %443 = vset.pattern.permute.xlu0 0
        %444 = vperm.xlu0 %443, %v421
        %v445 = vpop.permute.xlu0 %444
        %446 = vset.pattern.permute.xlu0 0
        %447 = vperm.xlu0 %446, %v422
        %v448 = vpop.permute.xlu0 %447
        %449 = vset.pattern.permute.xlu0 0
        %450 = vperm.xlu0 %449, %v423
        %v451 = vpop.permute.xlu0 %450
        %452 = vset.pattern.permute.xlu0 0
        %453 = vperm.xlu0 %452, %v424
        %v454 = vpop.permute.xlu0 %453
        %455 = vset.pattern.permute.xlu0 0
        %456 = vperm.xlu0 %455, %v425
        %v457 = vpop.permute.xlu0 %456
        %458 = vset.pattern.permute.xlu0 0
        %459 = vperm.xlu0 %458, %v426
        %v460 = vpop.permute.xlu0 %459
        %461 = vset.pattern.permute.xlu0 0
        %462 = vperm.xlu0 %461, %v427
        %v463 = vpop.permute.xlu0 %462
        %464 = vset.pattern.permute.xlu0 0
        %465 = vperm.xlu0 %464, %v428
        %v466 = vpop.permute.xlu0 %465
        %467 = vset.pattern.permute.xlu0 0
        %468 = vperm.xlu0 %467, %v429
        %v469 = vpop.permute.xlu0 %468
        %470 = vset.pattern.permute.xlu0 0
        %471 = vperm.xlu0 %470, %v430
        %v472 = vpop.permute.xlu0 %471
        %473 = vset.pattern.permute.xlu0 0
        %474 = vperm.xlu0 %473, %v431
        %v475 = vpop.permute.xlu0 %474
        %476 = vset.pattern.permute.xlu0 0
        %477 = vperm.xlu0 %476, %v432
        %v478 = vpop.permute.xlu0 %477
        %479 = vset.pattern.permute.xlu0 0
        %480 = vperm.xlu0 %479, %v433
        %v481 = vpop.permute.xlu0 %480
        %482 = vset.pattern.permute.xlu0 0
        %483 = vperm.xlu0 %482, %v434
        %v484 = vpop.permute.xlu0 %483
        %vm485 = vcmp.eq.s32.totalorder %v436, %v439
        %vm486 = vcmp.eq.s32.totalorder %v436, %v442
        %vm487 = vcmp.eq.s32.totalorder %v436, %v445
        %vm488 = vcmp.eq.s32.totalorder %v436, %v448
        %vm489 = vcmp.eq.s32.totalorder %v436, %v451
        %vm490 = vcmp.eq.s32.totalorder %v436, %v454
        %vm491 = vcmp.eq.s32.totalorder %v436, %v457
        %vm492 = vcmp.eq.s32.totalorder %v436, %v460
        %vm493 = vcmp.eq.s32.totalorder %v436, %v463
        %vm494 = vcmp.eq.s32.totalorder %v436, %v466
        %vm495 = vcmp.eq.s32.totalorder %v436, %v469
        %vm496 = vcmp.eq.s32.totalorder %v436, %v472
        %vm497 = vcmp.eq.s32.totalorder %v436, %v475
        %vm498 = vcmp.eq.s32.totalorder %v436, %v478
        %vm499 = vcmp.eq.s32.totalorder %v436, %v481
        %vm500 = vcmp.eq.s32.totalorder %v436, %v484
        %v501 = vsel %vm485, 1, 0
        %v502 = vsel %vm486, 1, 0
        %v503 = vsel %vm487, 1, 0
        %v504 = vsel %vm488, 1, 0
        %v505 = vsel %vm489, 1, 0
        %v506 = vsel %vm490, 1, 0
        %v507 = vsel %vm491, 1, 0
        %v508 = vsel %vm492, 1, 0
        %v509 = vsel %vm493, 1, 0
        %v510 = vsel %vm494, 1, 0
        %v511 = vsel %vm495, 1, 0
        %v512 = vsel %vm496, 1, 0
        %v513 = vsel %vm497, 1, 0
        %v514 = vsel %vm498, 1, 0
        %v515 = vsel %vm499, 1, 0
        %v516 = vsel %vm500, 1, 0
        %v517 = vcvt.s32.f32 %v501
        %v518 = vcvt.s32.f32 %v502
        %v519 = vcvt.s32.f32 %v503
        %v520 = vcvt.s32.f32 %v504
        %v521 = vcvt.s32.f32 %v505
        %v522 = vcvt.s32.f32 %v506
        %v523 = vcvt.s32.f32 %v507
        %v524 = vcvt.s32.f32 %v508
        %v525 = vcvt.s32.f32 %v509
        %v526 = vcvt.s32.f32 %v510
        %v527 = vcvt.s32.f32 %v511
        %v528 = vcvt.s32.f32 %v512
        %v529 = vcvt.s32.f32 %v513
        %v530 = vcvt.s32.f32 %v514
        %v531 = vcvt.s32.f32 %v515
        %v532 = vcvt.s32.f32 %v516
        %v533 = vld [vmem:[#allocation2] sm:$0xff]
        %v534 = vld [vmem:[#allocation2 + $0x8] sm:$0xff]
        %v535 = vld [vmem:[#allocation2 + $0x10] sm:$0xff]
        %v536 = vld [vmem:[#allocation2 + $0x18] sm:$0xff]
        %v537 = vld [vmem:[#allocation2 + $0x20] sm:$0xff]
        %v538 = vld [vmem:[#allocation2 + $0x28] sm:$0xff]
        %v539 = vld [vmem:[#allocation2 + $0x30] sm:$0xff]
        %v540 = vld [vmem:[#allocation2 + $0x38] sm:$0xff]
        %v541 = vld [vmem:[#allocation2 + $0x40] sm:$0xff]
        %v542 = vld [vmem:[#allocation2 + $0x48] sm:$0xff]
        %v543 = vld [vmem:[#allocation2 + $0x50] sm:$0xff]
        %v544 = vld [vmem:[#allocation2 + $0x58] sm:$0xff]
        %v545 = vld [vmem:[#allocation2 + $0x60] sm:$0xff]
        %v546 = vld [vmem:[#allocation2 + $0x68] sm:$0xff]
        %v547 = vld [vmem:[#allocation2 + $0x70] sm:$0xff]
        %v548 = vld [vmem:[#allocation2 + $0x78] sm:$0xff]
        %v549 = vld [vmem:[%s2] sm:$0x1]
        %v551 = vlaneseq
        %v552 = vshrl.u32 %v551, 7
        %v553 = vsub.s32 0, %v552
        %v554 = vrot.slane %v549, %v553
        %556 = vmatprep.subr.mxu0 0.0
        %v557 = vand.u32 %v533, 4294901760
        %558 = vmatpush1.msra.mxu0 %v557
        %559 = vmatprep.subr.mxu0 0.0
        %v560 = vand.u32 %v534, 4294901760
        %561 = vmatpush1.msra.mxu0 %v560
        %562 = vmatprep.subr.mxu0 0.0
        %v563 = vand.u32 %v535, 4294901760
        %564 = vmatpush1.msra.mxu0 %v563
        %565 = vmatprep.subr.mxu0 0.0
        %v566 = vand.u32 %v536, 4294901760
        %567 = vmatpush1.msra.mxu0 %v566
        %568 = vmatprep.subr.mxu0 0.0
        %v569 = vand.u32 %v537, 4294901760
        %570 = vmatpush1.msra.mxu0 %v569
        %571 = vmatprep.subr.mxu0 0.0
        %v572 = vand.u32 %v538, 4294901760
        %573 = vmatpush1.msra.mxu0 %v572
        %574 = vmatprep.subr.mxu0 0.0
        %v575 = vand.u32 %v539, 4294901760
        %576 = vmatpush1.msra.mxu0 %v575
        %577 = vmatprep.subr.mxu0 0.0
        %v578 = vand.u32 %v540, 4294901760
        %579 = vmatpush1.msra.mxu0 %v578
        %580 = vmatprep.subr.mxu0 0.0
        %v581 = vand.u32 %v541, 4294901760
        %582 = vmatpush1.msra.mxu0 %v581
        %583 = vmatprep.subr.mxu0 0.0
        %v584 = vand.u32 %v542, 4294901760
        %585 = vmatpush1.msra.mxu0 %v584
        %586 = vmatprep.subr.mxu0 0.0
        %v587 = vand.u32 %v543, 4294901760
        %588 = vmatpush1.msra.mxu0 %v587
        %589 = vmatprep.subr.mxu0 0.0
        %v590 = vand.u32 %v544, 4294901760
        %591 = vmatpush1.msra.mxu0 %v590
        %592 = vmatprep.subr.mxu0 0.0
        %v593 = vand.u32 %v545, 4294901760
        %594 = vmatpush1.msra.mxu0 %v593
        %595 = vmatprep.subr.mxu0 0.0
        %v596 = vand.u32 %v546, 4294901760
        %597 = vmatpush1.msra.mxu0 %v596
        %598 = vmatprep.subr.mxu0 0.0
        %v599 = vand.u32 %v547, 4294901760
        %600 = vmatpush1.msra.mxu0 %v599
        %601 = vmatprep.subr.mxu0 0.0
        %v602 = vand.u32 %v548, 4294901760
        %603 = vmatpush1.msra.mxu0 %v602
        %604 = vmatprep.subr.mxu0 0.0
        %605 = vmatpush1.msra.mxu0 0.0
        %606 = vmatprep.subr.mxu0 0.0
        %607 = vmatpush1.msra.mxu0 0.0
        %608 = vmatprep.subr.mxu0 0.0
        %609 = vmatpush1.msra.mxu0 0.0
        %610 = vmatprep.subr.mxu0 0.0
        %611 = vmatpush1.msra.mxu0 0.0
        %612 = vmatprep.subr.mxu0 0.0
        %613 = vmatpush1.msra.mxu0 0.0
        %614 = vmatprep.subr.mxu0 0.0
        %615 = vmatpush1.msra.mxu0 0.0
        %616 = vmatprep.subr.mxu0 0.0
        %617 = vmatpush1.msra.mxu0 0.0
        %618 = vmatprep.subr.mxu0 0.0
        %619 = vmatpush1.msra.mxu0 0.0
        %620 = vmatprep.subr.mxu0 0.0
        %621 = vmatpush1.msra.mxu0 0.0
        %622 = vmatprep.subr.mxu0 0.0
        %623 = vmatpush1.msra.mxu0 0.0
        %624 = vmatprep.subr.mxu0 0.0
        %625 = vmatpush1.msra.mxu0 0.0
        %626 = vmatprep.subr.mxu0 0.0
        %627 = vmatpush1.msra.mxu0 0.0
        %628 = vmatprep.subr.mxu0 0.0
        %629 = vmatpush1.msra.mxu0 0.0
        %630 = vmatprep.subr.mxu0 0.0
        %631 = vmatpush1.msra.mxu0 0.0
        %632 = vmatprep.subr.mxu0 0.0
        %633 = vmatpush1.msra.mxu0 0.0
        %634 = vmatprep.subr.mxu0 0.0
        %635 = vmatpush1.msra.mxu0 0.0
        %636 = vmatprep.mubr.f32.mxu0 0.0
        %v637 = vand.u32 %v517, 4294901760
        %v638 = vsub.f32 %v517, %v637
        %v639 = vand.u32 %v638, 4294901760
        %v640 = vsub.f32 %v638, %v639
        %v641 = vand.u32 %v640, 4294901760
        %642 = vmatmul.mubr.f32.gmra.mrb[0].mxu0 %v641
        %v643 = vpop.f32.mrb[0].mxu0
        %v644 = vadd.f32 %v554, %v643
        %v645 = vpop.f32.mrb[0].mxu0
        %646 = vmatprep.mubr.f32.mxu0 0.0
        %v647 = vand.u32 %v518, 4294901760
        %v648 = vsub.f32 %v518, %v647
        %v649 = vand.u32 %v648, 4294901760
        %v650 = vsub.f32 %v648, %v649
        %v651 = vand.u32 %v650, 4294901760
        %652 = vmatmul.mubr.f32.gmra.mrb[0].mxu0 %v651
        %v653 = vpop.f32.mrb[0].mxu0
        %v654 = vadd.f32 %v554, %v653
        %v655 = vpop.f32.mrb[0].mxu0
        %656 = vmatprep.mubr.f32.mxu0 0.0
        %v657 = vand.u32 %v519, 4294901760
        %v658 = vsub.f32 %v519, %v657
        %v659 = vand.u32 %v658, 4294901760
        %v660 = vsub.f32 %v658, %v659
        %v661 = vand.u32 %v660, 4294901760
        %662 = vmatmul.mubr.f32.gmra.mrb[0].mxu0 %v661
        %v663 = vpop.f32.mrb[0].mxu0
        %v664 = vadd.f32 %v554, %v663
        %v665 = vpop.f32.mrb[0].mxu0
        %666 = vmatprep.mubr.f32.mxu0 0.0
        %v667 = vand.u32 %v520, 4294901760
        %v668 = vsub.f32 %v520, %v667
        %v669 = vand.u32 %v668, 4294901760
        %v670 = vsub.f32 %v668, %v669
        %v671 = vand.u32 %v670, 4294901760
        %672 = vmatmul.mubr.f32.gmra.mrb[0].mxu0 %v671
        %v673 = vpop.f32.mrb[0].mxu0
        %v674 = vadd.f32 %v554, %v673
        %v675 = vpop.f32.mrb[0].mxu0
        %676 = vmatprep.mubr.f32.mxu0 0.0
        %v677 = vand.u32 %v521, 4294901760
        %v678 = vsub.f32 %v521, %v677
        %v679 = vand.u32 %v678, 4294901760
        %v680 = vsub.f32 %v678, %v679
        %v681 = vand.u32 %v680, 4294901760
        %682 = vmatmul.mubr.f32.gmra.mrb[0].mxu0 %v681
        %v683 = vpop.f32.mrb[0].mxu0
        %v684 = vadd.f32 %v554, %v683
        %v685 = vpop.f32.mrb[0].mxu0
        %686 = vmatprep.mubr.f32.mxu0 0.0
        %v687 = vand.u32 %v522, 4294901760
        %v688 = vsub.f32 %v522, %v687
        %v689 = vand.u32 %v688, 4294901760
        %v690 = vsub.f32 %v688, %v689
        %v691 = vand.u32 %v690, 4294901760
        %692 = vmatmul.mubr.f32.gmra.mrb[0].mxu0 %v691
        %v693 = vpop.f32.mrb[0].mxu0
        %v694 = vadd.f32 %v554, %v693
        %v695 = vpop.f32.mrb[0].mxu0
        %696 = vmatprep.mubr.f32.mxu0 0.0
        %v697 = vand.u32 %v523, 4294901760
        %v698 = vsub.f32 %v523, %v697
        %v699 = vand.u32 %v698, 4294901760
        %v700 = vsub.f32 %v698, %v699
        %v701 = vand.u32 %v700, 4294901760
        %702 = vmatmul.mubr.f32.gmra.mrb[0].mxu0 %v701
        %v703 = vpop.f32.mrb[0].mxu0
        %v704 = vadd.f32 %v554, %v703
        %v705 = vpop.f32.mrb[0].mxu0
        %706 = vmatprep.mubr.f32.mxu0 0.0
        %v707 = vand.u32 %v524, 4294901760
        %v708 = vsub.f32 %v524, %v707
        %v709 = vand.u32 %v708, 4294901760
        %v710 = vsub.f32 %v708, %v709
        %v711 = vand.u32 %v710, 4294901760
        %712 = vmatmul.mubr.f32.gmra.mrb[0].mxu0 %v711
        %v713 = vpop.f32.mrb[0].mxu0
        %v714 = vadd.f32 %v554, %v713
        %v715 = vpop.f32.mrb[0].mxu0
        %716 = vmatprep.mubr.f32.mxu0 0.0
        %v717 = vand.u32 %v525, 4294901760
        %v718 = vsub.f32 %v525, %v717
        %v719 = vand.u32 %v718, 4294901760
        %v720 = vsub.f32 %v718, %v719
        %v721 = vand.u32 %v720, 4294901760
        %722 = vmatmul.mubr.f32.gmra.mrb[0].mxu0 %v721
        %v723 = vpop.f32.mrb[0].mxu0
        %v724 = vadd.f32 %v554, %v723
        %v725 = vpop.f32.mrb[0].mxu0
        %726 = vmatprep.mubr.f32.mxu0 0.0
        %v727 = vand.u32 %v526, 4294901760
        %v728 = vsub.f32 %v526, %v727
        %v729 = vand.u32 %v728, 4294901760
        %v730 = vsub.f32 %v728, %v729
        %v731 = vand.u32 %v730, 4294901760
        %732 = vmatmul.mubr.f32.gmra.mrb[0].mxu0 %v731
        %v733 = vpop.f32.mrb[0].mxu0
        %v734 = vadd.f32 %v554, %v733
        %v735 = vpop.f32.mrb[0].mxu0
        %736 = vmatprep.mubr.f32.mxu0 0.0
        %v737 = vand.u32 %v527, 4294901760
        %v738 = vsub.f32 %v527, %v737
        %v739 = vand.u32 %v738, 4294901760
        %v740 = vsub.f32 %v738, %v739
        %v741 = vand.u32 %v740, 4294901760
        %742 = vmatmul.mubr.f32.gmra.mrb[0].mxu0 %v741
        %v743 = vpop.f32.mrb[0].mxu0
        %v744 = vadd.f32 %v554, %v743
        %v745 = vpop.f32.mrb[0].mxu0
        %746 = vmatprep.mubr.f32.mxu0 0.0
        %v747 = vand.u32 %v528, 4294901760
        %v748 = vsub.f32 %v528, %v747
        %v749 = vand.u32 %v748, 4294901760
        %v750 = vsub.f32 %v748, %v749
        %v751 = vand.u32 %v750, 4294901760
        %752 = vmatmul.mubr.f32.gmra.mrb[0].mxu0 %v751
        %v753 = vpop.f32.mrb[0].mxu0
        %v754 = vadd.f32 %v554, %v753
        %v755 = vpop.f32.mrb[0].mxu0
        %756 = vmatprep.mubr.f32.mxu0 0.0
        %v757 = vand.u32 %v529, 4294901760
        %v758 = vsub.f32 %v529, %v757
        %v759 = vand.u32 %v758, 4294901760
        %v760 = vsub.f32 %v758, %v759
        %v761 = vand.u32 %v760, 4294901760
        %762 = vmatmul.mubr.f32.gmra.mrb[0].mxu0 %v761
        %v763 = vpop.f32.mrb[0].mxu0
        %v764 = vadd.f32 %v554, %v763
        %v765 = vpop.f32.mrb[0].mxu0
        %766 = vmatprep.mubr.f32.mxu0 0.0
        %v767 = vand.u32 %v530, 4294901760
        %v768 = vsub.f32 %v530, %v767
        %v769 = vand.u32 %v768, 4294901760
        %v770 = vsub.f32 %v768, %v769
        %v771 = vand.u32 %v770, 4294901760
        %772 = vmatmul.mubr.f32.gmra.mrb[0].mxu0 %v771
        %v773 = vpop.f32.mrb[0].mxu0
        %v774 = vadd.f32 %v554, %v773
        %v775 = vpop.f32.mrb[0].mxu0
        %776 = vmatprep.mubr.f32.mxu0 0.0
        %v777 = vand.u32 %v531, 4294901760
        %v778 = vsub.f32 %v531, %v777
        %v779 = vand.u32 %v778, 4294901760
        %v780 = vsub.f32 %v778, %v779
        %v781 = vand.u32 %v780, 4294901760
        %782 = vmatmul.mubr.f32.gmra.mrb[0].mxu0 %v781
        %v783 = vpop.f32.mrb[0].mxu0
        %v784 = vadd.f32 %v554, %v783
        %v785 = vpop.f32.mrb[0].mxu0
        %786 = vmatprep.mubr.f32.mxu0 0.0
        %v787 = vand.u32 %v532, 4294901760
        %v788 = vsub.f32 %v532, %v787
        %v789 = vand.u32 %v788, 4294901760
        %v790 = vsub.f32 %v788, %v789
        %v791 = vand.u32 %v790, 4294901760
        %792 = vmatmul.mubr.f32.gmra.mrb[0].mxu0 %v791
        %v793 = vpop.f32.mrb[0].mxu0
        %v794 = vadd.f32 %v554, %v793
        %v795 = vpop.f32.mrb[0].mxu0
        %796 = vdwg.mxu0
        %797 = vmatprep.subr.mxu0 0.0
        %v798 = vand.u32 %v533, 4294901760
        %v799 = vsub.f32 %v533, %v798
        %v800 = vand.u32 %v799, 4294901760
        %v801 = vsub.f32 %v799, %v800
        %v802 = vand.u32 %v801, 4294901760
        %803 = vmatpush1.msra.mxu0 %v802
        %804 = vmatprep.subr.mxu0 0.0
        %v805 = vand.u32 %v534, 4294901760
        %v806 = vsub.f32 %v534, %v805
        %v807 = vand.u32 %v806, 4294901760
        %v808 = vsub.f32 %v806, %v807
        %v809 = vand.u32 %v808, 4294901760
        %810 = vmatpush1.msra.mxu0 %v809
        %811 = vmatprep.subr.mxu0 0.0
        %v812 = vand.u32 %v535, 4294901760
        %v813 = vsub.f32 %v535, %v812
        %v814 = vand.u32 %v813, 4294901760
        %v815 = vsub.f32 %v813, %v814
        %v816 = vand.u32 %v815, 4294901760
        %817 = vmatpush1.msra.mxu0 %v816
        %818 = vmatprep.subr.mxu0 0.0
        %v819 = vand.u32 %v536, 4294901760
        %v820 = vsub.f32 %v536, %v819
        %v821 = vand.u32 %v820, 4294901760
        %v822 = vsub.f32 %v820, %v821
        %v823 = vand.u32 %v822, 4294901760
        %824 = vmatpush1.msra.mxu0 %v823
        %825 = vmatprep.subr.mxu0 0.0
        %v826 = vand.u32 %v537, 4294901760
        %v827 = vsub.f32 %v537, %v826
        %v828 = vand.u32 %v827, 4294901760
        %v829 = vsub.f32 %v827, %v828
        %v830 = vand.u32 %v829, 4294901760
        %831 = vmatpush1.msra.mxu0 %v830
        %832 = vmatprep.subr.mxu0 0.0
        %v833 = vand.u32 %v538, 4294901760
        %v834 = vsub.f32 %v538, %v833
        %v835 = vand.u32 %v834, 4294901760
        %v836 = vsub.f32 %v834, %v835
        %v837 = vand.u32 %v836, 4294901760
        %838 = vmatpush1.msra.mxu0 %v837
        %839 = vmatprep.subr.mxu0 0.0
        %v840 = vand.u32 %v539, 4294901760
        %v841 = vsub.f32 %v539, %v840
        %v842 = vand.u32 %v841, 4294901760
        %v843 = vsub.f32 %v841, %v842
        %v844 = vand.u32 %v843, 4294901760
        %845 = vmatpush1.msra.mxu0 %v844
        %846 = vmatprep.subr.mxu0 0.0
        %v847 = vand.u32 %v540, 4294901760
        %v848 = vsub.f32 %v540, %v847
        %v849 = vand.u32 %v848, 4294901760
        %v850 = vsub.f32 %v848, %v849
        %v851 = vand.u32 %v850, 4294901760
        %852 = vmatpush1.msra.mxu0 %v851
        %853 = vmatprep.subr.mxu0 0.0
        %v854 = vand.u32 %v541, 4294901760
        %v855 = vsub.f32 %v541, %v854
        %v856 = vand.u32 %v855, 4294901760
        %v857 = vsub.f32 %v855, %v856
        %v858 = vand.u32 %v857, 4294901760
        %859 = vmatpush1.msra.mxu0 %v858
        %860 = vmatprep.subr.mxu0 0.0
        %v861 = vand.u32 %v542, 4294901760
        %v862 = vsub.f32 %v542, %v861
        %v863 = vand.u32 %v862, 4294901760
        %v864 = vsub.f32 %v862, %v863
        %v865 = vand.u32 %v864, 4294901760
        %866 = vmatpush1.msra.mxu0 %v865
        %867 = vmatprep.subr.mxu0 0.0
        %v868 = vand.u32 %v543, 4294901760
        %v869 = vsub.f32 %v543, %v868
        %v870 = vand.u32 %v869, 4294901760
        %v871 = vsub.f32 %v869, %v870
        %v872 = vand.u32 %v871, 4294901760
        %873 = vmatpush1.msra.mxu0 %v872
        %874 = vmatprep.subr.mxu0 0.0
        %v875 = vand.u32 %v544, 4294901760
        %v876 = vsub.f32 %v544, %v875
        %v877 = vand.u32 %v876, 4294901760
        %v878 = vsub.f32 %v876, %v877
        %v879 = vand.u32 %v878, 4294901760
        %880 = vmatpush1.msra.mxu0 %v879
        %881 = vmatprep.subr.mxu0 0.0
        %v882 = vand.u32 %v545, 4294901760
        %v883 = vsub.f32 %v545, %v882
        %v884 = vand.u32 %v883, 4294901760
        %v885 = vsub.f32 %v883, %v884
        %v886 = vand.u32 %v885, 4294901760
        %887 = vmatpush1.msra.mxu0 %v886
        %888 = vmatprep.subr.mxu0 0.0
        %v889 = vand.u32 %v546, 4294901760
        %v890 = vsub.f32 %v546, %v889
        %v891 = vand.u32 %v890, 4294901760
        %v892 = vsub.f32 %v890, %v891
        %v893 = vand.u32 %v892, 4294901760
        %894 = vmatpush1.msra.mxu0 %v893
        %895 = vmatprep.subr.mxu0 0.0
        %v896 = vand.u32 %v547, 4294901760
        %v897 = vsub.f32 %v547, %v896
        %v898 = vand.u32 %v897, 4294901760
        %v899 = vsub.f32 %v897, %v898
        %v900 = vand.u32 %v899, 4294901760
        %901 = vmatpush1.msra.mxu0 %v900
        %902 = vmatprep.subr.mxu0 0.0
        %v903 = vand.u32 %v548, 4294901760
        %v904 = vsub.f32 %v548, %v903
        %v905 = vand.u32 %v904, 4294901760
        %v906 = vsub.f32 %v904, %v905
        %v907 = vand.u32 %v906, 4294901760
        %908 = vmatpush1.msra.mxu0 %v907
        %909 = vmatprep.subr.mxu0 0.0
        %910 = vmatpush1.msra.mxu0 0.0
        %911 = vmatprep.subr.mxu0 0.0
        %912 = vmatpush1.msra.mxu0 0.0
        %913 = vmatprep.subr.mxu0 0.0
        %914 = vmatpush1.msra.mxu0 0.0
        %915 = vmatprep.subr.mxu0 0.0
        %916 = vmatpush1.msra.mxu0 0.0
        %917 = vmatprep.subr.mxu0 0.0
        %918 = vmatpush1.msra.mxu0 0.0
        %919 = vmatprep.subr.mxu0 0.0
        %920 = vmatpush1.msra.mxu0 0.0
        %921 = vmatprep.subr.mxu0 0.0
        %922 = vmatpush1.msra.mxu0 0.0
        %923 = vmatprep.subr.mxu0 0.0
        %924 = vmatpush1.msra.mxu0 0.0
        %925 = vmatprep.subr.mxu0 0.0
        %926 = vmatpush1.msra.mxu0 0.0
        %927 = vmatprep.subr.mxu0 0.0
        %928 = vmatpush1.msra.mxu0 0.0
        %929 = vmatprep.subr.mxu0 0.0
        %930 = vmatpush1.msra.mxu0 0.0
        %931 = vmatprep.subr.mxu0 0.0
        %932 = vmatpush1.msra.mxu0 0.0
        %933 = vmatprep.subr.mxu0 0.0
        %934 = vmatpush1.msra.mxu0 0.0
        %935 = vmatprep.subr.mxu0 0.0
        %936 = vmatpush1.msra.mxu0 0.0
        %937 = vmatprep.subr.mxu0 0.0
        %938 = vmatpush1.msra.mxu0 0.0
        %939 = vmatprep.subr.mxu0 0.0
        %940 = vmatpush1.msra.mxu0 0.0
        %941 = vmatprep.mubr.f32.mxu0 0.0
        %v942 = vand.u32 %v517, 4294901760
        %943 = vmatmul.mubr.f32.gmra.mrb[0].mxu0 %v942
        %v944 = vpop.f32.mrb[0].mxu0
        %v945 = vadd.f32 %v644, %v944
        %v946 = vpop.f32.mrb[0].mxu0
        %947 = vmatprep.mubr.f32.mxu0 0.0
        %v948 = vand.u32 %v518, 4294901760
        %949 = vmatmul.mubr.f32.gmra.mrb[0].mxu0 %v948
        %v950 = vpop.f32.mrb[0].mxu0
        %v951 = vadd.f32 %v654, %v950
        %v952 = vpop.f32.mrb[0].mxu0
        %953 = vmatprep.mubr.f32.mxu0 0.0
        %v954 = vand.u32 %v519, 4294901760
        %955 = vmatmul.mubr.f32.gmra.mrb[0].mxu0 %v954
        %v956 = vpop.f32.mrb[0].mxu0
        %v957 = vadd.f32 %v664, %v956
        %v958 = vpop.f32.mrb[0].mxu0
        %959 = vmatprep.mubr.f32.mxu0 0.0
        %v960 = vand.u32 %v520, 4294901760
        %961 = vmatmul.mubr.f32.gmra.mrb[0].mxu0 %v960
        %v962 = vpop.f32.mrb[0].mxu0
        %v963 = vadd.f32 %v674, %v962
        %v964 = vpop.f32.mrb[0].mxu0
        %965 = vmatprep.mubr.f32.mxu0 0.0
        %v966 = vand.u32 %v521, 4294901760
        %967 = vmatmul.mubr.f32.gmra.mrb[0].mxu0 %v966
        %v968 = vpop.f32.mrb[0].mxu0
        %v969 = vadd.f32 %v684, %v968
        %v970 = vpop.f32.mrb[0].mxu0
        %971 = vmatprep.mubr.f32.mxu0 0.0
        %v972 = vand.u32 %v522, 4294901760
        %973 = vmatmul.mubr.f32.gmra.mrb[0].mxu0 %v972
        %v974 = vpop.f32.mrb[0].mxu0
        %v975 = vadd.f32 %v694, %v974
        %v976 = vpop.f32.mrb[0].mxu0
        %977 = vmatprep.mubr.f32.mxu0 0.0
        %v978 = vand.u32 %v523, 4294901760
        %979 = vmatmul.mubr.f32.gmra.mrb[0].mxu0 %v978
        %v980 = vpop.f32.mrb[0].mxu0
        %v981 = vadd.f32 %v704, %v980
        %v982 = vpop.f32.mrb[0].mxu0
        %983 = vmatprep.mubr.f32.mxu0 0.0
        %v984 = vand.u32 %v524, 4294901760
        %985 = vmatmul.mubr.f32.gmra.mrb[0].mxu0 %v984
        %v986 = vpop.f32.mrb[0].mxu0
        %v987 = vadd.f32 %v714, %v986
        %v988 = vpop.f32.mrb[0].mxu0
        %989 = vmatprep.mubr.f32.mxu0 0.0
        %v990 = vand.u32 %v525, 4294901760
        %991 = vmatmul.mubr.f32.gmra.mrb[0].mxu0 %v990
        %v992 = vpop.f32.mrb[0].mxu0
        %v993 = vadd.f32 %v724, %v992
        %v994 = vpop.f32.mrb[0].mxu0
        %995 = vmatprep.mubr.f32.mxu0 0.0
        %v996 = vand.u32 %v526, 4294901760
        %997 = vmatmul.mubr.f32.gmra.mrb[0].mxu0 %v996
        %v998 = vpop.f32.mrb[0].mxu0
        %v999 = vadd.f32 %v734, %v998
        %v1000 = vpop.f32.mrb[0].mxu0
        %1001 = vmatprep.mubr.f32.mxu0 0.0
        %v1002 = vand.u32 %v527, 4294901760
        %1003 = vmatmul.mubr.f32.gmra.mrb[0].mxu0 %v1002
        %v1004 = vpop.f32.mrb[0].mxu0
        %v1005 = vadd.f32 %v744, %v1004
        %v1006 = vpop.f32.mrb[0].mxu0
        %1007 = vmatprep.mubr.f32.mxu0 0.0
        %v1008 = vand.u32 %v528, 4294901760
        %1009 = vmatmul.mubr.f32.gmra.mrb[0].mxu0 %v1008
        %v1010 = vpop.f32.mrb[0].mxu0
        %v1011 = vadd.f32 %v754, %v1010
        %v1012 = vpop.f32.mrb[0].mxu0
        %1013 = vmatprep.mubr.f32.mxu0 0.0
        %v1014 = vand.u32 %v529, 4294901760
        %1015 = vmatmul.mubr.f32.gmra.mrb[0].mxu0 %v1014
        %v1016 = vpop.f32.mrb[0].mxu0
        %v1017 = vadd.f32 %v764, %v1016
        %v1018 = vpop.f32.mrb[0].mxu0
        %1019 = vmatprep.mubr.f32.mxu0 0.0
        %v1020 = vand.u32 %v530, 4294901760
        %1021 = vmatmul.mubr.f32.gmra.mrb[0].mxu0 %v1020
        %v1022 = vpop.f32.mrb[0].mxu0
        %v1023 = vadd.f32 %v774, %v1022
        %v1024 = vpop.f32.mrb[0].mxu0
        %1025 = vmatprep.mubr.f32.mxu0 0.0
        %v1026 = vand.u32 %v531, 4294901760
        %1027 = vmatmul.mubr.f32.gmra.mrb[0].mxu0 %v1026
        %v1028 = vpop.f32.mrb[0].mxu0
        %v1029 = vadd.f32 %v784, %v1028
        %v1030 = vpop.f32.mrb[0].mxu0
        %1031 = vmatprep.mubr.f32.mxu0 0.0
        %v1032 = vand.u32 %v532, 4294901760
        %1033 = vmatmul.mubr.f32.gmra.mrb[0].mxu0 %v1032
        %v1034 = vpop.f32.mrb[0].mxu0
        %v1035 = vadd.f32 %v794, %v1034
        %v1036 = vpop.f32.mrb[0].mxu0
        %1037 = vdwg.mxu0
        %1038 = vmatprep.subr.mxu0 0.0
        %v1039 = vand.u32 %v533, 4294901760
        %v1040 = vsub.f32 %v533, %v1039
        %1041 = vmatpush1.msra.mxu0 %v1040
        %1042 = vmatprep.subr.mxu0 0.0
        %v1043 = vand.u32 %v534, 4294901760
        %v1044 = vsub.f32 %v534, %v1043
        %1045 = vmatpush1.msra.mxu0 %v1044
        %1046 = vmatprep.subr.mxu0 0.0
        %v1047 = vand.u32 %v535, 4294901760
        %v1048 = vsub.f32 %v535, %v1047
        %1049 = vmatpush1.msra.mxu0 %v1048
        %1050 = vmatprep.subr.mxu0 0.0
        %v1051 = vand.u32 %v536, 4294901760
        %v1052 = vsub.f32 %v536, %v1051
        %1053 = vmatpush1.msra.mxu0 %v1052
        %1054 = vmatprep.subr.mxu0 0.0
        %v1055 = vand.u32 %v537, 4294901760
        %v1056 = vsub.f32 %v537, %v1055
        %1057 = vmatpush1.msra.mxu0 %v1056
        %1058 = vmatprep.subr.mxu0 0.0
        %v1059 = vand.u32 %v538, 4294901760
        %v1060 = vsub.f32 %v538, %v1059
        %1061 = vmatpush1.msra.mxu0 %v1060
        %1062 = vmatprep.subr.mxu0 0.0
        %v1063 = vand.u32 %v539, 4294901760
        %v1064 = vsub.f32 %v539, %v1063
        %1065 = vmatpush1.msra.mxu0 %v1064
        %1066 = vmatprep.subr.mxu0 0.0
        %v1067 = vand.u32 %v540, 4294901760
        %v1068 = vsub.f32 %v540, %v1067
        %1069 = vmatpush1.msra.mxu0 %v1068
        %1070 = vmatprep.subr.mxu0 0.0
        %v1071 = vand.u32 %v541, 4294901760
        %v1072 = vsub.f32 %v541, %v1071
        %1073 = vmatpush1.msra.mxu0 %v1072
        %1074 = vmatprep.subr.mxu0 0.0
        %v1075 = vand.u32 %v542, 4294901760
        %v1076 = vsub.f32 %v542, %v1075
        %1077 = vmatpush1.msra.mxu0 %v1076
        %1078 = vmatprep.subr.mxu0 0.0
        %v1079 = vand.u32 %v543, 4294901760
        %v1080 = vsub.f32 %v543, %v1079
        %1081 = vmatpush1.msra.mxu0 %v1080
        %1082 = vmatprep.subr.mxu0 0.0
        %v1083 = vand.u32 %v544, 4294901760
        %v1084 = vsub.f32 %v544, %v1083
        %1085 = vmatpush1.msra.mxu0 %v1084
        %1086 = vmatprep.subr.mxu0 0.0
        %v1087 = vand.u32 %v545, 4294901760
        %v1088 = vsub.f32 %v545, %v1087
        %1089 = vmatpush1.msra.mxu0 %v1088
        %1090 = vmatprep.subr.mxu0 0.0
        %v1091 = vand.u32 %v546, 4294901760
        %v1092 = vsub.f32 %v546, %v1091
        %1093 = vmatpush1.msra.mxu0 %v1092
        %1094 = vmatprep.subr.mxu0 0.0
        %v1095 = vand.u32 %v547, 4294901760
        %v1096 = vsub.f32 %v547, %v1095
        %1097 = vmatpush1.msra.mxu0 %v1096
        %1098 = vmatprep.subr.mxu0 0.0
        %v1099 = vand.u32 %v548, 4294901760
        %v1100 = vsub.f32 %v548, %v1099
        %1101 = vmatpush1.msra.mxu0 %v1100
        %1102 = vmatprep.subr.mxu0 0.0
        %1103 = vmatpush1.msra.mxu0 0.0
        %1104 = vmatprep.subr.mxu0 0.0
        %1105 = vmatpush1.msra.mxu0 0.0
        %1106 = vmatprep.subr.mxu0 0.0
        %1107 = vmatpush1.msra.mxu0 0.0
        %1108 = vmatprep.subr.mxu0 0.0
        %1109 = vmatpush1.msra.mxu0 0.0
        %1110 = vmatprep.subr.mxu0 0.0
        %1111 = vmatpush1.msra.mxu0 0.0
        %1112 = vmatprep.subr.mxu0 0.0
        %1113 = vmatpush1.msra.mxu0 0.0
        %1114 = vmatprep.subr.mxu0 0.0
        %1115 = vmatpush1.msra.mxu0 0.0
        %1116 = vmatprep.subr.mxu0 0.0
        %1117 = vmatpush1.msra.mxu0 0.0
        %1118 = vmatprep.subr.mxu0 0.0
        %1119 = vmatpush1.msra.mxu0 0.0
        %1120 = vmatprep.subr.mxu0 0.0
        %1121 = vmatpush1.msra.mxu0 0.0
        %1122 = vmatprep.subr.mxu0 0.0
        %1123 = vmatpush1.msra.mxu0 0.0
        %1124 = vmatprep.subr.mxu0 0.0
        %1125 = vmatpush1.msra.mxu0 0.0
        %1126 = vmatprep.subr.mxu0 0.0
        %1127 = vmatpush1.msra.mxu0 0.0
        %1128 = vmatprep.subr.mxu0 0.0
        %1129 = vmatpush1.msra.mxu0 0.0
        %1130 = vmatprep.subr.mxu0 0.0
        %1131 = vmatpush1.msra.mxu0 0.0
        %1132 = vmatprep.subr.mxu0 0.0
        %1133 = vmatpush1.msra.mxu0 0.0
        %1134 = vmatprep.mubr.f32.mxu0 0.0
        %v1135 = vand.u32 %v517, 4294901760
        %v1136 = vsub.f32 %v517, %v1135
        %1137 = vmatmul.mubr.f32.gmra.mrb[0].mxu0 %v1136
        %v1138 = vpop.f32.mrb[0].mxu0
        %v1139 = vadd.f32 %v945, %v1138
        %v1140 = vpop.f32.mrb[0].mxu0
        %1141 = vmatprep.mubr.f32.mxu0 0.0
        %v1142 = vand.u32 %v518, 4294901760
        %v1143 = vsub.f32 %v518, %v1142
        %1144 = vmatmul.mubr.f32.gmra.mrb[0].mxu0 %v1143
        %v1145 = vpop.f32.mrb[0].mxu0
        %v1146 = vadd.f32 %v951, %v1145
        %v1147 = vpop.f32.mrb[0].mxu0
        %1148 = vmatprep.mubr.f32.mxu0 0.0
        %v1149 = vand.u32 %v519, 4294901760
        %v1150 = vsub.f32 %v519, %v1149
        %1151 = vmatmul.mubr.f32.gmra.mrb[0].mxu0 %v1150
        %v1152 = vpop.f32.mrb[0].mxu0
        %v1153 = vadd.f32 %v957, %v1152
        %v1154 = vpop.f32.mrb[0].mxu0
        %1155 = vmatprep.mubr.f32.mxu0 0.0
        %v1156 = vand.u32 %v520, 4294901760
        %v1157 = vsub.f32 %v520, %v1156
        %1158 = vmatmul.mubr.f32.gmra.mrb[0].mxu0 %v1157
        %v1159 = vpop.f32.mrb[0].mxu0
        %v1160 = vadd.f32 %v963, %v1159
        %v1161 = vpop.f32.mrb[0].mxu0
        %1162 = vmatprep.mubr.f32.mxu0 0.0
        %v1163 = vand.u32 %v521, 4294901760
        %v1164 = vsub.f32 %v521, %v1163
        %1165 = vmatmul.mubr.f32.gmra.mrb[0].mxu0 %v1164
        %v1166 = vpop.f32.mrb[0].mxu0
        %v1167 = vadd.f32 %v969, %v1166
        %v1168 = vpop.f32.mrb[0].mxu0
        %1169 = vmatprep.mubr.f32.mxu0 0.0
        %v1170 = vand.u32 %v522, 4294901760
        %v1171 = vsub.f32 %v522, %v1170
        %1172 = vmatmul.mubr.f32.gmra.mrb[0].mxu0 %v1171
        %v1173 = vpop.f32.mrb[0].mxu0
        %v1174 = vadd.f32 %v975, %v1173
        %v1175 = vpop.f32.mrb[0].mxu0
        %1176 = vmatprep.mubr.f32.mxu0 0.0
        %v1177 = vand.u32 %v523, 4294901760
        %v1178 = vsub.f32 %v523, %v1177
        %1179 = vmatmul.mubr.f32.gmra.mrb[0].mxu0 %v1178
        %v1180 = vpop.f32.mrb[0].mxu0
        %v1181 = vadd.f32 %v981, %v1180
        %v1182 = vpop.f32.mrb[0].mxu0
        %1183 = vmatprep.mubr.f32.mxu0 0.0
        %v1184 = vand.u32 %v524, 4294901760
        %v1185 = vsub.f32 %v524, %v1184
        %1186 = vmatmul.mubr.f32.gmra.mrb[0].mxu0 %v1185
        %v1187 = vpop.f32.mrb[0].mxu0
        %v1188 = vadd.f32 %v987, %v1187
        %v1189 = vpop.f32.mrb[0].mxu0
        %1190 = vmatprep.mubr.f32.mxu0 0.0
        %v1191 = vand.u32 %v525, 4294901760
        %v1192 = vsub.f32 %v525, %v1191
        %1193 = vmatmul.mubr.f32.gmra.mrb[0].mxu0 %v1192
        %v1194 = vpop.f32.mrb[0].mxu0
        %v1195 = vadd.f32 %v993, %v1194
        %v1196 = vpop.f32.mrb[0].mxu0
        %1197 = vmatprep.mubr.f32.mxu0 0.0
        %v1198 = vand.u32 %v526, 4294901760
        %v1199 = vsub.f32 %v526, %v1198
        %1200 = vmatmul.mubr.f32.gmra.mrb[0].mxu0 %v1199
        %v1201 = vpop.f32.mrb[0].mxu0
        %v1202 = vadd.f32 %v999, %v1201
        %v1203 = vpop.f32.mrb[0].mxu0
        %1204 = vmatprep.mubr.f32.mxu0 0.0
        %v1205 = vand.u32 %v527, 4294901760
        %v1206 = vsub.f32 %v527, %v1205
        %1207 = vmatmul.mubr.f32.gmra.mrb[0].mxu0 %v1206
        %v1208 = vpop.f32.mrb[0].mxu0
        %v1209 = vadd.f32 %v1005, %v1208
        %v1210 = vpop.f32.mrb[0].mxu0
        %1211 = vmatprep.mubr.f32.mxu0 0.0
        %v1212 = vand.u32 %v528, 4294901760
        %v1213 = vsub.f32 %v528, %v1212
        %1214 = vmatmul.mubr.f32.gmra.mrb[0].mxu0 %v1213
        %v1215 = vpop.f32.mrb[0].mxu0
        %v1216 = vadd.f32 %v1011, %v1215
        %v1217 = vpop.f32.mrb[0].mxu0
        %1218 = vmatprep.mubr.f32.mxu0 0.0
        %v1219 = vand.u32 %v529, 4294901760
        %v1220 = vsub.f32 %v529, %v1219
        %1221 = vmatmul.mubr.f32.gmra.mrb[0].mxu0 %v1220
        %v1222 = vpop.f32.mrb[0].mxu0
        %v1223 = vadd.f32 %v1017, %v1222
        %v1224 = vpop.f32.mrb[0].mxu0
        %1225 = vmatprep.mubr.f32.mxu0 0.0
        %v1226 = vand.u32 %v530, 4294901760
        %v1227 = vsub.f32 %v530, %v1226
        %1228 = vmatmul.mubr.f32.gmra.mrb[0].mxu0 %v1227
        %v1229 = vpop.f32.mrb[0].mxu0
        %v1230 = vadd.f32 %v1023, %v1229
        %v1231 = vpop.f32.mrb[0].mxu0
        %1232 = vmatprep.mubr.f32.mxu0 0.0
        %v1233 = vand.u32 %v531, 4294901760
        %v1234 = vsub.f32 %v531, %v1233
        %1235 = vmatmul.mubr.f32.gmra.mrb[0].mxu0 %v1234
        %v1236 = vpop.f32.mrb[0].mxu0
        %v1237 = vadd.f32 %v1029, %v1236
        %v1238 = vpop.f32.mrb[0].mxu0
        %1239 = vmatprep.mubr.f32.mxu0 0.0
        %v1240 = vand.u32 %v532, 4294901760
        %v1241 = vsub.f32 %v532, %v1240
        %1242 = vmatmul.mubr.f32.gmra.mrb[0].mxu0 %v1241
        %v1243 = vpop.f32.mrb[0].mxu0
        %v1244 = vadd.f32 %v1035, %v1243
        %v1245 = vpop.f32.mrb[0].mxu0
        %1246 = vdwg.mxu0
        %1247 = vmatprep.subr.mxu0 0.0
        %v1248 = vand.u32 %v533, 4294901760
        %1249 = vmatpush1.msra.mxu0 %v1248
        %1250 = vmatprep.subr.mxu0 0.0
        %v1251 = vand.u32 %v534, 4294901760
        %1252 = vmatpush1.msra.mxu0 %v1251
        %1253 = vmatprep.subr.mxu0 0.0
        %v1254 = vand.u32 %v535, 4294901760
        %1255 = vmatpush1.msra.mxu0 %v1254
        %1256 = vmatprep.subr.mxu0 0.0
        %v1257 = vand.u32 %v536, 4294901760
        %1258 = vmatpush1.msra.mxu0 %v1257
        %1259 = vmatprep.subr.mxu0 0.0
        %v1260 = vand.u32 %v537, 4294901760
        %1261 = vmatpush1.msra.mxu0 %v1260
        %1262 = vmatprep.subr.mxu0 0.0
        %v1263 = vand.u32 %v538, 4294901760
        %1264 = vmatpush1.msra.mxu0 %v1263
        %1265 = vmatprep.subr.mxu0 0.0
        %v1266 = vand.u32 %v539, 4294901760
        %1267 = vmatpush1.msra.mxu0 %v1266
        %1268 = vmatprep.subr.mxu0 0.0
        %v1269 = vand.u32 %v540, 4294901760
        %1270 = vmatpush1.msra.mxu0 %v1269
        %1271 = vmatprep.subr.mxu0 0.0
        %v1272 = vand.u32 %v541, 4294901760
        %1273 = vmatpush1.msra.mxu0 %v1272
        %1274 = vmatprep.subr.mxu0 0.0
        %v1275 = vand.u32 %v542, 4294901760
        %1276 = vmatpush1.msra.mxu0 %v1275
        %1277 = vmatprep.subr.mxu0 0.0
        %v1278 = vand.u32 %v543, 4294901760
        %1279 = vmatpush1.msra.mxu0 %v1278
        %1280 = vmatprep.subr.mxu0 0.0
        %v1281 = vand.u32 %v544, 4294901760
        %1282 = vmatpush1.msra.mxu0 %v1281
        %1283 = vmatprep.subr.mxu0 0.0
        %v1284 = vand.u32 %v545, 4294901760
        %1285 = vmatpush1.msra.mxu0 %v1284
        %1286 = vmatprep.subr.mxu0 0.0
        %v1287 = vand.u32 %v546, 4294901760
        %1288 = vmatpush1.msra.mxu0 %v1287
        %1289 = vmatprep.subr.mxu0 0.0
        %v1290 = vand.u32 %v547, 4294901760
        %1291 = vmatpush1.msra.mxu0 %v1290
        %1292 = vmatprep.subr.mxu0 0.0
        %v1293 = vand.u32 %v548, 4294901760
        %1294 = vmatpush1.msra.mxu0 %v1293
        %1295 = vmatprep.subr.mxu0 0.0
        %1296 = vmatpush1.msra.mxu0 0.0
        %1297 = vmatprep.subr.mxu0 0.0
        %1298 = vmatpush1.msra.mxu0 0.0
        %1299 = vmatprep.subr.mxu0 0.0
        %1300 = vmatpush1.msra.mxu0 0.0
        %1301 = vmatprep.subr.mxu0 0.0
        %1302 = vmatpush1.msra.mxu0 0.0
        %1303 = vmatprep.subr.mxu0 0.0
        %1304 = vmatpush1.msra.mxu0 0.0
        %1305 = vmatprep.subr.mxu0 0.0
        %1306 = vmatpush1.msra.mxu0 0.0
        %1307 = vmatprep.subr.mxu0 0.0
        %1308 = vmatpush1.msra.mxu0 0.0
        %1309 = vmatprep.subr.mxu0 0.0
        %1310 = vmatpush1.msra.mxu0 0.0
        %1311 = vmatprep.subr.mxu0 0.0
        %1312 = vmatpush1.msra.mxu0 0.0
        %1313 = vmatprep.subr.mxu0 0.0
        %1314 = vmatpush1.msra.mxu0 0.0
        %1315 = vmatprep.subr.mxu0 0.0
        %1316 = vmatpush1.msra.mxu0 0.0
        %1317 = vmatprep.subr.mxu0 0.0
        %1318 = vmatpush1.msra.mxu0 0.0
        %1319 = vmatprep.subr.mxu0 0.0
        %1320 = vmatpush1.msra.mxu0 0.0
        %1321 = vmatprep.subr.mxu0 0.0
        %1322 = vmatpush1.msra.mxu0 0.0
        %1323 = vmatprep.subr.mxu0 0.0
        %1324 = vmatpush1.msra.mxu0 0.0
        %1325 = vmatprep.subr.mxu0 0.0
        %1326 = vmatpush1.msra.mxu0 0.0
        %1327 = vmatprep.mubr.f32.mxu0 0.0
        %v1328 = vand.u32 %v517, 4294901760
        %v1329 = vsub.f32 %v517, %v1328
        %v1330 = vand.u32 %v1329, 4294901760
        %1331 = vmatmul.mubr.f32.gmra.mrb[0].mxu0 %v1330
        %v1332 = vpop.f32.mrb[0].mxu0
        %v1333 = vadd.f32 %v1139, %v1332
        %v1334 = vpop.f32.mrb[0].mxu0
        %1335 = vmatprep.mubr.f32.mxu0 0.0
        %v1336 = vand.u32 %v518, 4294901760
        %v1337 = vsub.f32 %v518, %v1336
        %v1338 = vand.u32 %v1337, 4294901760
        %1339 = vmatmul.mubr.f32.gmra.mrb[0].mxu0 %v1338
        %v1340 = vpop.f32.mrb[0].mxu0
        %v1341 = vadd.f32 %v1146, %v1340
        %v1342 = vpop.f32.mrb[0].mxu0
        %1343 = vmatprep.mubr.f32.mxu0 0.0
        %v1344 = vand.u32 %v519, 4294901760
        %v1345 = vsub.f32 %v519, %v1344
        %v1346 = vand.u32 %v1345, 4294901760
        %1347 = vmatmul.mubr.f32.gmra.mrb[0].mxu0 %v1346
        %v1348 = vpop.f32.mrb[0].mxu0
        %v1349 = vadd.f32 %v1153, %v1348
        %v1350 = vpop.f32.mrb[0].mxu0
        %1351 = vmatprep.mubr.f32.mxu0 0.0
        %v1352 = vand.u32 %v520, 4294901760
        %v1353 = vsub.f32 %v520, %v1352
        %v1354 = vand.u32 %v1353, 4294901760
        %1355 = vmatmul.mubr.f32.gmra.mrb[0].mxu0 %v1354
        %v1356 = vpop.f32.mrb[0].mxu0
        %v1357 = vadd.f32 %v1160, %v1356
        %v1358 = vpop.f32.mrb[0].mxu0
        %1359 = vmatprep.mubr.f32.mxu0 0.0
        %v1360 = vand.u32 %v521, 4294901760
        %v1361 = vsub.f32 %v521, %v1360
        %v1362 = vand.u32 %v1361, 4294901760
        %1363 = vmatmul.mubr.f32.gmra.mrb[0].mxu0 %v1362
        %v1364 = vpop.f32.mrb[0].mxu0
        %v1365 = vadd.f32 %v1167, %v1364
        %v1366 = vpop.f32.mrb[0].mxu0
        %1367 = vmatprep.mubr.f32.mxu0 0.0
        %v1368 = vand.u32 %v522, 4294901760
        %v1369 = vsub.f32 %v522, %v1368
        %v1370 = vand.u32 %v1369, 4294901760
        %1371 = vmatmul.mubr.f32.gmra.mrb[0].mxu0 %v1370
        %v1372 = vpop.f32.mrb[0].mxu0
        %v1373 = vadd.f32 %v1174, %v1372
        %v1374 = vpop.f32.mrb[0].mxu0
        %1375 = vmatprep.mubr.f32.mxu0 0.0
        %v1376 = vand.u32 %v523, 4294901760
        %v1377 = vsub.f32 %v523, %v1376
        %v1378 = vand.u32 %v1377, 4294901760
        %1379 = vmatmul.mubr.f32.gmra.mrb[0].mxu0 %v1378
        %v1380 = vpop.f32.mrb[0].mxu0
        %v1381 = vadd.f32 %v1181, %v1380
        %v1382 = vpop.f32.mrb[0].mxu0
        %1383 = vmatprep.mubr.f32.mxu0 0.0
        %v1384 = vand.u32 %v524, 4294901760
        %v1385 = vsub.f32 %v524, %v1384
        %v1386 = vand.u32 %v1385, 4294901760
        %1387 = vmatmul.mubr.f32.gmra.mrb[0].mxu0 %v1386
        %v1388 = vpop.f32.mrb[0].mxu0
        %v1389 = vadd.f32 %v1188, %v1388
        %v1390 = vpop.f32.mrb[0].mxu0
        %1391 = vmatprep.mubr.f32.mxu0 0.0
        %v1392 = vand.u32 %v525, 4294901760
        %v1393 = vsub.f32 %v525, %v1392
        %v1394 = vand.u32 %v1393, 4294901760
        %1395 = vmatmul.mubr.f32.gmra.mrb[0].mxu0 %v1394
        %v1396 = vpop.f32.mrb[0].mxu0
        %v1397 = vadd.f32 %v1195, %v1396
        %v1398 = vpop.f32.mrb[0].mxu0
        %1399 = vmatprep.mubr.f32.mxu0 0.0
        %v1400 = vand.u32 %v526, 4294901760
        %v1401 = vsub.f32 %v526, %v1400
        %v1402 = vand.u32 %v1401, 4294901760
        %1403 = vmatmul.mubr.f32.gmra.mrb[0].mxu0 %v1402
        %v1404 = vpop.f32.mrb[0].mxu0
        %v1405 = vadd.f32 %v1202, %v1404
        %v1406 = vpop.f32.mrb[0].mxu0
        %1407 = vmatprep.mubr.f32.mxu0 0.0
        %v1408 = vand.u32 %v527, 4294901760
        %v1409 = vsub.f32 %v527, %v1408
        %v1410 = vand.u32 %v1409, 4294901760
        %1411 = vmatmul.mubr.f32.gmra.mrb[0].mxu0 %v1410
        %v1412 = vpop.f32.mrb[0].mxu0
        %v1413 = vadd.f32 %v1209, %v1412
        %v1414 = vpop.f32.mrb[0].mxu0
        %1415 = vmatprep.mubr.f32.mxu0 0.0
        %v1416 = vand.u32 %v528, 4294901760
        %v1417 = vsub.f32 %v528, %v1416
        %v1418 = vand.u32 %v1417, 4294901760
        %1419 = vmatmul.mubr.f32.gmra.mrb[0].mxu0 %v1418
        %v1420 = vpop.f32.mrb[0].mxu0
        %v1421 = vadd.f32 %v1216, %v1420
        %v1422 = vpop.f32.mrb[0].mxu0
        %1423 = vmatprep.mubr.f32.mxu0 0.0
        %v1424 = vand.u32 %v529, 4294901760
        %v1425 = vsub.f32 %v529, %v1424
        %v1426 = vand.u32 %v1425, 4294901760
        %1427 = vmatmul.mubr.f32.gmra.mrb[0].mxu0 %v1426
        %v1428 = vpop.f32.mrb[0].mxu0
        %v1429 = vadd.f32 %v1223, %v1428
        %v1430 = vpop.f32.mrb[0].mxu0
        %1431 = vmatprep.mubr.f32.mxu0 0.0
        %v1432 = vand.u32 %v530, 4294901760
        %v1433 = vsub.f32 %v530, %v1432
        %v1434 = vand.u32 %v1433, 4294901760
        %1435 = vmatmul.mubr.f32.gmra.mrb[0].mxu0 %v1434
        %v1436 = vpop.f32.mrb[0].mxu0
        %v1437 = vadd.f32 %v1230, %v1436
        %v1438 = vpop.f32.mrb[0].mxu0
        %1439 = vmatprep.mubr.f32.mxu0 0.0
        %v1440 = vand.u32 %v531, 4294901760
        %v1441 = vsub.f32 %v531, %v1440
        %v1442 = vand.u32 %v1441, 4294901760
        %1443 = vmatmul.mubr.f32.gmra.mrb[0].mxu0 %v1442
        %v1444 = vpop.f32.mrb[0].mxu0
        %v1445 = vadd.f32 %v1237, %v1444
        %v1446 = vpop.f32.mrb[0].mxu0
        %1447 = vmatprep.mubr.f32.mxu0 0.0
        %v1448 = vand.u32 %v532, 4294901760
        %v1449 = vsub.f32 %v532, %v1448
        %v1450 = vand.u32 %v1449, 4294901760
        %1451 = vmatmul.mubr.f32.gmra.mrb[0].mxu0 %v1450
        %v1452 = vpop.f32.mrb[0].mxu0
        %v1453 = vadd.f32 %v1244, %v1452
        %v1454 = vpop.f32.mrb[0].mxu0
        %1455 = vdwg.mxu0
        %1456 = vmatprep.subr.mxu0 0.0
        %v1457 = vand.u32 %v533, 4294901760
        %v1458 = vsub.f32 %v533, %v1457
        %v1459 = vand.u32 %v1458, 4294901760
        %1460 = vmatpush1.msra.mxu0 %v1459
        %1461 = vmatprep.subr.mxu0 0.0
        %v1462 = vand.u32 %v534, 4294901760
        %v1463 = vsub.f32 %v534, %v1462
        %v1464 = vand.u32 %v1463, 4294901760
        %1465 = vmatpush1.msra.mxu0 %v1464
        %1466 = vmatprep.subr.mxu0 0.0
        %v1467 = vand.u32 %v535, 4294901760
        %v1468 = vsub.f32 %v535, %v1467
        %v1469 = vand.u32 %v1468, 4294901760
        %1470 = vmatpush1.msra.mxu0 %v1469
        %1471 = vmatprep.subr.mxu0 0.0
        %v1472 = vand.u32 %v536, 4294901760
        %v1473 = vsub.f32 %v536, %v1472
        %v1474 = vand.u32 %v1473, 4294901760
        %1475 = vmatpush1.msra.mxu0 %v1474
        %1476 = vmatprep.subr.mxu0 0.0
        %v1477 = vand.u32 %v537, 4294901760
        %v1478 = vsub.f32 %v537, %v1477
        %v1479 = vand.u32 %v1478, 4294901760
        %1480 = vmatpush1.msra.mxu0 %v1479
        %1481 = vmatprep.subr.mxu0 0.0
        %v1482 = vand.u32 %v538, 4294901760
        %v1483 = vsub.f32 %v538, %v1482
        %v1484 = vand.u32 %v1483, 4294901760
        %1485 = vmatpush1.msra.mxu0 %v1484
        %1486 = vmatprep.subr.mxu0 0.0
        %v1487 = vand.u32 %v539, 4294901760
        %v1488 = vsub.f32 %v539, %v1487
        %v1489 = vand.u32 %v1488, 4294901760
        %1490 = vmatpush1.msra.mxu0 %v1489
        %1491 = vmatprep.subr.mxu0 0.0
        %v1492 = vand.u32 %v540, 4294901760
        %v1493 = vsub.f32 %v540, %v1492
        %v1494 = vand.u32 %v1493, 4294901760
        %1495 = vmatpush1.msra.mxu0 %v1494
        %1496 = vmatprep.subr.mxu0 0.0
        %v1497 = vand.u32 %v541, 4294901760
        %v1498 = vsub.f32 %v541, %v1497
        %v1499 = vand.u32 %v1498, 4294901760
        %1500 = vmatpush1.msra.mxu0 %v1499
        %1501 = vmatprep.subr.mxu0 0.0
        %v1502 = vand.u32 %v542, 4294901760
        %v1503 = vsub.f32 %v542, %v1502
        %v1504 = vand.u32 %v1503, 4294901760
        %1505 = vmatpush1.msra.mxu0 %v1504
        %1506 = vmatprep.subr.mxu0 0.0
        %v1507 = vand.u32 %v543, 4294901760
        %v1508 = vsub.f32 %v543, %v1507
        %v1509 = vand.u32 %v1508, 4294901760
        %1510 = vmatpush1.msra.mxu0 %v1509
        %1511 = vmatprep.subr.mxu0 0.0
        %v1512 = vand.u32 %v544, 4294901760
        %v1513 = vsub.f32 %v544, %v1512
        %v1514 = vand.u32 %v1513, 4294901760
        %1515 = vmatpush1.msra.mxu0 %v1514
        %1516 = vmatprep.subr.mxu0 0.0
        %v1517 = vand.u32 %v545, 4294901760
        %v1518 = vsub.f32 %v545, %v1517
        %v1519 = vand.u32 %v1518, 4294901760
        %1520 = vmatpush1.msra.mxu0 %v1519
        %1521 = vmatprep.subr.mxu0 0.0
        %v1522 = vand.u32 %v546, 4294901760
        %v1523 = vsub.f32 %v546, %v1522
        %v1524 = vand.u32 %v1523, 4294901760
        %1525 = vmatpush1.msra.mxu0 %v1524
        %1526 = vmatprep.subr.mxu0 0.0
        %v1527 = vand.u32 %v547, 4294901760
        %v1528 = vsub.f32 %v547, %v1527
        %v1529 = vand.u32 %v1528, 4294901760
        %1530 = vmatpush1.msra.mxu0 %v1529
        %1531 = vmatprep.subr.mxu0 0.0
        %v1532 = vand.u32 %v548, 4294901760
        %v1533 = vsub.f32 %v548, %v1532
        %v1534 = vand.u32 %v1533, 4294901760
        %1535 = vmatpush1.msra.mxu0 %v1534
        %1536 = vmatprep.subr.mxu0 0.0
        %1537 = vmatpush1.msra.mxu0 0.0
        %1538 = vmatprep.subr.mxu0 0.0
        %1539 = vmatpush1.msra.mxu0 0.0
        %1540 = vmatprep.subr.mxu0 0.0
        %1541 = vmatpush1.msra.mxu0 0.0
        %1542 = vmatprep.subr.mxu0 0.0
        %1543 = vmatpush1.msra.mxu0 0.0
        %1544 = vmatprep.subr.mxu0 0.0
        %1545 = vmatpush1.msra.mxu0 0.0
        %1546 = vmatprep.subr.mxu0 0.0
        %1547 = vmatpush1.msra.mxu0 0.0
        %1548 = vmatprep.subr.mxu0 0.0
        %1549 = vmatpush1.msra.mxu0 0.0
        %1550 = vmatprep.subr.mxu0 0.0
        %1551 = vmatpush1.msra.mxu0 0.0
        %1552 = vmatprep.subr.mxu0 0.0
        %1553 = vmatpush1.msra.mxu0 0.0
        %1554 = vmatprep.subr.mxu0 0.0
        %1555 = vmatpush1.msra.mxu0 0.0
        %1556 = vmatprep.subr.mxu0 0.0
        %1557 = vmatpush1.msra.mxu0 0.0
        %1558 = vmatprep.subr.mxu0 0.0
        %1559 = vmatpush1.msra.mxu0 0.0
        %1560 = vmatprep.subr.mxu0 0.0
        %1561 = vmatpush1.msra.mxu0 0.0
        %1562 = vmatprep.subr.mxu0 0.0
        %1563 = vmatpush1.msra.mxu0 0.0
        %1564 = vmatprep.subr.mxu0 0.0
        %1565 = vmatpush1.msra.mxu0 0.0
        %1566 = vmatprep.subr.mxu0 0.0
        %1567 = vmatpush1.msra.mxu0 0.0
        %1568 = vmatprep.mubr.f32.mxu0 0.0
        %v1569 = vand.u32 %v517, 4294901760
        %1570 = vmatmul.mubr.f32.gmra.mrb[0].mxu0 %v1569
        %v1571 = vpop.f32.mrb[0].mxu0
        %v1572 = vadd.f32 %v1333, %v1571
        %v1573 = vpop.f32.mrb[0].mxu0
        %1574 = vmatprep.mubr.f32.mxu0 0.0
        %v1575 = vand.u32 %v518, 4294901760
        %1576 = vmatmul.mubr.f32.gmra.mrb[0].mxu0 %v1575
        %v1577 = vpop.f32.mrb[0].mxu0
        %v1578 = vadd.f32 %v1341, %v1577
        %v1579 = vpop.f32.mrb[0].mxu0
        %1580 = vmatprep.mubr.f32.mxu0 0.0
        %v1581 = vand.u32 %v519, 4294901760
        %1582 = vmatmul.mubr.f32.gmra.mrb[0].mxu0 %v1581
        %v1583 = vpop.f32.mrb[0].mxu0
        %v1584 = vadd.f32 %v1349, %v1583
        %v1585 = vpop.f32.mrb[0].mxu0
        %1586 = vmatprep.mubr.f32.mxu0 0.0
        %v1587 = vand.u32 %v520, 4294901760
        %1588 = vmatmul.mubr.f32.gmra.mrb[0].mxu0 %v1587
        %v1589 = vpop.f32.mrb[0].mxu0
        %v1590 = vadd.f32 %v1357, %v1589
        %v1591 = vpop.f32.mrb[0].mxu0
        %1592 = vmatprep.mubr.f32.mxu0 0.0
        %v1593 = vand.u32 %v521, 4294901760
        %1594 = vmatmul.mubr.f32.gmra.mrb[0].mxu0 %v1593
        %v1595 = vpop.f32.mrb[0].mxu0
        %v1596 = vadd.f32 %v1365, %v1595
        %v1597 = vpop.f32.mrb[0].mxu0
        %1598 = vmatprep.mubr.f32.mxu0 0.0
        %v1599 = vand.u32 %v522, 4294901760
        %1600 = vmatmul.mubr.f32.gmra.mrb[0].mxu0 %v1599
        %v1601 = vpop.f32.mrb[0].mxu0
        %v1602 = vadd.f32 %v1373, %v1601
        %v1603 = vpop.f32.mrb[0].mxu0
        %1604 = vmatprep.mubr.f32.mxu0 0.0
        %v1605 = vand.u32 %v523, 4294901760
        %1606 = vmatmul.mubr.f32.gmra.mrb[0].mxu0 %v1605
        %v1607 = vpop.f32.mrb[0].mxu0
        %v1608 = vadd.f32 %v1381, %v1607
        %v1609 = vpop.f32.mrb[0].mxu0
        %1610 = vmatprep.mubr.f32.mxu0 0.0
        %v1611 = vand.u32 %v524, 4294901760
        %1612 = vmatmul.mubr.f32.gmra.mrb[0].mxu0 %v1611
        %v1613 = vpop.f32.mrb[0].mxu0
        %v1614 = vadd.f32 %v1389, %v1613
        %v1615 = vpop.f32.mrb[0].mxu0
        %1616 = vmatprep.mubr.f32.mxu0 0.0
        %v1617 = vand.u32 %v525, 4294901760
        %1618 = vmatmul.mubr.f32.gmra.mrb[0].mxu0 %v1617
        %v1619 = vpop.f32.mrb[0].mxu0
        %v1620 = vadd.f32 %v1397, %v1619
        %v1621 = vpop.f32.mrb[0].mxu0
        %1622 = vmatprep.mubr.f32.mxu0 0.0
        %v1623 = vand.u32 %v526, 4294901760
        %1624 = vmatmul.mubr.f32.gmra.mrb[0].mxu0 %v1623
        %v1625 = vpop.f32.mrb[0].mxu0
        %v1626 = vadd.f32 %v1405, %v1625
        %v1627 = vpop.f32.mrb[0].mxu0
        %1628 = vmatprep.mubr.f32.mxu0 0.0
        %v1629 = vand.u32 %v527, 4294901760
        %1630 = vmatmul.mubr.f32.gmra.mrb[0].mxu0 %v1629
        %v1631 = vpop.f32.mrb[0].mxu0
        %v1632 = vadd.f32 %v1413, %v1631
        %v1633 = vpop.f32.mrb[0].mxu0
        %1634 = vmatprep.mubr.f32.mxu0 0.0
        %v1635 = vand.u32 %v528, 4294901760
        %1636 = vmatmul.mubr.f32.gmra.mrb[0].mxu0 %v1635
        %v1637 = vpop.f32.mrb[0].mxu0
        %v1638 = vadd.f32 %v1421, %v1637
        %v1639 = vpop.f32.mrb[0].mxu0
        %1640 = vmatprep.mubr.f32.mxu0 0.0
        %v1641 = vand.u32 %v529, 4294901760
        %1642 = vmatmul.mubr.f32.gmra.mrb[0].mxu0 %v1641
        %v1643 = vpop.f32.mrb[0].mxu0
        %v1644 = vadd.f32 %v1429, %v1643
        %v1645 = vpop.f32.mrb[0].mxu0
        %1646 = vmatprep.mubr.f32.mxu0 0.0
        %v1647 = vand.u32 %v530, 4294901760
        %1648 = vmatmul.mubr.f32.gmra.mrb[0].mxu0 %v1647
        %v1649 = vpop.f32.mrb[0].mxu0
        %v1650 = vadd.f32 %v1437, %v1649
        %v1651 = vpop.f32.mrb[0].mxu0
        %1652 = vmatprep.mubr.f32.mxu0 0.0
        %v1653 = vand.u32 %v531, 4294901760
        %1654 = vmatmul.mubr.f32.gmra.mrb[0].mxu0 %v1653
        %v1655 = vpop.f32.mrb[0].mxu0
        %v1656 = vadd.f32 %v1445, %v1655
        %v1657 = vpop.f32.mrb[0].mxu0
        %1658 = vmatprep.mubr.f32.mxu0 0.0
        %v1659 = vand.u32 %v532, 4294901760
        %1660 = vmatmul.mubr.f32.gmra.mrb[0].mxu0 %v1659
        %v1661 = vpop.f32.mrb[0].mxu0
        %v1662 = vadd.f32 %v1453, %v1661
        %v1663 = vpop.f32.mrb[0].mxu0
        %1664 = vdwg.mxu0
        %1665 = vmatprep.subr.mxu0 0.0
        %v1666 = vand.u32 %v533, 4294901760
        %1667 = vmatpush1.msra.mxu0 %v1666
        %1668 = vmatprep.subr.mxu0 0.0
        %v1669 = vand.u32 %v534, 4294901760
        %1670 = vmatpush1.msra.mxu0 %v1669
        %1671 = vmatprep.subr.mxu0 0.0
        %v1672 = vand.u32 %v535, 4294901760
        %1673 = vmatpush1.msra.mxu0 %v1672
        %1674 = vmatprep.subr.mxu0 0.0
        %v1675 = vand.u32 %v536, 4294901760
        %1676 = vmatpush1.msra.mxu0 %v1675
        %1677 = vmatprep.subr.mxu0 0.0
        %v1678 = vand.u32 %v537, 4294901760
        %1679 = vmatpush1.msra.mxu0 %v1678
        %1680 = vmatprep.subr.mxu0 0.0
        %v1681 = vand.u32 %v538, 4294901760
        %1682 = vmatpush1.msra.mxu0 %v1681
        %1683 = vmatprep.subr.mxu0 0.0
        %v1684 = vand.u32 %v539, 4294901760
        %1685 = vmatpush1.msra.mxu0 %v1684
        %1686 = vmatprep.subr.mxu0 0.0
        %v1687 = vand.u32 %v540, 4294901760
        %1688 = vmatpush1.msra.mxu0 %v1687
        %1689 = vmatprep.subr.mxu0 0.0
        %v1690 = vand.u32 %v541, 4294901760
        %1691 = vmatpush1.msra.mxu0 %v1690
        %1692 = vmatprep.subr.mxu0 0.0
        %v1693 = vand.u32 %v542, 4294901760
        %1694 = vmatpush1.msra.mxu0 %v1693
        %1695 = vmatprep.subr.mxu0 0.0
        %v1696 = vand.u32 %v543, 4294901760
        %1697 = vmatpush1.msra.mxu0 %v1696
        %1698 = vmatprep.subr.mxu0 0.0
        %v1699 = vand.u32 %v544, 4294901760
        %1700 = vmatpush1.msra.mxu0 %v1699
        %1701 = vmatprep.subr.mxu0 0.0
        %v1702 = vand.u32 %v545, 4294901760
        %1703 = vmatpush1.msra.mxu0 %v1702
        %1704 = vmatprep.subr.mxu0 0.0
        %v1705 = vand.u32 %v546, 4294901760
        %1706 = vmatpush1.msra.mxu0 %v1705
        %1707 = vmatprep.subr.mxu0 0.0
        %v1708 = vand.u32 %v547, 4294901760
        %1709 = vmatpush1.msra.mxu0 %v1708
        %1710 = vmatprep.subr.mxu0 0.0
        %v1711 = vand.u32 %v548, 4294901760
        %1712 = vmatpush1.msra.mxu0 %v1711
        %1713 = vmatprep.subr.mxu0 0.0
        %1714 = vmatpush1.msra.mxu0 0.0
        %1715 = vmatprep.subr.mxu0 0.0
        %1716 = vmatpush1.msra.mxu0 0.0
        %1717 = vmatprep.subr.mxu0 0.0
        %1718 = vmatpush1.msra.mxu0 0.0
        %1719 = vmatprep.subr.mxu0 0.0
        %1720 = vmatpush1.msra.mxu0 0.0
        %1721 = vmatprep.subr.mxu0 0.0
        %1722 = vmatpush1.msra.mxu0 0.0
        %1723 = vmatprep.subr.mxu0 0.0
        %1724 = vmatpush1.msra.mxu0 0.0
        %1725 = vmatprep.subr.mxu0 0.0
        %1726 = vmatpush1.msra.mxu0 0.0
        %1727 = vmatprep.subr.mxu0 0.0
        %1728 = vmatpush1.msra.mxu0 0.0
        %1729 = vmatprep.subr.mxu0 0.0
        %1730 = vmatpush1.msra.mxu0 0.0
        %1731 = vmatprep.subr.mxu0 0.0
        %1732 = vmatpush1.msra.mxu0 0.0
        %1733 = vmatprep.subr.mxu0 0.0
        %1734 = vmatpush1.msra.mxu0 0.0
        %1735 = vmatprep.subr.mxu0 0.0
        %1736 = vmatpush1.msra.mxu0 0.0
        %1737 = vmatprep.subr.mxu0 0.0
        %1738 = vmatpush1.msra.mxu0 0.0
        %1739 = vmatprep.subr.mxu0 0.0
        %1740 = vmatpush1.msra.mxu0 0.0
        %1741 = vmatprep.subr.mxu0 0.0
        %1742 = vmatpush1.msra.mxu0 0.0
        %1743 = vmatprep.subr.mxu0 0.0
        %1744 = vmatpush1.msra.mxu0 0.0
        %1745 = vmatprep.mubr.f32.mxu0 0.0
        %v1746 = vand.u32 %v517, 4294901760
        %1747 = vmatmul.mubr.f32.gmra.mrb[0].mxu0 %v1746
        %v1748 = vpop.f32.mrb[0].mxu0
        %v1749 = vadd.f32 %v1572, %v1748
        %v1750 = vpop.f32.mrb[0].mxu0
        %1751 = vmatprep.mubr.f32.mxu0 0.0
        %v1752 = vand.u32 %v518, 4294901760
        %1753 = vmatmul.mubr.f32.gmra.mrb[0].mxu0 %v1752
        %v1754 = vpop.f32.mrb[0].mxu0
        %v1755 = vadd.f32 %v1578, %v1754
        %v1756 = vpop.f32.mrb[0].mxu0
        %1757 = vmatprep.mubr.f32.mxu0 0.0
        %v1758 = vand.u32 %v519, 4294901760
        %1759 = vmatmul.mubr.f32.gmra.mrb[0].mxu0 %v1758
        %v1760 = vpop.f32.mrb[0].mxu0
        %v1761 = vadd.f32 %v1584, %v1760
        %v1762 = vpop.f32.mrb[0].mxu0
        %1763 = vmatprep.mubr.f32.mxu0 0.0
        %v1764 = vand.u32 %v520, 4294901760
        %1765 = vmatmul.mubr.f32.gmra.mrb[0].mxu0 %v1764
        %v1766 = vpop.f32.mrb[0].mxu0
        %v1767 = vadd.f32 %v1590, %v1766
        %v1768 = vpop.f32.mrb[0].mxu0
        %1769 = vmatprep.mubr.f32.mxu0 0.0
        %v1770 = vand.u32 %v521, 4294901760
        %1771 = vmatmul.mubr.f32.gmra.mrb[0].mxu0 %v1770
        %v1772 = vpop.f32.mrb[0].mxu0
        %v1773 = vadd.f32 %v1596, %v1772
        %v1774 = vpop.f32.mrb[0].mxu0
        %1775 = vmatprep.mubr.f32.mxu0 0.0
        %v1776 = vand.u32 %v522, 4294901760
        %1777 = vmatmul.mubr.f32.gmra.mrb[0].mxu0 %v1776
        %v1778 = vpop.f32.mrb[0].mxu0
        %v1779 = vadd.f32 %v1602, %v1778
        %v1780 = vpop.f32.mrb[0].mxu0
        %1781 = vmatprep.mubr.f32.mxu0 0.0
        %v1782 = vand.u32 %v523, 4294901760
        %1783 = vmatmul.mubr.f32.gmra.mrb[0].mxu0 %v1782
        %v1784 = vpop.f32.mrb[0].mxu0
        %v1785 = vadd.f32 %v1608, %v1784
        %v1786 = vpop.f32.mrb[0].mxu0
        %1787 = vmatprep.mubr.f32.mxu0 0.0
        %v1788 = vand.u32 %v524, 4294901760
        %1789 = vmatmul.mubr.f32.gmra.mrb[0].mxu0 %v1788
        %v1790 = vpop.f32.mrb[0].mxu0
        %v1791 = vadd.f32 %v1614, %v1790
        %v1792 = vpop.f32.mrb[0].mxu0
        %1793 = vmatprep.mubr.f32.mxu0 0.0
        %v1794 = vand.u32 %v525, 4294901760
        %1795 = vmatmul.mubr.f32.gmra.mrb[0].mxu0 %v1794
        %v1796 = vpop.f32.mrb[0].mxu0
        %v1797 = vadd.f32 %v1620, %v1796
        %v1798 = vpop.f32.mrb[0].mxu0
        %1799 = vmatprep.mubr.f32.mxu0 0.0
        %v1800 = vand.u32 %v526, 4294901760
        %1801 = vmatmul.mubr.f32.gmra.mrb[0].mxu0 %v1800
        %v1802 = vpop.f32.mrb[0].mxu0
        %v1803 = vadd.f32 %v1626, %v1802
        %v1804 = vpop.f32.mrb[0].mxu0
        %1805 = vmatprep.mubr.f32.mxu0 0.0
        %v1806 = vand.u32 %v527, 4294901760
        %1807 = vmatmul.mubr.f32.gmra.mrb[0].mxu0 %v1806
        %v1808 = vpop.f32.mrb[0].mxu0
        %v1809 = vadd.f32 %v1632, %v1808
        %v1810 = vpop.f32.mrb[0].mxu0
        %1811 = vmatprep.mubr.f32.mxu0 0.0
        %v1812 = vand.u32 %v528, 4294901760
        %1813 = vmatmul.mubr.f32.gmra.mrb[0].mxu0 %v1812
        %v1814 = vpop.f32.mrb[0].mxu0
        %v1815 = vadd.f32 %v1638, %v1814
        %v1816 = vpop.f32.mrb[0].mxu0
        %1817 = vmatprep.mubr.f32.mxu0 0.0
        %v1818 = vand.u32 %v529, 4294901760
        %1819 = vmatmul.mubr.f32.gmra.mrb[0].mxu0 %v1818
        %v1820 = vpop.f32.mrb[0].mxu0
        %v1821 = vadd.f32 %v1644, %v1820
        %v1822 = vpop.f32.mrb[0].mxu0
        %1823 = vmatprep.mubr.f32.mxu0 0.0
        %v1824 = vand.u32 %v530, 4294901760
        %1825 = vmatmul.mubr.f32.gmra.mrb[0].mxu0 %v1824
        %v1826 = vpop.f32.mrb[0].mxu0
        %v1827 = vadd.f32 %v1650, %v1826
        %v1828 = vpop.f32.mrb[0].mxu0
        %1829 = vmatprep.mubr.f32.mxu0 0.0
        %v1830 = vand.u32 %v531, 4294901760
        %1831 = vmatmul.mubr.f32.gmra.mrb[0].mxu0 %v1830
        %v1832 = vpop.f32.mrb[0].mxu0
        %v1833 = vadd.f32 %v1656, %v1832
        %v1834 = vpop.f32.mrb[0].mxu0
        %1835 = vmatprep.mubr.f32.mxu0 0.0
        %v1836 = vand.u32 %v532, 4294901760
        %1837 = vmatmul.mubr.f32.gmra.mrb[0].mxu0 %v1836
        %v1838 = vpop.f32.mrb[0].mxu0
        %v1839 = vadd.f32 %v1662, %v1838
        %v1840 = vpop.f32.mrb[0].mxu0
        %1841 = vdwg.mxu0
        %v1842 = vmax.f32 %v1749, 0.0
        %v1843 = vmax.f32 %v1755, 0.0
        %v1844 = vmax.f32 %v1761, 0.0
        %v1845 = vmax.f32 %v1767, 0.0
        %v1846 = vmax.f32 %v1773, 0.0
        %v1847 = vmax.f32 %v1779, 0.0
        %v1848 = vmax.f32 %v1785, 0.0
        %v1849 = vmax.f32 %v1791, 0.0
        %v1850 = vmax.f32 %v1797, 0.0
        %v1851 = vmax.f32 %v1803, 0.0
        %v1852 = vmax.f32 %v1809, 0.0
        %v1853 = vmax.f32 %v1815, 0.0
        %v1854 = vmax.f32 %v1821, 0.0
        %v1855 = vmax.f32 %v1827, 0.0
        %v1856 = vmax.f32 %v1833, 0.0
        %v1857 = vmax.f32 %v1839, 0.0
        %v1858 = vrot.slane %v1842, 4
        %v1859 = vadd.f32 %v1842, %v1858
        %v1860 = vrot.slane %v1859, 2
        %v1861 = vadd.f32 %v1859, %v1860
        %v1862 = vrot.slane %v1861, 1
        %v1863 = vadd.f32 %v1861, %v1862
        %v1864 = vrot.slane %v1843, 4
        %v1865 = vadd.f32 %v1843, %v1864
        %v1866 = vrot.slane %v1865, 2
        %v1867 = vadd.f32 %v1865, %v1866
        %v1868 = vrot.slane %v1867, 1
        %v1869 = vadd.f32 %v1867, %v1868
        %v1870 = vrot.slane %v1844, 4
        %v1871 = vadd.f32 %v1844, %v1870
        %v1872 = vrot.slane %v1871, 2
        %v1873 = vadd.f32 %v1871, %v1872
        %v1874 = vrot.slane %v1873, 1
        %v1875 = vadd.f32 %v1873, %v1874
        %v1876 = vrot.slane %v1845, 4
        %v1877 = vadd.f32 %v1845, %v1876
        %v1878 = vrot.slane %v1877, 2
        %v1879 = vadd.f32 %v1877, %v1878
        %v1880 = vrot.slane %v1879, 1
        %v1881 = vadd.f32 %v1879, %v1880
        %v1882 = vrot.slane %v1846, 4
        %v1883 = vadd.f32 %v1846, %v1882
        %v1884 = vrot.slane %v1883, 2
        %v1885 = vadd.f32 %v1883, %v1884
        %v1886 = vrot.slane %v1885, 1
        %v1887 = vadd.f32 %v1885, %v1886
        %v1888 = vrot.slane %v1847, 4
        %v1889 = vadd.f32 %v1847, %v1888
        %v1890 = vrot.slane %v1889, 2
        %v1891 = vadd.f32 %v1889, %v1890
        %v1892 = vrot.slane %v1891, 1
        %v1893 = vadd.f32 %v1891, %v1892
        %v1894 = vrot.slane %v1848, 4
        %v1895 = vadd.f32 %v1848, %v1894
        %v1896 = vrot.slane %v1895, 2
        %v1897 = vadd.f32 %v1895, %v1896
        %v1898 = vrot.slane %v1897, 1
        %v1899 = vadd.f32 %v1897, %v1898
        %v1900 = vrot.slane %v1849, 4
        %v1901 = vadd.f32 %v1849, %v1900
        %v1902 = vrot.slane %v1901, 2
        %v1903 = vadd.f32 %v1901, %v1902
        %v1904 = vrot.slane %v1903, 1
        %v1905 = vadd.f32 %v1903, %v1904
        %v1906 = vrot.slane %v1850, 4
        %v1907 = vadd.f32 %v1850, %v1906
        %v1908 = vrot.slane %v1907, 2
        %v1909 = vadd.f32 %v1907, %v1908
        %v1910 = vrot.slane %v1909, 1
        %v1911 = vadd.f32 %v1909, %v1910
        %v1912 = vrot.slane %v1851, 4
        %v1913 = vadd.f32 %v1851, %v1912
        %v1914 = vrot.slane %v1913, 2
        %v1915 = vadd.f32 %v1913, %v1914
        %v1916 = vrot.slane %v1915, 1
        %v1917 = vadd.f32 %v1915, %v1916
        %v1918 = vrot.slane %v1852, 4
        %v1919 = vadd.f32 %v1852, %v1918
        %v1920 = vrot.slane %v1919, 2
        %v1921 = vadd.f32 %v1919, %v1920
        %v1922 = vrot.slane %v1921, 1
        %v1923 = vadd.f32 %v1921, %v1922
        %v1924 = vrot.slane %v1853, 4
        %v1925 = vadd.f32 %v1853, %v1924
        %v1926 = vrot.slane %v1925, 2
        %v1927 = vadd.f32 %v1925, %v1926
        %v1928 = vrot.slane %v1927, 1
        %v1929 = vadd.f32 %v1927, %v1928
        %v1930 = vrot.slane %v1854, 4
        %v1931 = vadd.f32 %v1854, %v1930
        %v1932 = vrot.slane %v1931, 2
        %v1933 = vadd.f32 %v1931, %v1932
        %v1934 = vrot.slane %v1933, 1
        %v1935 = vadd.f32 %v1933, %v1934
        %v1936 = vrot.slane %v1855, 4
        %v1937 = vadd.f32 %v1855, %v1936
        %v1938 = vrot.slane %v1937, 2
        %v1939 = vadd.f32 %v1937, %v1938
        %v1940 = vrot.slane %v1939, 1
        %v1941 = vadd.f32 %v1939, %v1940
        %v1942 = vrot.slane %v1856, 4
        %v1943 = vadd.f32 %v1856, %v1942
        %v1944 = vrot.slane %v1943, 2
        %v1945 = vadd.f32 %v1943, %v1944
        %v1946 = vrot.slane %v1945, 1
        %v1947 = vadd.f32 %v1945, %v1946
        %v1948 = vrot.slane %v1857, 4
        %v1949 = vadd.f32 %v1857, %v1948
        %v1950 = vrot.slane %v1949, 2
        %v1951 = vadd.f32 %v1949, %v1950
        %v1952 = vrot.slane %v1951, 1
        %v1953 = vadd.f32 %v1951, %v1952
        %v1954 = vld [vmem:[%s3] sm:$0xff]
        %v1955 = vld [vmem:[%s3 + $0x8] sm:$0xff]
        %v1956 = vld [vmem:[%s3 + $0x10] sm:$0xff]
        %v1957 = vld [vmem:[%s3 + $0x18] sm:$0xff]
        %v1958 = vld [vmem:[%s3 + $0x20] sm:$0xff]
        %v1959 = vld [vmem:[%s3 + $0x28] sm:$0xff]
        %v1960 = vld [vmem:[%s3 + $0x30] sm:$0xff]
        %v1961 = vld [vmem:[%s3 + $0x38] sm:$0xff]
        %v1962 = vld [vmem:[%s3 + $0x40] sm:$0xff]
        %v1963 = vld [vmem:[%s3 + $0x48] sm:$0xff]
        %v1964 = vld [vmem:[%s3 + $0x50] sm:$0xff]
        %v1965 = vld [vmem:[%s3 + $0x58] sm:$0xff]
        %v1966 = vld [vmem:[%s3 + $0x60] sm:$0xff]
        %v1967 = vld [vmem:[%s3 + $0x68] sm:$0xff]
        %v1968 = vld [vmem:[%s3 + $0x70] sm:$0xff]
        %v1969 = vld [vmem:[%s3 + $0x78] sm:$0xff]
        %v1970 = vld [vmem:[%s3 + $0x80] sm:$0xff]
        %v1971 = vld [vmem:[%s3 + $0x88] sm:$0xff]
        %v1972 = vld [vmem:[%s3 + $0x90] sm:$0xff]
        %v1973 = vld [vmem:[%s3 + $0x98] sm:$0xff]
        %v1974 = vld [vmem:[%s3 + $0xa0] sm:$0xff]
        %v1975 = vld [vmem:[%s3 + $0xa8] sm:$0xff]
        %v1976 = vld [vmem:[%s3 + $0xb0] sm:$0xff]
        %v1977 = vld [vmem:[%s3 + $0xb8] sm:$0xff]
        %v1978 = vld [vmem:[%s3 + $0xc0] sm:$0xff]
        %v1979 = vld [vmem:[%s3 + $0xc8] sm:$0xff]
        %v1980 = vld [vmem:[%s3 + $0xd0] sm:$0xff]
        %v1981 = vld [vmem:[%s3 + $0xd8] sm:$0xff]
        %v1982 = vld [vmem:[%s3 + $0xe0] sm:$0xff]
        %v1983 = vld [vmem:[%s3 + $0xe8] sm:$0xff]
        %v1984 = vld [vmem:[%s3 + $0xf0] sm:$0xff]
        %v1985 = vld [vmem:[%s3 + $0xf8] sm:$0xff]
        %v1986 = vld [vmem:[%s4] sm:$0x3]
        %v1988 = vlaneseq
        %v1989 = vshrl.u32 %v1988, 7
        %v1990 = vsub.s32 0, %v1989
        %v1991 = vrot.slane %v1986, %v1990
        %v1992 = vlaneseq
        %v1993 = vshrl.u32 %v1992, 7
        %v1994 = vsub.s32 1, %v1993
        %v1995 = vrot.slane %v1986, %v1994
        %vm2014 = vcmask 1041409
        %v2015 = vsel %vm2014, %v1869, %v1863
        %vm2016 = vcmask 1042434
        %v2017 = vsel %vm2016, %v1875, %v2015
        %vm2018 = vcmask 1043459
        %v2019 = vsel %vm2018, %v1881, %v2017
        %vm2020 = vcmask 1044484
        %v2021 = vsel %vm2020, %v1887, %v2019
        %vm2022 = vcmask 1045509
        %v2023 = vsel %vm2022, %v1893, %v2021
        %vm2024 = vcmask 1046534
        %v2025 = vsel %vm2024, %v1899, %v2023
        %vm2026 = vcmask 1047559
        %v2027 = vsel %vm2026, %v1905, %v2025
        %v2028 = vsel %vm2014, %v1917, %v1911
        %v2029 = vsel %vm2016, %v1923, %v2028
        %v2030 = vsel %vm2018, %v1929, %v2029
        %v2031 = vsel %vm2020, %v1935, %v2030
        %v2032 = vsel %vm2022, %v1941, %v2031
        %v2033 = vsel %vm2024, %v1947, %v2032
        %v2034 = vsel %vm2026, %v1953, %v2033
        %v2037 = vand.u32 %v1955, 4294901760
        %2038 = vmatprep.subr.mxu0 %v2037
        %v2039 = vand.u32 %v1954, 4294901760
        %2040 = vmatpush1.msra.mxu0 %v2039
        %v2041 = vand.u32 %v1957, 4294901760
        %2042 = vmatprep.subr.mxu0 %v2041
        %v2043 = vand.u32 %v1956, 4294901760
        %2044 = vmatpush1.msra.mxu0 %v2043
        %v2045 = vand.u32 %v1959, 4294901760
        %2046 = vmatprep.subr.mxu0 %v2045
        %v2047 = vand.u32 %v1958, 4294901760
        %2048 = vmatpush1.msra.mxu0 %v2047
        %v2049 = vand.u32 %v1961, 4294901760
        %2050 = vmatprep.subr.mxu0 %v2049
        %v2051 = vand.u32 %v1960, 4294901760
        %2052 = vmatpush1.msra.mxu0 %v2051
        %v2053 = vand.u32 %v1963, 4294901760
        %2054 = vmatprep.subr.mxu0 %v2053
        %v2055 = vand.u32 %v1962, 4294901760
        %2056 = vmatpush1.msra.mxu0 %v2055
        %v2057 = vand.u32 %v1965, 4294901760
        %2058 = vmatprep.subr.mxu0 %v2057
        %v2059 = vand.u32 %v1964, 4294901760
        %2060 = vmatpush1.msra.mxu0 %v2059
        %v2061 = vand.u32 %v1967, 4294901760
        %2062 = vmatprep.subr.mxu0 %v2061
        %v2063 = vand.u32 %v1966, 4294901760
        %2064 = vmatpush1.msra.mxu0 %v2063
        %v2065 = vand.u32 %v1969, 4294901760
        %2066 = vmatprep.subr.mxu0 %v2065
        %v2067 = vand.u32 %v1968, 4294901760
        %2068 = vmatpush1.msra.mxu0 %v2067
        %v2069 = vand.u32 %v1971, 4294901760
        %2070 = vmatprep.subr.mxu0 %v2069
        %v2071 = vand.u32 %v1970, 4294901760
        %2072 = vmatpush1.msra.mxu0 %v2071
        %v2073 = vand.u32 %v1973, 4294901760
        %2074 = vmatprep.subr.mxu0 %v2073
        %v2075 = vand.u32 %v1972, 4294901760
        %2076 = vmatpush1.msra.mxu0 %v2075
        %v2077 = vand.u32 %v1975, 4294901760
        %2078 = vmatprep.subr.mxu0 %v2077
        %v2079 = vand.u32 %v1974, 4294901760
        %2080 = vmatpush1.msra.mxu0 %v2079
        %v2081 = vand.u32 %v1977, 4294901760
        %2082 = vmatprep.subr.mxu0 %v2081
        %v2083 = vand.u32 %v1976, 4294901760
        %2084 = vmatpush1.msra.mxu0 %v2083
        %v2085 = vand.u32 %v1979, 4294901760
        %2086 = vmatprep.subr.mxu0 %v2085
        %v2087 = vand.u32 %v1978, 4294901760
        %2088 = vmatpush1.msra.mxu0 %v2087
        %v2089 = vand.u32 %v1981, 4294901760
        %2090 = vmatprep.subr.mxu0 %v2089
        %v2091 = vand.u32 %v1980, 4294901760
        %2092 = vmatpush1.msra.mxu0 %v2091
        %v2093 = vand.u32 %v1983, 4294901760
        %2094 = vmatprep.subr.mxu0 %v2093
        %v2095 = vand.u32 %v1982, 4294901760
        %2096 = vmatpush1.msra.mxu0 %v2095
        %v2097 = vand.u32 %v1985, 4294901760
        %2098 = vmatprep.subr.mxu0 %v2097
        %v2099 = vand.u32 %v1984, 4294901760
        %2100 = vmatpush1.msra.mxu0 %v2099
        %2101 = vmatprep.subr.mxu0 0.0
        %2102 = vmatpush1.msra.mxu0 0.0
        %2103 = vmatprep.subr.mxu0 0.0
        %2104 = vmatpush1.msra.mxu0 0.0
        %2105 = vmatprep.subr.mxu0 0.0
        %2106 = vmatpush1.msra.mxu0 0.0
        %2107 = vmatprep.subr.mxu0 0.0
        %2108 = vmatpush1.msra.mxu0 0.0
        %2109 = vmatprep.subr.mxu0 0.0
        %2110 = vmatpush1.msra.mxu0 0.0
        %2111 = vmatprep.subr.mxu0 0.0
        %2112 = vmatpush1.msra.mxu0 0.0
        %2113 = vmatprep.subr.mxu0 0.0
        %2114 = vmatpush1.msra.mxu0 0.0
        %2115 = vmatprep.subr.mxu0 0.0
        %2116 = vmatpush1.msra.mxu0 0.0
        %2117 = vmatprep.subr.mxu0 0.0
        %2118 = vmatpush1.msra.mxu0 0.0
        %2119 = vmatprep.subr.mxu0 0.0
        %2120 = vmatpush1.msra.mxu0 0.0
        %2121 = vmatprep.subr.mxu0 0.0
        %2122 = vmatpush1.msra.mxu0 0.0
        %2123 = vmatprep.subr.mxu0 0.0
        %2124 = vmatpush1.msra.mxu0 0.0
        %2125 = vmatprep.subr.mxu0 0.0
        %2126 = vmatpush1.msra.mxu0 0.0
        %2127 = vmatprep.subr.mxu0 0.0
        %2128 = vmatpush1.msra.mxu0 0.0
        %2129 = vmatprep.subr.mxu0 0.0
        %2130 = vmatpush1.msra.mxu0 0.0
        %2131 = vmatprep.subr.mxu0 0.0
        %2132 = vmatpush1.msra.mxu0 0.0
        %2133 = vmatprep.mubr.f32.mxu0 0.0
        %v2134 = vand.u32 %v2027, 4294901760
        %v2135 = vsub.f32 %v2027, %v2134
        %v2136 = vand.u32 %v2135, 4294901760
        %v2137 = vsub.f32 %v2135, %v2136
        %v2138 = vand.u32 %v2137, 4294901760
        %2139 = vmatmul.mubr.f32.gmra.mrb[0].mxu0 %v2138
        %v2140 = vpop.f32.mrb[0].mxu0
        %v2141 = vadd.f32 %v1991, %v2140
        %v2142 = vpop.f32.mrb[0].mxu0
        %v2143 = vadd.f32 %v1995, %v2142
        %2144 = vmatprep.mubr.f32.mxu0 0.0
        %v2145 = vand.u32 %v2034, 4294901760
        %v2146 = vsub.f32 %v2034, %v2145
        %v2147 = vand.u32 %v2146, 4294901760
        %v2148 = vsub.f32 %v2146, %v2147
        %v2149 = vand.u32 %v2148, 4294901760
        %2150 = vmatmul.mubr.f32.gmra.mrb[0].mxu0 %v2149
        %v2151 = vpop.f32.mrb[0].mxu0
        %v2152 = vadd.f32 %v1991, %v2151
        %v2153 = vpop.f32.mrb[0].mxu0
        %v2154 = vadd.f32 %v1995, %v2153
        %2155 = vdwg.mxu0
        %v2156 = vand.u32 %v1955, 4294901760
        %v2157 = vsub.f32 %v1955, %v2156
        %v2158 = vand.u32 %v2157, 4294901760
        %v2159 = vsub.f32 %v2157, %v2158
        %v2160 = vand.u32 %v2159, 4294901760
        %2161 = vmatprep.subr.mxu0 %v2160
        %v2162 = vand.u32 %v1954, 4294901760
        %v2163 = vsub.f32 %v1954, %v2162
        %v2164 = vand.u32 %v2163, 4294901760
        %v2165 = vsub.f32 %v2163, %v2164
        %v2166 = vand.u32 %v2165, 4294901760
        %2167 = vmatpush1.msra.mxu0 %v2166
        %v2168 = vand.u32 %v1957, 4294901760
        %v2169 = vsub.f32 %v1957, %v2168
        %v2170 = vand.u32 %v2169, 4294901760
        %v2171 = vsub.f32 %v2169, %v2170
        %v2172 = vand.u32 %v2171, 4294901760
        %2173 = vmatprep.subr.mxu0 %v2172
        %v2174 = vand.u32 %v1956, 4294901760
        %v2175 = vsub.f32 %v1956, %v2174
        %v2176 = vand.u32 %v2175, 4294901760
        %v2177 = vsub.f32 %v2175, %v2176
        %v2178 = vand.u32 %v2177, 4294901760
        %2179 = vmatpush1.msra.mxu0 %v2178
        %v2180 = vand.u32 %v1959, 4294901760
        %v2181 = vsub.f32 %v1959, %v2180
        %v2182 = vand.u32 %v2181, 4294901760
        %v2183 = vsub.f32 %v2181, %v2182
        %v2184 = vand.u32 %v2183, 4294901760
        %2185 = vmatprep.subr.mxu0 %v2184
        %v2186 = vand.u32 %v1958, 4294901760
        %v2187 = vsub.f32 %v1958, %v2186
        %v2188 = vand.u32 %v2187, 4294901760
        %v2189 = vsub.f32 %v2187, %v2188
        %v2190 = vand.u32 %v2189, 4294901760
        %2191 = vmatpush1.msra.mxu0 %v2190
        %v2192 = vand.u32 %v1961, 4294901760
        %v2193 = vsub.f32 %v1961, %v2192
        %v2194 = vand.u32 %v2193, 4294901760
        %v2195 = vsub.f32 %v2193, %v2194
        %v2196 = vand.u32 %v2195, 4294901760
        %2197 = vmatprep.subr.mxu0 %v2196
        %v2198 = vand.u32 %v1960, 4294901760
        %v2199 = vsub.f32 %v1960, %v2198
        %v2200 = vand.u32 %v2199, 4294901760
        %v2201 = vsub.f32 %v2199, %v2200
        %v2202 = vand.u32 %v2201, 4294901760
        %2203 = vmatpush1.msra.mxu0 %v2202
        %v2204 = vand.u32 %v1963, 4294901760
        %v2205 = vsub.f32 %v1963, %v2204
        %v2206 = vand.u32 %v2205, 4294901760
        %v2207 = vsub.f32 %v2205, %v2206
        %v2208 = vand.u32 %v2207, 4294901760
        %2209 = vmatprep.subr.mxu0 %v2208
        %v2210 = vand.u32 %v1962, 4294901760
        %v2211 = vsub.f32 %v1962, %v2210
        %v2212 = vand.u32 %v2211, 4294901760
        %v2213 = vsub.f32 %v2211, %v2212
        %v2214 = vand.u32 %v2213, 4294901760
        %2215 = vmatpush1.msra.mxu0 %v2214
        %v2216 = vand.u32 %v1965, 4294901760
        %v2217 = vsub.f32 %v1965, %v2216
        %v2218 = vand.u32 %v2217, 4294901760
        %v2219 = vsub.f32 %v2217, %v2218
        %v2220 = vand.u32 %v2219, 4294901760
        %2221 = vmatprep.subr.mxu0 %v2220
        %v2222 = vand.u32 %v1964, 4294901760
        %v2223 = vsub.f32 %v1964, %v2222
        %v2224 = vand.u32 %v2223, 4294901760
        %v2225 = vsub.f32 %v2223, %v2224
        %v2226 = vand.u32 %v2225, 4294901760
        %2227 = vmatpush1.msra.mxu0 %v2226
        %v2228 = vand.u32 %v1967, 4294901760
        %v2229 = vsub.f32 %v1967, %v2228
        %v2230 = vand.u32 %v2229, 4294901760
        %v2231 = vsub.f32 %v2229, %v2230
        %v2232 = vand.u32 %v2231, 4294901760
        %2233 = vmatprep.subr.mxu0 %v2232
        %v2234 = vand.u32 %v1966, 4294901760
        %v2235 = vsub.f32 %v1966, %v2234
        %v2236 = vand.u32 %v2235, 4294901760
        %v2237 = vsub.f32 %v2235, %v2236
        %v2238 = vand.u32 %v2237, 4294901760
        %2239 = vmatpush1.msra.mxu0 %v2238
        %v2240 = vand.u32 %v1969, 4294901760
        %v2241 = vsub.f32 %v1969, %v2240
        %v2242 = vand.u32 %v2241, 4294901760
        %v2243 = vsub.f32 %v2241, %v2242
        %v2244 = vand.u32 %v2243, 4294901760
        %2245 = vmatprep.subr.mxu0 %v2244
        %v2246 = vand.u32 %v1968, 4294901760
        %v2247 = vsub.f32 %v1968, %v2246
        %v2248 = vand.u32 %v2247, 4294901760
        %v2249 = vsub.f32 %v2247, %v2248
        %v2250 = vand.u32 %v2249, 4294901760
        %2251 = vmatpush1.msra.mxu0 %v2250
        %v2252 = vand.u32 %v1971, 4294901760
        %v2253 = vsub.f32 %v1971, %v2252
        %v2254 = vand.u32 %v2253, 4294901760
        %v2255 = vsub.f32 %v2253, %v2254
        %v2256 = vand.u32 %v2255, 4294901760
        %2257 = vmatprep.subr.mxu0 %v2256
        %v2258 = vand.u32 %v1970, 4294901760
        %v2259 = vsub.f32 %v1970, %v2258
        %v2260 = vand.u32 %v2259, 4294901760
        %v2261 = vsub.f32 %v2259, %v2260
        %v2262 = vand.u32 %v2261, 4294901760
        %2263 = vmatpush1.msra.mxu0 %v2262
        %v2264 = vand.u32 %v1973, 4294901760
        %v2265 = vsub.f32 %v1973, %v2264
        %v2266 = vand.u32 %v2265, 4294901760
        %v2267 = vsub.f32 %v2265, %v2266
        %v2268 = vand.u32 %v2267, 4294901760
        %2269 = vmatprep.subr.mxu0 %v2268
        %v2270 = vand.u32 %v1972, 4294901760
        %v2271 = vsub.f32 %v1972, %v2270
        %v2272 = vand.u32 %v2271, 4294901760
        %v2273 = vsub.f32 %v2271, %v2272
        %v2274 = vand.u32 %v2273, 4294901760
        %2275 = vmatpush1.msra.mxu0 %v2274
        %v2276 = vand.u32 %v1975, 4294901760
        %v2277 = vsub.f32 %v1975, %v2276
        %v2278 = vand.u32 %v2277, 4294901760
        %v2279 = vsub.f32 %v2277, %v2278
        %v2280 = vand.u32 %v2279, 4294901760
        %2281 = vmatprep.subr.mxu0 %v2280
        %v2282 = vand.u32 %v1974, 4294901760
        %v2283 = vsub.f32 %v1974, %v2282
        %v2284 = vand.u32 %v2283, 4294901760
        %v2285 = vsub.f32 %v2283, %v2284
        %v2286 = vand.u32 %v2285, 4294901760
        %2287 = vmatpush1.msra.mxu0 %v2286
        %v2288 = vand.u32 %v1977, 4294901760
        %v2289 = vsub.f32 %v1977, %v2288
        %v2290 = vand.u32 %v2289, 4294901760
        %v2291 = vsub.f32 %v2289, %v2290
        %v2292 = vand.u32 %v2291, 4294901760
        %2293 = vmatprep.subr.mxu0 %v2292
        %v2294 = vand.u32 %v1976, 4294901760
        %v2295 = vsub.f32 %v1976, %v2294
        %v2296 = vand.u32 %v2295, 4294901760
        %v2297 = vsub.f32 %v2295, %v2296
        %v2298 = vand.u32 %v2297, 4294901760
        %2299 = vmatpush1.msra.mxu0 %v2298
        %v2300 = vand.u32 %v1979, 4294901760
        %v2301 = vsub.f32 %v1979, %v2300
        %v2302 = vand.u32 %v2301, 4294901760
        %v2303 = vsub.f32 %v2301, %v2302
        %v2304 = vand.u32 %v2303, 4294901760
        %2305 = vmatprep.subr.mxu0 %v2304
        %v2306 = vand.u32 %v1978, 4294901760
        %v2307 = vsub.f32 %v1978, %v2306
        %v2308 = vand.u32 %v2307, 4294901760
        %v2309 = vsub.f32 %v2307, %v2308
        %v2310 = vand.u32 %v2309, 4294901760
        %2311 = vmatpush1.msra.mxu0 %v2310
        %v2312 = vand.u32 %v1981, 4294901760
        %v2313 = vsub.f32 %v1981, %v2312
        %v2314 = vand.u32 %v2313, 4294901760
        %v2315 = vsub.f32 %v2313, %v2314
        %v2316 = vand.u32 %v2315, 4294901760
        %2317 = vmatprep.subr.mxu0 %v2316
        %v2318 = vand.u32 %v1980, 4294901760
        %v2319 = vsub.f32 %v1980, %v2318
        %v2320 = vand.u32 %v2319, 4294901760
        %v2321 = vsub.f32 %v2319, %v2320
        %v2322 = vand.u32 %v2321, 4294901760
        %2323 = vmatpush1.msra.mxu0 %v2322
        %v2324 = vand.u32 %v1983, 4294901760
        %v2325 = vsub.f32 %v1983, %v2324
        %v2326 = vand.u32 %v2325, 4294901760
        %v2327 = vsub.f32 %v2325, %v2326
        %v2328 = vand.u32 %v2327, 4294901760
        %2329 = vmatprep.subr.mxu0 %v2328
        %v2330 = vand.u32 %v1982, 4294901760
        %v2331 = vsub.f32 %v1982, %v2330
        %v2332 = vand.u32 %v2331, 4294901760
        %v2333 = vsub.f32 %v2331, %v2332
        %v2334 = vand.u32 %v2333, 4294901760
        %2335 = vmatpush1.msra.mxu0 %v2334
        %v2336 = vand.u32 %v1985, 4294901760
        %v2337 = vsub.f32 %v1985, %v2336
        %v2338 = vand.u32 %v2337, 4294901760
        %v2339 = vsub.f32 %v2337, %v2338
        %v2340 = vand.u32 %v2339, 4294901760
        %2341 = vmatprep.subr.mxu0 %v2340
        %v2342 = vand.u32 %v1984, 4294901760
        %v2343 = vsub.f32 %v1984, %v2342
        %v2344 = vand.u32 %v2343, 4294901760
        %v2345 = vsub.f32 %v2343, %v2344
        %v2346 = vand.u32 %v2345, 4294901760
        %2347 = vmatpush1.msra.mxu0 %v2346
        %2348 = vmatprep.subr.mxu0 0.0
        %2349 = vmatpush1.msra.mxu0 0.0
        %2350 = vmatprep.subr.mxu0 0.0
        %2351 = vmatpush1.msra.mxu0 0.0
        %2352 = vmatprep.subr.mxu0 0.0
        %2353 = vmatpush1.msra.mxu0 0.0
        %2354 = vmatprep.subr.mxu0 0.0
        %2355 = vmatpush1.msra.mxu0 0.0
        %2356 = vmatprep.subr.mxu0 0.0
        %2357 = vmatpush1.msra.mxu0 0.0
        %2358 = vmatprep.subr.mxu0 0.0
        %2359 = vmatpush1.msra.mxu0 0.0
        %2360 = vmatprep.subr.mxu0 0.0
        %2361 = vmatpush1.msra.mxu0 0.0
        %2362 = vmatprep.subr.mxu0 0.0
        %2363 = vmatpush1.msra.mxu0 0.0
        %2364 = vmatprep.subr.mxu0 0.0
        %2365 = vmatpush1.msra.mxu0 0.0
        %2366 = vmatprep.subr.mxu0 0.0
        %2367 = vmatpush1.msra.mxu0 0.0
        %2368 = vmatprep.subr.mxu0 0.0
        %2369 = vmatpush1.msra.mxu0 0.0
        %2370 = vmatprep.subr.mxu0 0.0
        %2371 = vmatpush1.msra.mxu0 0.0
        %2372 = vmatprep.subr.mxu0 0.0
        %2373 = vmatpush1.msra.mxu0 0.0
        %2374 = vmatprep.subr.mxu0 0.0
        %2375 = vmatpush1.msra.mxu0 0.0
        %2376 = vmatprep.subr.mxu0 0.0
        %2377 = vmatpush1.msra.mxu0 0.0
        %2378 = vmatprep.subr.mxu0 0.0
        %2379 = vmatpush1.msra.mxu0 0.0
        %2380 = vmatprep.mubr.f32.mxu0 0.0
        %v2381 = vand.u32 %v2027, 4294901760
        %2382 = vmatmul.mubr.f32.gmra.mrb[0].mxu0 %v2381
        %v2383 = vpop.f32.mrb[0].mxu0
        %v2384 = vadd.f32 %v2141, %v2383
        %v2385 = vpop.f32.mrb[0].mxu0
        %v2386 = vadd.f32 %v2143, %v2385
        %2387 = vmatprep.mubr.f32.mxu0 0.0
        %v2388 = vand.u32 %v2034, 4294901760
        %2389 = vmatmul.mubr.f32.gmra.mrb[0].mxu0 %v2388
        %v2390 = vpop.f32.mrb[0].mxu0
        %v2391 = vadd.f32 %v2152, %v2390
        %v2392 = vpop.f32.mrb[0].mxu0
        %v2393 = vadd.f32 %v2154, %v2392
        %2394 = vdwg.mxu0
        %v2395 = vand.u32 %v1955, 4294901760
        %v2396 = vsub.f32 %v1955, %v2395
        %2397 = vmatprep.subr.mxu0 %v2396
        %v2398 = vand.u32 %v1954, 4294901760
        %v2399 = vsub.f32 %v1954, %v2398
        %2400 = vmatpush1.msra.mxu0 %v2399
        %v2401 = vand.u32 %v1957, 4294901760
        %v2402 = vsub.f32 %v1957, %v2401
        %2403 = vmatprep.subr.mxu0 %v2402
        %v2404 = vand.u32 %v1956, 4294901760
        %v2405 = vsub.f32 %v1956, %v2404
        %2406 = vmatpush1.msra.mxu0 %v2405
        %v2407 = vand.u32 %v1959, 4294901760
        %v2408 = vsub.f32 %v1959, %v2407
        %2409 = vmatprep.subr.mxu0 %v2408
        %v2410 = vand.u32 %v1958, 4294901760
        %v2411 = vsub.f32 %v1958, %v2410
        %2412 = vmatpush1.msra.mxu0 %v2411
        %v2413 = vand.u32 %v1961, 4294901760
        %v2414 = vsub.f32 %v1961, %v2413
        %2415 = vmatprep.subr.mxu0 %v2414
        %v2416 = vand.u32 %v1960, 4294901760
        %v2417 = vsub.f32 %v1960, %v2416
        %2418 = vmatpush1.msra.mxu0 %v2417
        %v2419 = vand.u32 %v1963, 4294901760
        %v2420 = vsub.f32 %v1963, %v2419
        %2421 = vmatprep.subr.mxu0 %v2420
        %v2422 = vand.u32 %v1962, 4294901760
        %v2423 = vsub.f32 %v1962, %v2422
        %2424 = vmatpush1.msra.mxu0 %v2423
        %v2425 = vand.u32 %v1965, 4294901760
        %v2426 = vsub.f32 %v1965, %v2425
        %2427 = vmatprep.subr.mxu0 %v2426
        %v2428 = vand.u32 %v1964, 4294901760
        %v2429 = vsub.f32 %v1964, %v2428
        %2430 = vmatpush1.msra.mxu0 %v2429
        %v2431 = vand.u32 %v1967, 4294901760
        %v2432 = vsub.f32 %v1967, %v2431
        %2433 = vmatprep.subr.mxu0 %v2432
        %v2434 = vand.u32 %v1966, 4294901760
        %v2435 = vsub.f32 %v1966, %v2434
        %2436 = vmatpush1.msra.mxu0 %v2435
        %v2437 = vand.u32 %v1969, 4294901760
        %v2438 = vsub.f32 %v1969, %v2437
        %2439 = vmatprep.subr.mxu0 %v2438
        %v2440 = vand.u32 %v1968, 4294901760
        %v2441 = vsub.f32 %v1968, %v2440
        %2442 = vmatpush1.msra.mxu0 %v2441
        %v2443 = vand.u32 %v1971, 4294901760
        %v2444 = vsub.f32 %v1971, %v2443
        %2445 = vmatprep.subr.mxu0 %v2444
        %v2446 = vand.u32 %v1970, 4294901760
        %v2447 = vsub.f32 %v1970, %v2446
        %2448 = vmatpush1.msra.mxu0 %v2447
        %v2449 = vand.u32 %v1973, 4294901760
        %v2450 = vsub.f32 %v1973, %v2449
        %2451 = vmatprep.subr.mxu0 %v2450
        %v2452 = vand.u32 %v1972, 4294901760
        %v2453 = vsub.f32 %v1972, %v2452
        %2454 = vmatpush1.msra.mxu0 %v2453
        %v2455 = vand.u32 %v1975, 4294901760
        %v2456 = vsub.f32 %v1975, %v2455
        %2457 = vmatprep.subr.mxu0 %v2456
        %v2458 = vand.u32 %v1974, 4294901760
        %v2459 = vsub.f32 %v1974, %v2458
        %2460 = vmatpush1.msra.mxu0 %v2459
        %v2461 = vand.u32 %v1977, 4294901760
        %v2462 = vsub.f32 %v1977, %v2461
        %2463 = vmatprep.subr.mxu0 %v2462
        %v2464 = vand.u32 %v1976, 4294901760
        %v2465 = vsub.f32 %v1976, %v2464
        %2466 = vmatpush1.msra.mxu0 %v2465
        %v2467 = vand.u32 %v1979, 4294901760
        %v2468 = vsub.f32 %v1979, %v2467
        %2469 = vmatprep.subr.mxu0 %v2468
        %v2470 = vand.u32 %v1978, 4294901760
        %v2471 = vsub.f32 %v1978, %v2470
        %2472 = vmatpush1.msra.mxu0 %v2471
        %v2473 = vand.u32 %v1981, 4294901760
        %v2474 = vsub.f32 %v1981, %v2473
        %2475 = vmatprep.subr.mxu0 %v2474
        %v2476 = vand.u32 %v1980, 4294901760
        %v2477 = vsub.f32 %v1980, %v2476
        %2478 = vmatpush1.msra.mxu0 %v2477
        %v2479 = vand.u32 %v1983, 4294901760
        %v2480 = vsub.f32 %v1983, %v2479
        %2481 = vmatprep.subr.mxu0 %v2480
        %v2482 = vand.u32 %v1982, 4294901760
        %v2483 = vsub.f32 %v1982, %v2482
        %2484 = vmatpush1.msra.mxu0 %v2483
        %v2485 = vand.u32 %v1985, 4294901760
        %v2486 = vsub.f32 %v1985, %v2485
        %2487 = vmatprep.subr.mxu0 %v2486
        %v2488 = vand.u32 %v1984, 4294901760
        %v2489 = vsub.f32 %v1984, %v2488
        %2490 = vmatpush1.msra.mxu0 %v2489
        %2491 = vmatprep.subr.mxu0 0.0
        %2492 = vmatpush1.msra.mxu0 0.0
        %2493 = vmatprep.subr.mxu0 0.0
        %2494 = vmatpush1.msra.mxu0 0.0
        %2495 = vmatprep.subr.mxu0 0.0
        %2496 = vmatpush1.msra.mxu0 0.0
        %2497 = vmatprep.subr.mxu0 0.0
        %2498 = vmatpush1.msra.mxu0 0.0
        %2499 = vmatprep.subr.mxu0 0.0
        %2500 = vmatpush1.msra.mxu0 0.0
        %2501 = vmatprep.subr.mxu0 0.0
        %2502 = vmatpush1.msra.mxu0 0.0
        %2503 = vmatprep.subr.mxu0 0.0
        %2504 = vmatpush1.msra.mxu0 0.0
        %2505 = vmatprep.subr.mxu0 0.0
        %2506 = vmatpush1.msra.mxu0 0.0
        %2507 = vmatprep.subr.mxu0 0.0
        %2508 = vmatpush1.msra.mxu0 0.0
        %2509 = vmatprep.subr.mxu0 0.0
        %2510 = vmatpush1.msra.mxu0 0.0
        %2511 = vmatprep.subr.mxu0 0.0
        %2512 = vmatpush1.msra.mxu0 0.0
        %2513 = vmatprep.subr.mxu0 0.0
        %2514 = vmatpush1.msra.mxu0 0.0
        %2515 = vmatprep.subr.mxu0 0.0
        %2516 = vmatpush1.msra.mxu0 0.0
        %2517 = vmatprep.subr.mxu0 0.0
        %2518 = vmatpush1.msra.mxu0 0.0
        %2519 = vmatprep.subr.mxu0 0.0
        %2520 = vmatpush1.msra.mxu0 0.0
        %2521 = vmatprep.subr.mxu0 0.0
        %2522 = vmatpush1.msra.mxu0 0.0
        %2523 = vmatprep.mubr.f32.mxu0 0.0
        %v2524 = vand.u32 %v2027, 4294901760
        %v2525 = vsub.f32 %v2027, %v2524
        %2526 = vmatmul.mubr.f32.gmra.mrb[0].mxu0 %v2525
        %v2527 = vpop.f32.mrb[0].mxu0
        %v2528 = vadd.f32 %v2384, %v2527
        %v2529 = vpop.f32.mrb[0].mxu0
        %v2530 = vadd.f32 %v2386, %v2529
        %2531 = vmatprep.mubr.f32.mxu0 0.0
        %v2532 = vand.u32 %v2034, 4294901760
        %v2533 = vsub.f32 %v2034, %v2532
        %2534 = vmatmul.mubr.f32.gmra.mrb[0].mxu0 %v2533
        %v2535 = vpop.f32.mrb[0].mxu0
        %v2536 = vadd.f32 %v2391, %v2535
        %v2537 = vpop.f32.mrb[0].mxu0
        %v2538 = vadd.f32 %v2393, %v2537
        %2539 = vdwg.mxu0
        %v2540 = vand.u32 %v1955, 4294901760
        %2541 = vmatprep.subr.mxu0 %v2540
        %v2542 = vand.u32 %v1954, 4294901760
        %2543 = vmatpush1.msra.mxu0 %v2542
        %v2544 = vand.u32 %v1957, 4294901760
        %2545 = vmatprep.subr.mxu0 %v2544
        %v2546 = vand.u32 %v1956, 4294901760
        %2547 = vmatpush1.msra.mxu0 %v2546
        %v2548 = vand.u32 %v1959, 4294901760
        %2549 = vmatprep.subr.mxu0 %v2548
        %v2550 = vand.u32 %v1958, 4294901760
        %2551 = vmatpush1.msra.mxu0 %v2550
        %v2552 = vand.u32 %v1961, 4294901760
        %2553 = vmatprep.subr.mxu0 %v2552
        %v2554 = vand.u32 %v1960, 4294901760
        %2555 = vmatpush1.msra.mxu0 %v2554
        %v2556 = vand.u32 %v1963, 4294901760
        %2557 = vmatprep.subr.mxu0 %v2556
        %v2558 = vand.u32 %v1962, 4294901760
        %2559 = vmatpush1.msra.mxu0 %v2558
        %v2560 = vand.u32 %v1965, 4294901760
        %2561 = vmatprep.subr.mxu0 %v2560
        %v2562 = vand.u32 %v1964, 4294901760
        %2563 = vmatpush1.msra.mxu0 %v2562
        %v2564 = vand.u32 %v1967, 4294901760
        %2565 = vmatprep.subr.mxu0 %v2564
        %v2566 = vand.u32 %v1966, 4294901760
        %2567 = vmatpush1.msra.mxu0 %v2566
        %v2568 = vand.u32 %v1969, 4294901760
        %2569 = vmatprep.subr.mxu0 %v2568
        %v2570 = vand.u32 %v1968, 4294901760
        %2571 = vmatpush1.msra.mxu0 %v2570
        %v2572 = vand.u32 %v1971, 4294901760
        %2573 = vmatprep.subr.mxu0 %v2572
        %v2574 = vand.u32 %v1970, 4294901760
        %2575 = vmatpush1.msra.mxu0 %v2574
        %v2576 = vand.u32 %v1973, 4294901760
        %2577 = vmatprep.subr.mxu0 %v2576
        %v2578 = vand.u32 %v1972, 4294901760
        %2579 = vmatpush1.msra.mxu0 %v2578
        %v2580 = vand.u32 %v1975, 4294901760
        %2581 = vmatprep.subr.mxu0 %v2580
        %v2582 = vand.u32 %v1974, 4294901760
        %2583 = vmatpush1.msra.mxu0 %v2582
        %v2584 = vand.u32 %v1977, 4294901760
        %2585 = vmatprep.subr.mxu0 %v2584
        %v2586 = vand.u32 %v1976, 4294901760
        %2587 = vmatpush1.msra.mxu0 %v2586
        %v2588 = vand.u32 %v1979, 4294901760
        %2589 = vmatprep.subr.mxu0 %v2588
        %v2590 = vand.u32 %v1978, 4294901760
        %2591 = vmatpush1.msra.mxu0 %v2590
        %v2592 = vand.u32 %v1981, 4294901760
        %2593 = vmatprep.subr.mxu0 %v2592
        %v2594 = vand.u32 %v1980, 4294901760
        %2595 = vmatpush1.msra.mxu0 %v2594
        %v2596 = vand.u32 %v1983, 4294901760
        %2597 = vmatprep.subr.mxu0 %v2596
        %v2598 = vand.u32 %v1982, 4294901760
        %2599 = vmatpush1.msra.mxu0 %v2598
        %v2600 = vand.u32 %v1985, 4294901760
        %2601 = vmatprep.subr.mxu0 %v2600
        %v2602 = vand.u32 %v1984, 4294901760
        %2603 = vmatpush1.msra.mxu0 %v2602
        %2604 = vmatprep.subr.mxu0 0.0
        %2605 = vmatpush1.msra.mxu0 0.0
        %2606 = vmatprep.subr.mxu0 0.0
        %2607 = vmatpush1.msra.mxu0 0.0
        %2608 = vmatprep.subr.mxu0 0.0
        %2609 = vmatpush1.msra.mxu0 0.0
        %2610 = vmatprep.subr.mxu0 0.0
        %2611 = vmatpush1.msra.mxu0 0.0
        %2612 = vmatprep.subr.mxu0 0.0
        %2613 = vmatpush1.msra.mxu0 0.0
        %2614 = vmatprep.subr.mxu0 0.0
        %2615 = vmatpush1.msra.mxu0 0.0
        %2616 = vmatprep.subr.mxu0 0.0
        %2617 = vmatpush1.msra.mxu0 0.0
        %2618 = vmatprep.subr.mxu0 0.0
        %2619 = vmatpush1.msra.mxu0 0.0
        %2620 = vmatprep.subr.mxu0 0.0
        %2621 = vmatpush1.msra.mxu0 0.0
        %2622 = vmatprep.subr.mxu0 0.0
        %2623 = vmatpush1.msra.mxu0 0.0
        %2624 = vmatprep.subr.mxu0 0.0
        %2625 = vmatpush1.msra.mxu0 0.0
        %2626 = vmatprep.subr.mxu0 0.0
        %2627 = vmatpush1.msra.mxu0 0.0
        %2628 = vmatprep.subr.mxu0 0.0
        %2629 = vmatpush1.msra.mxu0 0.0
        %2630 = vmatprep.subr.mxu0 0.0
        %2631 = vmatpush1.msra.mxu0 0.0
        %2632 = vmatprep.subr.mxu0 0.0
        %2633 = vmatpush1.msra.mxu0 0.0
        %2634 = vmatprep.subr.mxu0 0.0
        %2635 = vmatpush1.msra.mxu0 0.0
        %2636 = vmatprep.mubr.f32.mxu0 0.0
        %v2637 = vand.u32 %v2027, 4294901760
        %v2638 = vsub.f32 %v2027, %v2637
        %v2639 = vand.u32 %v2638, 4294901760
        %2640 = vmatmul.mubr.f32.gmra.mrb[0].mxu0 %v2639
        %v2641 = vpop.f32.mrb[0].mxu0
        %v2642 = vadd.f32 %v2528, %v2641
        %v2643 = vpop.f32.mrb[0].mxu0
        %v2644 = vadd.f32 %v2530, %v2643
        %2645 = vmatprep.mubr.f32.mxu0 0.0
        %v2646 = vand.u32 %v2034, 4294901760
        %v2647 = vsub.f32 %v2034, %v2646
        %v2648 = vand.u32 %v2647, 4294901760
        %2649 = vmatmul.mubr.f32.gmra.mrb[0].mxu0 %v2648
        %v2650 = vpop.f32.mrb[0].mxu0
        %v2651 = vadd.f32 %v2536, %v2650
        %v2652 = vpop.f32.mrb[0].mxu0
        %v2653 = vadd.f32 %v2538, %v2652
        %2654 = vdwg.mxu0
        %v2655 = vand.u32 %v1955, 4294901760
        %v2656 = vsub.f32 %v1955, %v2655
        %v2657 = vand.u32 %v2656, 4294901760
        %2658 = vmatprep.subr.mxu0 %v2657
        %v2659 = vand.u32 %v1954, 4294901760
        %v2660 = vsub.f32 %v1954, %v2659
        %v2661 = vand.u32 %v2660, 4294901760
        %2662 = vmatpush1.msra.mxu0 %v2661
        %v2663 = vand.u32 %v1957, 4294901760
        %v2664 = vsub.f32 %v1957, %v2663
        %v2665 = vand.u32 %v2664, 4294901760
        %2666 = vmatprep.subr.mxu0 %v2665
        %v2667 = vand.u32 %v1956, 4294901760
        %v2668 = vsub.f32 %v1956, %v2667
        %v2669 = vand.u32 %v2668, 4294901760
        %2670 = vmatpush1.msra.mxu0 %v2669
        %v2671 = vand.u32 %v1959, 4294901760
        %v2672 = vsub.f32 %v1959, %v2671
        %v2673 = vand.u32 %v2672, 4294901760
        %2674 = vmatprep.subr.mxu0 %v2673
        %v2675 = vand.u32 %v1958, 4294901760
        %v2676 = vsub.f32 %v1958, %v2675
        %v2677 = vand.u32 %v2676, 4294901760
        %2678 = vmatpush1.msra.mxu0 %v2677
        %v2679 = vand.u32 %v1961, 4294901760
        %v2680 = vsub.f32 %v1961, %v2679
        %v2681 = vand.u32 %v2680, 4294901760
        %2682 = vmatprep.subr.mxu0 %v2681
        %v2683 = vand.u32 %v1960, 4294901760
        %v2684 = vsub.f32 %v1960, %v2683
        %v2685 = vand.u32 %v2684, 4294901760
        %2686 = vmatpush1.msra.mxu0 %v2685
        %v2687 = vand.u32 %v1963, 4294901760
        %v2688 = vsub.f32 %v1963, %v2687
        %v2689 = vand.u32 %v2688, 4294901760
        %2690 = vmatprep.subr.mxu0 %v2689
        %v2691 = vand.u32 %v1962, 4294901760
        %v2692 = vsub.f32 %v1962, %v2691
        %v2693 = vand.u32 %v2692, 4294901760
        %2694 = vmatpush1.msra.mxu0 %v2693
        %v2695 = vand.u32 %v1965, 4294901760
        %v2696 = vsub.f32 %v1965, %v2695
        %v2697 = vand.u32 %v2696, 4294901760
        %2698 = vmatprep.subr.mxu0 %v2697
        %v2699 = vand.u32 %v1964, 4294901760
        %v2700 = vsub.f32 %v1964, %v2699
        %v2701 = vand.u32 %v2700, 4294901760
        %2702 = vmatpush1.msra.mxu0 %v2701
        %v2703 = vand.u32 %v1967, 4294901760
        %v2704 = vsub.f32 %v1967, %v2703
        %v2705 = vand.u32 %v2704, 4294901760
        %2706 = vmatprep.subr.mxu0 %v2705
        %v2707 = vand.u32 %v1966, 4294901760
        %v2708 = vsub.f32 %v1966, %v2707
        %v2709 = vand.u32 %v2708, 4294901760
        %2710 = vmatpush1.msra.mxu0 %v2709
        %v2711 = vand.u32 %v1969, 4294901760
        %v2712 = vsub.f32 %v1969, %v2711
        %v2713 = vand.u32 %v2712, 4294901760
        %2714 = vmatprep.subr.mxu0 %v2713
        %v2715 = vand.u32 %v1968, 4294901760
        %v2716 = vsub.f32 %v1968, %v2715
        %v2717 = vand.u32 %v2716, 4294901760
        %2718 = vmatpush1.msra.mxu0 %v2717
        %v2719 = vand.u32 %v1971, 4294901760
        %v2720 = vsub.f32 %v1971, %v2719
        %v2721 = vand.u32 %v2720, 4294901760
        %2722 = vmatprep.subr.mxu0 %v2721
        %v2723 = vand.u32 %v1970, 4294901760
        %v2724 = vsub.f32 %v1970, %v2723
        %v2725 = vand.u32 %v2724, 4294901760
        %2726 = vmatpush1.msra.mxu0 %v2725
        %v2727 = vand.u32 %v1973, 4294901760
        %v2728 = vsub.f32 %v1973, %v2727
        %v2729 = vand.u32 %v2728, 4294901760
        %2730 = vmatprep.subr.mxu0 %v2729
        %v2731 = vand.u32 %v1972, 4294901760
        %v2732 = vsub.f32 %v1972, %v2731
        %v2733 = vand.u32 %v2732, 4294901760
        %2734 = vmatpush1.msra.mxu0 %v2733
        %v2735 = vand.u32 %v1975, 4294901760
        %v2736 = vsub.f32 %v1975, %v2735
        %v2737 = vand.u32 %v2736, 4294901760
        %2738 = vmatprep.subr.mxu0 %v2737
        %v2739 = vand.u32 %v1974, 4294901760
        %v2740 = vsub.f32 %v1974, %v2739
        %v2741 = vand.u32 %v2740, 4294901760
        %2742 = vmatpush1.msra.mxu0 %v2741
        %v2743 = vand.u32 %v1977, 4294901760
        %v2744 = vsub.f32 %v1977, %v2743
        %v2745 = vand.u32 %v2744, 4294901760
        %2746 = vmatprep.subr.mxu0 %v2745
        %v2747 = vand.u32 %v1976, 4294901760
        %v2748 = vsub.f32 %v1976, %v2747
        %v2749 = vand.u32 %v2748, 4294901760
        %2750 = vmatpush1.msra.mxu0 %v2749
        %v2751 = vand.u32 %v1979, 4294901760
        %v2752 = vsub.f32 %v1979, %v2751
        %v2753 = vand.u32 %v2752, 4294901760
        %2754 = vmatprep.subr.mxu0 %v2753
        %v2755 = vand.u32 %v1978, 4294901760
        %v2756 = vsub.f32 %v1978, %v2755
        %v2757 = vand.u32 %v2756, 4294901760
        %2758 = vmatpush1.msra.mxu0 %v2757
        %v2759 = vand.u32 %v1981, 4294901760
        %v2760 = vsub.f32 %v1981, %v2759
        %v2761 = vand.u32 %v2760, 4294901760
        %2762 = vmatprep.subr.mxu0 %v2761
        %v2763 = vand.u32 %v1980, 4294901760
        %v2764 = vsub.f32 %v1980, %v2763
        %v2765 = vand.u32 %v2764, 4294901760
        %2766 = vmatpush1.msra.mxu0 %v2765
        %v2767 = vand.u32 %v1983, 4294901760
        %v2768 = vsub.f32 %v1983, %v2767
        %v2769 = vand.u32 %v2768, 4294901760
        %2770 = vmatprep.subr.mxu0 %v2769
        %v2771 = vand.u32 %v1982, 4294901760
        %v2772 = vsub.f32 %v1982, %v2771
        %v2773 = vand.u32 %v2772, 4294901760
        %2774 = vmatpush1.msra.mxu0 %v2773
        %v2775 = vand.u32 %v1985, 4294901760
        %v2776 = vsub.f32 %v1985, %v2775
        %v2777 = vand.u32 %v2776, 4294901760
        %2778 = vmatprep.subr.mxu0 %v2777
        %v2779 = vand.u32 %v1984, 4294901760
        %v2780 = vsub.f32 %v1984, %v2779
        %v2781 = vand.u32 %v2780, 4294901760
        %2782 = vmatpush1.msra.mxu0 %v2781
        %2783 = vmatprep.subr.mxu0 0.0
        %2784 = vmatpush1.msra.mxu0 0.0
        %2785 = vmatprep.subr.mxu0 0.0
        %2786 = vmatpush1.msra.mxu0 0.0
        %2787 = vmatprep.subr.mxu0 0.0
        %2788 = vmatpush1.msra.mxu0 0.0
        %2789 = vmatprep.subr.mxu0 0.0
        %2790 = vmatpush1.msra.mxu0 0.0
        %2791 = vmatprep.subr.mxu0 0.0
        %2792 = vmatpush1.msra.mxu0 0.0
        %2793 = vmatprep.subr.mxu0 0.0
        %2794 = vmatpush1.msra.mxu0 0.0
        %2795 = vmatprep.subr.mxu0 0.0
        %2796 = vmatpush1.msra.mxu0 0.0
        %2797 = vmatprep.subr.mxu0 0.0
        %2798 = vmatpush1.msra.mxu0 0.0
        %2799 = vmatprep.subr.mxu0 0.0
        %2800 = vmatpush1.msra.mxu0 0.0
        %2801 = vmatprep.subr.mxu0 0.0
        %2802 = vmatpush1.msra.mxu0 0.0
        %2803 = vmatprep.subr.mxu0 0.0
        %2804 = vmatpush1.msra.mxu0 0.0
        %2805 = vmatprep.subr.mxu0 0.0
        %2806 = vmatpush1.msra.mxu0 0.0
        %2807 = vmatprep.subr.mxu0 0.0
        %2808 = vmatpush1.msra.mxu0 0.0
        %2809 = vmatprep.subr.mxu0 0.0
        %2810 = vmatpush1.msra.mxu0 0.0
        %2811 = vmatprep.subr.mxu0 0.0
        %2812 = vmatpush1.msra.mxu0 0.0
        %2813 = vmatprep.subr.mxu0 0.0
        %2814 = vmatpush1.msra.mxu0 0.0
        %2815 = vmatprep.mubr.f32.mxu0 0.0
        %v2816 = vand.u32 %v2027, 4294901760
        %2817 = vmatmul.mubr.f32.gmra.mrb[0].mxu0 %v2816
        %v2818 = vpop.f32.mrb[0].mxu0
        %v2819 = vadd.f32 %v2642, %v2818
        %v2820 = vpop.f32.mrb[0].mxu0
        %v2821 = vadd.f32 %v2644, %v2820
        %2822 = vmatprep.mubr.f32.mxu0 0.0
        %v2823 = vand.u32 %v2034, 4294901760
        %2824 = vmatmul.mubr.f32.gmra.mrb[0].mxu0 %v2823
        %v2825 = vpop.f32.mrb[0].mxu0
        %v2826 = vadd.f32 %v2651, %v2825
        %v2827 = vpop.f32.mrb[0].mxu0
        %v2828 = vadd.f32 %v2653, %v2827
        %2829 = vdwg.mxu0
        %v2830 = vand.u32 %v1955, 4294901760
        %2831 = vmatprep.subr.mxu0 %v2830
        %v2832 = vand.u32 %v1954, 4294901760
        %2833 = vmatpush1.msra.mxu0 %v2832
        %v2834 = vand.u32 %v1957, 4294901760
        %2835 = vmatprep.subr.mxu0 %v2834
        %v2836 = vand.u32 %v1956, 4294901760
        %2837 = vmatpush1.msra.mxu0 %v2836
        %v2838 = vand.u32 %v1959, 4294901760
        %2839 = vmatprep.subr.mxu0 %v2838
        %v2840 = vand.u32 %v1958, 4294901760
        %2841 = vmatpush1.msra.mxu0 %v2840
        %v2842 = vand.u32 %v1961, 4294901760
        %2843 = vmatprep.subr.mxu0 %v2842
        %v2844 = vand.u32 %v1960, 4294901760
        %2845 = vmatpush1.msra.mxu0 %v2844
        %v2846 = vand.u32 %v1963, 4294901760
        %2847 = vmatprep.subr.mxu0 %v2846
        %v2848 = vand.u32 %v1962, 4294901760
        %2849 = vmatpush1.msra.mxu0 %v2848
        %v2850 = vand.u32 %v1965, 4294901760
        %2851 = vmatprep.subr.mxu0 %v2850
        %v2852 = vand.u32 %v1964, 4294901760
        %2853 = vmatpush1.msra.mxu0 %v2852
        %v2854 = vand.u32 %v1967, 4294901760
        %2855 = vmatprep.subr.mxu0 %v2854
        %v2856 = vand.u32 %v1966, 4294901760
        %2857 = vmatpush1.msra.mxu0 %v2856
        %v2858 = vand.u32 %v1969, 4294901760
        %2859 = vmatprep.subr.mxu0 %v2858
        %v2860 = vand.u32 %v1968, 4294901760
        %2861 = vmatpush1.msra.mxu0 %v2860
        %v2862 = vand.u32 %v1971, 4294901760
        %2863 = vmatprep.subr.mxu0 %v2862
        %v2864 = vand.u32 %v1970, 4294901760
        %2865 = vmatpush1.msra.mxu0 %v2864
        %v2866 = vand.u32 %v1973, 4294901760
        %2867 = vmatprep.subr.mxu0 %v2866
        %v2868 = vand.u32 %v1972, 4294901760
        %2869 = vmatpush1.msra.mxu0 %v2868
        %v2870 = vand.u32 %v1975, 4294901760
        %2871 = vmatprep.subr.mxu0 %v2870
        %v2872 = vand.u32 %v1974, 4294901760
        %2873 = vmatpush1.msra.mxu0 %v2872
        %v2874 = vand.u32 %v1977, 4294901760
        %2875 = vmatprep.subr.mxu0 %v2874
        %v2876 = vand.u32 %v1976, 4294901760
        %2877 = vmatpush1.msra.mxu0 %v2876
        %v2878 = vand.u32 %v1979, 4294901760
        %2879 = vmatprep.subr.mxu0 %v2878
        %v2880 = vand.u32 %v1978, 4294901760
        %2881 = vmatpush1.msra.mxu0 %v2880
        %v2882 = vand.u32 %v1981, 4294901760
        %2883 = vmatprep.subr.mxu0 %v2882
        %v2884 = vand.u32 %v1980, 4294901760
        %2885 = vmatpush1.msra.mxu0 %v2884
        %v2886 = vand.u32 %v1983, 4294901760
        %2887 = vmatprep.subr.mxu0 %v2886
        %v2888 = vand.u32 %v1982, 4294901760
        %2889 = vmatpush1.msra.mxu0 %v2888
        %v2890 = vand.u32 %v1985, 4294901760
        %2891 = vmatprep.subr.mxu0 %v2890
        %v2892 = vand.u32 %v1984, 4294901760
        %2893 = vmatpush1.msra.mxu0 %v2892
        %2894 = vmatprep.subr.mxu0 0.0
        %2895 = vmatpush1.msra.mxu0 0.0
        %2896 = vmatprep.subr.mxu0 0.0
        %2897 = vmatpush1.msra.mxu0 0.0
        %2898 = vmatprep.subr.mxu0 0.0
        %2899 = vmatpush1.msra.mxu0 0.0
        %2900 = vmatprep.subr.mxu0 0.0
        %2901 = vmatpush1.msra.mxu0 0.0
        %2902 = vmatprep.subr.mxu0 0.0
        %2903 = vmatpush1.msra.mxu0 0.0
        %2904 = vmatprep.subr.mxu0 0.0
        %2905 = vmatpush1.msra.mxu0 0.0
        %2906 = vmatprep.subr.mxu0 0.0
        %2907 = vmatpush1.msra.mxu0 0.0
        %2908 = vmatprep.subr.mxu0 0.0
        %2909 = vmatpush1.msra.mxu0 0.0
        %2910 = vmatprep.subr.mxu0 0.0
        %2911 = vmatpush1.msra.mxu0 0.0
        %2912 = vmatprep.subr.mxu0 0.0
        %2913 = vmatpush1.msra.mxu0 0.0
        %2914 = vmatprep.subr.mxu0 0.0
        %2915 = vmatpush1.msra.mxu0 0.0
        %2916 = vmatprep.subr.mxu0 0.0
        %2917 = vmatpush1.msra.mxu0 0.0
        %2918 = vmatprep.subr.mxu0 0.0
        %2919 = vmatpush1.msra.mxu0 0.0
        %2920 = vmatprep.subr.mxu0 0.0
        %2921 = vmatpush1.msra.mxu0 0.0
        %2922 = vmatprep.subr.mxu0 0.0
        %2923 = vmatpush1.msra.mxu0 0.0
        %2924 = vmatprep.subr.mxu0 0.0
        %2925 = vmatpush1.msra.mxu0 0.0
        %2926 = vmatprep.mubr.f32.mxu0 0.0
        %v2927 = vand.u32 %v2027, 4294901760
        %2928 = vmatmul.mubr.f32.gmra.mrb[0].mxu0 %v2927
        %v2929 = vpop.f32.mrb[0].mxu0
        %v2930 = vadd.f32 %v2819, %v2929
        %v2931 = vpop.f32.mrb[0].mxu0
        %v2932 = vadd.f32 %v2821, %v2931
        %2933 = vmatprep.mubr.f32.mxu0 0.0
        %v2934 = vand.u32 %v2034, 4294901760
        %2935 = vmatmul.mubr.f32.gmra.mrb[0].mxu0 %v2934
        %v2936 = vpop.f32.mrb[0].mxu0
        %v2937 = vadd.f32 %v2826, %v2936
        %v2938 = vpop.f32.mrb[0].mxu0
        %v2939 = vadd.f32 %v2828, %v2938
        %2940 = vdwg.mxu0
        %v2941 = vld [vmem:[#allocation5] sm:$0xff]
        %v2942 = vld [vmem:[#allocation5 + $0x8] sm:$0xff]
        %v2943 = vld [vmem:[#allocation5 + $0x10] sm:$0xff]
        %v2944 = vld [vmem:[#allocation5 + $0x18] sm:$0xff]
        %v2945 = vld [vmem:[#allocation5 + $0x20] sm:$0xff]
        %v2946 = vld [vmem:[#allocation5 + $0x28] sm:$0xff]
        %v2947 = vld [vmem:[#allocation5 + $0x30] sm:$0xff]
        %v2948 = vld [vmem:[#allocation5 + $0x38] sm:$0xff]
        %v2949 = vld [vmem:[#allocation5 + $0x40] sm:$0xff]
        %v2950 = vld [vmem:[#allocation5 + $0x48] sm:$0xff]
        %v2951 = vld [vmem:[#allocation5 + $0x50] sm:$0xff]
        %v2952 = vld [vmem:[#allocation5 + $0x58] sm:$0xff]
        %v2953 = vld [vmem:[#allocation5 + $0x60] sm:$0xff]
        %v2954 = vld [vmem:[#allocation5 + $0x68] sm:$0xff]
        %v2955 = vld [vmem:[#allocation5 + $0x70] sm:$0xff]
        %v2956 = vld [vmem:[#allocation5 + $0x78] sm:$0xff]
        %v2957 = vld [vmem:[#allocation5 + $0x80] sm:$0xff]
        %v2958 = vld [vmem:[#allocation5 + $0x88] sm:$0xff]
        %v2959 = vld [vmem:[#allocation5 + $0x90] sm:$0xff]
        %v2960 = vld [vmem:[#allocation5 + $0x98] sm:$0xff]
        %v2961 = vld [vmem:[#allocation5 + $0xa0] sm:$0xff]
        %v2962 = vld [vmem:[#allocation5 + $0xa8] sm:$0xff]
        %v2963 = vld [vmem:[#allocation5 + $0xb0] sm:$0xff]
        %v2964 = vld [vmem:[#allocation5 + $0xb8] sm:$0xff]
        %v2965 = vld [vmem:[#allocation5 + $0xc0] sm:$0xff]
        %v2966 = vld [vmem:[#allocation5 + $0xc8] sm:$0xff]
        %v2967 = vld [vmem:[#allocation5 + $0xd0] sm:$0xff]
        %v2968 = vld [vmem:[#allocation5 + $0xd8] sm:$0xff]
        %v2969 = vld [vmem:[#allocation5 + $0xe0] sm:$0xff]
        %v2970 = vld [vmem:[#allocation5 + $0xe8] sm:$0xff]
        %v2971 = vld [vmem:[#allocation5 + $0xf0] sm:$0xff]
        %v2972 = vld [vmem:[#allocation5 + $0xf8] sm:$0xff]
        %v2973 = vld [vmem:[#allocation5 + $0x100] sm:$0xff]
        %v2974 = vld [vmem:[#allocation5 + $0x108] sm:$0xff]
        %v2975 = vld [vmem:[#allocation5 + $0x110] sm:$0xff]
        %v2976 = vld [vmem:[#allocation5 + $0x118] sm:$0xff]
        %v2977 = vld [vmem:[#allocation5 + $0x120] sm:$0xff]
        %v2978 = vld [vmem:[#allocation5 + $0x128] sm:$0xff]
        %v2979 = vld [vmem:[#allocation5 + $0x130] sm:$0xff]
        %v2980 = vld [vmem:[#allocation5 + $0x138] sm:$0xff]
        %v2981 = vld [vmem:[#allocation5 + $0x140] sm:$0xff]
        %v2982 = vld [vmem:[#allocation5 + $0x148] sm:$0xff]
        %v2983 = vld [vmem:[#allocation5 + $0x150] sm:$0xff]
        %v2984 = vld [vmem:[#allocation5 + $0x158] sm:$0xff]
        %v2985 = vld [vmem:[#allocation5 + $0x160] sm:$0xff]
        %v2986 = vld [vmem:[#allocation5 + $0x168] sm:$0xff]
        %v2987 = vld [vmem:[#allocation5 + $0x170] sm:$0xff]
        %v2988 = vld [vmem:[#allocation5 + $0x178] sm:$0xff]
        %v2989 = vld [vmem:[#allocation5 + $0x180] sm:$0xff]
        %v2990 = vld [vmem:[#allocation5 + $0x188] sm:$0xff]
        %v2991 = vld [vmem:[#allocation5 + $0x190] sm:$0xff]
        %v2992 = vld [vmem:[#allocation5 + $0x198] sm:$0xff]
        %v2993 = vld [vmem:[#allocation5 + $0x1a0] sm:$0xff]
        %v2994 = vld [vmem:[#allocation5 + $0x1a8] sm:$0xff]
        %v2995 = vld [vmem:[#allocation5 + $0x1b0] sm:$0xff]
        %v2996 = vld [vmem:[#allocation5 + $0x1b8] sm:$0xff]
        %v2997 = vld [vmem:[#allocation5 + $0x1c0] sm:$0xff]
        %v2998 = vld [vmem:[#allocation5 + $0x1c8] sm:$0xff]
        %v2999 = vld [vmem:[#allocation5 + $0x1d0] sm:$0xff]
        %v3000 = vld [vmem:[#allocation5 + $0x1d8] sm:$0xff]
        %v3001 = vld [vmem:[#allocation5 + $0x1e0] sm:$0xff]
        %v3002 = vld [vmem:[#allocation5 + $0x1e8] sm:$0xff]
        %v3003 = vld [vmem:[#allocation5 + $0x1f0] sm:$0xff]
        %v3004 = vld [vmem:[#allocation5 + $0x1f8] sm:$0xff]
        %v3005 = vld [vmem:[#allocation7] sm:$0xff]
        %v3006 = vld [vmem:[#allocation7 + $0x8] sm:$0xff]
        %v3007 = vld [vmem:[#allocation7 + $0x10] sm:$0xff]
        %v3008 = vld [vmem:[#allocation7 + $0x18] sm:$0xff]
        %v3009 = vld [vmem:[#allocation7 + $0x20] sm:$0xff]
        %v3010 = vld [vmem:[#allocation7 + $0x28] sm:$0xff]
        %v3011 = vld [vmem:[#allocation7 + $0x30] sm:$0xff]
        %v3012 = vld [vmem:[#allocation7 + $0x38] sm:$0xff]
        %v3013 = vld [vmem:[#allocation7 + $0x40] sm:$0xff]
        %v3014 = vld [vmem:[#allocation7 + $0x48] sm:$0xff]
        %v3015 = vld [vmem:[#allocation7 + $0x50] sm:$0xff]
        %v3016 = vld [vmem:[#allocation7 + $0x58] sm:$0xff]
        %v3017 = vld [vmem:[#allocation7 + $0x60] sm:$0xff]
        %v3018 = vld [vmem:[#allocation7 + $0x68] sm:$0xff]
        %v3019 = vld [vmem:[#allocation7 + $0x70] sm:$0xff]
        %v3020 = vld [vmem:[#allocation7 + $0x78] sm:$0xff]
        %v3021 = vld [vmem:[#allocation7 + $0x80] sm:$0xff]
        %v3022 = vld [vmem:[#allocation7 + $0x88] sm:$0xff]
        %v3023 = vld [vmem:[#allocation7 + $0x90] sm:$0xff]
        %v3024 = vld [vmem:[#allocation7 + $0x98] sm:$0xff]
        %v3025 = vld [vmem:[#allocation7 + $0xa0] sm:$0xff]
        %v3026 = vld [vmem:[#allocation7 + $0xa8] sm:$0xff]
        %v3027 = vld [vmem:[#allocation7 + $0xb0] sm:$0xff]
        %v3028 = vld [vmem:[#allocation7 + $0xb8] sm:$0xff]
        %v3029 = vld [vmem:[#allocation7 + $0xc0] sm:$0xff]
        %v3030 = vld [vmem:[#allocation7 + $0xc8] sm:$0xff]
        %v3031 = vld [vmem:[#allocation7 + $0xd0] sm:$0xff]
        %v3032 = vld [vmem:[#allocation7 + $0xd8] sm:$0xff]
        %v3033 = vld [vmem:[#allocation7 + $0xe0] sm:$0xff]
        %v3034 = vld [vmem:[#allocation7 + $0xe8] sm:$0xff]
        %v3035 = vld [vmem:[#allocation7 + $0xf0] sm:$0xff]
        %v3036 = vld [vmem:[#allocation7 + $0xf8] sm:$0xff]
        %v3037 = vld [vmem:[#allocation7 + $0x100] sm:$0xff]
        %v3038 = vld [vmem:[#allocation7 + $0x108] sm:$0xff]
        %v3039 = vld [vmem:[#allocation7 + $0x110] sm:$0xff]
        %v3040 = vld [vmem:[#allocation7 + $0x118] sm:$0xff]
        %v3041 = vld [vmem:[#allocation7 + $0x120] sm:$0xff]
        %v3042 = vld [vmem:[#allocation7 + $0x128] sm:$0xff]
        %v3043 = vld [vmem:[#allocation7 + $0x130] sm:$0xff]
        %v3044 = vld [vmem:[#allocation7 + $0x138] sm:$0xff]
        %v3045 = vld [vmem:[#allocation7 + $0x140] sm:$0xff]
        %v3046 = vld [vmem:[#allocation7 + $0x148] sm:$0xff]
        %v3047 = vld [vmem:[#allocation7 + $0x150] sm:$0xff]
        %v3048 = vld [vmem:[#allocation7 + $0x158] sm:$0xff]
        %v3049 = vld [vmem:[#allocation7 + $0x160] sm:$0xff]
        %v3050 = vld [vmem:[#allocation7 + $0x168] sm:$0xff]
        %v3051 = vld [vmem:[#allocation7 + $0x170] sm:$0xff]
        %v3052 = vld [vmem:[#allocation7 + $0x178] sm:$0xff]
        %v3053 = vld [vmem:[#allocation7 + $0x180] sm:$0xff]
        %v3054 = vld [vmem:[#allocation7 + $0x188] sm:$0xff]
        %v3055 = vld [vmem:[#allocation7 + $0x190] sm:$0xff]
        %v3056 = vld [vmem:[#allocation7 + $0x198] sm:$0xff]
        %v3057 = vld [vmem:[#allocation7 + $0x1a0] sm:$0xff]
        %v3058 = vld [vmem:[#allocation7 + $0x1a8] sm:$0xff]
        %v3059 = vld [vmem:[#allocation7 + $0x1b0] sm:$0xff]
        %v3060 = vld [vmem:[#allocation7 + $0x1b8] sm:$0xff]
        %v3061 = vld [vmem:[#allocation7 + $0x1c0] sm:$0xff]
        %v3062 = vld [vmem:[#allocation7 + $0x1c8] sm:$0xff]
        %v3063 = vld [vmem:[#allocation7 + $0x1d0] sm:$0xff]
        %v3064 = vld [vmem:[#allocation7 + $0x1d8] sm:$0xff]
        %v3065 = vld [vmem:[#allocation7 + $0x1e0] sm:$0xff]
        %v3066 = vld [vmem:[#allocation7 + $0x1e8] sm:$0xff]
        %v3067 = vld [vmem:[#allocation7 + $0x1f0] sm:$0xff]
        %v3068 = vld [vmem:[#allocation7 + $0x1f8] sm:$0xff]
        %v3069 = vand.u32 %v3006, 4294901760
        %3070 = vmatprep.subr.mxu0 %v3069
        %v3071 = vand.u32 %v3005, 4294901760
        %3072 = vmatpush1.msra.mxu0 %v3071
        %v3073 = vand.u32 %v3008, 4294901760
        %3074 = vmatprep.subr.mxu0 %v3073
        %v3075 = vand.u32 %v3007, 4294901760
        %3076 = vmatpush1.msra.mxu0 %v3075
        %v3077 = vand.u32 %v3010, 4294901760
        %3078 = vmatprep.subr.mxu0 %v3077
        %v3079 = vand.u32 %v3009, 4294901760
        %3080 = vmatpush1.msra.mxu0 %v3079
        %v3081 = vand.u32 %v3012, 4294901760
        %3082 = vmatprep.subr.mxu0 %v3081
        %v3083 = vand.u32 %v3011, 4294901760
        %3084 = vmatpush1.msra.mxu0 %v3083
        %v3085 = vand.u32 %v3014, 4294901760
        %3086 = vmatprep.subr.mxu0 %v3085
        %v3087 = vand.u32 %v3013, 4294901760
        %3088 = vmatpush1.msra.mxu0 %v3087
        %v3089 = vand.u32 %v3016, 4294901760
        %3090 = vmatprep.subr.mxu0 %v3089
        %v3091 = vand.u32 %v3015, 4294901760
        %3092 = vmatpush1.msra.mxu0 %v3091
        %v3093 = vand.u32 %v3018, 4294901760
        %3094 = vmatprep.subr.mxu0 %v3093
        %v3095 = vand.u32 %v3017, 4294901760
        %3096 = vmatpush1.msra.mxu0 %v3095
        %v3097 = vand.u32 %v3020, 4294901760
        %3098 = vmatprep.subr.mxu0 %v3097
        %v3099 = vand.u32 %v3019, 4294901760
        %3100 = vmatpush1.msra.mxu0 %v3099
        %v3101 = vand.u32 %v3022, 4294901760
        %3102 = vmatprep.subr.mxu0 %v3101
        %v3103 = vand.u32 %v3021, 4294901760
        %3104 = vmatpush1.msra.mxu0 %v3103
        %v3105 = vand.u32 %v3024, 4294901760
        %3106 = vmatprep.subr.mxu0 %v3105
        %v3107 = vand.u32 %v3023, 4294901760
        %3108 = vmatpush1.msra.mxu0 %v3107
        %v3109 = vand.u32 %v3026, 4294901760
        %3110 = vmatprep.subr.mxu0 %v3109
        %v3111 = vand.u32 %v3025, 4294901760
        %3112 = vmatpush1.msra.mxu0 %v3111
        %v3113 = vand.u32 %v3028, 4294901760
        %3114 = vmatprep.subr.mxu0 %v3113
        %v3115 = vand.u32 %v3027, 4294901760
        %3116 = vmatpush1.msra.mxu0 %v3115
        %v3117 = vand.u32 %v3030, 4294901760
        %3118 = vmatprep.subr.mxu0 %v3117
        %v3119 = vand.u32 %v3029, 4294901760
        %3120 = vmatpush1.msra.mxu0 %v3119
        %v3121 = vand.u32 %v3032, 4294901760
        %3122 = vmatprep.subr.mxu0 %v3121
        %v3123 = vand.u32 %v3031, 4294901760
        %3124 = vmatpush1.msra.mxu0 %v3123
        %v3125 = vand.u32 %v3034, 4294901760
        %3126 = vmatprep.subr.mxu0 %v3125
        %v3127 = vand.u32 %v3033, 4294901760
        %3128 = vmatpush1.msra.mxu0 %v3127
        %v3129 = vand.u32 %v3036, 4294901760
        %3130 = vmatprep.subr.mxu0 %v3129
        %v3131 = vand.u32 %v3035, 4294901760
        %3132 = vmatpush1.msra.mxu0 %v3131
        %v3133 = vand.u32 %v3038, 4294901760
        %3134 = vmatprep.subr.mxu0 %v3133
        %v3135 = vand.u32 %v3037, 4294901760
        %3136 = vmatpush1.msra.mxu0 %v3135
        %v3137 = vand.u32 %v3040, 4294901760
        %3138 = vmatprep.subr.mxu0 %v3137
        %v3139 = vand.u32 %v3039, 4294901760
        %3140 = vmatpush1.msra.mxu0 %v3139
        %v3141 = vand.u32 %v3042, 4294901760
        %3142 = vmatprep.subr.mxu0 %v3141
        %v3143 = vand.u32 %v3041, 4294901760
        %3144 = vmatpush1.msra.mxu0 %v3143
        %v3145 = vand.u32 %v3044, 4294901760
        %3146 = vmatprep.subr.mxu0 %v3145
        %v3147 = vand.u32 %v3043, 4294901760
        %3148 = vmatpush1.msra.mxu0 %v3147
        %v3149 = vand.u32 %v3046, 4294901760
        %3150 = vmatprep.subr.mxu0 %v3149
        %v3151 = vand.u32 %v3045, 4294901760
        %3152 = vmatpush1.msra.mxu0 %v3151
        %v3153 = vand.u32 %v3048, 4294901760
        %3154 = vmatprep.subr.mxu0 %v3153
        %v3155 = vand.u32 %v3047, 4294901760
        %3156 = vmatpush1.msra.mxu0 %v3155
        %v3157 = vand.u32 %v3050, 4294901760
        %3158 = vmatprep.subr.mxu0 %v3157
        %v3159 = vand.u32 %v3049, 4294901760
        %3160 = vmatpush1.msra.mxu0 %v3159
        %v3161 = vand.u32 %v3052, 4294901760
        %3162 = vmatprep.subr.mxu0 %v3161
        %v3163 = vand.u32 %v3051, 4294901760
        %3164 = vmatpush1.msra.mxu0 %v3163
        %v3165 = vand.u32 %v3054, 4294901760
        %3166 = vmatprep.subr.mxu0 %v3165
        %v3167 = vand.u32 %v3053, 4294901760
        %3168 = vmatpush1.msra.mxu0 %v3167
        %v3169 = vand.u32 %v3056, 4294901760
        %3170 = vmatprep.subr.mxu0 %v3169
        %v3171 = vand.u32 %v3055, 4294901760
        %3172 = vmatpush1.msra.mxu0 %v3171
        %v3173 = vand.u32 %v3058, 4294901760
        %3174 = vmatprep.subr.mxu0 %v3173
        %v3175 = vand.u32 %v3057, 4294901760
        %3176 = vmatpush1.msra.mxu0 %v3175
        %v3177 = vand.u32 %v3060, 4294901760
        %3178 = vmatprep.subr.mxu0 %v3177
        %v3179 = vand.u32 %v3059, 4294901760
        %3180 = vmatpush1.msra.mxu0 %v3179
        %v3181 = vand.u32 %v3062, 4294901760
        %3182 = vmatprep.subr.mxu0 %v3181
        %v3183 = vand.u32 %v3061, 4294901760
        %3184 = vmatpush1.msra.mxu0 %v3183
        %v3185 = vand.u32 %v3064, 4294901760
        %3186 = vmatprep.subr.mxu0 %v3185
        %v3187 = vand.u32 %v3063, 4294901760
        %3188 = vmatpush1.msra.mxu0 %v3187
        %v3189 = vand.u32 %v3066, 4294901760
        %3190 = vmatprep.subr.mxu0 %v3189
        %v3191 = vand.u32 %v3065, 4294901760
        %3192 = vmatpush1.msra.mxu0 %v3191
        %v3193 = vand.u32 %v3068, 4294901760
        %3194 = vmatprep.subr.mxu0 %v3193
        %v3195 = vand.u32 %v3067, 4294901760
        %3196 = vmatpush1.msra.mxu0 %v3195
        %v3197 = vand.u32 %v2939, 4294901760
        %v3198 = vsub.f32 %v2939, %v3197
        %v3199 = vand.u32 %v3198, 4294901760
        %v3200 = vsub.f32 %v3198, %v3199
        %v3201 = vand.u32 %v3200, 4294901760
        %3202 = vmatprep.mubr.f32.mxu0 %v3201
        %v3203 = vand.u32 %v2937, 4294901760
        %v3204 = vsub.f32 %v2937, %v3203
        %v3205 = vand.u32 %v3204, 4294901760
        %v3206 = vsub.f32 %v3204, %v3205
        %v3207 = vand.u32 %v3206, 4294901760
        %3208 = vmatmul.mubr.f32.gmra.mrb[0].mxu0 %v3207
        %v3209 = vpop.f32.mrb[0].mxu0
        %v3210 = vadd.f32 0.0, %v3209
        %v3211 = vpop.f32.mrb[0].mxu0
        %v3212 = vadd.f32 0.0, %v3211
        %3213 = vdwg.mxu0
        %v3214 = vand.u32 %v3006, 4294901760
        %v3215 = vsub.f32 %v3006, %v3214
        %v3216 = vand.u32 %v3215, 4294901760
        %v3217 = vsub.f32 %v3215, %v3216
        %v3218 = vand.u32 %v3217, 4294901760
        %3219 = vmatprep.subr.mxu0 %v3218
        %v3220 = vand.u32 %v3005, 4294901760
        %v3221 = vsub.f32 %v3005, %v3220
        %v3222 = vand.u32 %v3221, 4294901760
        %v3223 = vsub.f32 %v3221, %v3222
        %v3224 = vand.u32 %v3223, 4294901760
        %3225 = vmatpush1.msra.mxu0 %v3224
        %v3226 = vand.u32 %v3008, 4294901760
        %v3227 = vsub.f32 %v3008, %v3226
        %v3228 = vand.u32 %v3227, 4294901760
        %v3229 = vsub.f32 %v3227, %v3228
        %v3230 = vand.u32 %v3229, 4294901760
        %3231 = vmatprep.subr.mxu0 %v3230
        %v3232 = vand.u32 %v3007, 4294901760
        %v3233 = vsub.f32 %v3007, %v3232
        %v3234 = vand.u32 %v3233, 4294901760
        %v3235 = vsub.f32 %v3233, %v3234
        %v3236 = vand.u32 %v3235, 4294901760
        %3237 = vmatpush1.msra.mxu0 %v3236
        %v3238 = vand.u32 %v3010, 4294901760
        %v3239 = vsub.f32 %v3010, %v3238
        %v3240 = vand.u32 %v3239, 4294901760
        %v3241 = vsub.f32 %v3239, %v3240
        %v3242 = vand.u32 %v3241, 4294901760
        %3243 = vmatprep.subr.mxu0 %v3242
        %v3244 = vand.u32 %v3009, 4294901760
        %v3245 = vsub.f32 %v3009, %v3244
        %v3246 = vand.u32 %v3245, 4294901760
        %v3247 = vsub.f32 %v3245, %v3246
        %v3248 = vand.u32 %v3247, 4294901760
        %3249 = vmatpush1.msra.mxu0 %v3248
        %v3250 = vand.u32 %v3012, 4294901760
        %v3251 = vsub.f32 %v3012, %v3250
        %v3252 = vand.u32 %v3251, 4294901760
        %v3253 = vsub.f32 %v3251, %v3252
        %v3254 = vand.u32 %v3253, 4294901760
        %3255 = vmatprep.subr.mxu0 %v3254
        %v3256 = vand.u32 %v3011, 4294901760
        %v3257 = vsub.f32 %v3011, %v3256
        %v3258 = vand.u32 %v3257, 4294901760
        %v3259 = vsub.f32 %v3257, %v3258
        %v3260 = vand.u32 %v3259, 4294901760
        %3261 = vmatpush1.msra.mxu0 %v3260
        %v3262 = vand.u32 %v3014, 4294901760
        %v3263 = vsub.f32 %v3014, %v3262
        %v3264 = vand.u32 %v3263, 4294901760
        %v3265 = vsub.f32 %v3263, %v3264
        %v3266 = vand.u32 %v3265, 4294901760
        %3267 = vmatprep.subr.mxu0 %v3266
        %v3268 = vand.u32 %v3013, 4294901760
        %v3269 = vsub.f32 %v3013, %v3268
        %v3270 = vand.u32 %v3269, 4294901760
        %v3271 = vsub.f32 %v3269, %v3270
        %v3272 = vand.u32 %v3271, 4294901760
        %3273 = vmatpush1.msra.mxu0 %v3272
        %v3274 = vand.u32 %v3016, 4294901760
        %v3275 = vsub.f32 %v3016, %v3274
        %v3276 = vand.u32 %v3275, 4294901760
        %v3277 = vsub.f32 %v3275, %v3276
        %v3278 = vand.u32 %v3277, 4294901760
        %3279 = vmatprep.subr.mxu0 %v3278
        %v3280 = vand.u32 %v3015, 4294901760
        %v3281 = vsub.f32 %v3015, %v3280
        %v3282 = vand.u32 %v3281, 4294901760
        %v3283 = vsub.f32 %v3281, %v3282
        %v3284 = vand.u32 %v3283, 4294901760
        %3285 = vmatpush1.msra.mxu0 %v3284
        %v3286 = vand.u32 %v3018, 4294901760
        %v3287 = vsub.f32 %v3018, %v3286
        %v3288 = vand.u32 %v3287, 4294901760
        %v3289 = vsub.f32 %v3287, %v3288
        %v3290 = vand.u32 %v3289, 4294901760
        %3291 = vmatprep.subr.mxu0 %v3290
        %v3292 = vand.u32 %v3017, 4294901760
        %v3293 = vsub.f32 %v3017, %v3292
        %v3294 = vand.u32 %v3293, 4294901760
        %v3295 = vsub.f32 %v3293, %v3294
        %v3296 = vand.u32 %v3295, 4294901760
        %3297 = vmatpush1.msra.mxu0 %v3296
        %v3298 = vand.u32 %v3020, 4294901760
        %v3299 = vsub.f32 %v3020, %v3298
        %v3300 = vand.u32 %v3299, 4294901760
        %v3301 = vsub.f32 %v3299, %v3300
        %v3302 = vand.u32 %v3301, 4294901760
        %3303 = vmatprep.subr.mxu0 %v3302
        %v3304 = vand.u32 %v3019, 4294901760
        %v3305 = vsub.f32 %v3019, %v3304
        %v3306 = vand.u32 %v3305, 4294901760
        %v3307 = vsub.f32 %v3305, %v3306
        %v3308 = vand.u32 %v3307, 4294901760
        %3309 = vmatpush1.msra.mxu0 %v3308
        %v3310 = vand.u32 %v3022, 4294901760
        %v3311 = vsub.f32 %v3022, %v3310
        %v3312 = vand.u32 %v3311, 4294901760
        %v3313 = vsub.f32 %v3311, %v3312
        %v3314 = vand.u32 %v3313, 4294901760
        %3315 = vmatprep.subr.mxu0 %v3314
        %v3316 = vand.u32 %v3021, 4294901760
        %v3317 = vsub.f32 %v3021, %v3316
        %v3318 = vand.u32 %v3317, 4294901760
        %v3319 = vsub.f32 %v3317, %v3318
        %v3320 = vand.u32 %v3319, 4294901760
        %3321 = vmatpush1.msra.mxu0 %v3320
        %v3322 = vand.u32 %v3024, 4294901760
        %v3323 = vsub.f32 %v3024, %v3322
        %v3324 = vand.u32 %v3323, 4294901760
        %v3325 = vsub.f32 %v3323, %v3324
        %v3326 = vand.u32 %v3325, 4294901760
        %3327 = vmatprep.subr.mxu0 %v3326
        %v3328 = vand.u32 %v3023, 4294901760
        %v3329 = vsub.f32 %v3023, %v3328
        %v3330 = vand.u32 %v3329, 4294901760
        %v3331 = vsub.f32 %v3329, %v3330
        %v3332 = vand.u32 %v3331, 4294901760
        %3333 = vmatpush1.msra.mxu0 %v3332
        %v3334 = vand.u32 %v3026, 4294901760
        %v3335 = vsub.f32 %v3026, %v3334
        %v3336 = vand.u32 %v3335, 4294901760
        %v3337 = vsub.f32 %v3335, %v3336
        %v3338 = vand.u32 %v3337, 4294901760
        %3339 = vmatprep.subr.mxu0 %v3338
        %v3340 = vand.u32 %v3025, 4294901760
        %v3341 = vsub.f32 %v3025, %v3340
        %v3342 = vand.u32 %v3341, 4294901760
        %v3343 = vsub.f32 %v3341, %v3342
        %v3344 = vand.u32 %v3343, 4294901760
        %3345 = vmatpush1.msra.mxu0 %v3344
        %v3346 = vand.u32 %v3028, 4294901760
        %v3347 = vsub.f32 %v3028, %v3346
        %v3348 = vand.u32 %v3347, 4294901760
        %v3349 = vsub.f32 %v3347, %v3348
        %v3350 = vand.u32 %v3349, 4294901760
        %3351 = vmatprep.subr.mxu0 %v3350
        %v3352 = vand.u32 %v3027, 4294901760
        %v3353 = vsub.f32 %v3027, %v3352
        %v3354 = vand.u32 %v3353, 4294901760
        %v3355 = vsub.f32 %v3353, %v3354
        %v3356 = vand.u32 %v3355, 4294901760
        %3357 = vmatpush1.msra.mxu0 %v3356
        %v3358 = vand.u32 %v3030, 4294901760
        %v3359 = vsub.f32 %v3030, %v3358
        %v3360 = vand.u32 %v3359, 4294901760
        %v3361 = vsub.f32 %v3359, %v3360
        %v3362 = vand.u32 %v3361, 4294901760
        %3363 = vmatprep.subr.mxu0 %v3362
        %v3364 = vand.u32 %v3029, 4294901760
        %v3365 = vsub.f32 %v3029, %v3364
        %v3366 = vand.u32 %v3365, 4294901760
        %v3367 = vsub.f32 %v3365, %v3366
        %v3368 = vand.u32 %v3367, 4294901760
        %3369 = vmatpush1.msra.mxu0 %v3368
        %v3370 = vand.u32 %v3032, 4294901760
        %v3371 = vsub.f32 %v3032, %v3370
        %v3372 = vand.u32 %v3371, 4294901760
        %v3373 = vsub.f32 %v3371, %v3372
        %v3374 = vand.u32 %v3373, 4294901760
        %3375 = vmatprep.subr.mxu0 %v3374
        %v3376 = vand.u32 %v3031, 4294901760
        %v3377 = vsub.f32 %v3031, %v3376
        %v3378 = vand.u32 %v3377, 4294901760
        %v3379 = vsub.f32 %v3377, %v3378
        %v3380 = vand.u32 %v3379, 4294901760
        %3381 = vmatpush1.msra.mxu0 %v3380
        %v3382 = vand.u32 %v3034, 4294901760
        %v3383 = vsub.f32 %v3034, %v3382
        %v3384 = vand.u32 %v3383, 4294901760
        %v3385 = vsub.f32 %v3383, %v3384
        %v3386 = vand.u32 %v3385, 4294901760
        %3387 = vmatprep.subr.mxu0 %v3386
        %v3388 = vand.u32 %v3033, 4294901760
        %v3389 = vsub.f32 %v3033, %v3388
        %v3390 = vand.u32 %v3389, 4294901760
        %v3391 = vsub.f32 %v3389, %v3390
        %v3392 = vand.u32 %v3391, 4294901760
        %3393 = vmatpush1.msra.mxu0 %v3392
        %v3394 = vand.u32 %v3036, 4294901760
        %v3395 = vsub.f32 %v3036, %v3394
        %v3396 = vand.u32 %v3395, 4294901760
        %v3397 = vsub.f32 %v3395, %v3396
        %v3398 = vand.u32 %v3397, 4294901760
        %3399 = vmatprep.subr.mxu0 %v3398
        %v3400 = vand.u32 %v3035, 4294901760
        %v3401 = vsub.f32 %v3035, %v3400
        %v3402 = vand.u32 %v3401, 4294901760
        %v3403 = vsub.f32 %v3401, %v3402
        %v3404 = vand.u32 %v3403, 4294901760
        %3405 = vmatpush1.msra.mxu0 %v3404
        %v3406 = vand.u32 %v3038, 4294901760
        %v3407 = vsub.f32 %v3038, %v3406
        %v3408 = vand.u32 %v3407, 4294901760
        %v3409 = vsub.f32 %v3407, %v3408
        %v3410 = vand.u32 %v3409, 4294901760
        %3411 = vmatprep.subr.mxu0 %v3410
        %v3412 = vand.u32 %v3037, 4294901760
        %v3413 = vsub.f32 %v3037, %v3412
        %v3414 = vand.u32 %v3413, 4294901760
        %v3415 = vsub.f32 %v3413, %v3414
        %v3416 = vand.u32 %v3415, 4294901760
        %3417 = vmatpush1.msra.mxu0 %v3416
        %v3418 = vand.u32 %v3040, 4294901760
        %v3419 = vsub.f32 %v3040, %v3418
        %v3420 = vand.u32 %v3419, 4294901760
        %v3421 = vsub.f32 %v3419, %v3420
        %v3422 = vand.u32 %v3421, 4294901760
        %3423 = vmatprep.subr.mxu0 %v3422
        %v3424 = vand.u32 %v3039, 4294901760
        %v3425 = vsub.f32 %v3039, %v3424
        %v3426 = vand.u32 %v3425, 4294901760
        %v3427 = vsub.f32 %v3425, %v3426
        %v3428 = vand.u32 %v3427, 4294901760
        %3429 = vmatpush1.msra.mxu0 %v3428
        %v3430 = vand.u32 %v3042, 4294901760
        %v3431 = vsub.f32 %v3042, %v3430
        %v3432 = vand.u32 %v3431, 4294901760
        %v3433 = vsub.f32 %v3431, %v3432
        %v3434 = vand.u32 %v3433, 4294901760
        %3435 = vmatprep.subr.mxu0 %v3434
        %v3436 = vand.u32 %v3041, 4294901760
        %v3437 = vsub.f32 %v3041, %v3436
        %v3438 = vand.u32 %v3437, 4294901760
        %v3439 = vsub.f32 %v3437, %v3438
        %v3440 = vand.u32 %v3439, 4294901760
        %3441 = vmatpush1.msra.mxu0 %v3440
        %v3442 = vand.u32 %v3044, 4294901760
        %v3443 = vsub.f32 %v3044, %v3442
        %v3444 = vand.u32 %v3443, 4294901760
        %v3445 = vsub.f32 %v3443, %v3444
        %v3446 = vand.u32 %v3445, 4294901760
        %3447 = vmatprep.subr.mxu0 %v3446
        %v3448 = vand.u32 %v3043, 4294901760
        %v3449 = vsub.f32 %v3043, %v3448
        %v3450 = vand.u32 %v3449, 4294901760
        %v3451 = vsub.f32 %v3449, %v3450
        %v3452 = vand.u32 %v3451, 4294901760
        %3453 = vmatpush1.msra.mxu0 %v3452
        %v3454 = vand.u32 %v3046, 4294901760
        %v3455 = vsub.f32 %v3046, %v3454
        %v3456 = vand.u32 %v3455, 4294901760
        %v3457 = vsub.f32 %v3455, %v3456
        %v3458 = vand.u32 %v3457, 4294901760
        %3459 = vmatprep.subr.mxu0 %v3458
        %v3460 = vand.u32 %v3045, 4294901760
        %v3461 = vsub.f32 %v3045, %v3460
        %v3462 = vand.u32 %v3461, 4294901760
        %v3463 = vsub.f32 %v3461, %v3462
        %v3464 = vand.u32 %v3463, 4294901760
        %3465 = vmatpush1.msra.mxu0 %v3464
        %v3466 = vand.u32 %v3048, 4294901760
        %v3467 = vsub.f32 %v3048, %v3466
        %v3468 = vand.u32 %v3467, 4294901760
        %v3469 = vsub.f32 %v3467, %v3468
        %v3470 = vand.u32 %v3469, 4294901760
        %3471 = vmatprep.subr.mxu0 %v3470
        %v3472 = vand.u32 %v3047, 4294901760
        %v3473 = vsub.f32 %v3047, %v3472
        %v3474 = vand.u32 %v3473, 4294901760
        %v3475 = vsub.f32 %v3473, %v3474
        %v3476 = vand.u32 %v3475, 4294901760
        %3477 = vmatpush1.msra.mxu0 %v3476
        %v3478 = vand.u32 %v3050, 4294901760
        %v3479 = vsub.f32 %v3050, %v3478
        %v3480 = vand.u32 %v3479, 4294901760
        %v3481 = vsub.f32 %v3479, %v3480
        %v3482 = vand.u32 %v3481, 4294901760
        %3483 = vmatprep.subr.mxu0 %v3482
        %v3484 = vand.u32 %v3049, 4294901760
        %v3485 = vsub.f32 %v3049, %v3484
        %v3486 = vand.u32 %v3485, 4294901760
        %v3487 = vsub.f32 %v3485, %v3486
        %v3488 = vand.u32 %v3487, 4294901760
        %3489 = vmatpush1.msra.mxu0 %v3488
        %v3490 = vand.u32 %v3052, 4294901760
        %v3491 = vsub.f32 %v3052, %v3490
        %v3492 = vand.u32 %v3491, 4294901760
        %v3493 = vsub.f32 %v3491, %v3492
        %v3494 = vand.u32 %v3493, 4294901760
        %3495 = vmatprep.subr.mxu0 %v3494
        %v3496 = vand.u32 %v3051, 4294901760
        %v3497 = vsub.f32 %v3051, %v3496
        %v3498 = vand.u32 %v3497, 4294901760
        %v3499 = vsub.f32 %v3497, %v3498
        %v3500 = vand.u32 %v3499, 4294901760
        %3501 = vmatpush1.msra.mxu0 %v3500
        %v3502 = vand.u32 %v3054, 4294901760
        %v3503 = vsub.f32 %v3054, %v3502
        %v3504 = vand.u32 %v3503, 4294901760
        %v3505 = vsub.f32 %v3503, %v3504
        %v3506 = vand.u32 %v3505, 4294901760
        %3507 = vmatprep.subr.mxu0 %v3506
        %v3508 = vand.u32 %v3053, 4294901760
        %v3509 = vsub.f32 %v3053, %v3508
        %v3510 = vand.u32 %v3509, 4294901760
        %v3511 = vsub.f32 %v3509, %v3510
        %v3512 = vand.u32 %v3511, 4294901760
        %3513 = vmatpush1.msra.mxu0 %v3512
        %v3514 = vand.u32 %v3056, 4294901760
        %v3515 = vsub.f32 %v3056, %v3514
        %v3516 = vand.u32 %v3515, 4294901760
        %v3517 = vsub.f32 %v3515, %v3516
        %v3518 = vand.u32 %v3517, 4294901760
        %3519 = vmatprep.subr.mxu0 %v3518
        %v3520 = vand.u32 %v3055, 4294901760
        %v3521 = vsub.f32 %v3055, %v3520
        %v3522 = vand.u32 %v3521, 4294901760
        %v3523 = vsub.f32 %v3521, %v3522
        %v3524 = vand.u32 %v3523, 4294901760
        %3525 = vmatpush1.msra.mxu0 %v3524
        %v3526 = vand.u32 %v3058, 4294901760
        %v3527 = vsub.f32 %v3058, %v3526
        %v3528 = vand.u32 %v3527, 4294901760
        %v3529 = vsub.f32 %v3527, %v3528
        %v3530 = vand.u32 %v3529, 4294901760
        %3531 = vmatprep.subr.mxu0 %v3530
        %v3532 = vand.u32 %v3057, 4294901760
        %v3533 = vsub.f32 %v3057, %v3532
        %v3534 = vand.u32 %v3533, 4294901760
        %v3535 = vsub.f32 %v3533, %v3534
        %v3536 = vand.u32 %v3535, 4294901760
        %3537 = vmatpush1.msra.mxu0 %v3536
        %v3538 = vand.u32 %v3060, 4294901760
        %v3539 = vsub.f32 %v3060, %v3538
        %v3540 = vand.u32 %v3539, 4294901760
        %v3541 = vsub.f32 %v3539, %v3540
        %v3542 = vand.u32 %v3541, 4294901760
        %3543 = vmatprep.subr.mxu0 %v3542
        %v3544 = vand.u32 %v3059, 4294901760
        %v3545 = vsub.f32 %v3059, %v3544
        %v3546 = vand.u32 %v3545, 4294901760
        %v3547 = vsub.f32 %v3545, %v3546
        %v3548 = vand.u32 %v3547, 4294901760
        %3549 = vmatpush1.msra.mxu0 %v3548
        %v3550 = vand.u32 %v3062, 4294901760
        %v3551 = vsub.f32 %v3062, %v3550
        %v3552 = vand.u32 %v3551, 4294901760
        %v3553 = vsub.f32 %v3551, %v3552
        %v3554 = vand.u32 %v3553, 4294901760
        %3555 = vmatprep.subr.mxu0 %v3554
        %v3556 = vand.u32 %v3061, 4294901760
        %v3557 = vsub.f32 %v3061, %v3556
        %v3558 = vand.u32 %v3557, 4294901760
        %v3559 = vsub.f32 %v3557, %v3558
        %v3560 = vand.u32 %v3559, 4294901760
        %3561 = vmatpush1.msra.mxu0 %v3560
        %v3562 = vand.u32 %v3064, 4294901760
        %v3563 = vsub.f32 %v3064, %v3562
        %v3564 = vand.u32 %v3563, 4294901760
        %v3565 = vsub.f32 %v3563, %v3564
        %v3566 = vand.u32 %v3565, 4294901760
        %3567 = vmatprep.subr.mxu0 %v3566
        %v3568 = vand.u32 %v3063, 4294901760
        %v3569 = vsub.f32 %v3063, %v3568
        %v3570 = vand.u32 %v3569, 4294901760
        %v3571 = vsub.f32 %v3569, %v3570
        %v3572 = vand.u32 %v3571, 4294901760
        %3573 = vmatpush1.msra.mxu0 %v3572
        %v3574 = vand.u32 %v3066, 4294901760
        %v3575 = vsub.f32 %v3066, %v3574
        %v3576 = vand.u32 %v3575, 4294901760
        %v3577 = vsub.f32 %v3575, %v3576
        %v3578 = vand.u32 %v3577, 4294901760
        %3579 = vmatprep.subr.mxu0 %v3578
        %v3580 = vand.u32 %v3065, 4294901760
        %v3581 = vsub.f32 %v3065, %v3580
        %v3582 = vand.u32 %v3581, 4294901760
        %v3583 = vsub.f32 %v3581, %v3582
        %v3584 = vand.u32 %v3583, 4294901760
        %3585 = vmatpush1.msra.mxu0 %v3584
        %v3586 = vand.u32 %v3068, 4294901760
        %v3587 = vsub.f32 %v3068, %v3586
        %v3588 = vand.u32 %v3587, 4294901760
        %v3589 = vsub.f32 %v3587, %v3588
        %v3590 = vand.u32 %v3589, 4294901760
        %3591 = vmatprep.subr.mxu0 %v3590
        %v3592 = vand.u32 %v3067, 4294901760
        %v3593 = vsub.f32 %v3067, %v3592
        %v3594 = vand.u32 %v3593, 4294901760
        %v3595 = vsub.f32 %v3593, %v3594
        %v3596 = vand.u32 %v3595, 4294901760
        %3597 = vmatpush1.msra.mxu0 %v3596
        %v3598 = vand.u32 %v2939, 4294901760
        %3599 = vmatprep.mubr.f32.mxu0 %v3598
        %v3600 = vand.u32 %v2937, 4294901760
        %3601 = vmatmul.mubr.f32.gmra.mrb[0].mxu0 %v3600
        %v3602 = vpop.f32.mrb[0].mxu0
        %v3603 = vadd.f32 %v3210, %v3602
        %v3604 = vpop.f32.mrb[0].mxu0
        %v3605 = vadd.f32 %v3212, %v3604
        %3606 = vdwg.mxu0
        %v3607 = vand.u32 %v3006, 4294901760
        %v3608 = vsub.f32 %v3006, %v3607
        %3609 = vmatprep.subr.mxu0 %v3608
        %v3610 = vand.u32 %v3005, 4294901760
        %v3611 = vsub.f32 %v3005, %v3610
        %3612 = vmatpush1.msra.mxu0 %v3611
        %v3613 = vand.u32 %v3008, 4294901760
        %v3614 = vsub.f32 %v3008, %v3613
        %3615 = vmatprep.subr.mxu0 %v3614
        %v3616 = vand.u32 %v3007, 4294901760
        %v3617 = vsub.f32 %v3007, %v3616
        %3618 = vmatpush1.msra.mxu0 %v3617
        %v3619 = vand.u32 %v3010, 4294901760
        %v3620 = vsub.f32 %v3010, %v3619
        %3621 = vmatprep.subr.mxu0 %v3620
        %v3622 = vand.u32 %v3009, 4294901760
        %v3623 = vsub.f32 %v3009, %v3622
        %3624 = vmatpush1.msra.mxu0 %v3623
        %v3625 = vand.u32 %v3012, 4294901760
        %v3626 = vsub.f32 %v3012, %v3625
        %3627 = vmatprep.subr.mxu0 %v3626
        %v3628 = vand.u32 %v3011, 4294901760
        %v3629 = vsub.f32 %v3011, %v3628
        %3630 = vmatpush1.msra.mxu0 %v3629
        %v3631 = vand.u32 %v3014, 4294901760
        %v3632 = vsub.f32 %v3014, %v3631
        %3633 = vmatprep.subr.mxu0 %v3632
        %v3634 = vand.u32 %v3013, 4294901760
        %v3635 = vsub.f32 %v3013, %v3634
        %3636 = vmatpush1.msra.mxu0 %v3635
        %v3637 = vand.u32 %v3016, 4294901760
        %v3638 = vsub.f32 %v3016, %v3637
        %3639 = vmatprep.subr.mxu0 %v3638
        %v3640 = vand.u32 %v3015, 4294901760
        %v3641 = vsub.f32 %v3015, %v3640
        %3642 = vmatpush1.msra.mxu0 %v3641
        %v3643 = vand.u32 %v3018, 4294901760
        %v3644 = vsub.f32 %v3018, %v3643
        %3645 = vmatprep.subr.mxu0 %v3644
        %v3646 = vand.u32 %v3017, 4294901760
        %v3647 = vsub.f32 %v3017, %v3646
        %3648 = vmatpush1.msra.mxu0 %v3647
        %v3649 = vand.u32 %v3020, 4294901760
        %v3650 = vsub.f32 %v3020, %v3649
        %3651 = vmatprep.subr.mxu0 %v3650
        %v3652 = vand.u32 %v3019, 4294901760
        %v3653 = vsub.f32 %v3019, %v3652
        %3654 = vmatpush1.msra.mxu0 %v3653
        %v3655 = vand.u32 %v3022, 4294901760
        %v3656 = vsub.f32 %v3022, %v3655
        %3657 = vmatprep.subr.mxu0 %v3656
        %v3658 = vand.u32 %v3021, 4294901760
        %v3659 = vsub.f32 %v3021, %v3658
        %3660 = vmatpush1.msra.mxu0 %v3659
        %v3661 = vand.u32 %v3024, 4294901760
        %v3662 = vsub.f32 %v3024, %v3661
        %3663 = vmatprep.subr.mxu0 %v3662
        %v3664 = vand.u32 %v3023, 4294901760
        %v3665 = vsub.f32 %v3023, %v3664
        %3666 = vmatpush1.msra.mxu0 %v3665
        %v3667 = vand.u32 %v3026, 4294901760
        %v3668 = vsub.f32 %v3026, %v3667
        %3669 = vmatprep.subr.mxu0 %v3668
        %v3670 = vand.u32 %v3025, 4294901760
        %v3671 = vsub.f32 %v3025, %v3670
        %3672 = vmatpush1.msra.mxu0 %v3671
        %v3673 = vand.u32 %v3028, 4294901760
        %v3674 = vsub.f32 %v3028, %v3673
        %3675 = vmatprep.subr.mxu0 %v3674
        %v3676 = vand.u32 %v3027, 4294901760
        %v3677 = vsub.f32 %v3027, %v3676
        %3678 = vmatpush1.msra.mxu0 %v3677
        %v3679 = vand.u32 %v3030, 4294901760
        %v3680 = vsub.f32 %v3030, %v3679
        %3681 = vmatprep.subr.mxu0 %v3680
        %v3682 = vand.u32 %v3029, 4294901760
        %v3683 = vsub.f32 %v3029, %v3682
        %3684 = vmatpush1.msra.mxu0 %v3683
        %v3685 = vand.u32 %v3032, 4294901760
        %v3686 = vsub.f32 %v3032, %v3685
        %3687 = vmatprep.subr.mxu0 %v3686
        %v3688 = vand.u32 %v3031, 4294901760
        %v3689 = vsub.f32 %v3031, %v3688
        %3690 = vmatpush1.msra.mxu0 %v3689
        %v3691 = vand.u32 %v3034, 4294901760
        %v3692 = vsub.f32 %v3034, %v3691
        %3693 = vmatprep.subr.mxu0 %v3692
        %v3694 = vand.u32 %v3033, 4294901760
        %v3695 = vsub.f32 %v3033, %v3694
        %3696 = vmatpush1.msra.mxu0 %v3695
        %v3697 = vand.u32 %v3036, 4294901760
        %v3698 = vsub.f32 %v3036, %v3697
        %3699 = vmatprep.subr.mxu0 %v3698
        %v3700 = vand.u32 %v3035, 4294901760
        %v3701 = vsub.f32 %v3035, %v3700
        %3702 = vmatpush1.msra.mxu0 %v3701
        %v3703 = vand.u32 %v3038, 4294901760
        %v3704 = vsub.f32 %v3038, %v3703
        %3705 = vmatprep.subr.mxu0 %v3704
        %v3706 = vand.u32 %v3037, 4294901760
        %v3707 = vsub.f32 %v3037, %v3706
        %3708 = vmatpush1.msra.mxu0 %v3707
        %v3709 = vand.u32 %v3040, 4294901760
        %v3710 = vsub.f32 %v3040, %v3709
        %3711 = vmatprep.subr.mxu0 %v3710
        %v3712 = vand.u32 %v3039, 4294901760
        %v3713 = vsub.f32 %v3039, %v3712
        %3714 = vmatpush1.msra.mxu0 %v3713
        %v3715 = vand.u32 %v3042, 4294901760
        %v3716 = vsub.f32 %v3042, %v3715
        %3717 = vmatprep.subr.mxu0 %v3716
        %v3718 = vand.u32 %v3041, 4294901760
        %v3719 = vsub.f32 %v3041, %v3718
        %3720 = vmatpush1.msra.mxu0 %v3719
        %v3721 = vand.u32 %v3044, 4294901760
        %v3722 = vsub.f32 %v3044, %v3721
        %3723 = vmatprep.subr.mxu0 %v3722
        %v3724 = vand.u32 %v3043, 4294901760
        %v3725 = vsub.f32 %v3043, %v3724
        %3726 = vmatpush1.msra.mxu0 %v3725
        %v3727 = vand.u32 %v3046, 4294901760
        %v3728 = vsub.f32 %v3046, %v3727
        %3729 = vmatprep.subr.mxu0 %v3728
        %v3730 = vand.u32 %v3045, 4294901760
        %v3731 = vsub.f32 %v3045, %v3730
        %3732 = vmatpush1.msra.mxu0 %v3731
        %v3733 = vand.u32 %v3048, 4294901760
        %v3734 = vsub.f32 %v3048, %v3733
        %3735 = vmatprep.subr.mxu0 %v3734
        %v3736 = vand.u32 %v3047, 4294901760
        %v3737 = vsub.f32 %v3047, %v3736
        %3738 = vmatpush1.msra.mxu0 %v3737
        %v3739 = vand.u32 %v3050, 4294901760
        %v3740 = vsub.f32 %v3050, %v3739
        %3741 = vmatprep.subr.mxu0 %v3740
        %v3742 = vand.u32 %v3049, 4294901760
        %v3743 = vsub.f32 %v3049, %v3742
        %3744 = vmatpush1.msra.mxu0 %v3743
        %v3745 = vand.u32 %v3052, 4294901760
        %v3746 = vsub.f32 %v3052, %v3745
        %3747 = vmatprep.subr.mxu0 %v3746
        %v3748 = vand.u32 %v3051, 4294901760
        %v3749 = vsub.f32 %v3051, %v3748
        %3750 = vmatpush1.msra.mxu0 %v3749
        %v3751 = vand.u32 %v3054, 4294901760
        %v3752 = vsub.f32 %v3054, %v3751
        %3753 = vmatprep.subr.mxu0 %v3752
        %v3754 = vand.u32 %v3053, 4294901760
        %v3755 = vsub.f32 %v3053, %v3754
        %3756 = vmatpush1.msra.mxu0 %v3755
        %v3757 = vand.u32 %v3056, 4294901760
        %v3758 = vsub.f32 %v3056, %v3757
        %3759 = vmatprep.subr.mxu0 %v3758
        %v3760 = vand.u32 %v3055, 4294901760
        %v3761 = vsub.f32 %v3055, %v3760
        %3762 = vmatpush1.msra.mxu0 %v3761
        %v3763 = vand.u32 %v3058, 4294901760
        %v3764 = vsub.f32 %v3058, %v3763
        %3765 = vmatprep.subr.mxu0 %v3764
        %v3766 = vand.u32 %v3057, 4294901760
        %v3767 = vsub.f32 %v3057, %v3766
        %3768 = vmatpush1.msra.mxu0 %v3767
        %v3769 = vand.u32 %v3060, 4294901760
        %v3770 = vsub.f32 %v3060, %v3769
        %3771 = vmatprep.subr.mxu0 %v3770
        %v3772 = vand.u32 %v3059, 4294901760
        %v3773 = vsub.f32 %v3059, %v3772
        %3774 = vmatpush1.msra.mxu0 %v3773
        %v3775 = vand.u32 %v3062, 4294901760
        %v3776 = vsub.f32 %v3062, %v3775
        %3777 = vmatprep.subr.mxu0 %v3776
        %v3778 = vand.u32 %v3061, 4294901760
        %v3779 = vsub.f32 %v3061, %v3778
        %3780 = vmatpush1.msra.mxu0 %v3779
        %v3781 = vand.u32 %v3064, 4294901760
        %v3782 = vsub.f32 %v3064, %v3781
        %3783 = vmatprep.subr.mxu0 %v3782
        %v3784 = vand.u32 %v3063, 4294901760
        %v3785 = vsub.f32 %v3063, %v3784
        %3786 = vmatpush1.msra.mxu0 %v3785
        %v3787 = vand.u32 %v3066, 4294901760
        %v3788 = vsub.f32 %v3066, %v3787
        %3789 = vmatprep.subr.mxu0 %v3788
        %v3790 = vand.u32 %v3065, 4294901760
        %v3791 = vsub.f32 %v3065, %v3790
        %3792 = vmatpush1.msra.mxu0 %v3791
        %v3793 = vand.u32 %v3068, 4294901760
        %v3794 = vsub.f32 %v3068, %v3793
        %3795 = vmatprep.subr.mxu0 %v3794
        %v3796 = vand.u32 %v3067, 4294901760
        %v3797 = vsub.f32 %v3067, %v3796
        %3798 = vmatpush1.msra.mxu0 %v3797
        %v3799 = vand.u32 %v2939, 4294901760
        %v3800 = vsub.f32 %v2939, %v3799
        %3801 = vmatprep.mubr.f32.mxu0 %v3800
        %v3802 = vand.u32 %v2937, 4294901760
        %v3803 = vsub.f32 %v2937, %v3802
        %3804 = vmatmul.mubr.f32.gmra.mrb[0].mxu0 %v3803
        %v3805 = vpop.f32.mrb[0].mxu0
        %v3806 = vadd.f32 %v3603, %v3805
        %v3807 = vpop.f32.mrb[0].mxu0
        %v3808 = vadd.f32 %v3605, %v3807
        %3809 = vdwg.mxu0
        %v3810 = vand.u32 %v3006, 4294901760
        %3811 = vmatprep.subr.mxu0 %v3810
        %v3812 = vand.u32 %v3005, 4294901760
        %3813 = vmatpush1.msra.mxu0 %v3812
        %v3814 = vand.u32 %v3008, 4294901760
        %3815 = vmatprep.subr.mxu0 %v3814
        %v3816 = vand.u32 %v3007, 4294901760
        %3817 = vmatpush1.msra.mxu0 %v3816
        %v3818 = vand.u32 %v3010, 4294901760
        %3819 = vmatprep.subr.mxu0 %v3818
        %v3820 = vand.u32 %v3009, 4294901760
        %3821 = vmatpush1.msra.mxu0 %v3820
        %v3822 = vand.u32 %v3012, 4294901760
        %3823 = vmatprep.subr.mxu0 %v3822
        %v3824 = vand.u32 %v3011, 4294901760
        %3825 = vmatpush1.msra.mxu0 %v3824
        %v3826 = vand.u32 %v3014, 4294901760
        %3827 = vmatprep.subr.mxu0 %v3826
        %v3828 = vand.u32 %v3013, 4294901760
        %3829 = vmatpush1.msra.mxu0 %v3828
        %v3830 = vand.u32 %v3016, 4294901760
        %3831 = vmatprep.subr.mxu0 %v3830
        %v3832 = vand.u32 %v3015, 4294901760
        %3833 = vmatpush1.msra.mxu0 %v3832
        %v3834 = vand.u32 %v3018, 4294901760
        %3835 = vmatprep.subr.mxu0 %v3834
        %v3836 = vand.u32 %v3017, 4294901760
        %3837 = vmatpush1.msra.mxu0 %v3836
        %v3838 = vand.u32 %v3020, 4294901760
        %3839 = vmatprep.subr.mxu0 %v3838
        %v3840 = vand.u32 %v3019, 4294901760
        %3841 = vmatpush1.msra.mxu0 %v3840
        %v3842 = vand.u32 %v3022, 4294901760
        %3843 = vmatprep.subr.mxu0 %v3842
        %v3844 = vand.u32 %v3021, 4294901760
        %3845 = vmatpush1.msra.mxu0 %v3844
        %v3846 = vand.u32 %v3024, 4294901760
        %3847 = vmatprep.subr.mxu0 %v3846
        %v3848 = vand.u32 %v3023, 4294901760
        %3849 = vmatpush1.msra.mxu0 %v3848
        %v3850 = vand.u32 %v3026, 4294901760
        %3851 = vmatprep.subr.mxu0 %v3850
        %v3852 = vand.u32 %v3025, 4294901760
        %3853 = vmatpush1.msra.mxu0 %v3852
        %v3854 = vand.u32 %v3028, 4294901760
        %3855 = vmatprep.subr.mxu0 %v3854
        %v3856 = vand.u32 %v3027, 4294901760
        %3857 = vmatpush1.msra.mxu0 %v3856
        %v3858 = vand.u32 %v3030, 4294901760
        %3859 = vmatprep.subr.mxu0 %v3858
        %v3860 = vand.u32 %v3029, 4294901760
        %3861 = vmatpush1.msra.mxu0 %v3860
        %v3862 = vand.u32 %v3032, 4294901760
        %3863 = vmatprep.subr.mxu0 %v3862
        %v3864 = vand.u32 %v3031, 4294901760
        %3865 = vmatpush1.msra.mxu0 %v3864
        %v3866 = vand.u32 %v3034, 4294901760
        %3867 = vmatprep.subr.mxu0 %v3866
        %v3868 = vand.u32 %v3033, 4294901760
        %3869 = vmatpush1.msra.mxu0 %v3868
        %v3870 = vand.u32 %v3036, 4294901760
        %3871 = vmatprep.subr.mxu0 %v3870
        %v3872 = vand.u32 %v3035, 4294901760
        %3873 = vmatpush1.msra.mxu0 %v3872
        %v3874 = vand.u32 %v3038, 4294901760
        %3875 = vmatprep.subr.mxu0 %v3874
        %v3876 = vand.u32 %v3037, 4294901760
        %3877 = vmatpush1.msra.mxu0 %v3876
        %v3878 = vand.u32 %v3040, 4294901760
        %3879 = vmatprep.subr.mxu0 %v3878
        %v3880 = vand.u32 %v3039, 4294901760
        %3881 = vmatpush1.msra.mxu0 %v3880
        %v3882 = vand.u32 %v3042, 4294901760
        %3883 = vmatprep.subr.mxu0 %v3882
        %v3884 = vand.u32 %v3041, 4294901760
        %3885 = vmatpush1.msra.mxu0 %v3884
        %v3886 = vand.u32 %v3044, 4294901760
        %3887 = vmatprep.subr.mxu0 %v3886
        %v3888 = vand.u32 %v3043, 4294901760
        %3889 = vmatpush1.msra.mxu0 %v3888
        %v3890 = vand.u32 %v3046, 4294901760
        %3891 = vmatprep.subr.mxu0 %v3890
        %v3892 = vand.u32 %v3045, 4294901760
        %3893 = vmatpush1.msra.mxu0 %v3892
        %v3894 = vand.u32 %v3048, 4294901760
        %3895 = vmatprep.subr.mxu0 %v3894
        %v3896 = vand.u32 %v3047, 4294901760
        %3897 = vmatpush1.msra.mxu0 %v3896
        %v3898 = vand.u32 %v3050, 4294901760
        %3899 = vmatprep.subr.mxu0 %v3898
        %v3900 = vand.u32 %v3049, 4294901760
        %3901 = vmatpush1.msra.mxu0 %v3900
        %v3902 = vand.u32 %v3052, 4294901760
        %3903 = vmatprep.subr.mxu0 %v3902
        %v3904 = vand.u32 %v3051, 4294901760
        %3905 = vmatpush1.msra.mxu0 %v3904
        %v3906 = vand.u32 %v3054, 4294901760
        %3907 = vmatprep.subr.mxu0 %v3906
        %v3908 = vand.u32 %v3053, 4294901760
        %3909 = vmatpush1.msra.mxu0 %v3908
        %v3910 = vand.u32 %v3056, 4294901760
        %3911 = vmatprep.subr.mxu0 %v3910
        %v3912 = vand.u32 %v3055, 4294901760
        %3913 = vmatpush1.msra.mxu0 %v3912
        %v3914 = vand.u32 %v3058, 4294901760
        %3915 = vmatprep.subr.mxu0 %v3914
        %v3916 = vand.u32 %v3057, 4294901760
        %3917 = vmatpush1.msra.mxu0 %v3916
        %v3918 = vand.u32 %v3060, 4294901760
        %3919 = vmatprep.subr.mxu0 %v3918
        %v3920 = vand.u32 %v3059, 4294901760
        %3921 = vmatpush1.msra.mxu0 %v3920
        %v3922 = vand.u32 %v3062, 4294901760
        %3923 = vmatprep.subr.mxu0 %v3922
        %v3924 = vand.u32 %v3061, 4294901760
        %3925 = vmatpush1.msra.mxu0 %v3924
        %v3926 = vand.u32 %v3064, 4294901760
        %3927 = vmatprep.subr.mxu0 %v3926
        %v3928 = vand.u32 %v3063, 4294901760
        %3929 = vmatpush1.msra.mxu0 %v3928
        %v3930 = vand.u32 %v3066, 4294901760
        %3931 = vmatprep.subr.mxu0 %v3930
        %v3932 = vand.u32 %v3065, 4294901760
        %3933 = vmatpush1.msra.mxu0 %v3932
        %v3934 = vand.u32 %v3068, 4294901760
        %3935 = vmatprep.subr.mxu0 %v3934
        %v3936 = vand.u32 %v3067, 4294901760
        %3937 = vmatpush1.msra.mxu0 %v3936
        %v3938 = vand.u32 %v2939, 4294901760
        %v3939 = vsub.f32 %v2939, %v3938
        %v3940 = vand.u32 %v3939, 4294901760
        %3941 = vmatprep.mubr.f32.mxu0 %v3940
        %v3942 = vand.u32 %v2937, 4294901760
        %v3943 = vsub.f32 %v2937, %v3942
        %v3944 = vand.u32 %v3943, 4294901760
        %3945 = vmatmul.mubr.f32.gmra.mrb[0].mxu0 %v3944
        %v3946 = vpop.f32.mrb[0].mxu0
        %v3947 = vadd.f32 %v3806, %v3946
        %v3948 = vpop.f32.mrb[0].mxu0
        %v3949 = vadd.f32 %v3808, %v3948
        %3950 = vdwg.mxu0
        %v3951 = vand.u32 %v3006, 4294901760
        %v3952 = vsub.f32 %v3006, %v3951
        %v3953 = vand.u32 %v3952, 4294901760
        %3954 = vmatprep.subr.mxu0 %v3953
        %v3955 = vand.u32 %v3005, 4294901760
        %v3956 = vsub.f32 %v3005, %v3955
        %v3957 = vand.u32 %v3956, 4294901760
        %3958 = vmatpush1.msra.mxu0 %v3957
        %v3959 = vand.u32 %v3008, 4294901760
        %v3960 = vsub.f32 %v3008, %v3959
        %v3961 = vand.u32 %v3960, 4294901760
        %3962 = vmatprep.subr.mxu0 %v3961
        %v3963 = vand.u32 %v3007, 4294901760
        %v3964 = vsub.f32 %v3007, %v3963
        %v3965 = vand.u32 %v3964, 4294901760
        %3966 = vmatpush1.msra.mxu0 %v3965
        %v3967 = vand.u32 %v3010, 4294901760
        %v3968 = vsub.f32 %v3010, %v3967
        %v3969 = vand.u32 %v3968, 4294901760
        %3970 = vmatprep.subr.mxu0 %v3969
        %v3971 = vand.u32 %v3009, 4294901760
        %v3972 = vsub.f32 %v3009, %v3971
        %v3973 = vand.u32 %v3972, 4294901760
        %3974 = vmatpush1.msra.mxu0 %v3973
        %v3975 = vand.u32 %v3012, 4294901760
        %v3976 = vsub.f32 %v3012, %v3975
        %v3977 = vand.u32 %v3976, 4294901760
        %3978 = vmatprep.subr.mxu0 %v3977
        %v3979 = vand.u32 %v3011, 4294901760
        %v3980 = vsub.f32 %v3011, %v3979
        %v3981 = vand.u32 %v3980, 4294901760
        %3982 = vmatpush1.msra.mxu0 %v3981
        %v3983 = vand.u32 %v3014, 4294901760
        %v3984 = vsub.f32 %v3014, %v3983
        %v3985 = vand.u32 %v3984, 4294901760
        %3986 = vmatprep.subr.mxu0 %v3985
        %v3987 = vand.u32 %v3013, 4294901760
        %v3988 = vsub.f32 %v3013, %v3987
        %v3989 = vand.u32 %v3988, 4294901760
        %3990 = vmatpush1.msra.mxu0 %v3989
        %v3991 = vand.u32 %v3016, 4294901760
        %v3992 = vsub.f32 %v3016, %v3991
        %v3993 = vand.u32 %v3992, 4294901760
        %3994 = vmatprep.subr.mxu0 %v3993
        %v3995 = vand.u32 %v3015, 4294901760
        %v3996 = vsub.f32 %v3015, %v3995
        %v3997 = vand.u32 %v3996, 4294901760
        %3998 = vmatpush1.msra.mxu0 %v3997
        %v3999 = vand.u32 %v3018, 4294901760
        %v4000 = vsub.f32 %v3018, %v3999
        %v4001 = vand.u32 %v4000, 4294901760
        %4002 = vmatprep.subr.mxu0 %v4001
        %v4003 = vand.u32 %v3017, 4294901760
        %v4004 = vsub.f32 %v3017, %v4003
        %v4005 = vand.u32 %v4004, 4294901760
        %4006 = vmatpush1.msra.mxu0 %v4005
        %v4007 = vand.u32 %v3020, 4294901760
        %v4008 = vsub.f32 %v3020, %v4007
        %v4009 = vand.u32 %v4008, 4294901760
        %4010 = vmatprep.subr.mxu0 %v4009
        %v4011 = vand.u32 %v3019, 4294901760
        %v4012 = vsub.f32 %v3019, %v4011
        %v4013 = vand.u32 %v4012, 4294901760
        %4014 = vmatpush1.msra.mxu0 %v4013
        %v4015 = vand.u32 %v3022, 4294901760
        %v4016 = vsub.f32 %v3022, %v4015
        %v4017 = vand.u32 %v4016, 4294901760
        %4018 = vmatprep.subr.mxu0 %v4017
        %v4019 = vand.u32 %v3021, 4294901760
        %v4020 = vsub.f32 %v3021, %v4019
        %v4021 = vand.u32 %v4020, 4294901760
        %4022 = vmatpush1.msra.mxu0 %v4021
        %v4023 = vand.u32 %v3024, 4294901760
        %v4024 = vsub.f32 %v3024, %v4023
        %v4025 = vand.u32 %v4024, 4294901760
        %4026 = vmatprep.subr.mxu0 %v4025
        %v4027 = vand.u32 %v3023, 4294901760
        %v4028 = vsub.f32 %v3023, %v4027
        %v4029 = vand.u32 %v4028, 4294901760
        %4030 = vmatpush1.msra.mxu0 %v4029
        %v4031 = vand.u32 %v3026, 4294901760
        %v4032 = vsub.f32 %v3026, %v4031
        %v4033 = vand.u32 %v4032, 4294901760
        %4034 = vmatprep.subr.mxu0 %v4033
        %v4035 = vand.u32 %v3025, 4294901760
        %v4036 = vsub.f32 %v3025, %v4035
        %v4037 = vand.u32 %v4036, 4294901760
        %4038 = vmatpush1.msra.mxu0 %v4037
        %v4039 = vand.u32 %v3028, 4294901760
        %v4040 = vsub.f32 %v3028, %v4039
        %v4041 = vand.u32 %v4040, 4294901760
        %4042 = vmatprep.subr.mxu0 %v4041
        %v4043 = vand.u32 %v3027, 4294901760
        %v4044 = vsub.f32 %v3027, %v4043
        %v4045 = vand.u32 %v4044, 4294901760
        %4046 = vmatpush1.msra.mxu0 %v4045
        %v4047 = vand.u32 %v3030, 4294901760
        %v4048 = vsub.f32 %v3030, %v4047
        %v4049 = vand.u32 %v4048, 4294901760
        %4050 = vmatprep.subr.mxu0 %v4049
        %v4051 = vand.u32 %v3029, 4294901760
        %v4052 = vsub.f32 %v3029, %v4051
        %v4053 = vand.u32 %v4052, 4294901760
        %4054 = vmatpush1.msra.mxu0 %v4053
        %v4055 = vand.u32 %v3032, 4294901760
        %v4056 = vsub.f32 %v3032, %v4055
        %v4057 = vand.u32 %v4056, 4294901760
        %4058 = vmatprep.subr.mxu0 %v4057
        %v4059 = vand.u32 %v3031, 4294901760
        %v4060 = vsub.f32 %v3031, %v4059
        %v4061 = vand.u32 %v4060, 4294901760
        %4062 = vmatpush1.msra.mxu0 %v4061
        %v4063 = vand.u32 %v3034, 4294901760
        %v4064 = vsub.f32 %v3034, %v4063
        %v4065 = vand.u32 %v4064, 4294901760
        %4066 = vmatprep.subr.mxu0 %v4065
        %v4067 = vand.u32 %v3033, 4294901760
        %v4068 = vsub.f32 %v3033, %v4067
        %v4069 = vand.u32 %v4068, 4294901760
        %4070 = vmatpush1.msra.mxu0 %v4069
        %v4071 = vand.u32 %v3036, 4294901760
        %v4072 = vsub.f32 %v3036, %v4071
        %v4073 = vand.u32 %v4072, 4294901760
        %4074 = vmatprep.subr.mxu0 %v4073
        %v4075 = vand.u32 %v3035, 4294901760
        %v4076 = vsub.f32 %v3035, %v4075
        %v4077 = vand.u32 %v4076, 4294901760
        %4078 = vmatpush1.msra.mxu0 %v4077
        %v4079 = vand.u32 %v3038, 4294901760
        %v4080 = vsub.f32 %v3038, %v4079
        %v4081 = vand.u32 %v4080, 4294901760
        %4082 = vmatprep.subr.mxu0 %v4081
        %v4083 = vand.u32 %v3037, 4294901760
        %v4084 = vsub.f32 %v3037, %v4083
        %v4085 = vand.u32 %v4084, 4294901760
        %4086 = vmatpush1.msra.mxu0 %v4085
        %v4087 = vand.u32 %v3040, 4294901760
        %v4088 = vsub.f32 %v3040, %v4087
        %v4089 = vand.u32 %v4088, 4294901760
        %4090 = vmatprep.subr.mxu0 %v4089
        %v4091 = vand.u32 %v3039, 4294901760
        %v4092 = vsub.f32 %v3039, %v4091
        %v4093 = vand.u32 %v4092, 4294901760
        %4094 = vmatpush1.msra.mxu0 %v4093
        %v4095 = vand.u32 %v3042, 4294901760
        %v4096 = vsub.f32 %v3042, %v4095
        %v4097 = vand.u32 %v4096, 4294901760
        %4098 = vmatprep.subr.mxu0 %v4097
        %v4099 = vand.u32 %v3041, 4294901760
        %v4100 = vsub.f32 %v3041, %v4099
        %v4101 = vand.u32 %v4100, 4294901760
        %4102 = vmatpush1.msra.mxu0 %v4101
        %v4103 = vand.u32 %v3044, 4294901760
        %v4104 = vsub.f32 %v3044, %v4103
        %v4105 = vand.u32 %v4104, 4294901760
        %4106 = vmatprep.subr.mxu0 %v4105
        %v4107 = vand.u32 %v3043, 4294901760
        %v4108 = vsub.f32 %v3043, %v4107
        %v4109 = vand.u32 %v4108, 4294901760
        %4110 = vmatpush1.msra.mxu0 %v4109
        %v4111 = vand.u32 %v3046, 4294901760
        %v4112 = vsub.f32 %v3046, %v4111
        %v4113 = vand.u32 %v4112, 4294901760
        %4114 = vmatprep.subr.mxu0 %v4113
        %v4115 = vand.u32 %v3045, 4294901760
        %v4116 = vsub.f32 %v3045, %v4115
        %v4117 = vand.u32 %v4116, 4294901760
        %4118 = vmatpush1.msra.mxu0 %v4117
        %v4119 = vand.u32 %v3048, 4294901760
        %v4120 = vsub.f32 %v3048, %v4119
        %v4121 = vand.u32 %v4120, 4294901760
        %4122 = vmatprep.subr.mxu0 %v4121
        %v4123 = vand.u32 %v3047, 4294901760
        %v4124 = vsub.f32 %v3047, %v4123
        %v4125 = vand.u32 %v4124, 4294901760
        %4126 = vmatpush1.msra.mxu0 %v4125
        %v4127 = vand.u32 %v3050, 4294901760
        %v4128 = vsub.f32 %v3050, %v4127
        %v4129 = vand.u32 %v4128, 4294901760
        %4130 = vmatprep.subr.mxu0 %v4129
        %v4131 = vand.u32 %v3049, 4294901760
        %v4132 = vsub.f32 %v3049, %v4131
        %v4133 = vand.u32 %v4132, 4294901760
        %4134 = vmatpush1.msra.mxu0 %v4133
        %v4135 = vand.u32 %v3052, 4294901760
        %v4136 = vsub.f32 %v3052, %v4135
        %v4137 = vand.u32 %v4136, 4294901760
        %4138 = vmatprep.subr.mxu0 %v4137
        %v4139 = vand.u32 %v3051, 4294901760
        %v4140 = vsub.f32 %v3051, %v4139
        %v4141 = vand.u32 %v4140, 4294901760
        %4142 = vmatpush1.msra.mxu0 %v4141
        %v4143 = vand.u32 %v3054, 4294901760
        %v4144 = vsub.f32 %v3054, %v4143
        %v4145 = vand.u32 %v4144, 4294901760
        %4146 = vmatprep.subr.mxu0 %v4145
        %v4147 = vand.u32 %v3053, 4294901760
        %v4148 = vsub.f32 %v3053, %v4147
        %v4149 = vand.u32 %v4148, 4294901760
        %4150 = vmatpush1.msra.mxu0 %v4149
        %v4151 = vand.u32 %v3056, 4294901760
        %v4152 = vsub.f32 %v3056, %v4151
        %v4153 = vand.u32 %v4152, 4294901760
        %4154 = vmatprep.subr.mxu0 %v4153
        %v4155 = vand.u32 %v3055, 4294901760
        %v4156 = vsub.f32 %v3055, %v4155
        %v4157 = vand.u32 %v4156, 4294901760
        %4158 = vmatpush1.msra.mxu0 %v4157
        %v4159 = vand.u32 %v3058, 4294901760
        %v4160 = vsub.f32 %v3058, %v4159
        %v4161 = vand.u32 %v4160, 4294901760
        %4162 = vmatprep.subr.mxu0 %v4161
        %v4163 = vand.u32 %v3057, 4294901760
        %v4164 = vsub.f32 %v3057, %v4163
        %v4165 = vand.u32 %v4164, 4294901760
        %4166 = vmatpush1.msra.mxu0 %v4165
        %v4167 = vand.u32 %v3060, 4294901760
        %v4168 = vsub.f32 %v3060, %v4167
        %v4169 = vand.u32 %v4168, 4294901760
        %4170 = vmatprep.subr.mxu0 %v4169
        %v4171 = vand.u32 %v3059, 4294901760
        %v4172 = vsub.f32 %v3059, %v4171
        %v4173 = vand.u32 %v4172, 4294901760
        %4174 = vmatpush1.msra.mxu0 %v4173
        %v4175 = vand.u32 %v3062, 4294901760
        %v4176 = vsub.f32 %v3062, %v4175
        %v4177 = vand.u32 %v4176, 4294901760
        %4178 = vmatprep.subr.mxu0 %v4177
        %v4179 = vand.u32 %v3061, 4294901760
        %v4180 = vsub.f32 %v3061, %v4179
        %v4181 = vand.u32 %v4180, 4294901760
        %4182 = vmatpush1.msra.mxu0 %v4181
        %v4183 = vand.u32 %v3064, 4294901760
        %v4184 = vsub.f32 %v3064, %v4183
        %v4185 = vand.u32 %v4184, 4294901760
        %4186 = vmatprep.subr.mxu0 %v4185
        %v4187 = vand.u32 %v3063, 4294901760
        %v4188 = vsub.f32 %v3063, %v4187
        %v4189 = vand.u32 %v4188, 4294901760
        %4190 = vmatpush1.msra.mxu0 %v4189
        %v4191 = vand.u32 %v3066, 4294901760
        %v4192 = vsub.f32 %v3066, %v4191
        %v4193 = vand.u32 %v4192, 4294901760
        %4194 = vmatprep.subr.mxu0 %v4193
        %v4195 = vand.u32 %v3065, 4294901760
        %v4196 = vsub.f32 %v3065, %v4195
        %v4197 = vand.u32 %v4196, 4294901760
        %4198 = vmatpush1.msra.mxu0 %v4197
        %v4199 = vand.u32 %v3068, 4294901760
        %v4200 = vsub.f32 %v3068, %v4199
        %v4201 = vand.u32 %v4200, 4294901760
        %4202 = vmatprep.subr.mxu0 %v4201
        %v4203 = vand.u32 %v3067, 4294901760
        %v4204 = vsub.f32 %v3067, %v4203
        %v4205 = vand.u32 %v4204, 4294901760
        %4206 = vmatpush1.msra.mxu0 %v4205
        %v4207 = vand.u32 %v2939, 4294901760
        %4208 = vmatprep.mubr.f32.mxu0 %v4207
        %v4209 = vand.u32 %v2937, 4294901760
        %4210 = vmatmul.mubr.f32.gmra.mrb[0].mxu0 %v4209
        %v4211 = vpop.f32.mrb[0].mxu0
        %v4212 = vadd.f32 %v3947, %v4211
        %v4213 = vpop.f32.mrb[0].mxu0
        %v4214 = vadd.f32 %v3949, %v4213
        %4215 = vdwg.mxu0
        %v4216 = vand.u32 %v3006, 4294901760
        %4217 = vmatprep.subr.mxu0 %v4216
        %v4218 = vand.u32 %v3005, 4294901760
        %4219 = vmatpush1.msra.mxu0 %v4218
        %v4220 = vand.u32 %v3008, 4294901760
        %4221 = vmatprep.subr.mxu0 %v4220
        %v4222 = vand.u32 %v3007, 4294901760
        %4223 = vmatpush1.msra.mxu0 %v4222
        %v4224 = vand.u32 %v3010, 4294901760
        %4225 = vmatprep.subr.mxu0 %v4224
        %v4226 = vand.u32 %v3009, 4294901760
        %4227 = vmatpush1.msra.mxu0 %v4226
        %v4228 = vand.u32 %v3012, 4294901760
        %4229 = vmatprep.subr.mxu0 %v4228
        %v4230 = vand.u32 %v3011, 4294901760
        %4231 = vmatpush1.msra.mxu0 %v4230
        %v4232 = vand.u32 %v3014, 4294901760
        %4233 = vmatprep.subr.mxu0 %v4232
        %v4234 = vand.u32 %v3013, 4294901760
        %4235 = vmatpush1.msra.mxu0 %v4234
        %v4236 = vand.u32 %v3016, 4294901760
        %4237 = vmatprep.subr.mxu0 %v4236
        %v4238 = vand.u32 %v3015, 4294901760
        %4239 = vmatpush1.msra.mxu0 %v4238
        %v4240 = vand.u32 %v3018, 4294901760
        %4241 = vmatprep.subr.mxu0 %v4240
        %v4242 = vand.u32 %v3017, 4294901760
        %4243 = vmatpush1.msra.mxu0 %v4242
        %v4244 = vand.u32 %v3020, 4294901760
        %4245 = vmatprep.subr.mxu0 %v4244
        %v4246 = vand.u32 %v3019, 4294901760
        %4247 = vmatpush1.msra.mxu0 %v4246
        %v4248 = vand.u32 %v3022, 4294901760
        %4249 = vmatprep.subr.mxu0 %v4248
        %v4250 = vand.u32 %v3021, 4294901760
        %4251 = vmatpush1.msra.mxu0 %v4250
        %v4252 = vand.u32 %v3024, 4294901760
        %4253 = vmatprep.subr.mxu0 %v4252
        %v4254 = vand.u32 %v3023, 4294901760
        %4255 = vmatpush1.msra.mxu0 %v4254
        %v4256 = vand.u32 %v3026, 4294901760
        %4257 = vmatprep.subr.mxu0 %v4256
        %v4258 = vand.u32 %v3025, 4294901760
        %4259 = vmatpush1.msra.mxu0 %v4258
        %v4260 = vand.u32 %v3028, 4294901760
        %4261 = vmatprep.subr.mxu0 %v4260
        %v4262 = vand.u32 %v3027, 4294901760
        %4263 = vmatpush1.msra.mxu0 %v4262
        %v4264 = vand.u32 %v3030, 4294901760
        %4265 = vmatprep.subr.mxu0 %v4264
        %v4266 = vand.u32 %v3029, 4294901760
        %4267 = vmatpush1.msra.mxu0 %v4266
        %v4268 = vand.u32 %v3032, 4294901760
        %4269 = vmatprep.subr.mxu0 %v4268
        %v4270 = vand.u32 %v3031, 4294901760
        %4271 = vmatpush1.msra.mxu0 %v4270
        %v4272 = vand.u32 %v3034, 4294901760
        %4273 = vmatprep.subr.mxu0 %v4272
        %v4274 = vand.u32 %v3033, 4294901760
        %4275 = vmatpush1.msra.mxu0 %v4274
        %v4276 = vand.u32 %v3036, 4294901760
        %4277 = vmatprep.subr.mxu0 %v4276
        %v4278 = vand.u32 %v3035, 4294901760
        %4279 = vmatpush1.msra.mxu0 %v4278
        %v4280 = vand.u32 %v3038, 4294901760
        %4281 = vmatprep.subr.mxu0 %v4280
        %v4282 = vand.u32 %v3037, 4294901760
        %4283 = vmatpush1.msra.mxu0 %v4282
        %v4284 = vand.u32 %v3040, 4294901760
        %4285 = vmatprep.subr.mxu0 %v4284
        %v4286 = vand.u32 %v3039, 4294901760
        %4287 = vmatpush1.msra.mxu0 %v4286
        %v4288 = vand.u32 %v3042, 4294901760
        %4289 = vmatprep.subr.mxu0 %v4288
        %v4290 = vand.u32 %v3041, 4294901760
        %4291 = vmatpush1.msra.mxu0 %v4290
        %v4292 = vand.u32 %v3044, 4294901760
        %4293 = vmatprep.subr.mxu0 %v4292
        %v4294 = vand.u32 %v3043, 4294901760
        %4295 = vmatpush1.msra.mxu0 %v4294
        %v4296 = vand.u32 %v3046, 4294901760
        %4297 = vmatprep.subr.mxu0 %v4296
        %v4298 = vand.u32 %v3045, 4294901760
        %4299 = vmatpush1.msra.mxu0 %v4298
        %v4300 = vand.u32 %v3048, 4294901760
        %4301 = vmatprep.subr.mxu0 %v4300
        %v4302 = vand.u32 %v3047, 4294901760
        %4303 = vmatpush1.msra.mxu0 %v4302
        %v4304 = vand.u32 %v3050, 4294901760
        %4305 = vmatprep.subr.mxu0 %v4304
        %v4306 = vand.u32 %v3049, 4294901760
        %4307 = vmatpush1.msra.mxu0 %v4306
        %v4308 = vand.u32 %v3052, 4294901760
        %4309 = vmatprep.subr.mxu0 %v4308
        %v4310 = vand.u32 %v3051, 4294901760
        %4311 = vmatpush1.msra.mxu0 %v4310
        %v4312 = vand.u32 %v3054, 4294901760
        %4313 = vmatprep.subr.mxu0 %v4312
        %v4314 = vand.u32 %v3053, 4294901760
        %4315 = vmatpush1.msra.mxu0 %v4314
        %v4316 = vand.u32 %v3056, 4294901760
        %4317 = vmatprep.subr.mxu0 %v4316
        %v4318 = vand.u32 %v3055, 4294901760
        %4319 = vmatpush1.msra.mxu0 %v4318
        %v4320 = vand.u32 %v3058, 4294901760
        %4321 = vmatprep.subr.mxu0 %v4320
        %v4322 = vand.u32 %v3057, 4294901760
        %4323 = vmatpush1.msra.mxu0 %v4322
        %v4324 = vand.u32 %v3060, 4294901760
        %4325 = vmatprep.subr.mxu0 %v4324
        %v4326 = vand.u32 %v3059, 4294901760
        %4327 = vmatpush1.msra.mxu0 %v4326
        %v4328 = vand.u32 %v3062, 4294901760
        %4329 = vmatprep.subr.mxu0 %v4328
        %v4330 = vand.u32 %v3061, 4294901760
        %4331 = vmatpush1.msra.mxu0 %v4330
        %v4332 = vand.u32 %v3064, 4294901760
        %4333 = vmatprep.subr.mxu0 %v4332
        %v4334 = vand.u32 %v3063, 4294901760
        %4335 = vmatpush1.msra.mxu0 %v4334
        %v4336 = vand.u32 %v3066, 4294901760
        %4337 = vmatprep.subr.mxu0 %v4336
        %v4338 = vand.u32 %v3065, 4294901760
        %4339 = vmatpush1.msra.mxu0 %v4338
        %v4340 = vand.u32 %v3068, 4294901760
        %4341 = vmatprep.subr.mxu0 %v4340
        %v4342 = vand.u32 %v3067, 4294901760
        %4343 = vmatpush1.msra.mxu0 %v4342
        %v4344 = vand.u32 %v2939, 4294901760
        %4345 = vmatprep.mubr.f32.mxu0 %v4344
        %v4346 = vand.u32 %v2937, 4294901760
        %4347 = vmatmul.mubr.f32.gmra.mrb[0].mxu0 %v4346
        %v4348 = vpop.f32.mrb[0].mxu0
        %v4349 = vadd.f32 %v4212, %v4348
        %v4350 = vpop.f32.mrb[0].mxu0
        %v4351 = vadd.f32 %v4214, %v4350
        %4352 = vdwg.mxu0
        %v4353 = vand.u32 %v2942, 4294901760
        %4354 = vmatprep.subr.mxu0 %v4353
        %v4355 = vand.u32 %v2941, 4294901760
        %4356 = vmatpush1.msra.mxu0 %v4355
        %v4357 = vand.u32 %v2944, 4294901760
        %4358 = vmatprep.subr.mxu0 %v4357
        %v4359 = vand.u32 %v2943, 4294901760
        %4360 = vmatpush1.msra.mxu0 %v4359
        %v4361 = vand.u32 %v2946, 4294901760
        %4362 = vmatprep.subr.mxu0 %v4361
        %v4363 = vand.u32 %v2945, 4294901760
        %4364 = vmatpush1.msra.mxu0 %v4363
        %v4365 = vand.u32 %v2948, 4294901760
        %4366 = vmatprep.subr.mxu0 %v4365
        %v4367 = vand.u32 %v2947, 4294901760
        %4368 = vmatpush1.msra.mxu0 %v4367
        %v4369 = vand.u32 %v2950, 4294901760
        %4370 = vmatprep.subr.mxu0 %v4369
        %v4371 = vand.u32 %v2949, 4294901760
        %4372 = vmatpush1.msra.mxu0 %v4371
        %v4373 = vand.u32 %v2952, 4294901760
        %4374 = vmatprep.subr.mxu0 %v4373
        %v4375 = vand.u32 %v2951, 4294901760
        %4376 = vmatpush1.msra.mxu0 %v4375
        %v4377 = vand.u32 %v2954, 4294901760
        %4378 = vmatprep.subr.mxu0 %v4377
        %v4379 = vand.u32 %v2953, 4294901760
        %4380 = vmatpush1.msra.mxu0 %v4379
        %v4381 = vand.u32 %v2956, 4294901760
        %4382 = vmatprep.subr.mxu0 %v4381
        %v4383 = vand.u32 %v2955, 4294901760
        %4384 = vmatpush1.msra.mxu0 %v4383
        %v4385 = vand.u32 %v2958, 4294901760
        %4386 = vmatprep.subr.mxu0 %v4385
        %v4387 = vand.u32 %v2957, 4294901760
        %4388 = vmatpush1.msra.mxu0 %v4387
        %v4389 = vand.u32 %v2960, 4294901760
        %4390 = vmatprep.subr.mxu0 %v4389
        %v4391 = vand.u32 %v2959, 4294901760
        %4392 = vmatpush1.msra.mxu0 %v4391
        %v4393 = vand.u32 %v2962, 4294901760
        %4394 = vmatprep.subr.mxu0 %v4393
        %v4395 = vand.u32 %v2961, 4294901760
        %4396 = vmatpush1.msra.mxu0 %v4395
        %v4397 = vand.u32 %v2964, 4294901760
        %4398 = vmatprep.subr.mxu0 %v4397
        %v4399 = vand.u32 %v2963, 4294901760
        %4400 = vmatpush1.msra.mxu0 %v4399
        %v4401 = vand.u32 %v2966, 4294901760
        %4402 = vmatprep.subr.mxu0 %v4401
        %v4403 = vand.u32 %v2965, 4294901760
        %4404 = vmatpush1.msra.mxu0 %v4403
        %v4405 = vand.u32 %v2968, 4294901760
        %4406 = vmatprep.subr.mxu0 %v4405
        %v4407 = vand.u32 %v2967, 4294901760
        %4408 = vmatpush1.msra.mxu0 %v4407
        %v4409 = vand.u32 %v2970, 4294901760
        %4410 = vmatprep.subr.mxu0 %v4409
        %v4411 = vand.u32 %v2969, 4294901760
        %4412 = vmatpush1.msra.mxu0 %v4411
        %v4413 = vand.u32 %v2972, 4294901760
        %4414 = vmatprep.subr.mxu0 %v4413
        %v4415 = vand.u32 %v2971, 4294901760
        %4416 = vmatpush1.msra.mxu0 %v4415
        %v4417 = vand.u32 %v2974, 4294901760
        %4418 = vmatprep.subr.mxu0 %v4417
        %v4419 = vand.u32 %v2973, 4294901760
        %4420 = vmatpush1.msra.mxu0 %v4419
        %v4421 = vand.u32 %v2976, 4294901760
        %4422 = vmatprep.subr.mxu0 %v4421
        %v4423 = vand.u32 %v2975, 4294901760
        %4424 = vmatpush1.msra.mxu0 %v4423
        %v4425 = vand.u32 %v2978, 4294901760
        %4426 = vmatprep.subr.mxu0 %v4425
        %v4427 = vand.u32 %v2977, 4294901760
        %4428 = vmatpush1.msra.mxu0 %v4427
        %v4429 = vand.u32 %v2980, 4294901760
        %4430 = vmatprep.subr.mxu0 %v4429
        %v4431 = vand.u32 %v2979, 4294901760
        %4432 = vmatpush1.msra.mxu0 %v4431
        %v4433 = vand.u32 %v2982, 4294901760
        %4434 = vmatprep.subr.mxu0 %v4433
        %v4435 = vand.u32 %v2981, 4294901760
        %4436 = vmatpush1.msra.mxu0 %v4435
        %v4437 = vand.u32 %v2984, 4294901760
        %4438 = vmatprep.subr.mxu0 %v4437
        %v4439 = vand.u32 %v2983, 4294901760
        %4440 = vmatpush1.msra.mxu0 %v4439
        %v4441 = vand.u32 %v2986, 4294901760
        %4442 = vmatprep.subr.mxu0 %v4441
        %v4443 = vand.u32 %v2985, 4294901760
        %4444 = vmatpush1.msra.mxu0 %v4443
        %v4445 = vand.u32 %v2988, 4294901760
        %4446 = vmatprep.subr.mxu0 %v4445
        %v4447 = vand.u32 %v2987, 4294901760
        %4448 = vmatpush1.msra.mxu0 %v4447
        %v4449 = vand.u32 %v2990, 4294901760
        %4450 = vmatprep.subr.mxu0 %v4449
        %v4451 = vand.u32 %v2989, 4294901760
        %4452 = vmatpush1.msra.mxu0 %v4451
        %v4453 = vand.u32 %v2992, 4294901760
        %4454 = vmatprep.subr.mxu0 %v4453
        %v4455 = vand.u32 %v2991, 4294901760
        %4456 = vmatpush1.msra.mxu0 %v4455
        %v4457 = vand.u32 %v2994, 4294901760
        %4458 = vmatprep.subr.mxu0 %v4457
        %v4459 = vand.u32 %v2993, 4294901760
        %4460 = vmatpush1.msra.mxu0 %v4459
        %v4461 = vand.u32 %v2996, 4294901760
        %4462 = vmatprep.subr.mxu0 %v4461
        %v4463 = vand.u32 %v2995, 4294901760
        %4464 = vmatpush1.msra.mxu0 %v4463
        %v4465 = vand.u32 %v2998, 4294901760
        %4466 = vmatprep.subr.mxu0 %v4465
        %v4467 = vand.u32 %v2997, 4294901760
        %4468 = vmatpush1.msra.mxu0 %v4467
        %v4469 = vand.u32 %v3000, 4294901760
        %4470 = vmatprep.subr.mxu0 %v4469
        %v4471 = vand.u32 %v2999, 4294901760
        %4472 = vmatpush1.msra.mxu0 %v4471
        %v4473 = vand.u32 %v3002, 4294901760
        %4474 = vmatprep.subr.mxu0 %v4473
        %v4475 = vand.u32 %v3001, 4294901760
        %4476 = vmatpush1.msra.mxu0 %v4475
        %v4477 = vand.u32 %v3004, 4294901760
        %4478 = vmatprep.subr.mxu0 %v4477
        %v4479 = vand.u32 %v3003, 4294901760
        %4480 = vmatpush1.msra.mxu0 %v4479
        %v4481 = vand.u32 %v2932, 4294901760
        %v4482 = vsub.f32 %v2932, %v4481
        %v4483 = vand.u32 %v4482, 4294901760
        %v4484 = vsub.f32 %v4482, %v4483
        %v4485 = vand.u32 %v4484, 4294901760
        %4486 = vmatprep.mubr.f32.mxu0 %v4485
        %v4487 = vand.u32 %v2930, 4294901760
        %v4488 = vsub.f32 %v2930, %v4487
        %v4489 = vand.u32 %v4488, 4294901760
        %v4490 = vsub.f32 %v4488, %v4489
        %v4491 = vand.u32 %v4490, 4294901760
        %4492 = vmatmul.mubr.f32.gmra.mrb[0].mxu0 %v4491
        %v4493 = vpop.f32.mrb[0].mxu0
        %v4494 = vadd.f32 %v4349, %v4493
        %v4495 = vpop.f32.mrb[0].mxu0
        %v4496 = vadd.f32 %v4351, %v4495
        %4497 = vdwg.mxu0
        %v4498 = vand.u32 %v2942, 4294901760
        %v4499 = vsub.f32 %v2942, %v4498
        %v4500 = vand.u32 %v4499, 4294901760
        %v4501 = vsub.f32 %v4499, %v4500
        %v4502 = vand.u32 %v4501, 4294901760
        %4503 = vmatprep.subr.mxu0 %v4502
        %v4504 = vand.u32 %v2941, 4294901760
        %v4505 = vsub.f32 %v2941, %v4504
        %v4506 = vand.u32 %v4505, 4294901760
        %v4507 = vsub.f32 %v4505, %v4506
        %v4508 = vand.u32 %v4507, 4294901760
        %4509 = vmatpush1.msra.mxu0 %v4508
        %v4510 = vand.u32 %v2944, 4294901760
        %v4511 = vsub.f32 %v2944, %v4510
        %v4512 = vand.u32 %v4511, 4294901760
        %v4513 = vsub.f32 %v4511, %v4512
        %v4514 = vand.u32 %v4513, 4294901760
        %4515 = vmatprep.subr.mxu0 %v4514
        %v4516 = vand.u32 %v2943, 4294901760
        %v4517 = vsub.f32 %v2943, %v4516
        %v4518 = vand.u32 %v4517, 4294901760
        %v4519 = vsub.f32 %v4517, %v4518
        %v4520 = vand.u32 %v4519, 4294901760
        %4521 = vmatpush1.msra.mxu0 %v4520
        %v4522 = vand.u32 %v2946, 4294901760
        %v4523 = vsub.f32 %v2946, %v4522
        %v4524 = vand.u32 %v4523, 4294901760
        %v4525 = vsub.f32 %v4523, %v4524
        %v4526 = vand.u32 %v4525, 4294901760
        %4527 = vmatprep.subr.mxu0 %v4526
        %v4528 = vand.u32 %v2945, 4294901760
        %v4529 = vsub.f32 %v2945, %v4528
        %v4530 = vand.u32 %v4529, 4294901760
        %v4531 = vsub.f32 %v4529, %v4530
        %v4532 = vand.u32 %v4531, 4294901760
        %4533 = vmatpush1.msra.mxu0 %v4532
        %v4534 = vand.u32 %v2948, 4294901760
        %v4535 = vsub.f32 %v2948, %v4534
        %v4536 = vand.u32 %v4535, 4294901760
        %v4537 = vsub.f32 %v4535, %v4536
        %v4538 = vand.u32 %v4537, 4294901760
        %4539 = vmatprep.subr.mxu0 %v4538
        %v4540 = vand.u32 %v2947, 4294901760
        %v4541 = vsub.f32 %v2947, %v4540
        %v4542 = vand.u32 %v4541, 4294901760
        %v4543 = vsub.f32 %v4541, %v4542
        %v4544 = vand.u32 %v4543, 4294901760
        %4545 = vmatpush1.msra.mxu0 %v4544
        %v4546 = vand.u32 %v2950, 4294901760
        %v4547 = vsub.f32 %v2950, %v4546
        %v4548 = vand.u32 %v4547, 4294901760
        %v4549 = vsub.f32 %v4547, %v4548
        %v4550 = vand.u32 %v4549, 4294901760
        %4551 = vmatprep.subr.mxu0 %v4550
        %v4552 = vand.u32 %v2949, 4294901760
        %v4553 = vsub.f32 %v2949, %v4552
        %v4554 = vand.u32 %v4553, 4294901760
        %v4555 = vsub.f32 %v4553, %v4554
        %v4556 = vand.u32 %v4555, 4294901760
        %4557 = vmatpush1.msra.mxu0 %v4556
        %v4558 = vand.u32 %v2952, 4294901760
        %v4559 = vsub.f32 %v2952, %v4558
        %v4560 = vand.u32 %v4559, 4294901760
        %v4561 = vsub.f32 %v4559, %v4560
        %v4562 = vand.u32 %v4561, 4294901760
        %4563 = vmatprep.subr.mxu0 %v4562
        %v4564 = vand.u32 %v2951, 4294901760
        %v4565 = vsub.f32 %v2951, %v4564
        %v4566 = vand.u32 %v4565, 4294901760
        %v4567 = vsub.f32 %v4565, %v4566
        %v4568 = vand.u32 %v4567, 4294901760
        %4569 = vmatpush1.msra.mxu0 %v4568
        %v4570 = vand.u32 %v2954, 4294901760
        %v4571 = vsub.f32 %v2954, %v4570
        %v4572 = vand.u32 %v4571, 4294901760
        %v4573 = vsub.f32 %v4571, %v4572
        %v4574 = vand.u32 %v4573, 4294901760
        %4575 = vmatprep.subr.mxu0 %v4574
        %v4576 = vand.u32 %v2953, 4294901760
        %v4577 = vsub.f32 %v2953, %v4576
        %v4578 = vand.u32 %v4577, 4294901760
        %v4579 = vsub.f32 %v4577, %v4578
        %v4580 = vand.u32 %v4579, 4294901760
        %4581 = vmatpush1.msra.mxu0 %v4580
        %v4582 = vand.u32 %v2956, 4294901760
        %v4583 = vsub.f32 %v2956, %v4582
        %v4584 = vand.u32 %v4583, 4294901760
        %v4585 = vsub.f32 %v4583, %v4584
        %v4586 = vand.u32 %v4585, 4294901760
        %4587 = vmatprep.subr.mxu0 %v4586
        %v4588 = vand.u32 %v2955, 4294901760
        %v4589 = vsub.f32 %v2955, %v4588
        %v4590 = vand.u32 %v4589, 4294901760
        %v4591 = vsub.f32 %v4589, %v4590
        %v4592 = vand.u32 %v4591, 4294901760
        %4593 = vmatpush1.msra.mxu0 %v4592
        %v4594 = vand.u32 %v2958, 4294901760
        %v4595 = vsub.f32 %v2958, %v4594
        %v4596 = vand.u32 %v4595, 4294901760
        %v4597 = vsub.f32 %v4595, %v4596
        %v4598 = vand.u32 %v4597, 4294901760
        %4599 = vmatprep.subr.mxu0 %v4598
        %v4600 = vand.u32 %v2957, 4294901760
        %v4601 = vsub.f32 %v2957, %v4600
        %v4602 = vand.u32 %v4601, 4294901760
        %v4603 = vsub.f32 %v4601, %v4602
        %v4604 = vand.u32 %v4603, 4294901760
        %4605 = vmatpush1.msra.mxu0 %v4604
        %v4606 = vand.u32 %v2960, 4294901760
        %v4607 = vsub.f32 %v2960, %v4606
        %v4608 = vand.u32 %v4607, 4294901760
        %v4609 = vsub.f32 %v4607, %v4608
        %v4610 = vand.u32 %v4609, 4294901760
        %4611 = vmatprep.subr.mxu0 %v4610
        %v4612 = vand.u32 %v2959, 4294901760
        %v4613 = vsub.f32 %v2959, %v4612
        %v4614 = vand.u32 %v4613, 4294901760
        %v4615 = vsub.f32 %v4613, %v4614
        %v4616 = vand.u32 %v4615, 4294901760
        %4617 = vmatpush1.msra.mxu0 %v4616
        %v4618 = vand.u32 %v2962, 4294901760
        %v4619 = vsub.f32 %v2962, %v4618
        %v4620 = vand.u32 %v4619, 4294901760
        %v4621 = vsub.f32 %v4619, %v4620
        %v4622 = vand.u32 %v4621, 4294901760
        %4623 = vmatprep.subr.mxu0 %v4622
        %v4624 = vand.u32 %v2961, 4294901760
        %v4625 = vsub.f32 %v2961, %v4624
        %v4626 = vand.u32 %v4625, 4294901760
        %v4627 = vsub.f32 %v4625, %v4626
        %v4628 = vand.u32 %v4627, 4294901760
        %4629 = vmatpush1.msra.mxu0 %v4628
        %v4630 = vand.u32 %v2964, 4294901760
        %v4631 = vsub.f32 %v2964, %v4630
        %v4632 = vand.u32 %v4631, 4294901760
        %v4633 = vsub.f32 %v4631, %v4632
        %v4634 = vand.u32 %v4633, 4294901760
        %4635 = vmatprep.subr.mxu0 %v4634
        %v4636 = vand.u32 %v2963, 4294901760
        %v4637 = vsub.f32 %v2963, %v4636
        %v4638 = vand.u32 %v4637, 4294901760
        %v4639 = vsub.f32 %v4637, %v4638
        %v4640 = vand.u32 %v4639, 4294901760
        %4641 = vmatpush1.msra.mxu0 %v4640
        %v4642 = vand.u32 %v2966, 4294901760
        %v4643 = vsub.f32 %v2966, %v4642
        %v4644 = vand.u32 %v4643, 4294901760
        %v4645 = vsub.f32 %v4643, %v4644
        %v4646 = vand.u32 %v4645, 4294901760
        %4647 = vmatprep.subr.mxu0 %v4646
        %v4648 = vand.u32 %v2965, 4294901760
        %v4649 = vsub.f32 %v2965, %v4648
        %v4650 = vand.u32 %v4649, 4294901760
        %v4651 = vsub.f32 %v4649, %v4650
        %v4652 = vand.u32 %v4651, 4294901760
        %4653 = vmatpush1.msra.mxu0 %v4652
        %v4654 = vand.u32 %v2968, 4294901760
        %v4655 = vsub.f32 %v2968, %v4654
        %v4656 = vand.u32 %v4655, 4294901760
        %v4657 = vsub.f32 %v4655, %v4656
        %v4658 = vand.u32 %v4657, 4294901760
        %4659 = vmatprep.subr.mxu0 %v4658
        %v4660 = vand.u32 %v2967, 4294901760
        %v4661 = vsub.f32 %v2967, %v4660
        %v4662 = vand.u32 %v4661, 4294901760
        %v4663 = vsub.f32 %v4661, %v4662
        %v4664 = vand.u32 %v4663, 4294901760
        %4665 = vmatpush1.msra.mxu0 %v4664
        %v4666 = vand.u32 %v2970, 4294901760
        %v4667 = vsub.f32 %v2970, %v4666
        %v4668 = vand.u32 %v4667, 4294901760
        %v4669 = vsub.f32 %v4667, %v4668
        %v4670 = vand.u32 %v4669, 4294901760
        %4671 = vmatprep.subr.mxu0 %v4670
        %v4672 = vand.u32 %v2969, 4294901760
        %v4673 = vsub.f32 %v2969, %v4672
        %v4674 = vand.u32 %v4673, 4294901760
        %v4675 = vsub.f32 %v4673, %v4674
        %v4676 = vand.u32 %v4675, 4294901760
        %4677 = vmatpush1.msra.mxu0 %v4676
        %v4678 = vand.u32 %v2972, 4294901760
        %v4679 = vsub.f32 %v2972, %v4678
        %v4680 = vand.u32 %v4679, 4294901760
        %v4681 = vsub.f32 %v4679, %v4680
        %v4682 = vand.u32 %v4681, 4294901760
        %4683 = vmatprep.subr.mxu0 %v4682
        %v4684 = vand.u32 %v2971, 4294901760
        %v4685 = vsub.f32 %v2971, %v4684
        %v4686 = vand.u32 %v4685, 4294901760
        %v4687 = vsub.f32 %v4685, %v4686
        %v4688 = vand.u32 %v4687, 4294901760
        %4689 = vmatpush1.msra.mxu0 %v4688
        %v4690 = vand.u32 %v2974, 4294901760
        %v4691 = vsub.f32 %v2974, %v4690
        %v4692 = vand.u32 %v4691, 4294901760
        %v4693 = vsub.f32 %v4691, %v4692
        %v4694 = vand.u32 %v4693, 4294901760
        %4695 = vmatprep.subr.mxu0 %v4694
        %v4696 = vand.u32 %v2973, 4294901760
        %v4697 = vsub.f32 %v2973, %v4696
        %v4698 = vand.u32 %v4697, 4294901760
        %v4699 = vsub.f32 %v4697, %v4698
        %v4700 = vand.u32 %v4699, 4294901760
        %4701 = vmatpush1.msra.mxu0 %v4700
        %v4702 = vand.u32 %v2976, 4294901760
        %v4703 = vsub.f32 %v2976, %v4702
        %v4704 = vand.u32 %v4703, 4294901760
        %v4705 = vsub.f32 %v4703, %v4704
        %v4706 = vand.u32 %v4705, 4294901760
        %4707 = vmatprep.subr.mxu0 %v4706
        %v4708 = vand.u32 %v2975, 4294901760
        %v4709 = vsub.f32 %v2975, %v4708
        %v4710 = vand.u32 %v4709, 4294901760
        %v4711 = vsub.f32 %v4709, %v4710
        %v4712 = vand.u32 %v4711, 4294901760
        %4713 = vmatpush1.msra.mxu0 %v4712
        %v4714 = vand.u32 %v2978, 4294901760
        %v4715 = vsub.f32 %v2978, %v4714
        %v4716 = vand.u32 %v4715, 4294901760
        %v4717 = vsub.f32 %v4715, %v4716
        %v4718 = vand.u32 %v4717, 4294901760
        %4719 = vmatprep.subr.mxu0 %v4718
        %v4720 = vand.u32 %v2977, 4294901760
        %v4721 = vsub.f32 %v2977, %v4720
        %v4722 = vand.u32 %v4721, 4294901760
        %v4723 = vsub.f32 %v4721, %v4722
        %v4724 = vand.u32 %v4723, 4294901760
        %4725 = vmatpush1.msra.mxu0 %v4724
        %v4726 = vand.u32 %v2980, 4294901760
        %v4727 = vsub.f32 %v2980, %v4726
        %v4728 = vand.u32 %v4727, 4294901760
        %v4729 = vsub.f32 %v4727, %v4728
        %v4730 = vand.u32 %v4729, 4294901760
        %4731 = vmatprep.subr.mxu0 %v4730
        %v4732 = vand.u32 %v2979, 4294901760
        %v4733 = vsub.f32 %v2979, %v4732
        %v4734 = vand.u32 %v4733, 4294901760
        %v4735 = vsub.f32 %v4733, %v4734
        %v4736 = vand.u32 %v4735, 4294901760
        %4737 = vmatpush1.msra.mxu0 %v4736
        %v4738 = vand.u32 %v2982, 4294901760
        %v4739 = vsub.f32 %v2982, %v4738
        %v4740 = vand.u32 %v4739, 4294901760
        %v4741 = vsub.f32 %v4739, %v4740
        %v4742 = vand.u32 %v4741, 4294901760
        %4743 = vmatprep.subr.mxu0 %v4742
        %v4744 = vand.u32 %v2981, 4294901760
        %v4745 = vsub.f32 %v2981, %v4744
        %v4746 = vand.u32 %v4745, 4294901760
        %v4747 = vsub.f32 %v4745, %v4746
        %v4748 = vand.u32 %v4747, 4294901760
        %4749 = vmatpush1.msra.mxu0 %v4748
        %v4750 = vand.u32 %v2984, 4294901760
        %v4751 = vsub.f32 %v2984, %v4750
        %v4752 = vand.u32 %v4751, 4294901760
        %v4753 = vsub.f32 %v4751, %v4752
        %v4754 = vand.u32 %v4753, 4294901760
        %4755 = vmatprep.subr.mxu0 %v4754
        %v4756 = vand.u32 %v2983, 4294901760
        %v4757 = vsub.f32 %v2983, %v4756
        %v4758 = vand.u32 %v4757, 4294901760
        %v4759 = vsub.f32 %v4757, %v4758
        %v4760 = vand.u32 %v4759, 4294901760
        %4761 = vmatpush1.msra.mxu0 %v4760
        %v4762 = vand.u32 %v2986, 4294901760
        %v4763 = vsub.f32 %v2986, %v4762
        %v4764 = vand.u32 %v4763, 4294901760
        %v4765 = vsub.f32 %v4763, %v4764
        %v4766 = vand.u32 %v4765, 4294901760
        %4767 = vmatprep.subr.mxu0 %v4766
        %v4768 = vand.u32 %v2985, 4294901760
        %v4769 = vsub.f32 %v2985, %v4768
        %v4770 = vand.u32 %v4769, 4294901760
        %v4771 = vsub.f32 %v4769, %v4770
        %v4772 = vand.u32 %v4771, 4294901760
        %4773 = vmatpush1.msra.mxu0 %v4772
        %v4774 = vand.u32 %v2988, 4294901760
        %v4775 = vsub.f32 %v2988, %v4774
        %v4776 = vand.u32 %v4775, 4294901760
        %v4777 = vsub.f32 %v4775, %v4776
        %v4778 = vand.u32 %v4777, 4294901760
        %4779 = vmatprep.subr.mxu0 %v4778
        %v4780 = vand.u32 %v2987, 4294901760
        %v4781 = vsub.f32 %v2987, %v4780
        %v4782 = vand.u32 %v4781, 4294901760
        %v4783 = vsub.f32 %v4781, %v4782
        %v4784 = vand.u32 %v4783, 4294901760
        %4785 = vmatpush1.msra.mxu0 %v4784
        %v4786 = vand.u32 %v2990, 4294901760
        %v4787 = vsub.f32 %v2990, %v4786
        %v4788 = vand.u32 %v4787, 4294901760
        %v4789 = vsub.f32 %v4787, %v4788
        %v4790 = vand.u32 %v4789, 4294901760
        %4791 = vmatprep.subr.mxu0 %v4790
        %v4792 = vand.u32 %v2989, 4294901760
        %v4793 = vsub.f32 %v2989, %v4792
        %v4794 = vand.u32 %v4793, 4294901760
        %v4795 = vsub.f32 %v4793, %v4794
        %v4796 = vand.u32 %v4795, 4294901760
        %4797 = vmatpush1.msra.mxu0 %v4796
        %v4798 = vand.u32 %v2992, 4294901760
        %v4799 = vsub.f32 %v2992, %v4798
        %v4800 = vand.u32 %v4799, 4294901760
        %v4801 = vsub.f32 %v4799, %v4800
        %v4802 = vand.u32 %v4801, 4294901760
        %4803 = vmatprep.subr.mxu0 %v4802
        %v4804 = vand.u32 %v2991, 4294901760
        %v4805 = vsub.f32 %v2991, %v4804
        %v4806 = vand.u32 %v4805, 4294901760
        %v4807 = vsub.f32 %v4805, %v4806
        %v4808 = vand.u32 %v4807, 4294901760
        %4809 = vmatpush1.msra.mxu0 %v4808
        %v4810 = vand.u32 %v2994, 4294901760
        %v4811 = vsub.f32 %v2994, %v4810
        %v4812 = vand.u32 %v4811, 4294901760
        %v4813 = vsub.f32 %v4811, %v4812
        %v4814 = vand.u32 %v4813, 4294901760
        %4815 = vmatprep.subr.mxu0 %v4814
        %v4816 = vand.u32 %v2993, 4294901760
        %v4817 = vsub.f32 %v2993, %v4816
        %v4818 = vand.u32 %v4817, 4294901760
        %v4819 = vsub.f32 %v4817, %v4818
        %v4820 = vand.u32 %v4819, 4294901760
        %4821 = vmatpush1.msra.mxu0 %v4820
        %v4822 = vand.u32 %v2996, 4294901760
        %v4823 = vsub.f32 %v2996, %v4822
        %v4824 = vand.u32 %v4823, 4294901760
        %v4825 = vsub.f32 %v4823, %v4824
        %v4826 = vand.u32 %v4825, 4294901760
        %4827 = vmatprep.subr.mxu0 %v4826
        %v4828 = vand.u32 %v2995, 4294901760
        %v4829 = vsub.f32 %v2995, %v4828
        %v4830 = vand.u32 %v4829, 4294901760
        %v4831 = vsub.f32 %v4829, %v4830
        %v4832 = vand.u32 %v4831, 4294901760
        %4833 = vmatpush1.msra.mxu0 %v4832
        %v4834 = vand.u32 %v2998, 4294901760
        %v4835 = vsub.f32 %v2998, %v4834
        %v4836 = vand.u32 %v4835, 4294901760
        %v4837 = vsub.f32 %v4835, %v4836
        %v4838 = vand.u32 %v4837, 4294901760
        %4839 = vmatprep.subr.mxu0 %v4838
        %v4840 = vand.u32 %v2997, 4294901760
        %v4841 = vsub.f32 %v2997, %v4840
        %v4842 = vand.u32 %v4841, 4294901760
        %v4843 = vsub.f32 %v4841, %v4842
        %v4844 = vand.u32 %v4843, 4294901760
        %4845 = vmatpush1.msra.mxu0 %v4844
        %v4846 = vand.u32 %v3000, 4294901760
        %v4847 = vsub.f32 %v3000, %v4846
        %v4848 = vand.u32 %v4847, 4294901760
        %v4849 = vsub.f32 %v4847, %v4848
        %v4850 = vand.u32 %v4849, 4294901760
        %4851 = vmatprep.subr.mxu0 %v4850
        %v4852 = vand.u32 %v2999, 4294901760
        %v4853 = vsub.f32 %v2999, %v4852
        %v4854 = vand.u32 %v4853, 4294901760
        %v4855 = vsub.f32 %v4853, %v4854
        %v4856 = vand.u32 %v4855, 4294901760
        %4857 = vmatpush1.msra.mxu0 %v4856
        %v4858 = vand.u32 %v3002, 4294901760
        %v4859 = vsub.f32 %v3002, %v4858
        %v4860 = vand.u32 %v4859, 4294901760
        %v4861 = vsub.f32 %v4859, %v4860
        %v4862 = vand.u32 %v4861, 4294901760
        %4863 = vmatprep.subr.mxu0 %v4862
        %v4864 = vand.u32 %v3001, 4294901760
        %v4865 = vsub.f32 %v3001, %v4864
        %v4866 = vand.u32 %v4865, 4294901760
        %v4867 = vsub.f32 %v4865, %v4866
        %v4868 = vand.u32 %v4867, 4294901760
        %4869 = vmatpush1.msra.mxu0 %v4868
        %v4870 = vand.u32 %v3004, 4294901760
        %v4871 = vsub.f32 %v3004, %v4870
        %v4872 = vand.u32 %v4871, 4294901760
        %v4873 = vsub.f32 %v4871, %v4872
        %v4874 = vand.u32 %v4873, 4294901760
        %4875 = vmatprep.subr.mxu0 %v4874
        %v4876 = vand.u32 %v3003, 4294901760
        %v4877 = vsub.f32 %v3003, %v4876
        %v4878 = vand.u32 %v4877, 4294901760
        %v4879 = vsub.f32 %v4877, %v4878
        %v4880 = vand.u32 %v4879, 4294901760
        %4881 = vmatpush1.msra.mxu0 %v4880
        %v4882 = vand.u32 %v2932, 4294901760
        %4883 = vmatprep.mubr.f32.mxu0 %v4882
        %v4884 = vand.u32 %v2930, 4294901760
        %4885 = vmatmul.mubr.f32.gmra.mrb[0].mxu0 %v4884
        %v4886 = vpop.f32.mrb[0].mxu0
        %v4887 = vadd.f32 %v4494, %v4886
        %v4888 = vpop.f32.mrb[0].mxu0
        %v4889 = vadd.f32 %v4496, %v4888
        %4890 = vdwg.mxu0
        %v4891 = vand.u32 %v2942, 4294901760
        %v4892 = vsub.f32 %v2942, %v4891
        %4893 = vmatprep.subr.mxu0 %v4892
        %v4894 = vand.u32 %v2941, 4294901760
        %v4895 = vsub.f32 %v2941, %v4894
        %4896 = vmatpush1.msra.mxu0 %v4895
        %v4897 = vand.u32 %v2944, 4294901760
        %v4898 = vsub.f32 %v2944, %v4897
        %4899 = vmatprep.subr.mxu0 %v4898
        %v4900 = vand.u32 %v2943, 4294901760
        %v4901 = vsub.f32 %v2943, %v4900
        %4902 = vmatpush1.msra.mxu0 %v4901
        %v4903 = vand.u32 %v2946, 4294901760
        %v4904 = vsub.f32 %v2946, %v4903
        %4905 = vmatprep.subr.mxu0 %v4904
        %v4906 = vand.u32 %v2945, 4294901760
        %v4907 = vsub.f32 %v2945, %v4906
        %4908 = vmatpush1.msra.mxu0 %v4907
        %v4909 = vand.u32 %v2948, 4294901760
        %v4910 = vsub.f32 %v2948, %v4909
        %4911 = vmatprep.subr.mxu0 %v4910
        %v4912 = vand.u32 %v2947, 4294901760
        %v4913 = vsub.f32 %v2947, %v4912
        %4914 = vmatpush1.msra.mxu0 %v4913
        %v4915 = vand.u32 %v2950, 4294901760
        %v4916 = vsub.f32 %v2950, %v4915
        %4917 = vmatprep.subr.mxu0 %v4916
        %v4918 = vand.u32 %v2949, 4294901760
        %v4919 = vsub.f32 %v2949, %v4918
        %4920 = vmatpush1.msra.mxu0 %v4919
        %v4921 = vand.u32 %v2952, 4294901760
        %v4922 = vsub.f32 %v2952, %v4921
        %4923 = vmatprep.subr.mxu0 %v4922
        %v4924 = vand.u32 %v2951, 4294901760
        %v4925 = vsub.f32 %v2951, %v4924
        %4926 = vmatpush1.msra.mxu0 %v4925
        %v4927 = vand.u32 %v2954, 4294901760
        %v4928 = vsub.f32 %v2954, %v4927
        %4929 = vmatprep.subr.mxu0 %v4928
        %v4930 = vand.u32 %v2953, 4294901760
        %v4931 = vsub.f32 %v2953, %v4930
        %4932 = vmatpush1.msra.mxu0 %v4931
        %v4933 = vand.u32 %v2956, 4294901760
        %v4934 = vsub.f32 %v2956, %v4933
        %4935 = vmatprep.subr.mxu0 %v4934
        %v4936 = vand.u32 %v2955, 4294901760
        %v4937 = vsub.f32 %v2955, %v4936
        %4938 = vmatpush1.msra.mxu0 %v4937
        %v4939 = vand.u32 %v2958, 4294901760
        %v4940 = vsub.f32 %v2958, %v4939
        %4941 = vmatprep.subr.mxu0 %v4940
        %v4942 = vand.u32 %v2957, 4294901760
        %v4943 = vsub.f32 %v2957, %v4942
        %4944 = vmatpush1.msra.mxu0 %v4943
        %v4945 = vand.u32 %v2960, 4294901760
        %v4946 = vsub.f32 %v2960, %v4945
        %4947 = vmatprep.subr.mxu0 %v4946
        %v4948 = vand.u32 %v2959, 4294901760
        %v4949 = vsub.f32 %v2959, %v4948
        %4950 = vmatpush1.msra.mxu0 %v4949
        %v4951 = vand.u32 %v2962, 4294901760
        %v4952 = vsub.f32 %v2962, %v4951
        %4953 = vmatprep.subr.mxu0 %v4952
        %v4954 = vand.u32 %v2961, 4294901760
        %v4955 = vsub.f32 %v2961, %v4954
        %4956 = vmatpush1.msra.mxu0 %v4955
        %v4957 = vand.u32 %v2964, 4294901760
        %v4958 = vsub.f32 %v2964, %v4957
        %4959 = vmatprep.subr.mxu0 %v4958
        %v4960 = vand.u32 %v2963, 4294901760
        %v4961 = vsub.f32 %v2963, %v4960
        %4962 = vmatpush1.msra.mxu0 %v4961
        %v4963 = vand.u32 %v2966, 4294901760
        %v4964 = vsub.f32 %v2966, %v4963
        %4965 = vmatprep.subr.mxu0 %v4964
        %v4966 = vand.u32 %v2965, 4294901760
        %v4967 = vsub.f32 %v2965, %v4966
        %4968 = vmatpush1.msra.mxu0 %v4967
        %v4969 = vand.u32 %v2968, 4294901760
        %v4970 = vsub.f32 %v2968, %v4969
        %4971 = vmatprep.subr.mxu0 %v4970
        %v4972 = vand.u32 %v2967, 4294901760
        %v4973 = vsub.f32 %v2967, %v4972
        %4974 = vmatpush1.msra.mxu0 %v4973
        %v4975 = vand.u32 %v2970, 4294901760
        %v4976 = vsub.f32 %v2970, %v4975
        %4977 = vmatprep.subr.mxu0 %v4976
        %v4978 = vand.u32 %v2969, 4294901760
        %v4979 = vsub.f32 %v2969, %v4978
        %4980 = vmatpush1.msra.mxu0 %v4979
        %v4981 = vand.u32 %v2972, 4294901760
        %v4982 = vsub.f32 %v2972, %v4981
        %4983 = vmatprep.subr.mxu0 %v4982
        %v4984 = vand.u32 %v2971, 4294901760
        %v4985 = vsub.f32 %v2971, %v4984
        %4986 = vmatpush1.msra.mxu0 %v4985
        %v4987 = vand.u32 %v2974, 4294901760
        %v4988 = vsub.f32 %v2974, %v4987
        %4989 = vmatprep.subr.mxu0 %v4988
        %v4990 = vand.u32 %v2973, 4294901760
        %v4991 = vsub.f32 %v2973, %v4990
        %4992 = vmatpush1.msra.mxu0 %v4991
        %v4993 = vand.u32 %v2976, 4294901760
        %v4994 = vsub.f32 %v2976, %v4993
        %4995 = vmatprep.subr.mxu0 %v4994
        %v4996 = vand.u32 %v2975, 4294901760
        %v4997 = vsub.f32 %v2975, %v4996
        %4998 = vmatpush1.msra.mxu0 %v4997
        %v4999 = vand.u32 %v2978, 4294901760
        %v5000 = vsub.f32 %v2978, %v4999
        %5001 = vmatprep.subr.mxu0 %v5000
        %v5002 = vand.u32 %v2977, 4294901760
        %v5003 = vsub.f32 %v2977, %v5002
        %5004 = vmatpush1.msra.mxu0 %v5003
        %v5005 = vand.u32 %v2980, 4294901760
        %v5006 = vsub.f32 %v2980, %v5005
        %5007 = vmatprep.subr.mxu0 %v5006
        %v5008 = vand.u32 %v2979, 4294901760
        %v5009 = vsub.f32 %v2979, %v5008
        %5010 = vmatpush1.msra.mxu0 %v5009
        %v5011 = vand.u32 %v2982, 4294901760
        %v5012 = vsub.f32 %v2982, %v5011
        %5013 = vmatprep.subr.mxu0 %v5012
        %v5014 = vand.u32 %v2981, 4294901760
        %v5015 = vsub.f32 %v2981, %v5014
        %5016 = vmatpush1.msra.mxu0 %v5015
        %v5017 = vand.u32 %v2984, 4294901760
        %v5018 = vsub.f32 %v2984, %v5017
        %5019 = vmatprep.subr.mxu0 %v5018
        %v5020 = vand.u32 %v2983, 4294901760
        %v5021 = vsub.f32 %v2983, %v5020
        %5022 = vmatpush1.msra.mxu0 %v5021
        %v5023 = vand.u32 %v2986, 4294901760
        %v5024 = vsub.f32 %v2986, %v5023
        %5025 = vmatprep.subr.mxu0 %v5024
        %v5026 = vand.u32 %v2985, 4294901760
        %v5027 = vsub.f32 %v2985, %v5026
        %5028 = vmatpush1.msra.mxu0 %v5027
        %v5029 = vand.u32 %v2988, 4294901760
        %v5030 = vsub.f32 %v2988, %v5029
        %5031 = vmatprep.subr.mxu0 %v5030
        %v5032 = vand.u32 %v2987, 4294901760
        %v5033 = vsub.f32 %v2987, %v5032
        %5034 = vmatpush1.msra.mxu0 %v5033
        %v5035 = vand.u32 %v2990, 4294901760
        %v5036 = vsub.f32 %v2990, %v5035
        %5037 = vmatprep.subr.mxu0 %v5036
        %v5038 = vand.u32 %v2989, 4294901760
        %v5039 = vsub.f32 %v2989, %v5038
        %5040 = vmatpush1.msra.mxu0 %v5039
        %v5041 = vand.u32 %v2992, 4294901760
        %v5042 = vsub.f32 %v2992, %v5041
        %5043 = vmatprep.subr.mxu0 %v5042
        %v5044 = vand.u32 %v2991, 4294901760
        %v5045 = vsub.f32 %v2991, %v5044
        %5046 = vmatpush1.msra.mxu0 %v5045
        %v5047 = vand.u32 %v2994, 4294901760
        %v5048 = vsub.f32 %v2994, %v5047
        %5049 = vmatprep.subr.mxu0 %v5048
        %v5050 = vand.u32 %v2993, 4294901760
        %v5051 = vsub.f32 %v2993, %v5050
        %5052 = vmatpush1.msra.mxu0 %v5051
        %v5053 = vand.u32 %v2996, 4294901760
        %v5054 = vsub.f32 %v2996, %v5053
        %5055 = vmatprep.subr.mxu0 %v5054
        %v5056 = vand.u32 %v2995, 4294901760
        %v5057 = vsub.f32 %v2995, %v5056
        %5058 = vmatpush1.msra.mxu0 %v5057
        %v5059 = vand.u32 %v2998, 4294901760
        %v5060 = vsub.f32 %v2998, %v5059
        %5061 = vmatprep.subr.mxu0 %v5060
        %v5062 = vand.u32 %v2997, 4294901760
        %v5063 = vsub.f32 %v2997, %v5062
        %5064 = vmatpush1.msra.mxu0 %v5063
        %v5065 = vand.u32 %v3000, 4294901760
        %v5066 = vsub.f32 %v3000, %v5065
        %5067 = vmatprep.subr.mxu0 %v5066
        %v5068 = vand.u32 %v2999, 4294901760
        %v5069 = vsub.f32 %v2999, %v5068
        %5070 = vmatpush1.msra.mxu0 %v5069
        %v5071 = vand.u32 %v3002, 4294901760
        %v5072 = vsub.f32 %v3002, %v5071
        %5073 = vmatprep.subr.mxu0 %v5072
        %v5074 = vand.u32 %v3001, 4294901760
        %v5075 = vsub.f32 %v3001, %v5074
        %5076 = vmatpush1.msra.mxu0 %v5075
        %v5077 = vand.u32 %v3004, 4294901760
        %v5078 = vsub.f32 %v3004, %v5077
        %5079 = vmatprep.subr.mxu0 %v5078
        %v5080 = vand.u32 %v3003, 4294901760
        %v5081 = vsub.f32 %v3003, %v5080
        %5082 = vmatpush1.msra.mxu0 %v5081
        %v5083 = vand.u32 %v2932, 4294901760
        %v5084 = vsub.f32 %v2932, %v5083
        %5085 = vmatprep.mubr.f32.mxu0 %v5084
        %v5086 = vand.u32 %v2930, 4294901760
        %v5087 = vsub.f32 %v2930, %v5086
        %5088 = vmatmul.mubr.f32.gmra.mrb[0].mxu0 %v5087
        %v5089 = vpop.f32.mrb[0].mxu0
        %v5090 = vadd.f32 %v4887, %v5089
        %v5091 = vpop.f32.mrb[0].mxu0
        %v5092 = vadd.f32 %v4889, %v5091
        %5093 = vdwg.mxu0
        %v5094 = vand.u32 %v2942, 4294901760
        %5095 = vmatprep.subr.mxu0 %v5094
        %v5096 = vand.u32 %v2941, 4294901760
        %5097 = vmatpush1.msra.mxu0 %v5096
        %v5098 = vand.u32 %v2944, 4294901760
        %5099 = vmatprep.subr.mxu0 %v5098
        %v5100 = vand.u32 %v2943, 4294901760
        %5101 = vmatpush1.msra.mxu0 %v5100
        %v5102 = vand.u32 %v2946, 4294901760
        %5103 = vmatprep.subr.mxu0 %v5102
        %v5104 = vand.u32 %v2945, 4294901760
        %5105 = vmatpush1.msra.mxu0 %v5104
        %v5106 = vand.u32 %v2948, 4294901760
        %5107 = vmatprep.subr.mxu0 %v5106
        %v5108 = vand.u32 %v2947, 4294901760
        %5109 = vmatpush1.msra.mxu0 %v5108
        %v5110 = vand.u32 %v2950, 4294901760
        %5111 = vmatprep.subr.mxu0 %v5110
        %v5112 = vand.u32 %v2949, 4294901760
        %5113 = vmatpush1.msra.mxu0 %v5112
        %v5114 = vand.u32 %v2952, 4294901760
        %5115 = vmatprep.subr.mxu0 %v5114
        %v5116 = vand.u32 %v2951, 4294901760
        %5117 = vmatpush1.msra.mxu0 %v5116
        %v5118 = vand.u32 %v2954, 4294901760
        %5119 = vmatprep.subr.mxu0 %v5118
        %v5120 = vand.u32 %v2953, 4294901760
        %5121 = vmatpush1.msra.mxu0 %v5120
        %v5122 = vand.u32 %v2956, 4294901760
        %5123 = vmatprep.subr.mxu0 %v5122
        %v5124 = vand.u32 %v2955, 4294901760
        %5125 = vmatpush1.msra.mxu0 %v5124
        %v5126 = vand.u32 %v2958, 4294901760
        %5127 = vmatprep.subr.mxu0 %v5126
        %v5128 = vand.u32 %v2957, 4294901760
        %5129 = vmatpush1.msra.mxu0 %v5128
        %v5130 = vand.u32 %v2960, 4294901760
        %5131 = vmatprep.subr.mxu0 %v5130
        %v5132 = vand.u32 %v2959, 4294901760
        %5133 = vmatpush1.msra.mxu0 %v5132
        %v5134 = vand.u32 %v2962, 4294901760
        %5135 = vmatprep.subr.mxu0 %v5134
        %v5136 = vand.u32 %v2961, 4294901760
        %5137 = vmatpush1.msra.mxu0 %v5136
        %v5138 = vand.u32 %v2964, 4294901760
        %5139 = vmatprep.subr.mxu0 %v5138
        %v5140 = vand.u32 %v2963, 4294901760
        %5141 = vmatpush1.msra.mxu0 %v5140
        %v5142 = vand.u32 %v2966, 4294901760
        %5143 = vmatprep.subr.mxu0 %v5142
        %v5144 = vand.u32 %v2965, 4294901760
        %5145 = vmatpush1.msra.mxu0 %v5144
        %v5146 = vand.u32 %v2968, 4294901760
        %5147 = vmatprep.subr.mxu0 %v5146
        %v5148 = vand.u32 %v2967, 4294901760
        %5149 = vmatpush1.msra.mxu0 %v5148
        %v5150 = vand.u32 %v2970, 4294901760
        %5151 = vmatprep.subr.mxu0 %v5150
        %v5152 = vand.u32 %v2969, 4294901760
        %5153 = vmatpush1.msra.mxu0 %v5152
        %v5154 = vand.u32 %v2972, 4294901760
        %5155 = vmatprep.subr.mxu0 %v5154
        %v5156 = vand.u32 %v2971, 4294901760
        %5157 = vmatpush1.msra.mxu0 %v5156
        %v5158 = vand.u32 %v2974, 4294901760
        %5159 = vmatprep.subr.mxu0 %v5158
        %v5160 = vand.u32 %v2973, 4294901760
        %5161 = vmatpush1.msra.mxu0 %v5160
        %v5162 = vand.u32 %v2976, 4294901760
        %5163 = vmatprep.subr.mxu0 %v5162
        %v5164 = vand.u32 %v2975, 4294901760
        %5165 = vmatpush1.msra.mxu0 %v5164
        %v5166 = vand.u32 %v2978, 4294901760
        %5167 = vmatprep.subr.mxu0 %v5166
        %v5168 = vand.u32 %v2977, 4294901760
        %5169 = vmatpush1.msra.mxu0 %v5168
        %v5170 = vand.u32 %v2980, 4294901760
        %5171 = vmatprep.subr.mxu0 %v5170
        %v5172 = vand.u32 %v2979, 4294901760
        %5173 = vmatpush1.msra.mxu0 %v5172
        %v5174 = vand.u32 %v2982, 4294901760
        %5175 = vmatprep.subr.mxu0 %v5174
        %v5176 = vand.u32 %v2981, 4294901760
        %5177 = vmatpush1.msra.mxu0 %v5176
        %v5178 = vand.u32 %v2984, 4294901760
        %5179 = vmatprep.subr.mxu0 %v5178
        %v5180 = vand.u32 %v2983, 4294901760
        %5181 = vmatpush1.msra.mxu0 %v5180
        %v5182 = vand.u32 %v2986, 4294901760
        %5183 = vmatprep.subr.mxu0 %v5182
        %v5184 = vand.u32 %v2985, 4294901760
        %5185 = vmatpush1.msra.mxu0 %v5184
        %v5186 = vand.u32 %v2988, 4294901760
        %5187 = vmatprep.subr.mxu0 %v5186
        %v5188 = vand.u32 %v2987, 4294901760
        %5189 = vmatpush1.msra.mxu0 %v5188
        %v5190 = vand.u32 %v2990, 4294901760
        %5191 = vmatprep.subr.mxu0 %v5190
        %v5192 = vand.u32 %v2989, 4294901760
        %5193 = vmatpush1.msra.mxu0 %v5192
        %v5194 = vand.u32 %v2992, 4294901760
        %5195 = vmatprep.subr.mxu0 %v5194
        %v5196 = vand.u32 %v2991, 4294901760
        %5197 = vmatpush1.msra.mxu0 %v5196
        %v5198 = vand.u32 %v2994, 4294901760
        %5199 = vmatprep.subr.mxu0 %v5198
        %v5200 = vand.u32 %v2993, 4294901760
        %5201 = vmatpush1.msra.mxu0 %v5200
        %v5202 = vand.u32 %v2996, 4294901760
        %5203 = vmatprep.subr.mxu0 %v5202
        %v5204 = vand.u32 %v2995, 4294901760
        %5205 = vmatpush1.msra.mxu0 %v5204
        %v5206 = vand.u32 %v2998, 4294901760
        %5207 = vmatprep.subr.mxu0 %v5206
        %v5208 = vand.u32 %v2997, 4294901760
        %5209 = vmatpush1.msra.mxu0 %v5208
        %v5210 = vand.u32 %v3000, 4294901760
        %5211 = vmatprep.subr.mxu0 %v5210
        %v5212 = vand.u32 %v2999, 4294901760
        %5213 = vmatpush1.msra.mxu0 %v5212
        %v5214 = vand.u32 %v3002, 4294901760
        %5215 = vmatprep.subr.mxu0 %v5214
        %v5216 = vand.u32 %v3001, 4294901760
        %5217 = vmatpush1.msra.mxu0 %v5216
        %v5218 = vand.u32 %v3004, 4294901760
        %5219 = vmatprep.subr.mxu0 %v5218
        %v5220 = vand.u32 %v3003, 4294901760
        %5221 = vmatpush1.msra.mxu0 %v5220
        %v5222 = vand.u32 %v2932, 4294901760
        %v5223 = vsub.f32 %v2932, %v5222
        %v5224 = vand.u32 %v5223, 4294901760
        %5225 = vmatprep.mubr.f32.mxu0 %v5224
        %v5226 = vand.u32 %v2930, 4294901760
        %v5227 = vsub.f32 %v2930, %v5226
        %v5228 = vand.u32 %v5227, 4294901760
        %5229 = vmatmul.mubr.f32.gmra.mrb[0].mxu0 %v5228
        %v5230 = vpop.f32.mrb[0].mxu0
        %v5231 = vadd.f32 %v5090, %v5230
        %v5232 = vpop.f32.mrb[0].mxu0
        %v5233 = vadd.f32 %v5092, %v5232
        %5234 = vdwg.mxu0
        %v5235 = vand.u32 %v2942, 4294901760
        %v5236 = vsub.f32 %v2942, %v5235
        %v5237 = vand.u32 %v5236, 4294901760
        %5238 = vmatprep.subr.mxu0 %v5237
        %v5239 = vand.u32 %v2941, 4294901760
        %v5240 = vsub.f32 %v2941, %v5239
        %v5241 = vand.u32 %v5240, 4294901760
        %5242 = vmatpush1.msra.mxu0 %v5241
        %v5243 = vand.u32 %v2944, 4294901760
        %v5244 = vsub.f32 %v2944, %v5243
        %v5245 = vand.u32 %v5244, 4294901760
        %5246 = vmatprep.subr.mxu0 %v5245
        %v5247 = vand.u32 %v2943, 4294901760
        %v5248 = vsub.f32 %v2943, %v5247
        %v5249 = vand.u32 %v5248, 4294901760
        %5250 = vmatpush1.msra.mxu0 %v5249
        %v5251 = vand.u32 %v2946, 4294901760
        %v5252 = vsub.f32 %v2946, %v5251
        %v5253 = vand.u32 %v5252, 4294901760
        %5254 = vmatprep.subr.mxu0 %v5253
        %v5255 = vand.u32 %v2945, 4294901760
        %v5256 = vsub.f32 %v2945, %v5255
        %v5257 = vand.u32 %v5256, 4294901760
        %5258 = vmatpush1.msra.mxu0 %v5257
        %v5259 = vand.u32 %v2948, 4294901760
        %v5260 = vsub.f32 %v2948, %v5259
        %v5261 = vand.u32 %v5260, 4294901760
        %5262 = vmatprep.subr.mxu0 %v5261
        %v5263 = vand.u32 %v2947, 4294901760
        %v5264 = vsub.f32 %v2947, %v5263
        %v5265 = vand.u32 %v5264, 4294901760
        %5266 = vmatpush1.msra.mxu0 %v5265
        %v5267 = vand.u32 %v2950, 4294901760
        %v5268 = vsub.f32 %v2950, %v5267
        %v5269 = vand.u32 %v5268, 4294901760
        %5270 = vmatprep.subr.mxu0 %v5269
        %v5271 = vand.u32 %v2949, 4294901760
        %v5272 = vsub.f32 %v2949, %v5271
        %v5273 = vand.u32 %v5272, 4294901760
        %5274 = vmatpush1.msra.mxu0 %v5273
        %v5275 = vand.u32 %v2952, 4294901760
        %v5276 = vsub.f32 %v2952, %v5275
        %v5277 = vand.u32 %v5276, 4294901760
        %5278 = vmatprep.subr.mxu0 %v5277
        %v5279 = vand.u32 %v2951, 4294901760
        %v5280 = vsub.f32 %v2951, %v5279
        %v5281 = vand.u32 %v5280, 4294901760
        %5282 = vmatpush1.msra.mxu0 %v5281
        %v5283 = vand.u32 %v2954, 4294901760
        %v5284 = vsub.f32 %v2954, %v5283
        %v5285 = vand.u32 %v5284, 4294901760
        %5286 = vmatprep.subr.mxu0 %v5285
        %v5287 = vand.u32 %v2953, 4294901760
        %v5288 = vsub.f32 %v2953, %v5287
        %v5289 = vand.u32 %v5288, 4294901760
        %5290 = vmatpush1.msra.mxu0 %v5289
        %v5291 = vand.u32 %v2956, 4294901760
        %v5292 = vsub.f32 %v2956, %v5291
        %v5293 = vand.u32 %v5292, 4294901760
        %5294 = vmatprep.subr.mxu0 %v5293
        %v5295 = vand.u32 %v2955, 4294901760
        %v5296 = vsub.f32 %v2955, %v5295
        %v5297 = vand.u32 %v5296, 4294901760
        %5298 = vmatpush1.msra.mxu0 %v5297
        %v5299 = vand.u32 %v2958, 4294901760
        %v5300 = vsub.f32 %v2958, %v5299
        %v5301 = vand.u32 %v5300, 4294901760
        %5302 = vmatprep.subr.mxu0 %v5301
        %v5303 = vand.u32 %v2957, 4294901760
        %v5304 = vsub.f32 %v2957, %v5303
        %v5305 = vand.u32 %v5304, 4294901760
        %5306 = vmatpush1.msra.mxu0 %v5305
        %v5307 = vand.u32 %v2960, 4294901760
        %v5308 = vsub.f32 %v2960, %v5307
        %v5309 = vand.u32 %v5308, 4294901760
        %5310 = vmatprep.subr.mxu0 %v5309
        %v5311 = vand.u32 %v2959, 4294901760
        %v5312 = vsub.f32 %v2959, %v5311
        %v5313 = vand.u32 %v5312, 4294901760
        %5314 = vmatpush1.msra.mxu0 %v5313
        %v5315 = vand.u32 %v2962, 4294901760
        %v5316 = vsub.f32 %v2962, %v5315
        %v5317 = vand.u32 %v5316, 4294901760
        %5318 = vmatprep.subr.mxu0 %v5317
        %v5319 = vand.u32 %v2961, 4294901760
        %v5320 = vsub.f32 %v2961, %v5319
        %v5321 = vand.u32 %v5320, 4294901760
        %5322 = vmatpush1.msra.mxu0 %v5321
        %v5323 = vand.u32 %v2964, 4294901760
        %v5324 = vsub.f32 %v2964, %v5323
        %v5325 = vand.u32 %v5324, 4294901760
        %5326 = vmatprep.subr.mxu0 %v5325
        %v5327 = vand.u32 %v2963, 4294901760
        %v5328 = vsub.f32 %v2963, %v5327
        %v5329 = vand.u32 %v5328, 4294901760
        %5330 = vmatpush1.msra.mxu0 %v5329
        %v5331 = vand.u32 %v2966, 4294901760
        %v5332 = vsub.f32 %v2966, %v5331
        %v5333 = vand.u32 %v5332, 4294901760
        %5334 = vmatprep.subr.mxu0 %v5333
        %v5335 = vand.u32 %v2965, 4294901760
        %v5336 = vsub.f32 %v2965, %v5335
        %v5337 = vand.u32 %v5336, 4294901760
        %5338 = vmatpush1.msra.mxu0 %v5337
        %v5339 = vand.u32 %v2968, 4294901760
        %v5340 = vsub.f32 %v2968, %v5339
        %v5341 = vand.u32 %v5340, 4294901760
        %5342 = vmatprep.subr.mxu0 %v5341
        %v5343 = vand.u32 %v2967, 4294901760
        %v5344 = vsub.f32 %v2967, %v5343
        %v5345 = vand.u32 %v5344, 4294901760
        %5346 = vmatpush1.msra.mxu0 %v5345
        %v5347 = vand.u32 %v2970, 4294901760
        %v5348 = vsub.f32 %v2970, %v5347
        %v5349 = vand.u32 %v5348, 4294901760
        %5350 = vmatprep.subr.mxu0 %v5349
        %v5351 = vand.u32 %v2969, 4294901760
        %v5352 = vsub.f32 %v2969, %v5351
        %v5353 = vand.u32 %v5352, 4294901760
        %5354 = vmatpush1.msra.mxu0 %v5353
        %v5355 = vand.u32 %v2972, 4294901760
        %v5356 = vsub.f32 %v2972, %v5355
        %v5357 = vand.u32 %v5356, 4294901760
        %5358 = vmatprep.subr.mxu0 %v5357
        %v5359 = vand.u32 %v2971, 4294901760
        %v5360 = vsub.f32 %v2971, %v5359
        %v5361 = vand.u32 %v5360, 4294901760
        %5362 = vmatpush1.msra.mxu0 %v5361
        %v5363 = vand.u32 %v2974, 4294901760
        %v5364 = vsub.f32 %v2974, %v5363
        %v5365 = vand.u32 %v5364, 4294901760
        %5366 = vmatprep.subr.mxu0 %v5365
        %v5367 = vand.u32 %v2973, 4294901760
        %v5368 = vsub.f32 %v2973, %v5367
        %v5369 = vand.u32 %v5368, 4294901760
        %5370 = vmatpush1.msra.mxu0 %v5369
        %v5371 = vand.u32 %v2976, 4294901760
        %v5372 = vsub.f32 %v2976, %v5371
        %v5373 = vand.u32 %v5372, 4294901760
        %5374 = vmatprep.subr.mxu0 %v5373
        %v5375 = vand.u32 %v2975, 4294901760
        %v5376 = vsub.f32 %v2975, %v5375
        %v5377 = vand.u32 %v5376, 4294901760
        %5378 = vmatpush1.msra.mxu0 %v5377
        %v5379 = vand.u32 %v2978, 4294901760
        %v5380 = vsub.f32 %v2978, %v5379
        %v5381 = vand.u32 %v5380, 4294901760
        %5382 = vmatprep.subr.mxu0 %v5381
        %v5383 = vand.u32 %v2977, 4294901760
        %v5384 = vsub.f32 %v2977, %v5383
        %v5385 = vand.u32 %v5384, 4294901760
        %5386 = vmatpush1.msra.mxu0 %v5385
        %v5387 = vand.u32 %v2980, 4294901760
        %v5388 = vsub.f32 %v2980, %v5387
        %v5389 = vand.u32 %v5388, 4294901760
        %5390 = vmatprep.subr.mxu0 %v5389
        %v5391 = vand.u32 %v2979, 4294901760
        %v5392 = vsub.f32 %v2979, %v5391
        %v5393 = vand.u32 %v5392, 4294901760
        %5394 = vmatpush1.msra.mxu0 %v5393
        %v5395 = vand.u32 %v2982, 4294901760
        %v5396 = vsub.f32 %v2982, %v5395
        %v5397 = vand.u32 %v5396, 4294901760
        %5398 = vmatprep.subr.mxu0 %v5397
        %v5399 = vand.u32 %v2981, 4294901760
        %v5400 = vsub.f32 %v2981, %v5399
        %v5401 = vand.u32 %v5400, 4294901760
        %5402 = vmatpush1.msra.mxu0 %v5401
        %v5403 = vand.u32 %v2984, 4294901760
        %v5404 = vsub.f32 %v2984, %v5403
        %v5405 = vand.u32 %v5404, 4294901760
        %5406 = vmatprep.subr.mxu0 %v5405
        %v5407 = vand.u32 %v2983, 4294901760
        %v5408 = vsub.f32 %v2983, %v5407
        %v5409 = vand.u32 %v5408, 4294901760
        %5410 = vmatpush1.msra.mxu0 %v5409
        %v5411 = vand.u32 %v2986, 4294901760
        %v5412 = vsub.f32 %v2986, %v5411
        %v5413 = vand.u32 %v5412, 4294901760
        %5414 = vmatprep.subr.mxu0 %v5413
        %v5415 = vand.u32 %v2985, 4294901760
        %v5416 = vsub.f32 %v2985, %v5415
        %v5417 = vand.u32 %v5416, 4294901760
        %5418 = vmatpush1.msra.mxu0 %v5417
        %v5419 = vand.u32 %v2988, 4294901760
        %v5420 = vsub.f32 %v2988, %v5419
        %v5421 = vand.u32 %v5420, 4294901760
        %5422 = vmatprep.subr.mxu0 %v5421
        %v5423 = vand.u32 %v2987, 4294901760
        %v5424 = vsub.f32 %v2987, %v5423
        %v5425 = vand.u32 %v5424, 4294901760
        %5426 = vmatpush1.msra.mxu0 %v5425
        %v5427 = vand.u32 %v2990, 4294901760
        %v5428 = vsub.f32 %v2990, %v5427
        %v5429 = vand.u32 %v5428, 4294901760
        %5430 = vmatprep.subr.mxu0 %v5429
        %v5431 = vand.u32 %v2989, 4294901760
        %v5432 = vsub.f32 %v2989, %v5431
        %v5433 = vand.u32 %v5432, 4294901760
        %5434 = vmatpush1.msra.mxu0 %v5433
        %v5435 = vand.u32 %v2992, 4294901760
        %v5436 = vsub.f32 %v2992, %v5435
        %v5437 = vand.u32 %v5436, 4294901760
        %5438 = vmatprep.subr.mxu0 %v5437
        %v5439 = vand.u32 %v2991, 4294901760
        %v5440 = vsub.f32 %v2991, %v5439
        %v5441 = vand.u32 %v5440, 4294901760
        %5442 = vmatpush1.msra.mxu0 %v5441
        %v5443 = vand.u32 %v2994, 4294901760
        %v5444 = vsub.f32 %v2994, %v5443
        %v5445 = vand.u32 %v5444, 4294901760
        %5446 = vmatprep.subr.mxu0 %v5445
        %v5447 = vand.u32 %v2993, 4294901760
        %v5448 = vsub.f32 %v2993, %v5447
        %v5449 = vand.u32 %v5448, 4294901760
        %5450 = vmatpush1.msra.mxu0 %v5449
        %v5451 = vand.u32 %v2996, 4294901760
        %v5452 = vsub.f32 %v2996, %v5451
        %v5453 = vand.u32 %v5452, 4294901760
        %5454 = vmatprep.subr.mxu0 %v5453
        %v5455 = vand.u32 %v2995, 4294901760
        %v5456 = vsub.f32 %v2995, %v5455
        %v5457 = vand.u32 %v5456, 4294901760
        %5458 = vmatpush1.msra.mxu0 %v5457
        %v5459 = vand.u32 %v2998, 4294901760
        %v5460 = vsub.f32 %v2998, %v5459
        %v5461 = vand.u32 %v5460, 4294901760
        %5462 = vmatprep.subr.mxu0 %v5461
        %v5463 = vand.u32 %v2997, 4294901760
        %v5464 = vsub.f32 %v2997, %v5463
        %v5465 = vand.u32 %v5464, 4294901760
        %5466 = vmatpush1.msra.mxu0 %v5465
        %v5467 = vand.u32 %v3000, 4294901760
        %v5468 = vsub.f32 %v3000, %v5467
        %v5469 = vand.u32 %v5468, 4294901760
        %5470 = vmatprep.subr.mxu0 %v5469
        %v5471 = vand.u32 %v2999, 4294901760
        %v5472 = vsub.f32 %v2999, %v5471
        %v5473 = vand.u32 %v5472, 4294901760
        %5474 = vmatpush1.msra.mxu0 %v5473
        %v5475 = vand.u32 %v3002, 4294901760
        %v5476 = vsub.f32 %v3002, %v5475
        %v5477 = vand.u32 %v5476, 4294901760
        %5478 = vmatprep.subr.mxu0 %v5477
        %v5479 = vand.u32 %v3001, 4294901760
        %v5480 = vsub.f32 %v3001, %v5479
        %v5481 = vand.u32 %v5480, 4294901760
        %5482 = vmatpush1.msra.mxu0 %v5481
        %v5483 = vand.u32 %v3004, 4294901760
        %v5484 = vsub.f32 %v3004, %v5483
        %v5485 = vand.u32 %v5484, 4294901760
        %5486 = vmatprep.subr.mxu0 %v5485
        %v5487 = vand.u32 %v3003, 4294901760
        %v5488 = vsub.f32 %v3003, %v5487
        %v5489 = vand.u32 %v5488, 4294901760
        %5490 = vmatpush1.msra.mxu0 %v5489
        %v5491 = vand.u32 %v2932, 4294901760
        %5492 = vmatprep.mubr.f32.mxu0 %v5491
        %v5493 = vand.u32 %v2930, 4294901760
        %5494 = vmatmul.mubr.f32.gmra.mrb[0].mxu0 %v5493
        %v5495 = vpop.f32.mrb[0].mxu0
        %v5496 = vadd.f32 %v5231, %v5495
        %v5497 = vpop.f32.mrb[0].mxu0
        %v5498 = vadd.f32 %v5233, %v5497
        %5499 = vdwg.mxu0
        %v5500 = vand.u32 %v2942, 4294901760
        %5501 = vmatprep.subr.mxu0 %v5500
        %v5502 = vand.u32 %v2941, 4294901760
        %5503 = vmatpush1.msra.mxu0 %v5502
        %v5504 = vand.u32 %v2944, 4294901760
        %5505 = vmatprep.subr.mxu0 %v5504
        %v5506 = vand.u32 %v2943, 4294901760
        %5507 = vmatpush1.msra.mxu0 %v5506
        %v5508 = vand.u32 %v2946, 4294901760
        %5509 = vmatprep.subr.mxu0 %v5508
        %v5510 = vand.u32 %v2945, 4294901760
        %5511 = vmatpush1.msra.mxu0 %v5510
        %v5512 = vand.u32 %v2948, 4294901760
        %5513 = vmatprep.subr.mxu0 %v5512
        %v5514 = vand.u32 %v2947, 4294901760
        %5515 = vmatpush1.msra.mxu0 %v5514
        %v5516 = vand.u32 %v2950, 4294901760
        %5517 = vmatprep.subr.mxu0 %v5516
        %v5518 = vand.u32 %v2949, 4294901760
        %5519 = vmatpush1.msra.mxu0 %v5518
        %v5520 = vand.u32 %v2952, 4294901760
        %5521 = vmatprep.subr.mxu0 %v5520
        %v5522 = vand.u32 %v2951, 4294901760
        %5523 = vmatpush1.msra.mxu0 %v5522
        %v5524 = vand.u32 %v2954, 4294901760
        %5525 = vmatprep.subr.mxu0 %v5524
        %v5526 = vand.u32 %v2953, 4294901760
        %5527 = vmatpush1.msra.mxu0 %v5526
        %v5528 = vand.u32 %v2956, 4294901760
        %5529 = vmatprep.subr.mxu0 %v5528
        %v5530 = vand.u32 %v2955, 4294901760
        %5531 = vmatpush1.msra.mxu0 %v5530
        %v5532 = vand.u32 %v2958, 4294901760
        %5533 = vmatprep.subr.mxu0 %v5532
        %v5534 = vand.u32 %v2957, 4294901760
        %5535 = vmatpush1.msra.mxu0 %v5534
        %v5536 = vand.u32 %v2960, 4294901760
        %5537 = vmatprep.subr.mxu0 %v5536
        %v5538 = vand.u32 %v2959, 4294901760
        %5539 = vmatpush1.msra.mxu0 %v5538
        %v5540 = vand.u32 %v2962, 4294901760
        %5541 = vmatprep.subr.mxu0 %v5540
        %v5542 = vand.u32 %v2961, 4294901760
        %5543 = vmatpush1.msra.mxu0 %v5542
        %v5544 = vand.u32 %v2964, 4294901760
        %5545 = vmatprep.subr.mxu0 %v5544
        %v5546 = vand.u32 %v2963, 4294901760
        %5547 = vmatpush1.msra.mxu0 %v5546
        %v5548 = vand.u32 %v2966, 4294901760
        %5549 = vmatprep.subr.mxu0 %v5548
        %v5550 = vand.u32 %v2965, 4294901760
        %5551 = vmatpush1.msra.mxu0 %v5550
        %v5552 = vand.u32 %v2968, 4294901760
        %5553 = vmatprep.subr.mxu0 %v5552
        %v5554 = vand.u32 %v2967, 4294901760
        %5555 = vmatpush1.msra.mxu0 %v5554
        %v5556 = vand.u32 %v2970, 4294901760
        %5557 = vmatprep.subr.mxu0 %v5556
        %v5558 = vand.u32 %v2969, 4294901760
        %5559 = vmatpush1.msra.mxu0 %v5558
        %v5560 = vand.u32 %v2972, 4294901760
        %5561 = vmatprep.subr.mxu0 %v5560
        %v5562 = vand.u32 %v2971, 4294901760
        %5563 = vmatpush1.msra.mxu0 %v5562
        %v5564 = vand.u32 %v2974, 4294901760
        %5565 = vmatprep.subr.mxu0 %v5564
        %v5566 = vand.u32 %v2973, 4294901760
        %5567 = vmatpush1.msra.mxu0 %v5566
        %v5568 = vand.u32 %v2976, 4294901760
        %5569 = vmatprep.subr.mxu0 %v5568
        %v5570 = vand.u32 %v2975, 4294901760
        %5571 = vmatpush1.msra.mxu0 %v5570
        %v5572 = vand.u32 %v2978, 4294901760
        %5573 = vmatprep.subr.mxu0 %v5572
        %v5574 = vand.u32 %v2977, 4294901760
        %5575 = vmatpush1.msra.mxu0 %v5574
        %v5576 = vand.u32 %v2980, 4294901760
        %5577 = vmatprep.subr.mxu0 %v5576
        %v5578 = vand.u32 %v2979, 4294901760
        %5579 = vmatpush1.msra.mxu0 %v5578
        %v5580 = vand.u32 %v2982, 4294901760
        %5581 = vmatprep.subr.mxu0 %v5580
        %v5582 = vand.u32 %v2981, 4294901760
        %5583 = vmatpush1.msra.mxu0 %v5582
        %v5584 = vand.u32 %v2984, 4294901760
        %5585 = vmatprep.subr.mxu0 %v5584
        %v5586 = vand.u32 %v2983, 4294901760
        %5587 = vmatpush1.msra.mxu0 %v5586
        %v5588 = vand.u32 %v2986, 4294901760
        %5589 = vmatprep.subr.mxu0 %v5588
        %v5590 = vand.u32 %v2985, 4294901760
        %5591 = vmatpush1.msra.mxu0 %v5590
        %v5592 = vand.u32 %v2988, 4294901760
        %5593 = vmatprep.subr.mxu0 %v5592
        %v5594 = vand.u32 %v2987, 4294901760
        %5595 = vmatpush1.msra.mxu0 %v5594
        %v5596 = vand.u32 %v2990, 4294901760
        %5597 = vmatprep.subr.mxu0 %v5596
        %v5598 = vand.u32 %v2989, 4294901760
        %5599 = vmatpush1.msra.mxu0 %v5598
        %v5600 = vand.u32 %v2992, 4294901760
        %5601 = vmatprep.subr.mxu0 %v5600
        %v5602 = vand.u32 %v2991, 4294901760
        %5603 = vmatpush1.msra.mxu0 %v5602
        %v5604 = vand.u32 %v2994, 4294901760
        %5605 = vmatprep.subr.mxu0 %v5604
        %v5606 = vand.u32 %v2993, 4294901760
        %5607 = vmatpush1.msra.mxu0 %v5606
        %v5608 = vand.u32 %v2996, 4294901760
        %5609 = vmatprep.subr.mxu0 %v5608
        %v5610 = vand.u32 %v2995, 4294901760
        %5611 = vmatpush1.msra.mxu0 %v5610
        %v5612 = vand.u32 %v2998, 4294901760
        %5613 = vmatprep.subr.mxu0 %v5612
        %v5614 = vand.u32 %v2997, 4294901760
        %5615 = vmatpush1.msra.mxu0 %v5614
        %v5616 = vand.u32 %v3000, 4294901760
        %5617 = vmatprep.subr.mxu0 %v5616
        %v5618 = vand.u32 %v2999, 4294901760
        %5619 = vmatpush1.msra.mxu0 %v5618
        %v5620 = vand.u32 %v3002, 4294901760
        %5621 = vmatprep.subr.mxu0 %v5620
        %v5622 = vand.u32 %v3001, 4294901760
        %5623 = vmatpush1.msra.mxu0 %v5622
        %v5624 = vand.u32 %v3004, 4294901760
        %5625 = vmatprep.subr.mxu0 %v5624
        %v5626 = vand.u32 %v3003, 4294901760
        %5627 = vmatpush1.msra.mxu0 %v5626
        %v5628 = vand.u32 %v2932, 4294901760
        %5629 = vmatprep.mubr.f32.mxu0 %v5628
        %v5630 = vand.u32 %v2930, 4294901760
        %5631 = vmatmul.mubr.f32.gmra.mrb[0].mxu0 %v5630
        %v5632 = vpop.f32.mrb[0].mxu0
        %v5633 = vadd.f32 %v5496, %v5632
        %v5634 = vpop.f32.mrb[0].mxu0
        %v5635 = vadd.f32 %v5498, %v5634
        %5636 = vdwg.mxu0
        %v5637 = vld [vmem:[%s7] sm:$0x3]
        %v5639 = vlaneseq
        %v5640 = vshrl.u32 %v5639, 7
        %v5641 = vsub.s32 0, %v5640
        %v5642 = vrot.slane %v5637, %v5641
        %v5643 = vlaneseq
        %v5644 = vshrl.u32 %v5643, 7
        %v5645 = vsub.s32 1, %v5644
        %v5646 = vrot.slane %v5637, %v5645
        %v5649 = vadd.f32 %v5633, %v5642
        %v5650 = vadd.f32 %v5635, %v5646
        %v5651 = vmax.f32 %v5649, 0.0
        %v5652 = vmax.f32 %v5650, 0.0
        %v5653 = vld [vmem:[#allocation8] sm:$0xff]
        %v5654 = vld [vmem:[#allocation8 + $0x8] sm:$0xff]
        %v5655 = vld [vmem:[#allocation8 + $0x10] sm:$0xff]
        %v5656 = vld [vmem:[#allocation8 + $0x18] sm:$0xff]
        %v5657 = vld [vmem:[#allocation8 + $0x20] sm:$0xff]
        %v5658 = vld [vmem:[#allocation8 + $0x28] sm:$0xff]
        %v5659 = vld [vmem:[#allocation8 + $0x30] sm:$0xff]
        %v5660 = vld [vmem:[#allocation8 + $0x38] sm:$0xff]
        %v5661 = vld [vmem:[#allocation8 + $0x40] sm:$0xff]
        %v5662 = vld [vmem:[#allocation8 + $0x48] sm:$0xff]
        %v5663 = vld [vmem:[#allocation8 + $0x50] sm:$0xff]
        %v5664 = vld [vmem:[#allocation8 + $0x58] sm:$0xff]
        %v5665 = vld [vmem:[#allocation8 + $0x60] sm:$0xff]
        %v5666 = vld [vmem:[#allocation8 + $0x68] sm:$0xff]
        %v5667 = vld [vmem:[#allocation8 + $0x70] sm:$0xff]
        %v5668 = vld [vmem:[#allocation8 + $0x78] sm:$0xff]
        %v5669 = vld [vmem:[#allocation8 + $0x80] sm:$0xff]
        %v5670 = vld [vmem:[#allocation8 + $0x88] sm:$0xff]
        %v5671 = vld [vmem:[#allocation8 + $0x90] sm:$0xff]
        %v5672 = vld [vmem:[#allocation8 + $0x98] sm:$0xff]
        %v5673 = vld [vmem:[#allocation8 + $0xa0] sm:$0xff]
        %v5674 = vld [vmem:[#allocation8 + $0xa8] sm:$0xff]
        %v5675 = vld [vmem:[#allocation8 + $0xb0] sm:$0xff]
        %v5676 = vld [vmem:[#allocation8 + $0xb8] sm:$0xff]
        %v5677 = vld [vmem:[#allocation8 + $0xc0] sm:$0xff]
        %v5678 = vld [vmem:[#allocation8 + $0xc8] sm:$0xff]
        %v5679 = vld [vmem:[#allocation8 + $0xd0] sm:$0xff]
        %v5680 = vld [vmem:[#allocation8 + $0xd8] sm:$0xff]
        %v5681 = vld [vmem:[#allocation8 + $0xe0] sm:$0xff]
        %v5682 = vld [vmem:[#allocation8 + $0xe8] sm:$0xff]
        %v5683 = vld [vmem:[#allocation8 + $0xf0] sm:$0xff]
        %v5684 = vld [vmem:[#allocation8 + $0xf8] sm:$0xff]
        %v5685 = vld [vmem:[%s9] sm:$0x1]
        %v5687 = vlaneseq
        %v5688 = vshrl.u32 %v5687, 7
        %v5689 = vsub.s32 0, %v5688
        %v5690 = vrot.slane %v5685, %v5689
        %5692 = vmatprep.subr.mxu0 0.0
        %v5693 = vand.u32 %v5653, 4294901760
        %5694 = vmatpush1.msra.mxu0 %v5693
        %5695 = vmatprep.subr.mxu0 0.0
        %v5696 = vand.u32 %v5654, 4294901760
        %5697 = vmatpush1.msra.mxu0 %v5696
        %5698 = vmatprep.subr.mxu0 0.0
        %v5699 = vand.u32 %v5655, 4294901760
        %5700 = vmatpush1.msra.mxu0 %v5699
        %5701 = vmatprep.subr.mxu0 0.0
        %v5702 = vand.u32 %v5656, 4294901760
        %5703 = vmatpush1.msra.mxu0 %v5702
        %5704 = vmatprep.subr.mxu0 0.0
        %v5705 = vand.u32 %v5657, 4294901760
        %5706 = vmatpush1.msra.mxu0 %v5705
        %5707 = vmatprep.subr.mxu0 0.0
        %v5708 = vand.u32 %v5658, 4294901760
        %5709 = vmatpush1.msra.mxu0 %v5708
        %5710 = vmatprep.subr.mxu0 0.0
        %v5711 = vand.u32 %v5659, 4294901760
        %5712 = vmatpush1.msra.mxu0 %v5711
        %5713 = vmatprep.subr.mxu0 0.0
        %v5714 = vand.u32 %v5660, 4294901760
        %5715 = vmatpush1.msra.mxu0 %v5714
        %5716 = vmatprep.subr.mxu0 0.0
        %v5717 = vand.u32 %v5661, 4294901760
        %5718 = vmatpush1.msra.mxu0 %v5717
        %5719 = vmatprep.subr.mxu0 0.0
        %v5720 = vand.u32 %v5662, 4294901760
        %5721 = vmatpush1.msra.mxu0 %v5720
        %5722 = vmatprep.subr.mxu0 0.0
        %v5723 = vand.u32 %v5663, 4294901760
        %5724 = vmatpush1.msra.mxu0 %v5723
        %5725 = vmatprep.subr.mxu0 0.0
        %v5726 = vand.u32 %v5664, 4294901760
        %5727 = vmatpush1.msra.mxu0 %v5726
        %5728 = vmatprep.subr.mxu0 0.0
        %v5729 = vand.u32 %v5665, 4294901760
        %5730 = vmatpush1.msra.mxu0 %v5729
        %5731 = vmatprep.subr.mxu0 0.0
        %v5732 = vand.u32 %v5666, 4294901760
        %5733 = vmatpush1.msra.mxu0 %v5732
        %5734 = vmatprep.subr.mxu0 0.0
        %v5735 = vand.u32 %v5667, 4294901760
        %5736 = vmatpush1.msra.mxu0 %v5735
        %5737 = vmatprep.subr.mxu0 0.0
        %v5738 = vand.u32 %v5668, 4294901760
        %5739 = vmatpush1.msra.mxu0 %v5738
        %5740 = vmatprep.subr.mxu0 0.0
        %v5741 = vand.u32 %v5669, 4294901760
        %5742 = vmatpush1.msra.mxu0 %v5741
        %5743 = vmatprep.subr.mxu0 0.0
        %v5744 = vand.u32 %v5670, 4294901760
        %5745 = vmatpush1.msra.mxu0 %v5744
        %5746 = vmatprep.subr.mxu0 0.0
        %v5747 = vand.u32 %v5671, 4294901760
        %5748 = vmatpush1.msra.mxu0 %v5747
        %5749 = vmatprep.subr.mxu0 0.0
        %v5750 = vand.u32 %v5672, 4294901760
        %5751 = vmatpush1.msra.mxu0 %v5750
        %5752 = vmatprep.subr.mxu0 0.0
        %v5753 = vand.u32 %v5673, 4294901760
        %5754 = vmatpush1.msra.mxu0 %v5753
        %5755 = vmatprep.subr.mxu0 0.0
        %v5756 = vand.u32 %v5674, 4294901760
        %5757 = vmatpush1.msra.mxu0 %v5756
        %5758 = vmatprep.subr.mxu0 0.0
        %v5759 = vand.u32 %v5675, 4294901760
        %5760 = vmatpush1.msra.mxu0 %v5759
        %5761 = vmatprep.subr.mxu0 0.0
        %v5762 = vand.u32 %v5676, 4294901760
        %5763 = vmatpush1.msra.mxu0 %v5762
        %5764 = vmatprep.subr.mxu0 0.0
        %v5765 = vand.u32 %v5677, 4294901760
        %5766 = vmatpush1.msra.mxu0 %v5765
        %5767 = vmatprep.subr.mxu0 0.0
        %v5768 = vand.u32 %v5678, 4294901760
        %5769 = vmatpush1.msra.mxu0 %v5768
        %5770 = vmatprep.subr.mxu0 0.0
        %v5771 = vand.u32 %v5679, 4294901760
        %5772 = vmatpush1.msra.mxu0 %v5771
        %5773 = vmatprep.subr.mxu0 0.0
        %v5774 = vand.u32 %v5680, 4294901760
        %5775 = vmatpush1.msra.mxu0 %v5774
        %5776 = vmatprep.subr.mxu0 0.0
        %v5777 = vand.u32 %v5681, 4294901760
        %5778 = vmatpush1.msra.mxu0 %v5777
        %5779 = vmatprep.subr.mxu0 0.0
        %v5780 = vand.u32 %v5682, 4294901760
        %5781 = vmatpush1.msra.mxu0 %v5780
        %5782 = vmatprep.subr.mxu0 0.0
        %v5783 = vand.u32 %v5683, 4294901760
        %5784 = vmatpush1.msra.mxu0 %v5783
        %5785 = vmatprep.subr.mxu0 0.0
        %v5786 = vand.u32 %v5684, 4294901760
        %5787 = vmatpush1.msra.mxu0 %v5786
        %v5788 = vand.u32 %v5652, 4294901760
        %v5789 = vsub.f32 %v5652, %v5788
        %v5790 = vand.u32 %v5789, 4294901760
        %v5791 = vsub.f32 %v5789, %v5790
        %v5792 = vand.u32 %v5791, 4294901760
        %5793 = vmatprep.mubr.f32.mxu0 %v5792
        %v5794 = vand.u32 %v5651, 4294901760
        %v5795 = vsub.f32 %v5651, %v5794
        %v5796 = vand.u32 %v5795, 4294901760
        %v5797 = vsub.f32 %v5795, %v5796
        %v5798 = vand.u32 %v5797, 4294901760
        %5799 = vmatmul.mubr.f32.gmra.mrb[0].mxu0 %v5798
        %v5800 = vpop.f32.mrb[0].mxu0
        %v5801 = vadd.f32 %v5690, %v5800
        %v5802 = vpop.f32.mrb[0].mxu0
        %5803 = vdwg.mxu0
        %5804 = vmatprep.subr.mxu0 0.0
        %v5805 = vand.u32 %v5653, 4294901760
        %v5806 = vsub.f32 %v5653, %v5805
        %v5807 = vand.u32 %v5806, 4294901760
        %v5808 = vsub.f32 %v5806, %v5807
        %v5809 = vand.u32 %v5808, 4294901760
        %5810 = vmatpush1.msra.mxu0 %v5809
        %5811 = vmatprep.subr.mxu0 0.0
        %v5812 = vand.u32 %v5654, 4294901760
        %v5813 = vsub.f32 %v5654, %v5812
        %v5814 = vand.u32 %v5813, 4294901760
        %v5815 = vsub.f32 %v5813, %v5814
        %v5816 = vand.u32 %v5815, 4294901760
        %5817 = vmatpush1.msra.mxu0 %v5816
        %5818 = vmatprep.subr.mxu0 0.0
        %v5819 = vand.u32 %v5655, 4294901760
        %v5820 = vsub.f32 %v5655, %v5819
        %v5821 = vand.u32 %v5820, 4294901760
        %v5822 = vsub.f32 %v5820, %v5821
        %v5823 = vand.u32 %v5822, 4294901760
        %5824 = vmatpush1.msra.mxu0 %v5823
        %5825 = vmatprep.subr.mxu0 0.0
        %v5826 = vand.u32 %v5656, 4294901760
        %v5827 = vsub.f32 %v5656, %v5826
        %v5828 = vand.u32 %v5827, 4294901760
        %v5829 = vsub.f32 %v5827, %v5828
        %v5830 = vand.u32 %v5829, 4294901760
        %5831 = vmatpush1.msra.mxu0 %v5830
        %5832 = vmatprep.subr.mxu0 0.0
        %v5833 = vand.u32 %v5657, 4294901760
        %v5834 = vsub.f32 %v5657, %v5833
        %v5835 = vand.u32 %v5834, 4294901760
        %v5836 = vsub.f32 %v5834, %v5835
        %v5837 = vand.u32 %v5836, 4294901760
        %5838 = vmatpush1.msra.mxu0 %v5837
        %5839 = vmatprep.subr.mxu0 0.0
        %v5840 = vand.u32 %v5658, 4294901760
        %v5841 = vsub.f32 %v5658, %v5840
        %v5842 = vand.u32 %v5841, 4294901760
        %v5843 = vsub.f32 %v5841, %v5842
        %v5844 = vand.u32 %v5843, 4294901760
        %5845 = vmatpush1.msra.mxu0 %v5844
        %5846 = vmatprep.subr.mxu0 0.0
        %v5847 = vand.u32 %v5659, 4294901760
        %v5848 = vsub.f32 %v5659, %v5847
        %v5849 = vand.u32 %v5848, 4294901760
        %v5850 = vsub.f32 %v5848, %v5849
        %v5851 = vand.u32 %v5850, 4294901760
        %5852 = vmatpush1.msra.mxu0 %v5851
        %5853 = vmatprep.subr.mxu0 0.0
        %v5854 = vand.u32 %v5660, 4294901760
        %v5855 = vsub.f32 %v5660, %v5854
        %v5856 = vand.u32 %v5855, 4294901760
        %v5857 = vsub.f32 %v5855, %v5856
        %v5858 = vand.u32 %v5857, 4294901760
        %5859 = vmatpush1.msra.mxu0 %v5858
        %5860 = vmatprep.subr.mxu0 0.0
        %v5861 = vand.u32 %v5661, 4294901760
        %v5862 = vsub.f32 %v5661, %v5861
        %v5863 = vand.u32 %v5862, 4294901760
        %v5864 = vsub.f32 %v5862, %v5863
        %v5865 = vand.u32 %v5864, 4294901760
        %5866 = vmatpush1.msra.mxu0 %v5865
        %5867 = vmatprep.subr.mxu0 0.0
        %v5868 = vand.u32 %v5662, 4294901760
        %v5869 = vsub.f32 %v5662, %v5868
        %v5870 = vand.u32 %v5869, 4294901760
        %v5871 = vsub.f32 %v5869, %v5870
        %v5872 = vand.u32 %v5871, 4294901760
        %5873 = vmatpush1.msra.mxu0 %v5872
        %5874 = vmatprep.subr.mxu0 0.0
        %v5875 = vand.u32 %v5663, 4294901760
        %v5876 = vsub.f32 %v5663, %v5875
        %v5877 = vand.u32 %v5876, 4294901760
        %v5878 = vsub.f32 %v5876, %v5877
        %v5879 = vand.u32 %v5878, 4294901760
        %5880 = vmatpush1.msra.mxu0 %v5879
        %5881 = vmatprep.subr.mxu0 0.0
        %v5882 = vand.u32 %v5664, 4294901760
        %v5883 = vsub.f32 %v5664, %v5882
        %v5884 = vand.u32 %v5883, 4294901760
        %v5885 = vsub.f32 %v5883, %v5884
        %v5886 = vand.u32 %v5885, 4294901760
        %5887 = vmatpush1.msra.mxu0 %v5886
        %5888 = vmatprep.subr.mxu0 0.0
        %v5889 = vand.u32 %v5665, 4294901760
        %v5890 = vsub.f32 %v5665, %v5889
        %v5891 = vand.u32 %v5890, 4294901760
        %v5892 = vsub.f32 %v5890, %v5891
        %v5893 = vand.u32 %v5892, 4294901760
        %5894 = vmatpush1.msra.mxu0 %v5893
        %5895 = vmatprep.subr.mxu0 0.0
        %v5896 = vand.u32 %v5666, 4294901760
        %v5897 = vsub.f32 %v5666, %v5896
        %v5898 = vand.u32 %v5897, 4294901760
        %v5899 = vsub.f32 %v5897, %v5898
        %v5900 = vand.u32 %v5899, 4294901760
        %5901 = vmatpush1.msra.mxu0 %v5900
        %5902 = vmatprep.subr.mxu0 0.0
        %v5903 = vand.u32 %v5667, 4294901760
        %v5904 = vsub.f32 %v5667, %v5903
        %v5905 = vand.u32 %v5904, 4294901760
        %v5906 = vsub.f32 %v5904, %v5905
        %v5907 = vand.u32 %v5906, 4294901760
        %5908 = vmatpush1.msra.mxu0 %v5907
        %5909 = vmatprep.subr.mxu0 0.0
        %v5910 = vand.u32 %v5668, 4294901760
        %v5911 = vsub.f32 %v5668, %v5910
        %v5912 = vand.u32 %v5911, 4294901760
        %v5913 = vsub.f32 %v5911, %v5912
        %v5914 = vand.u32 %v5913, 4294901760
        %5915 = vmatpush1.msra.mxu0 %v5914
        %5916 = vmatprep.subr.mxu0 0.0
        %v5917 = vand.u32 %v5669, 4294901760
        %v5918 = vsub.f32 %v5669, %v5917
        %v5919 = vand.u32 %v5918, 4294901760
        %v5920 = vsub.f32 %v5918, %v5919
        %v5921 = vand.u32 %v5920, 4294901760
        %5922 = vmatpush1.msra.mxu0 %v5921
        %5923 = vmatprep.subr.mxu0 0.0
        %v5924 = vand.u32 %v5670, 4294901760
        %v5925 = vsub.f32 %v5670, %v5924
        %v5926 = vand.u32 %v5925, 4294901760
        %v5927 = vsub.f32 %v5925, %v5926
        %v5928 = vand.u32 %v5927, 4294901760
        %5929 = vmatpush1.msra.mxu0 %v5928
        %5930 = vmatprep.subr.mxu0 0.0
        %v5931 = vand.u32 %v5671, 4294901760
        %v5932 = vsub.f32 %v5671, %v5931
        %v5933 = vand.u32 %v5932, 4294901760
        %v5934 = vsub.f32 %v5932, %v5933
        %v5935 = vand.u32 %v5934, 4294901760
        %5936 = vmatpush1.msra.mxu0 %v5935
        %5937 = vmatprep.subr.mxu0 0.0
        %v5938 = vand.u32 %v5672, 4294901760
        %v5939 = vsub.f32 %v5672, %v5938
        %v5940 = vand.u32 %v5939, 4294901760
        %v5941 = vsub.f32 %v5939, %v5940
        %v5942 = vand.u32 %v5941, 4294901760
        %5943 = vmatpush1.msra.mxu0 %v5942
        %5944 = vmatprep.subr.mxu0 0.0
        %v5945 = vand.u32 %v5673, 4294901760
        %v5946 = vsub.f32 %v5673, %v5945
        %v5947 = vand.u32 %v5946, 4294901760
        %v5948 = vsub.f32 %v5946, %v5947
        %v5949 = vand.u32 %v5948, 4294901760
        %5950 = vmatpush1.msra.mxu0 %v5949
        %5951 = vmatprep.subr.mxu0 0.0
        %v5952 = vand.u32 %v5674, 4294901760
        %v5953 = vsub.f32 %v5674, %v5952
        %v5954 = vand.u32 %v5953, 4294901760
        %v5955 = vsub.f32 %v5953, %v5954
        %v5956 = vand.u32 %v5955, 4294901760
        %5957 = vmatpush1.msra.mxu0 %v5956
        %5958 = vmatprep.subr.mxu0 0.0
        %v5959 = vand.u32 %v5675, 4294901760
        %v5960 = vsub.f32 %v5675, %v5959
        %v5961 = vand.u32 %v5960, 4294901760
        %v5962 = vsub.f32 %v5960, %v5961
        %v5963 = vand.u32 %v5962, 4294901760
        %5964 = vmatpush1.msra.mxu0 %v5963
        %5965 = vmatprep.subr.mxu0 0.0
        %v5966 = vand.u32 %v5676, 4294901760
        %v5967 = vsub.f32 %v5676, %v5966
        %v5968 = vand.u32 %v5967, 4294901760
        %v5969 = vsub.f32 %v5967, %v5968
        %v5970 = vand.u32 %v5969, 4294901760
        %5971 = vmatpush1.msra.mxu0 %v5970
        %5972 = vmatprep.subr.mxu0 0.0
        %v5973 = vand.u32 %v5677, 4294901760
        %v5974 = vsub.f32 %v5677, %v5973
        %v5975 = vand.u32 %v5974, 4294901760
        %v5976 = vsub.f32 %v5974, %v5975
        %v5977 = vand.u32 %v5976, 4294901760
        %5978 = vmatpush1.msra.mxu0 %v5977
        %5979 = vmatprep.subr.mxu0 0.0
        %v5980 = vand.u32 %v5678, 4294901760
        %v5981 = vsub.f32 %v5678, %v5980
        %v5982 = vand.u32 %v5981, 4294901760
        %v5983 = vsub.f32 %v5981, %v5982
        %v5984 = vand.u32 %v5983, 4294901760
        %5985 = vmatpush1.msra.mxu0 %v5984
        %5986 = vmatprep.subr.mxu0 0.0
        %v5987 = vand.u32 %v5679, 4294901760
        %v5988 = vsub.f32 %v5679, %v5987
        %v5989 = vand.u32 %v5988, 4294901760
        %v5990 = vsub.f32 %v5988, %v5989
        %v5991 = vand.u32 %v5990, 4294901760
        %5992 = vmatpush1.msra.mxu0 %v5991
        %5993 = vmatprep.subr.mxu0 0.0
        %v5994 = vand.u32 %v5680, 4294901760
        %v5995 = vsub.f32 %v5680, %v5994
        %v5996 = vand.u32 %v5995, 4294901760
        %v5997 = vsub.f32 %v5995, %v5996
        %v5998 = vand.u32 %v5997, 4294901760
        %5999 = vmatpush1.msra.mxu0 %v5998
        %6000 = vmatprep.subr.mxu0 0.0
        %v6001 = vand.u32 %v5681, 4294901760
        %v6002 = vsub.f32 %v5681, %v6001
        %v6003 = vand.u32 %v6002, 4294901760
        %v6004 = vsub.f32 %v6002, %v6003
        %v6005 = vand.u32 %v6004, 4294901760
        %6006 = vmatpush1.msra.mxu0 %v6005
        %6007 = vmatprep.subr.mxu0 0.0
        %v6008 = vand.u32 %v5682, 4294901760
        %v6009 = vsub.f32 %v5682, %v6008
        %v6010 = vand.u32 %v6009, 4294901760
        %v6011 = vsub.f32 %v6009, %v6010
        %v6012 = vand.u32 %v6011, 4294901760
        %6013 = vmatpush1.msra.mxu0 %v6012
        %6014 = vmatprep.subr.mxu0 0.0
        %v6015 = vand.u32 %v5683, 4294901760
        %v6016 = vsub.f32 %v5683, %v6015
        %v6017 = vand.u32 %v6016, 4294901760
        %v6018 = vsub.f32 %v6016, %v6017
        %v6019 = vand.u32 %v6018, 4294901760
        %6020 = vmatpush1.msra.mxu0 %v6019
        %6021 = vmatprep.subr.mxu0 0.0
        %v6022 = vand.u32 %v5684, 4294901760
        %v6023 = vsub.f32 %v5684, %v6022
        %v6024 = vand.u32 %v6023, 4294901760
        %v6025 = vsub.f32 %v6023, %v6024
        %v6026 = vand.u32 %v6025, 4294901760
        %6027 = vmatpush1.msra.mxu0 %v6026
        %v6028 = vand.u32 %v5652, 4294901760
        %6029 = vmatprep.mubr.f32.mxu0 %v6028
        %v6030 = vand.u32 %v5651, 4294901760
        %6031 = vmatmul.mubr.f32.gmra.mrb[0].mxu0 %v6030
        %v6032 = vpop.f32.mrb[0].mxu0
        %v6033 = vadd.f32 %v5801, %v6032
        %v6034 = vpop.f32.mrb[0].mxu0
        %6035 = vdwg.mxu0
        %6036 = vmatprep.subr.mxu0 0.0
        %v6037 = vand.u32 %v5653, 4294901760
        %v6038 = vsub.f32 %v5653, %v6037
        %6039 = vmatpush1.msra.mxu0 %v6038
        %6040 = vmatprep.subr.mxu0 0.0
        %v6041 = vand.u32 %v5654, 4294901760
        %v6042 = vsub.f32 %v5654, %v6041
        %6043 = vmatpush1.msra.mxu0 %v6042
        %6044 = vmatprep.subr.mxu0 0.0
        %v6045 = vand.u32 %v5655, 4294901760
        %v6046 = vsub.f32 %v5655, %v6045
        %6047 = vmatpush1.msra.mxu0 %v6046
        %6048 = vmatprep.subr.mxu0 0.0
        %v6049 = vand.u32 %v5656, 4294901760
        %v6050 = vsub.f32 %v5656, %v6049
        %6051 = vmatpush1.msra.mxu0 %v6050
        %6052 = vmatprep.subr.mxu0 0.0
        %v6053 = vand.u32 %v5657, 4294901760
        %v6054 = vsub.f32 %v5657, %v6053
        %6055 = vmatpush1.msra.mxu0 %v6054
        %6056 = vmatprep.subr.mxu0 0.0
        %v6057 = vand.u32 %v5658, 4294901760
        %v6058 = vsub.f32 %v5658, %v6057
        %6059 = vmatpush1.msra.mxu0 %v6058
        %6060 = vmatprep.subr.mxu0 0.0
        %v6061 = vand.u32 %v5659, 4294901760
        %v6062 = vsub.f32 %v5659, %v6061
        %6063 = vmatpush1.msra.mxu0 %v6062
        %6064 = vmatprep.subr.mxu0 0.0
        %v6065 = vand.u32 %v5660, 4294901760
        %v6066 = vsub.f32 %v5660, %v6065
        %6067 = vmatpush1.msra.mxu0 %v6066
        %6068 = vmatprep.subr.mxu0 0.0
        %v6069 = vand.u32 %v5661, 4294901760
        %v6070 = vsub.f32 %v5661, %v6069
        %6071 = vmatpush1.msra.mxu0 %v6070
        %6072 = vmatprep.subr.mxu0 0.0
        %v6073 = vand.u32 %v5662, 4294901760
        %v6074 = vsub.f32 %v5662, %v6073
        %6075 = vmatpush1.msra.mxu0 %v6074
        %6076 = vmatprep.subr.mxu0 0.0
        %v6077 = vand.u32 %v5663, 4294901760
        %v6078 = vsub.f32 %v5663, %v6077
        %6079 = vmatpush1.msra.mxu0 %v6078
        %6080 = vmatprep.subr.mxu0 0.0
        %v6081 = vand.u32 %v5664, 4294901760
        %v6082 = vsub.f32 %v5664, %v6081
        %6083 = vmatpush1.msra.mxu0 %v6082
        %6084 = vmatprep.subr.mxu0 0.0
        %v6085 = vand.u32 %v5665, 4294901760
        %v6086 = vsub.f32 %v5665, %v6085
        %6087 = vmatpush1.msra.mxu0 %v6086
        %6088 = vmatprep.subr.mxu0 0.0
        %v6089 = vand.u32 %v5666, 4294901760
        %v6090 = vsub.f32 %v5666, %v6089
        %6091 = vmatpush1.msra.mxu0 %v6090
        %6092 = vmatprep.subr.mxu0 0.0
        %v6093 = vand.u32 %v5667, 4294901760
        %v6094 = vsub.f32 %v5667, %v6093
        %6095 = vmatpush1.msra.mxu0 %v6094
        %6096 = vmatprep.subr.mxu0 0.0
        %v6097 = vand.u32 %v5668, 4294901760
        %v6098 = vsub.f32 %v5668, %v6097
        %6099 = vmatpush1.msra.mxu0 %v6098
        %6100 = vmatprep.subr.mxu0 0.0
        %v6101 = vand.u32 %v5669, 4294901760
        %v6102 = vsub.f32 %v5669, %v6101
        %6103 = vmatpush1.msra.mxu0 %v6102
        %6104 = vmatprep.subr.mxu0 0.0
        %v6105 = vand.u32 %v5670, 4294901760
        %v6106 = vsub.f32 %v5670, %v6105
        %6107 = vmatpush1.msra.mxu0 %v6106
        %6108 = vmatprep.subr.mxu0 0.0
        %v6109 = vand.u32 %v5671, 4294901760
        %v6110 = vsub.f32 %v5671, %v6109
        %6111 = vmatpush1.msra.mxu0 %v6110
        %6112 = vmatprep.subr.mxu0 0.0
        %v6113 = vand.u32 %v5672, 4294901760
        %v6114 = vsub.f32 %v5672, %v6113
        %6115 = vmatpush1.msra.mxu0 %v6114
        %6116 = vmatprep.subr.mxu0 0.0
        %v6117 = vand.u32 %v5673, 4294901760
        %v6118 = vsub.f32 %v5673, %v6117
        %6119 = vmatpush1.msra.mxu0 %v6118
        %6120 = vmatprep.subr.mxu0 0.0
        %v6121 = vand.u32 %v5674, 4294901760
        %v6122 = vsub.f32 %v5674, %v6121
        %6123 = vmatpush1.msra.mxu0 %v6122
        %6124 = vmatprep.subr.mxu0 0.0
        %v6125 = vand.u32 %v5675, 4294901760
        %v6126 = vsub.f32 %v5675, %v6125
        %6127 = vmatpush1.msra.mxu0 %v6126
        %6128 = vmatprep.subr.mxu0 0.0
        %v6129 = vand.u32 %v5676, 4294901760
        %v6130 = vsub.f32 %v5676, %v6129
        %6131 = vmatpush1.msra.mxu0 %v6130
        %6132 = vmatprep.subr.mxu0 0.0
        %v6133 = vand.u32 %v5677, 4294901760
        %v6134 = vsub.f32 %v5677, %v6133
        %6135 = vmatpush1.msra.mxu0 %v6134
        %6136 = vmatprep.subr.mxu0 0.0
        %v6137 = vand.u32 %v5678, 4294901760
        %v6138 = vsub.f32 %v5678, %v6137
        %6139 = vmatpush1.msra.mxu0 %v6138
        %6140 = vmatprep.subr.mxu0 0.0
        %v6141 = vand.u32 %v5679, 4294901760
        %v6142 = vsub.f32 %v5679, %v6141
        %6143 = vmatpush1.msra.mxu0 %v6142
        %6144 = vmatprep.subr.mxu0 0.0
        %v6145 = vand.u32 %v5680, 4294901760
        %v6146 = vsub.f32 %v5680, %v6145
        %6147 = vmatpush1.msra.mxu0 %v6146
        %6148 = vmatprep.subr.mxu0 0.0
        %v6149 = vand.u32 %v5681, 4294901760
        %v6150 = vsub.f32 %v5681, %v6149
        %6151 = vmatpush1.msra.mxu0 %v6150
        %6152 = vmatprep.subr.mxu0 0.0
        %v6153 = vand.u32 %v5682, 4294901760
        %v6154 = vsub.f32 %v5682, %v6153
        %6155 = vmatpush1.msra.mxu0 %v6154
        %6156 = vmatprep.subr.mxu0 0.0
        %v6157 = vand.u32 %v5683, 4294901760
        %v6158 = vsub.f32 %v5683, %v6157
        %6159 = vmatpush1.msra.mxu0 %v6158
        %6160 = vmatprep.subr.mxu0 0.0
        %v6161 = vand.u32 %v5684, 4294901760
        %v6162 = vsub.f32 %v5684, %v6161
        %6163 = vmatpush1.msra.mxu0 %v6162
        %v6164 = vand.u32 %v5652, 4294901760
        %v6165 = vsub.f32 %v5652, %v6164
        %6166 = vmatprep.mubr.f32.mxu0 %v6165
        %v6167 = vand.u32 %v5651, 4294901760
        %v6168 = vsub.f32 %v5651, %v6167
        %6169 = vmatmul.mubr.f32.gmra.mrb[0].mxu0 %v6168
        %v6170 = vpop.f32.mrb[0].mxu0
        %v6171 = vadd.f32 %v6033, %v6170
        %v6172 = vpop.f32.mrb[0].mxu0
        %6173 = vdwg.mxu0
        %6174 = vmatprep.subr.mxu0 0.0
        %v6175 = vand.u32 %v5653, 4294901760
        %6176 = vmatpush1.msra.mxu0 %v6175
        %6177 = vmatprep.subr.mxu0 0.0
        %v6178 = vand.u32 %v5654, 4294901760
        %6179 = vmatpush1.msra.mxu0 %v6178
        %6180 = vmatprep.subr.mxu0 0.0
        %v6181 = vand.u32 %v5655, 4294901760
        %6182 = vmatpush1.msra.mxu0 %v6181
        %6183 = vmatprep.subr.mxu0 0.0
        %v6184 = vand.u32 %v5656, 4294901760
        %6185 = vmatpush1.msra.mxu0 %v6184
        %6186 = vmatprep.subr.mxu0 0.0
        %v6187 = vand.u32 %v5657, 4294901760
        %6188 = vmatpush1.msra.mxu0 %v6187
        %6189 = vmatprep.subr.mxu0 0.0
        %v6190 = vand.u32 %v5658, 4294901760
        %6191 = vmatpush1.msra.mxu0 %v6190
        %6192 = vmatprep.subr.mxu0 0.0
        %v6193 = vand.u32 %v5659, 4294901760
        %6194 = vmatpush1.msra.mxu0 %v6193
        %6195 = vmatprep.subr.mxu0 0.0
        %v6196 = vand.u32 %v5660, 4294901760
        %6197 = vmatpush1.msra.mxu0 %v6196
        %6198 = vmatprep.subr.mxu0 0.0
        %v6199 = vand.u32 %v5661, 4294901760
        %6200 = vmatpush1.msra.mxu0 %v6199
        %6201 = vmatprep.subr.mxu0 0.0
        %v6202 = vand.u32 %v5662, 4294901760
        %6203 = vmatpush1.msra.mxu0 %v6202
        %6204 = vmatprep.subr.mxu0 0.0
        %v6205 = vand.u32 %v5663, 4294901760
        %6206 = vmatpush1.msra.mxu0 %v6205
        %6207 = vmatprep.subr.mxu0 0.0
        %v6208 = vand.u32 %v5664, 4294901760
        %6209 = vmatpush1.msra.mxu0 %v6208
        %6210 = vmatprep.subr.mxu0 0.0
        %v6211 = vand.u32 %v5665, 4294901760
        %6212 = vmatpush1.msra.mxu0 %v6211
        %6213 = vmatprep.subr.mxu0 0.0
        %v6214 = vand.u32 %v5666, 4294901760
        %6215 = vmatpush1.msra.mxu0 %v6214
        %6216 = vmatprep.subr.mxu0 0.0
        %v6217 = vand.u32 %v5667, 4294901760
        %6218 = vmatpush1.msra.mxu0 %v6217
        %6219 = vmatprep.subr.mxu0 0.0
        %v6220 = vand.u32 %v5668, 4294901760
        %6221 = vmatpush1.msra.mxu0 %v6220
        %6222 = vmatprep.subr.mxu0 0.0
        %v6223 = vand.u32 %v5669, 4294901760
        %6224 = vmatpush1.msra.mxu0 %v6223
        %6225 = vmatprep.subr.mxu0 0.0
        %v6226 = vand.u32 %v5670, 4294901760
        %6227 = vmatpush1.msra.mxu0 %v6226
        %6228 = vmatprep.subr.mxu0 0.0
        %v6229 = vand.u32 %v5671, 4294901760
        %6230 = vmatpush1.msra.mxu0 %v6229
        %6231 = vmatprep.subr.mxu0 0.0
        %v6232 = vand.u32 %v5672, 4294901760
        %6233 = vmatpush1.msra.mxu0 %v6232
        %6234 = vmatprep.subr.mxu0 0.0
        %v6235 = vand.u32 %v5673, 4294901760
        %6236 = vmatpush1.msra.mxu0 %v6235
        %6237 = vmatprep.subr.mxu0 0.0
        %v6238 = vand.u32 %v5674, 4294901760
        %6239 = vmatpush1.msra.mxu0 %v6238
        %6240 = vmatprep.subr.mxu0 0.0
        %v6241 = vand.u32 %v5675, 4294901760
        %6242 = vmatpush1.msra.mxu0 %v6241
        %6243 = vmatprep.subr.mxu0 0.0
        %v6244 = vand.u32 %v5676, 4294901760
        %6245 = vmatpush1.msra.mxu0 %v6244
        %6246 = vmatprep.subr.mxu0 0.0
        %v6247 = vand.u32 %v5677, 4294901760
        %6248 = vmatpush1.msra.mxu0 %v6247
        %6249 = vmatprep.subr.mxu0 0.0
        %v6250 = vand.u32 %v5678, 4294901760
        %6251 = vmatpush1.msra.mxu0 %v6250
        %6252 = vmatprep.subr.mxu0 0.0
        %v6253 = vand.u32 %v5679, 4294901760
        %6254 = vmatpush1.msra.mxu0 %v6253
        %6255 = vmatprep.subr.mxu0 0.0
        %v6256 = vand.u32 %v5680, 4294901760
        %6257 = vmatpush1.msra.mxu0 %v6256
        %6258 = vmatprep.subr.mxu0 0.0
        %v6259 = vand.u32 %v5681, 4294901760
        %6260 = vmatpush1.msra.mxu0 %v6259
        %6261 = vmatprep.subr.mxu0 0.0
        %v6262 = vand.u32 %v5682, 4294901760
        %6263 = vmatpush1.msra.mxu0 %v6262
        %6264 = vmatprep.subr.mxu0 0.0
        %v6265 = vand.u32 %v5683, 4294901760
        %6266 = vmatpush1.msra.mxu0 %v6265
        %6267 = vmatprep.subr.mxu0 0.0
        %v6268 = vand.u32 %v5684, 4294901760
        %6269 = vmatpush1.msra.mxu0 %v6268
        %v6270 = vand.u32 %v5652, 4294901760
        %v6271 = vsub.f32 %v5652, %v6270
        %v6272 = vand.u32 %v6271, 4294901760
        %6273 = vmatprep.mubr.f32.mxu0 %v6272
        %v6274 = vand.u32 %v5651, 4294901760
        %v6275 = vsub.f32 %v5651, %v6274
        %v6276 = vand.u32 %v6275, 4294901760
        %6277 = vmatmul.mubr.f32.gmra.mrb[0].mxu0 %v6276
        %v6278 = vpop.f32.mrb[0].mxu0
        %v6279 = vadd.f32 %v6171, %v6278
        %v6280 = vpop.f32.mrb[0].mxu0
        %6281 = vdwg.mxu0
        %6282 = vmatprep.subr.mxu0 0.0
        %v6283 = vand.u32 %v5653, 4294901760
        %v6284 = vsub.f32 %v5653, %v6283
        %v6285 = vand.u32 %v6284, 4294901760
        %6286 = vmatpush1.msra.mxu0 %v6285
        %6287 = vmatprep.subr.mxu0 0.0
        %v6288 = vand.u32 %v5654, 4294901760
        %v6289 = vsub.f32 %v5654, %v6288
        %v6290 = vand.u32 %v6289, 4294901760
        %6291 = vmatpush1.msra.mxu0 %v6290
        %6292 = vmatprep.subr.mxu0 0.0
        %v6293 = vand.u32 %v5655, 4294901760
        %v6294 = vsub.f32 %v5655, %v6293
        %v6295 = vand.u32 %v6294, 4294901760
        %6296 = vmatpush1.msra.mxu0 %v6295
        %6297 = vmatprep.subr.mxu0 0.0
        %v6298 = vand.u32 %v5656, 4294901760
        %v6299 = vsub.f32 %v5656, %v6298
        %v6300 = vand.u32 %v6299, 4294901760
        %6301 = vmatpush1.msra.mxu0 %v6300
        %6302 = vmatprep.subr.mxu0 0.0
        %v6303 = vand.u32 %v5657, 4294901760
        %v6304 = vsub.f32 %v5657, %v6303
        %v6305 = vand.u32 %v6304, 4294901760
        %6306 = vmatpush1.msra.mxu0 %v6305
        %6307 = vmatprep.subr.mxu0 0.0
        %v6308 = vand.u32 %v5658, 4294901760
        %v6309 = vsub.f32 %v5658, %v6308
        %v6310 = vand.u32 %v6309, 4294901760
        %6311 = vmatpush1.msra.mxu0 %v6310
        %6312 = vmatprep.subr.mxu0 0.0
        %v6313 = vand.u32 %v5659, 4294901760
        %v6314 = vsub.f32 %v5659, %v6313
        %v6315 = vand.u32 %v6314, 4294901760
        %6316 = vmatpush1.msra.mxu0 %v6315
        %6317 = vmatprep.subr.mxu0 0.0
        %v6318 = vand.u32 %v5660, 4294901760
        %v6319 = vsub.f32 %v5660, %v6318
        %v6320 = vand.u32 %v6319, 4294901760
        %6321 = vmatpush1.msra.mxu0 %v6320
        %6322 = vmatprep.subr.mxu0 0.0
        %v6323 = vand.u32 %v5661, 4294901760
        %v6324 = vsub.f32 %v5661, %v6323
        %v6325 = vand.u32 %v6324, 4294901760
        %6326 = vmatpush1.msra.mxu0 %v6325
        %6327 = vmatprep.subr.mxu0 0.0
        %v6328 = vand.u32 %v5662, 4294901760
        %v6329 = vsub.f32 %v5662, %v6328
        %v6330 = vand.u32 %v6329, 4294901760
        %6331 = vmatpush1.msra.mxu0 %v6330
        %6332 = vmatprep.subr.mxu0 0.0
        %v6333 = vand.u32 %v5663, 4294901760
        %v6334 = vsub.f32 %v5663, %v6333
        %v6335 = vand.u32 %v6334, 4294901760
        %6336 = vmatpush1.msra.mxu0 %v6335
        %6337 = vmatprep.subr.mxu0 0.0
        %v6338 = vand.u32 %v5664, 4294901760
        %v6339 = vsub.f32 %v5664, %v6338
        %v6340 = vand.u32 %v6339, 4294901760
        %6341 = vmatpush1.msra.mxu0 %v6340
        %6342 = vmatprep.subr.mxu0 0.0
        %v6343 = vand.u32 %v5665, 4294901760
        %v6344 = vsub.f32 %v5665, %v6343
        %v6345 = vand.u32 %v6344, 4294901760
        %6346 = vmatpush1.msra.mxu0 %v6345
        %6347 = vmatprep.subr.mxu0 0.0
        %v6348 = vand.u32 %v5666, 4294901760
        %v6349 = vsub.f32 %v5666, %v6348
        %v6350 = vand.u32 %v6349, 4294901760
        %6351 = vmatpush1.msra.mxu0 %v6350
        %6352 = vmatprep.subr.mxu0 0.0
        %v6353 = vand.u32 %v5667, 4294901760
        %v6354 = vsub.f32 %v5667, %v6353
        %v6355 = vand.u32 %v6354, 4294901760
        %6356 = vmatpush1.msra.mxu0 %v6355
        %6357 = vmatprep.subr.mxu0 0.0
        %v6358 = vand.u32 %v5668, 4294901760
        %v6359 = vsub.f32 %v5668, %v6358
        %v6360 = vand.u32 %v6359, 4294901760
        %6361 = vmatpush1.msra.mxu0 %v6360
        %6362 = vmatprep.subr.mxu0 0.0
        %v6363 = vand.u32 %v5669, 4294901760
        %v6364 = vsub.f32 %v5669, %v6363
        %v6365 = vand.u32 %v6364, 4294901760
        %6366 = vmatpush1.msra.mxu0 %v6365
        %6367 = vmatprep.subr.mxu0 0.0
        %v6368 = vand.u32 %v5670, 4294901760
        %v6369 = vsub.f32 %v5670, %v6368
        %v6370 = vand.u32 %v6369, 4294901760
        %6371 = vmatpush1.msra.mxu0 %v6370
        %6372 = vmatprep.subr.mxu0 0.0
        %v6373 = vand.u32 %v5671, 4294901760
        %v6374 = vsub.f32 %v5671, %v6373
        %v6375 = vand.u32 %v6374, 4294901760
        %6376 = vmatpush1.msra.mxu0 %v6375
        %6377 = vmatprep.subr.mxu0 0.0
        %v6378 = vand.u32 %v5672, 4294901760
        %v6379 = vsub.f32 %v5672, %v6378
        %v6380 = vand.u32 %v6379, 4294901760
        %6381 = vmatpush1.msra.mxu0 %v6380
        %6382 = vmatprep.subr.mxu0 0.0
        %v6383 = vand.u32 %v5673, 4294901760
        %v6384 = vsub.f32 %v5673, %v6383
        %v6385 = vand.u32 %v6384, 4294901760
        %6386 = vmatpush1.msra.mxu0 %v6385
        %6387 = vmatprep.subr.mxu0 0.0
        %v6388 = vand.u32 %v5674, 4294901760
        %v6389 = vsub.f32 %v5674, %v6388
        %v6390 = vand.u32 %v6389, 4294901760
        %6391 = vmatpush1.msra.mxu0 %v6390
        %6392 = vmatprep.subr.mxu0 0.0
        %v6393 = vand.u32 %v5675, 4294901760
        %v6394 = vsub.f32 %v5675, %v6393
        %v6395 = vand.u32 %v6394, 4294901760
        %6396 = vmatpush1.msra.mxu0 %v6395
        %6397 = vmatprep.subr.mxu0 0.0
        %v6398 = vand.u32 %v5676, 4294901760
        %v6399 = vsub.f32 %v5676, %v6398
        %v6400 = vand.u32 %v6399, 4294901760
        %6401 = vmatpush1.msra.mxu0 %v6400
        %6402 = vmatprep.subr.mxu0 0.0
        %v6403 = vand.u32 %v5677, 4294901760
        %v6404 = vsub.f32 %v5677, %v6403
        %v6405 = vand.u32 %v6404, 4294901760
        %6406 = vmatpush1.msra.mxu0 %v6405
        %6407 = vmatprep.subr.mxu0 0.0
        %v6408 = vand.u32 %v5678, 4294901760
        %v6409 = vsub.f32 %v5678, %v6408
        %v6410 = vand.u32 %v6409, 4294901760
        %6411 = vmatpush1.msra.mxu0 %v6410
        %6412 = vmatprep.subr.mxu0 0.0
        %v6413 = vand.u32 %v5679, 4294901760
        %v6414 = vsub.f32 %v5679, %v6413
        %v6415 = vand.u32 %v6414, 4294901760
        %6416 = vmatpush1.msra.mxu0 %v6415
        %6417 = vmatprep.subr.mxu0 0.0
        %v6418 = vand.u32 %v5680, 4294901760
        %v6419 = vsub.f32 %v5680, %v6418
        %v6420 = vand.u32 %v6419, 4294901760
        %6421 = vmatpush1.msra.mxu0 %v6420
        %6422 = vmatprep.subr.mxu0 0.0
        %v6423 = vand.u32 %v5681, 4294901760
        %v6424 = vsub.f32 %v5681, %v6423
        %v6425 = vand.u32 %v6424, 4294901760
        %6426 = vmatpush1.msra.mxu0 %v6425
        %6427 = vmatprep.subr.mxu0 0.0
        %v6428 = vand.u32 %v5682, 4294901760
        %v6429 = vsub.f32 %v5682, %v6428
        %v6430 = vand.u32 %v6429, 4294901760
        %6431 = vmatpush1.msra.mxu0 %v6430
        %6432 = vmatprep.subr.mxu0 0.0
        %v6433 = vand.u32 %v5683, 4294901760
        %v6434 = vsub.f32 %v5683, %v6433
        %v6435 = vand.u32 %v6434, 4294901760
        %6436 = vmatpush1.msra.mxu0 %v6435
        %6437 = vmatprep.subr.mxu0 0.0
        %v6438 = vand.u32 %v5684, 4294901760
        %v6439 = vsub.f32 %v5684, %v6438
        %v6440 = vand.u32 %v6439, 4294901760
        %6441 = vmatpush1.msra.mxu0 %v6440
        %v6442 = vand.u32 %v5652, 4294901760
        %6443 = vmatprep.mubr.f32.mxu0 %v6442
        %v6444 = vand.u32 %v5651, 4294901760
        %6445 = vmatmul.mubr.f32.gmra.mrb[0].mxu0 %v6444
        %v6446 = vpop.f32.mrb[0].mxu0
        %v6447 = vadd.f32 %v6279, %v6446
        %v6448 = vpop.f32.mrb[0].mxu0
        %6449 = vdwg.mxu0
        %6450 = vmatprep.subr.mxu0 0.0
        %v6451 = vand.u32 %v5653, 4294901760
        %6452 = vmatpush1.msra.mxu0 %v6451
        %6453 = vmatprep.subr.mxu0 0.0
        %v6454 = vand.u32 %v5654, 4294901760
        %6455 = vmatpush1.msra.mxu0 %v6454
        %6456 = vmatprep.subr.mxu0 0.0
        %v6457 = vand.u32 %v5655, 4294901760
        %6458 = vmatpush1.msra.mxu0 %v6457
        %6459 = vmatprep.subr.mxu0 0.0
        %v6460 = vand.u32 %v5656, 4294901760
        %6461 = vmatpush1.msra.mxu0 %v6460
        %6462 = vmatprep.subr.mxu0 0.0
        %v6463 = vand.u32 %v5657, 4294901760
        %6464 = vmatpush1.msra.mxu0 %v6463
        %6465 = vmatprep.subr.mxu0 0.0
        %v6466 = vand.u32 %v5658, 4294901760
        %6467 = vmatpush1.msra.mxu0 %v6466
        %6468 = vmatprep.subr.mxu0 0.0
        %v6469 = vand.u32 %v5659, 4294901760
        %6470 = vmatpush1.msra.mxu0 %v6469
        %6471 = vmatprep.subr.mxu0 0.0
        %v6472 = vand.u32 %v5660, 4294901760
        %6473 = vmatpush1.msra.mxu0 %v6472
        %6474 = vmatprep.subr.mxu0 0.0
        %v6475 = vand.u32 %v5661, 4294901760
        %6476 = vmatpush1.msra.mxu0 %v6475
        %6477 = vmatprep.subr.mxu0 0.0
        %v6478 = vand.u32 %v5662, 4294901760
        %6479 = vmatpush1.msra.mxu0 %v6478
        %6480 = vmatprep.subr.mxu0 0.0
        %v6481 = vand.u32 %v5663, 4294901760
        %6482 = vmatpush1.msra.mxu0 %v6481
        %6483 = vmatprep.subr.mxu0 0.0
        %v6484 = vand.u32 %v5664, 4294901760
        %6485 = vmatpush1.msra.mxu0 %v6484
        %6486 = vmatprep.subr.mxu0 0.0
        %v6487 = vand.u32 %v5665, 4294901760
        %6488 = vmatpush1.msra.mxu0 %v6487
        %6489 = vmatprep.subr.mxu0 0.0
        %v6490 = vand.u32 %v5666, 4294901760
        %6491 = vmatpush1.msra.mxu0 %v6490
        %6492 = vmatprep.subr.mxu0 0.0
        %v6493 = vand.u32 %v5667, 4294901760
        %6494 = vmatpush1.msra.mxu0 %v6493
        %6495 = vmatprep.subr.mxu0 0.0
        %v6496 = vand.u32 %v5668, 4294901760
        %6497 = vmatpush1.msra.mxu0 %v6496
        %6498 = vmatprep.subr.mxu0 0.0
        %v6499 = vand.u32 %v5669, 4294901760
        %6500 = vmatpush1.msra.mxu0 %v6499
        %6501 = vmatprep.subr.mxu0 0.0
        %v6502 = vand.u32 %v5670, 4294901760
        %6503 = vmatpush1.msra.mxu0 %v6502
        %6504 = vmatprep.subr.mxu0 0.0
        %v6505 = vand.u32 %v5671, 4294901760
        %6506 = vmatpush1.msra.mxu0 %v6505
        %6507 = vmatprep.subr.mxu0 0.0
        %v6508 = vand.u32 %v5672, 4294901760
        %6509 = vmatpush1.msra.mxu0 %v6508
        %6510 = vmatprep.subr.mxu0 0.0
        %v6511 = vand.u32 %v5673, 4294901760
        %6512 = vmatpush1.msra.mxu0 %v6511
        %6513 = vmatprep.subr.mxu0 0.0
        %v6514 = vand.u32 %v5674, 4294901760
        %6515 = vmatpush1.msra.mxu0 %v6514
        %6516 = vmatprep.subr.mxu0 0.0
        %v6517 = vand.u32 %v5675, 4294901760
        %6518 = vmatpush1.msra.mxu0 %v6517
        %6519 = vmatprep.subr.mxu0 0.0
        %v6520 = vand.u32 %v5676, 4294901760
        %6521 = vmatpush1.msra.mxu0 %v6520
        %6522 = vmatprep.subr.mxu0 0.0
        %v6523 = vand.u32 %v5677, 4294901760
        %6524 = vmatpush1.msra.mxu0 %v6523
        %6525 = vmatprep.subr.mxu0 0.0
        %v6526 = vand.u32 %v5678, 4294901760
        %6527 = vmatpush1.msra.mxu0 %v6526
        %6528 = vmatprep.subr.mxu0 0.0
        %v6529 = vand.u32 %v5679, 4294901760
        %6530 = vmatpush1.msra.mxu0 %v6529
        %6531 = vmatprep.subr.mxu0 0.0
        %v6532 = vand.u32 %v5680, 4294901760
        %6533 = vmatpush1.msra.mxu0 %v6532
        %6534 = vmatprep.subr.mxu0 0.0
        %v6535 = vand.u32 %v5681, 4294901760
        %6536 = vmatpush1.msra.mxu0 %v6535
        %6537 = vmatprep.subr.mxu0 0.0
        %v6538 = vand.u32 %v5682, 4294901760
        %6539 = vmatpush1.msra.mxu0 %v6538
        %6540 = vmatprep.subr.mxu0 0.0
        %v6541 = vand.u32 %v5683, 4294901760
        %6542 = vmatpush1.msra.mxu0 %v6541
        %6543 = vmatprep.subr.mxu0 0.0
        %v6544 = vand.u32 %v5684, 4294901760
        %6545 = vmatpush1.msra.mxu0 %v6544
        %v6546 = vand.u32 %v5652, 4294901760
        %6547 = vmatprep.mubr.f32.mxu0 %v6546
        %v6548 = vand.u32 %v5651, 4294901760
        %6549 = vmatmul.mubr.f32.gmra.mrb[0].mxu0 %v6548
        %v6550 = vpop.f32.mrb[0].mxu0
        %v6551 = vadd.f32 %v6447, %v6550
        %v6552 = vpop.f32.mrb[0].mxu0
        %6553 = vdwg.mxu0
        %6554 = vst [vmem:[%s412] sm:$0xff] %v6551
        %s6555 = sand.u32 %s250, 1
        %s6556 = scalar_lea.sflag [#allocation4], %s6555
        %s6557 = sand.u32 %s250, 1
        %s6558 = smul.addr %s6557, 8
        %s6559 = scalar_lea.vmem [#allocation10], %s6558
        // Predicated region
        $region77: #{tpu_custom_call.1} parent=59 // pred_check
          %p6560 = pneg %p260
        $region78: #{tpu_custom_call.1} parent=59 // pred_check_branch
          %6562 = sbr.rel (%p6560) target = $region80
        $region79: #{tpu_custom_call.1} parent=59 // pred_region
          %s6564 = ssub.s32 128, 128
          %6565 = vsyncadd %s6556, %s6564
          %s6566 = smul.addr %s27, 128
          %s6567 = scalar_lea.hbm %s10, %s6566
          %s6569 = sshll.u32 %s6559, 4
          %s6570 = int_to_ptr.vmem [resolvable:$true] %s6569
          %6572 = dma.vmem_to_hbm [thread:$0]  %s6570, 128, %s6567, %s6556
        $region80: #{tpu_custom_call.1} parent=59 // pred_fallthru
          _
      $region60: #{tpu_custom_call.1} parent=5 // pred_fallthru
        _
      %p6573 = scmp.le.s32.totalorder 2, %s22
      // Predicated region
      $region81: #{tpu_custom_call.1} parent=5 // pred_check
        %p6574 = pneg %p6573
      $region82: #{tpu_custom_call.1} parent=5 // pred_check_branch
        %6576 = sbr.rel (%p6574) target = $region84
      $region83: #{tpu_custom_call.1} parent=5 // pred_region
        %s6577 = ssub.s32 %s22, 2
        // Predicated region
        $region85: #{tpu_custom_call.1} parent=83 // pred_check
          %p6578 = pneg %p266
        $region86: #{tpu_custom_call.1} parent=83 // pred_check_branch
          %6580 = sbr.rel (%p6578) target = $region88
        $region87: #{tpu_custom_call.1} parent=83 // pred_region
          %s6581 = sand.u32 %s251, 1
          %s6582 = scalar_lea.sflag [#allocation4], %s6581
          %s6583 = sand.u32 %s251, 1
          %s6584 = smul.addr %s6583, 8
          %s6585 = scalar_lea.vmem [#allocation10], %s6584
          %6586 = dma.done %s6582, 128
        $region88: #{tpu_custom_call.1} parent=83 // pred_fallthru
          _
      $region84: #{tpu_custom_call.1} parent=5 // pred_fallthru
        _
    $region6: #{tpu_custom_call.1} parent=1 // loop_footer
      %s26 = sadd.s32 1, %s22
    $region7: #{tpu_custom_call.1} parent=1 // loop_footer_branch
      %21 = sbr.rel target = $region3
    $region8: #{tpu_custom_call.1} parent=1 // loop_exit
      _
    %6587 = vsyncpa [#allocation3], 1
    %s6588 = scalar_lea.sflag [#allocation3], 1
    %6589 = vsyncpa %s6588, 1
    %6590 = vsyncpa [#allocation6], 1
    %6591 = vsyncpa [#allocation9], 1
    %6592 = vsyncpa [#allocation4], 1
    %s6593 = scalar_lea.sflag [#allocation4], 1
    %6594 = vsyncpa %s6593, 1

</llo_original>
